<compile_context>
chip_gen: v6e
topology: v6e:2x2x1
jax: 0.10.0
libtpu: 0.0.40
codegen_flags: <defaults>
</compile_context>

<pallas_src>
import numpy as np
import jax
import jax.numpy as jnp
from jax.experimental import pallas as pl
from jax.experimental.pallas import tpu as pltpu


# ----------------------------------------------------------------------------
# Configuration (small, deterministic, consistent with the module: the Learner
# hard-codes 32x32 RGB input; channels chosen small).
# ----------------------------------------------------------------------------
BATCH = 2
IN_CH = 3
IMG = 32
CHANNELS = (8, 16, 64, 32)          # channel1..channel4
N_OUTPUTS = 10
KS = 5                              # 5x5 convs, padding 2
EPS = 1e-5

C1, C2, C3, C4 = CHANNELS
H1 = W1 = IMG                       # conv1 output spatial size
HP1 = WP1 = IMG // 2                # pool1 output spatial size (16)
HP2 = WP2 = IMG // 4                # pool2 output spatial size (8)
LANES1 = W1 * C1                    # 256 : lanes of conv1/bn1/pool1 rows
LANES2 = WP1 * C2                   # 256 : lanes of conv2/bn2/pool2 rows


# ----------------------------------------------------------------------------
# Fused forward kernel.  All refs are whole-array VMEM blocks (no grid).
# ----------------------------------------------------------------------------
def _learner_kernel(x_ref, m1_ref, c2_ref, g1_ref, b1_ref, g2_ref, b2_ref,
                    csum1_ref, ctile1_ref, csum2_ref, ctile2_ref,
                    sh1_ref, sh2_ref, w1f_ref, w2t_ref, w3t_ref, o_ref):
    f32 = jnp.float32

    def band_conv(xrows, m_ref, h_out, lanes_out):
        # xrows: (h_out + 4, (W+4)*Cin) spatially padded rows layout.
        # m_ref[dy]: ((W+4)*Cin, W*Cout) banded weight matrix.
        acc = jnp.zeros((h_out, lanes_out), f32)
        for dy in range(KS):
            acc = acc + jnp.dot(xrows[dy:dy + h_out, :], m_ref[dy],
                                preferred_element_type=f32)
        return acc

    def bn_relu(a, gamma, beta, csum, ctile, n_elems):
        # a: (rows, W*C); gamma/beta: (1, C); csum: (W*C, C); ctile: (C, W*C).
        # Batch statistics (biased variance) == BatchNorm2d(track_running_stats=False).
        inv_n = 1.0 / float(n_elems)
        rowsum = jnp.sum(a, axis=0, keepdims=True)                     # (1, W*C)
        mean_c = jnp.dot(rowsum, csum, preferred_element_type=f32) * inv_n
        mean_r = jnp.dot(mean_c, ctile, preferred_element_type=f32)    # (1, W*C)
        d = a - mean_r
        sqsum = jnp.sum(d * d, axis=0, keepdims=True)                  # (1, W*C)
        var_c = jnp.dot(sqsum, csum, preferred_element_type=f32) * inv_n
        scale_c = gamma * jax.lax.rsqrt(var_c + EPS)                   # (1, C)
        shift_c = beta - mean_c * scale_c                              # (1, C)
        scale_r = jnp.dot(scale_c, ctile, preferred_element_type=f32)
        shift_r = jnp.dot(shift_c, ctile, preferred_element_type=f32)
        return jnp.maximum(a * scale_r + shift_r, 0.0)

    def pool_rows(a, sh, c):
        # MaxPool2d(3, 2, padding=1) on one batch element in rows layout.
        # a: (H, W*C), post-ReLU (>=0 so zero padding == -inf padding).
        # Returns (H//2, W*C): rows are pooled+subsampled; along W only the
        # 3-tap max is taken -- the stride-2 column subsample is folded into
        # the next layer's (pre-processed) weights.
        lanes = a.shape[1]
        zr = jnp.zeros((1, lanes), f32)
        up = jnp.concatenate([a[1:, :], zr], axis=0)          # row y+1
        dn = jnp.concatenate([zr, a[:-1, :]], axis=0)         # row y-1
        hfull = jnp.maximum(jnp.maximum(a, up), dn)
        hsel = jnp.dot(sh, hfull, preferred_element_type=f32)  # even rows
        zc = jnp.zeros((hsel.shape[0], c), f32)
        xp = jnp.concatenate([hsel[:, c:], zc], axis=1)        # col x+1
        xm = jnp.concatenate([zc, hsel[:, :-c]], axis=1)       # col x-1
        return jnp.maximum(jnp.maximum(hsel, xp), xm)

    # ---- block 1: conv1 (banded matmuls) -> BN1 + ReLU ----------------------
    a1 = jnp.concatenate(
        [band_conv(x_ref[b], m1_ref, H1, LANES1) for b in range(BATCH)], axis=0)
    a1 = bn_relu(a1, g1_ref[...], b1_ref[...], csum1_ref[...], ctile1_ref[...],
                 BATCH * H1 * W1)                                       # (B*32, 256)

    # ---- pool1 + conv2 (pool-W subsample folded into conv2 band matrices) ---
    a2_parts = []
    for b in range(BATCH):
        p1 = pool_rows(a1[b * H1:(b + 1) * H1, :], sh1_ref[...], C1)    # (16, 256)
        p1pad = jnp.concatenate(
            [jnp.zeros((2, LANES1), f32), p1, jnp.zeros((2, LANES1), f32)], axis=0)
        a2_parts.append(band_conv(p1pad, c2_ref, HP1, LANES2))          # (16, 256)
    a2 = jnp.concatenate(a2_parts, axis=0)                              # (B*16, 256)
    a2 = bn_relu(a2, g2_ref[...], b2_ref[...], csum2_ref[...], ctile2_ref[...],
                 BATCH * HP1 * WP1)

    # ---- pool2 + (NCHW flatten + pool-W subsample folded into fc1 weights)
    #      -> fc1 -> ReLU -> fc2 -> ReLU -> fc3 -------------------------------
    feats = []
    for b in range(BATCH):
        p2 = pool_rows(a2[b * HP1:(b + 1) * HP1, :], sh2_ref[...], C2)  # (8, 256)
        hb = jnp.zeros((1, C3), f32)
        for yo in range(HP2):
            hb = hb + jnp.dot(p2[yo:yo + 1, :], w1f_ref[yo],
                              preferred_element_type=f32)
        feats.append(hb)
    h1 = jnp.maximum(jnp.concatenate(feats, axis=0), 0.0)               # (B, C3)
    h2 = jnp.maximum(jnp.dot(h1, w2t_ref[...], preferred_element_type=f32), 0.0)
    o_ref[...] = jnp.dot(h2, w3t_ref[...], preferred_element_type=f32)


# ----------------------------------------------------------------------------
# One-time weight preprocessing (runs once, outside the jitted forward).
# ----------------------------------------------------------------------------
def prepare_kernel_operands(params):
    w1 = params["conv1_w"]          # (5, 5, IN_CH, C1)  HWIO
    w2 = params["conv2_w"]          # (5, 5, C1, C2)     HWIO

    def band(w_dy, w_out, w_in_pad):
        # w_dy: (5, Cin, Cout) -> banded matrix (w_in_pad*Cin, w_out*Cout):
        # M[(x+dx)*Cin + ci, x*Cout + co] = w_dy[dx, ci, co].
        cin, cout = int(w_dy.shape[1]), int(w_dy.shape[2])
        m = jnp.zeros((w_in_pad * cin, w_out * cout), jnp.float32)
        for dx in range(KS):
            s = jnp.asarray(np.eye(w_in_pad, w_out, k=-dx, dtype=np.float32))
            m = m + jnp.kron(s, w_dy[dx])
        return m

    # conv1 band matrices: (5, (W1+4)*IN_CH, W1*C1) = (5, 108, 256)
    m1 = jnp.stack([band(w1[dy], W1, W1 + 4) for dy in range(KS)])

    # pool1 column subsample (even x) + conv2 spatial W-padding, folded into
    # conv2's band matrices:  (5, W1*C1, WP1*C2) = (5, 256, 256)
    t2conv = np.zeros((W1 * C1, (WP1 + 4) * C1), np.float32)
    for x in range(0, W1, 2):
        for c in range(C1):
            t2conv[x * C1 + c, (x // 2 + 2) * C1 + c] = 1.0
    c2m = jnp.stack([jnp.dot(jnp.asarray(t2conv), band(w2[dy], WP1, WP1 + 4))
                     for dy in range(KS)])

    # BN channel-sum / channel-tile matrices (exact 0/1 reductions on the MXU).
    def ch_mats(w, c):
        cs = np.zeros((w * c, c), np.float32)
        for x in range(w):
            for cc in range(c):
                cs[x * c + cc, cc] = 1.0
        return jnp.asarray(cs), jnp.asarray(cs.T)

    csum1, ctile1 = ch_mats(W1, C1)
    csum2, ctile2 = ch_mats(WP1, C2)

    # Stride-2 row selection matrices for the two max pools (per batch element).
    def hsel_mat(h_out, h_in):
        s = np.zeros((h_out, h_in), np.float32)
        for y in range(h_out):
            s[y, 2 * y] = 1.0
        return jnp.asarray(s)

    sh1 = hsel_mat(HP1, H1)          # (16, 32)
    sh2 = hsel_mat(HP2, HP1)         # (8, 16)

    # fc1: permute rows from PyTorch's NCHW flatten order to the kernel's
    # (y, x, c) rows layout and fold in the pool2 column subsample.
    w1t = params["fc1_w"].T                              # (C2*8*8, C3), rows c*64+y*8+x
    w1r = w1t.reshape(C2, HP2, WP2, C3).transpose(1, 2, 0, 3).reshape(HP2, WP2 * C2, C3)
    t2fc = np.zeros((WP1 * C2, WP2 * C2), np.float32)    # (256, 128)
    for x in range(0, WP1, 2):
        for c in range(C2):
            t2fc[x * C2 + c, (x // 2) * C2 + c] = 1.0
    w1f = jnp.einsum("ij,yjo->yio", jnp.asarray(t2fc), w1r)   # (8, 256, C3)

    return dict(
        m1=m1, c2=c2m,
        g1=params["bn1_g"].reshape(1, C1), b1=params["bn1_b"].reshape(1, C1),
        g2=params["bn2_g"].reshape(1, C2), b2=params["bn2_b"].reshape(1, C2),
        csum1=csum1, ctile1=ctile1, csum2=csum2, ctile2=ctile2,
        sh1=sh1, sh2=sh2, w1f=w1f,
        w2t=params["fc2_w"].T, w3t=params["fc3_w"].T,
    )


# ----------------------------------------------------------------------------
# Fused forward: tiny input prep + single pallas_call.
# ----------------------------------------------------------------------------
@jax.jit
def learner_forward(x_nchw, ops):
    # Input prep on the 12 KB network input only (read from HBM once anyway):
    # NCHW -> NHWC, zero pad spatially for the 5x5/pad-2 conv, fold (W, Cin)
    # into the lane dimension ("rows" layout).
    x = jnp.transpose(x_nchw, (0, 2, 3, 1)).astype(jnp.float32)
    x = jnp.pad(x, ((0, 0), (2, 2), (2, 2), (0, 0)))
    x_rows = x.reshape(BATCH, H1 + 4, (W1 + 4) * IN_CH)

    return pl.pallas_call(
        _learner_kernel,
        out_shape=jax.ShapeDtypeStruct((BATCH, N_OUTPUTS), jnp.float32),
        compiler_params=pltpu.CompilerParams(vmem_limit_bytes=32 * 1024 * 1024),
    )(x_rows, ops["m1"], ops["c2"], ops["g1"], ops["b1"], ops["g2"], ops["b2"],
      ops["csum1"], ops["ctile1"], ops["csum2"], ops["ctile2"],
      ops["sh1"], ops["sh2"], ops["w1f"], ops["w2t"], ops["w3t"])


# ----------------------------------------------------------------------------
# Pure-JAX reference (sanity check) using the raw parameters.
# ----------------------------------------------------------------------------
def reference_forward(x_nchw, params, eps=EPS):
    x = jnp.transpose(x_nchw, (0, 2, 3, 1))

    def conv(x, w):
        return jax.lax.conv_general_dilated(
            x, w, (1, 1), [(2, 2), (2, 2)],
            dimension_numbers=("NHWC", "HWIO", "NHWC"),
            precision=jax.lax.Precision.HIGHEST)

    def bn_relu(x, g, b):
        m = jnp.mean(x, axis=(0, 1, 2), keepdims=True)
        v = jnp.mean((x - m) ** 2, axis=(0, 1, 2), keepdims=True)   # biased var
        return jnp.maximum((x - m) / jnp.sqrt(v + eps) * g + b, 0.0)

    def pool(x):
        return jax.lax.reduce_window(
            x, -jnp.inf, jax.lax.max, (1, 3, 3, 1), (1, 2, 2, 1),
            [(0, 0), (1, 1), (1, 1), (0, 0)])

    x = pool(bn_relu(conv(x, params["conv1_w"]), params["bn1_g"], params["bn1_b"]))
    x = pool(bn_relu(conv(x, params["conv2_w"]), params["bn2_g"], params["bn2_b"]))
    x = jnp.transpose(x, (0, 3, 1, 2)).reshape(x.shape[0], -1)      # NCHW flatten
    x = jnp.maximum(x @ params["fc1_w"].T, 0.0)
    x = jnp.maximum(x @ params["fc2_w"].T, 0.0)
    return x @ params["fc3_w"].T


# ----------------------------------------------------------------------------
# Deterministic synthetic parameters (shapes from Learner.__init__).
# ----------------------------------------------------------------------------
def make_params(key):
    smid = IMG // 4
    flat = C2 * smid * smid
    ks = jax.random.split(key, 9)

    def unif(k, shape, fan_in):
        bound = 1.0 / float(np.sqrt(fan_in))
        return jax.random.uniform(k, shape, jnp.float32, -bound, bound)

    # PyTorch layouts -> kernel/reference layouts
    conv1 = unif(ks[0], (C1, IN_CH, KS, KS), IN_CH * KS * KS)   # OIHW
    conv2 = unif(ks[1], (C2, C1, KS, KS), C1 * KS * KS)
    return {
        "conv1_w": jnp.transpose(conv1, (2, 3, 1, 0)),          # HWIO
        "conv2_w": jnp.transpose(conv2, (2, 3, 1, 0)),
        "bn1_g": 1.0 + 0.1 * jax.random.normal(ks[2], (C1,), jnp.float32),
        "bn1_b": 0.1 * jax.random.normal(ks[3], (C1,), jnp.float32),
        "bn2_g": 1.0 + 0.1 * jax.random.normal(ks[4], (C2,), jnp.float32),
        "bn2_b": 0.1 * jax.random.normal(ks[5], (C2,), jnp.float32),
        "fc1_w": unif(ks[6], (C3, flat), flat),                 # PyTorch (out, in)
        "fc2_w": unif(ks[7], (C4, C3), C3),
        "fc3_w": unif(ks[8], (N_OUTPUTS, C4), C4),
    }


if __name__ == "__main__":
    key = jax.random.PRNGKey(0)
    k_params, k_x = jax.random.split(key)
    params = make_params(k_params)
    ops = prepare_kernel_operands(params)        # one-time weight preprocessing
    x = jax.random.normal(k_x, (BATCH, IN_CH, IMG, IMG), jnp.float32)

    y = jax.block_until_ready(learner_forward(x, ops))
    y_ref = reference_forward(x, params)

    assert y.shape == (BATCH, N_OUTPUTS), y.shape
    assert bool(jnp.all(jnp.isfinite(y)))
    max_err = float(jnp.max(jnp.abs(y - y_ref)))
    assert jnp.allclose(y, y_ref, atol=2e-2, rtol=2e-2), max_err

    print("KERNEL_OK")
</pallas_src>

<mosaic_0001>
module attributes {stable_mosaic.version = 11 : i64} {
  func.func @_learner_kernel(%arg0: memref<2x36x108xf32, #tpu.memory_space<vmem>>, %arg1: memref<5x108x256xf32, #tpu.memory_space<vmem>>, %arg2: memref<5x256x256xf32, #tpu.memory_space<vmem>>, %arg3: memref<1x8xf32, #tpu.memory_space<vmem>>, %arg4: memref<1x8xf32, #tpu.memory_space<vmem>>, %arg5: memref<1x16xf32, #tpu.memory_space<vmem>>, %arg6: memref<1x16xf32, #tpu.memory_space<vmem>>, %arg7: memref<256x8xf32, #tpu.memory_space<vmem>>, %arg8: memref<8x256xf32, #tpu.memory_space<vmem>>, %arg9: memref<256x16xf32, #tpu.memory_space<vmem>>, %arg10: memref<16x256xf32, #tpu.memory_space<vmem>>, %arg11: memref<16x32xf32, #tpu.memory_space<vmem>>, %arg12: memref<8x16xf32, #tpu.memory_space<vmem>>, %arg13: memref<8x256x64xf32, #tpu.memory_space<vmem>>, %arg14: memref<64x32xf32, #tpu.memory_space<vmem>>, %arg15: memref<32x10xf32, #tpu.memory_space<vmem>>, %arg16: memref<2x10xf32, #tpu.memory_space<vmem>>) attributes {dimension_semantics = [], scalar_prefetch = 0 : i64, scratch_operands = 0 : i64, tpu.core_type = #tpu.core_type<tc>} {
    %c0 = arith.constant 0 : index
    %c0_0 = arith.constant 0 : index
    %c0_1 = arith.constant 0 : index
    %0 = vector.load %arg0[%c0, %c0_0, %c0_1] : memref<2x36x108xf32, #tpu.memory_space<vmem>>, vector<1x36x108xf32>
    %1 = vector.shape_cast %0 : vector<1x36x108xf32> to vector<36x108xf32>
    %cst = arith.constant 0.000000e+00 : f32
    %2 = vector.broadcast %cst : f32 to vector<32x256xf32>
    %3 = vector.extract_strided_slice %1 {offsets = [0, 0], sizes = [32, 108], strides = [1, 1]} : vector<36x108xf32> to vector<32x108xf32>
    %c0_2 = arith.constant 0 : index
    %c0_3 = arith.constant 0 : index
    %c0_4 = arith.constant 0 : index
    %4 = vector.load %arg1[%c0_2, %c0_3, %c0_4] : memref<5x108x256xf32, #tpu.memory_space<vmem>>, vector<1x108x256xf32>
    %5 = vector.shape_cast %4 : vector<1x108x256xf32> to vector<108x256xf32>
    %cst_5 = arith.constant dense<0.000000e+00> : vector<32x256xf32>
    %6 = tpu.matmul %3, %5, %cst_5 {dimension_numbers = #tpu.dot_dimension_numbers<[1], [0], [0], [1], [0, 0, 1, 1], [], []>} : vector<32x108xf32>, vector<108x256xf32>, vector<32x256xf32> -> vector<32x256xf32>
    %7 = arith.addf %2, %6 : vector<32x256xf32>
    %8 = vector.extract_strided_slice %1 {offsets = [1, 0], sizes = [32, 108], strides = [1, 1]} : vector<36x108xf32> to vector<32x108xf32>
    %c1 = arith.constant 1 : index
    %c0_6 = arith.constant 0 : index
    %c0_7 = arith.constant 0 : index
    %9 = vector.load %arg1[%c1, %c0_6, %c0_7] : memref<5x108x256xf32, #tpu.memory_space<vmem>>, vector<1x108x256xf32>
    %10 = vector.shape_cast %9 : vector<1x108x256xf32> to vector<108x256xf32>
    %cst_8 = arith.constant dense<0.000000e+00> : vector<32x256xf32>
    %11 = tpu.matmul %8, %10, %cst_8 {dimension_numbers = #tpu.dot_dimension_numbers<[1], [0], [0], [1], [0, 0, 1, 1], [], []>} : vector<32x108xf32>, vector<108x256xf32>, vector<32x256xf32> -> vector<32x256xf32>
    %12 = arith.addf %7, %11 : vector<32x256xf32>
    %13 = vector.extract_strided_slice %1 {offsets = [2, 0], sizes = [32, 108], strides = [1, 1]} : vector<36x108xf32> to vector<32x108xf32>
    %c2 = arith.constant 2 : index
    %c0_9 = arith.constant 0 : index
    %c0_10 = arith.constant 0 : index
    %14 = vector.load %arg1[%c2, %c0_9, %c0_10] : memref<5x108x256xf32, #tpu.memory_space<vmem>>, vector<1x108x256xf32>
    %15 = vector.shape_cast %14 : vector<1x108x256xf32> to vector<108x256xf32>
    %cst_11 = arith.constant dense<0.000000e+00> : vector<32x256xf32>
    %16 = tpu.matmul %13, %15, %cst_11 {dimension_numbers = #tpu.dot_dimension_numbers<[1], [0], [0], [1], [0, 0, 1, 1], [], []>} : vector<32x108xf32>, vector<108x256xf32>, vector<32x256xf32> -> vector<32x256xf32>
    %17 = arith.addf %12, %16 : vector<32x256xf32>
    %18 = vector.extract_strided_slice %1 {offsets = [3, 0], sizes = [32, 108], strides = [1, 1]} : vector<36x108xf32> to vector<32x108xf32>
    %c3 = arith.constant 3 : index
    %c0_12 = arith.constant 0 : index
    %c0_13 = arith.constant 0 : index
    %19 = vector.load %arg1[%c3, %c0_12, %c0_13] : memref<5x108x256xf32, #tpu.memory_space<vmem>>, vector<1x108x256xf32>
    %20 = vector.shape_cast %19 : vector<1x108x256xf32> to vector<108x256xf32>
    %cst_14 = arith.constant dense<0.000000e+00> : vector<32x256xf32>
    %21 = tpu.matmul %18, %20, %cst_14 {dimension_numbers = #tpu.dot_dimension_numbers<[1], [0], [0], [1], [0, 0, 1, 1], [], []>} : vector<32x108xf32>, vector<108x256xf32>, vector<32x256xf32> -> vector<32x256xf32>
    %22 = arith.addf %17, %21 : vector<32x256xf32>
    %23 = vector.extract_strided_slice %1 {offsets = [4, 0], sizes = [32, 108], strides = [1, 1]} : vector<36x108xf32> to vector<32x108xf32>
    %c4 = arith.constant 4 : index
    %c0_15 = arith.constant 0 : index
    %c0_16 = arith.constant 0 : index
    %24 = vector.load %arg1[%c4, %c0_15, %c0_16] : memref<5x108x256xf32, #tpu.memory_space<vmem>>, vector<1x108x256xf32>
    %25 = vector.shape_cast %24 : vector<1x108x256xf32> to vector<108x256xf32>
    %cst_17 = arith.constant dense<0.000000e+00> : vector<32x256xf32>
    %26 = tpu.matmul %23, %25, %cst_17 {dimension_numbers = #tpu.dot_dimension_numbers<[1], [0], [0], [1], [0, 0, 1, 1], [], []>} : vector<32x108xf32>, vector<108x256xf32>, vector<32x256xf32> -> vector<32x256xf32>
    %27 = arith.addf %22, %26 : vector<32x256xf32>
    %c1_18 = arith.constant 1 : index
    %c0_19 = arith.constant 0 : index
    %c0_20 = arith.constant 0 : index
    %28 = vector.load %arg0[%c1_18, %c0_19, %c0_20] : memref<2x36x108xf32, #tpu.memory_space<vmem>>, vector<1x36x108xf32>
    %29 = vector.shape_cast %28 : vector<1x36x108xf32> to vector<36x108xf32>
    %cst_21 = arith.constant 0.000000e+00 : f32
    %30 = vector.broadcast %cst_21 : f32 to vector<32x256xf32>
    %31 = vector.extract_strided_slice %29 {offsets = [0, 0], sizes = [32, 108], strides = [1, 1]} : vector<36x108xf32> to vector<32x108xf32>
    %c0_22 = arith.constant 0 : index
    %c0_23 = arith.constant 0 : index
    %c0_24 = arith.constant 0 : index
    %32 = vector.load %arg1[%c0_22, %c0_23, %c0_24] : memref<5x108x256xf32, #tpu.memory_space<vmem>>, vector<1x108x256xf32>
    %33 = vector.shape_cast %32 : vector<1x108x256xf32> to vector<108x256xf32>
    %cst_25 = arith.constant dense<0.000000e+00> : vector<32x256xf32>
    %34 = tpu.matmul %31, %33, %cst_25 {dimension_numbers = #tpu.dot_dimension_numbers<[1], [0], [0], [1], [0, 0, 1, 1], [], []>} : vector<32x108xf32>, vector<108x256xf32>, vector<32x256xf32> -> vector<32x256xf32>
    %35 = arith.addf %30, %34 : vector<32x256xf32>
    %36 = vector.extract_strided_slice %29 {offsets = [1, 0], sizes = [32, 108], strides = [1, 1]} : vector<36x108xf32> to vector<32x108xf32>
    %c1_26 = arith.constant 1 : index
    %c0_27 = arith.constant 0 : index
    %c0_28 = arith.constant 0 : index
    %37 = vector.load %arg1[%c1_26, %c0_27, %c0_28] : memref<5x108x256xf32, #tpu.memory_space<vmem>>, vector<1x108x256xf32>
    %38 = vector.shape_cast %37 : vector<1x108x256xf32> to vector<108x256xf32>
    %cst_29 = arith.constant dense<0.000000e+00> : vector<32x256xf32>
    %39 = tpu.matmul %36, %38, %cst_29 {dimension_numbers = #tpu.dot_dimension_numbers<[1], [0], [0], [1], [0, 0, 1, 1], [], []>} : vector<32x108xf32>, vector<108x256xf32>, vector<32x256xf32> -> vector<32x256xf32>
    %40 = arith.addf %35, %39 : vector<32x256xf32>
    %41 = vector.extract_strided_slice %29 {offsets = [2, 0], sizes = [32, 108], strides = [1, 1]} : vector<36x108xf32> to vector<32x108xf32>
    %c2_30 = arith.constant 2 : index
    %c0_31 = arith.constant 0 : index
    %c0_32 = arith.constant 0 : index
    %42 = vector.load %arg1[%c2_30, %c0_31, %c0_32] : memref<5x108x256xf32, #tpu.memory_space<vmem>>, vector<1x108x256xf32>
    %43 = vector.shape_cast %42 : vector<1x108x256xf32> to vector<108x256xf32>
    %cst_33 = arith.constant dense<0.000000e+00> : vector<32x256xf32>
    %44 = tpu.matmul %41, %43, %cst_33 {dimension_numbers = #tpu.dot_dimension_numbers<[1], [0], [0], [1], [0, 0, 1, 1], [], []>} : vector<32x108xf32>, vector<108x256xf32>, vector<32x256xf32> -> vector<32x256xf32>
    %45 = arith.addf %40, %44 : vector<32x256xf32>
    %46 = vector.extract_strided_slice %29 {offsets = [3, 0], sizes = [32, 108], strides = [1, 1]} : vector<36x108xf32> to vector<32x108xf32>
    %c3_34 = arith.constant 3 : index
    %c0_35 = arith.constant 0 : index
    %c0_36 = arith.constant 0 : index
    %47 = vector.load %arg1[%c3_34, %c0_35, %c0_36] : memref<5x108x256xf32, #tpu.memory_space<vmem>>, vector<1x108x256xf32>
    %48 = vector.shape_cast %47 : vector<1x108x256xf32> to vector<108x256xf32>
    %cst_37 = arith.constant dense<0.000000e+00> : vector<32x256xf32>
    %49 = tpu.matmul %46, %48, %cst_37 {dimension_numbers = #tpu.dot_dimension_numbers<[1], [0], [0], [1], [0, 0, 1, 1], [], []>} : vector<32x108xf32>, vector<108x256xf32>, vector<32x256xf32> -> vector<32x256xf32>
    %50 = arith.addf %45, %49 : vector<32x256xf32>
    %51 = vector.extract_strided_slice %29 {offsets = [4, 0], sizes = [32, 108], strides = [1, 1]} : vector<36x108xf32> to vector<32x108xf32>
    %c4_38 = arith.constant 4 : index
    %c0_39 = arith.constant 0 : index
    %c0_40 = arith.constant 0 : index
    %52 = vector.load %arg1[%c4_38, %c0_39, %c0_40] : memref<5x108x256xf32, #tpu.memory_space<vmem>>, vector<1x108x256xf32>
    %53 = vector.shape_cast %52 : vector<1x108x256xf32> to vector<108x256xf32>
    %cst_41 = arith.constant dense<0.000000e+00> : vector<32x256xf32>
    %54 = tpu.matmul %51, %53, %cst_41 {dimension_numbers = #tpu.dot_dimension_numbers<[1], [0], [0], [1], [0, 0, 1, 1], [], []>} : vector<32x108xf32>, vector<108x256xf32>, vector<32x256xf32> -> vector<32x256xf32>
    %55 = arith.addf %50, %54 : vector<32x256xf32>
    %56 = tpu.concatenate %27, %55 in 0 : vector<32x256xf32>, vector<32x256xf32> -> vector<64x256xf32>
    %c0_42 = arith.constant 0 : index
    %c0_43 = arith.constant 0 : index
    %57 = vector.load %arg3[%c0_42, %c0_43] : memref<1x8xf32, #tpu.memory_space<vmem>>, vector<1x8xf32>
    %c0_44 = arith.constant 0 : index
    %c0_45 = arith.constant 0 : index
    %58 = vector.load %arg4[%c0_44, %c0_45] : memref<1x8xf32, #tpu.memory_space<vmem>>, vector<1x8xf32>
    %c0_46 = arith.constant 0 : index
    %c0_47 = arith.constant 0 : index
    %59 = vector.load %arg7[%c0_46, %c0_47] : memref<256x8xf32, #tpu.memory_space<vmem>>, vector<256x8xf32>
    %c0_48 = arith.constant 0 : index
    %c0_49 = arith.constant 0 : index
    %60 = vector.load %arg8[%c0_48, %c0_49] : memref<8x256xf32, #tpu.memory_space<vmem>>, vector<8x256xf32>
    %cst_50 = arith.constant dense<0.000000e+00> : vector<256xf32>
    %61 = vector.multi_reduction <add>, %56, %cst_50 [0] : vector<64x256xf32> to vector<256xf32>
    %62 = vector.shape_cast %61 : vector<256xf32> to vector<1x256xf32>
    %cst_51 = arith.constant dense<0.000000e+00> : vector<1x8xf32>
    %63 = tpu.matmul %62, %59, %cst_51 {dimension_numbers = #tpu.dot_dimension_numbers<[1], [0], [0], [1], [0, 0, 1, 1], [], []>} : vector<1x256xf32>, vector<256x8xf32>, vector<1x8xf32> -> vector<1x8xf32>
    %cst_52 = arith.constant 4.8828125E-4 : f32
    %64 = vector.broadcast %cst_52 : f32 to vector<1x8xf32>
    %65 = arith.mulf %63, %64 : vector<1x8xf32>
    %cst_53 = arith.constant dense<0.000000e+00> : vector<1x256xf32>
    %66 = tpu.matmul %65, %60, %cst_53 {dimension_numbers = #tpu.dot_dimension_numbers<[1], [0], [0], [1], [0, 0, 1, 1], [], []>} : vector<1x8xf32>, vector<8x256xf32>, vector<1x256xf32> -> vector<1x256xf32>
    %67 = vector.broadcast %66 : vector<1x256xf32> to vector<64x256xf32>
    %68 = arith.subf %56, %67 : vector<64x256xf32>
    %69 = arith.mulf %68, %68 : vector<64x256xf32>
    %cst_54 = arith.constant dense<0.000000e+00> : vector<256xf32>
    %70 = vector.multi_reduction <add>, %69, %cst_54 [0] : vector<64x256xf32> to vector<256xf32>
    %71 = vector.shape_cast %70 : vector<256xf32> to vector<1x256xf32>
    %cst_55 = arith.constant dense<0.000000e+00> : vector<1x8xf32>
    %72 = tpu.matmul %71, %59, %cst_55 {dimension_numbers = #tpu.dot_dimension_numbers<[1], [0], [0], [1], [0, 0, 1, 1], [], []>} : vector<1x256xf32>, vector<256x8xf32>, vector<1x8xf32> -> vector<1x8xf32>
    %cst_56 = arith.constant 4.8828125E-4 : f32
    %73 = vector.broadcast %cst_56 : f32 to vector<1x8xf32>
    %74 = arith.mulf %72, %73 : vector<1x8xf32>
    %cst_57 = arith.constant 9.99999974E-6 : f32
    %75 = vector.broadcast %cst_57 : f32 to vector<1x8xf32>
    %76 = arith.addf %74, %75 : vector<1x8xf32>
    %77 = math.rsqrt %76 : vector<1x8xf32>
    %78 = arith.mulf %57, %77 : vector<1x8xf32>
    %79 = arith.mulf %65, %78 : vector<1x8xf32>
    %80 = arith.subf %58, %79 : vector<1x8xf32>
    %cst_58 = arith.constant dense<0.000000e+00> : vector<1x256xf32>
    %81 = tpu.matmul %78, %60, %cst_58 {dimension_numbers = #tpu.dot_dimension_numbers<[1], [0], [0], [1], [0, 0, 1, 1], [], []>} : vector<1x8xf32>, vector<8x256xf32>, vector<1x256xf32> -> vector<1x256xf32>
    %cst_59 = arith.constant dense<0.000000e+00> : vector<1x256xf32>
    %82 = tpu.matmul %80, %60, %cst_59 {dimension_numbers = #tpu.dot_dimension_numbers<[1], [0], [0], [1], [0, 0, 1, 1], [], []>} : vector<1x8xf32>, vector<8x256xf32>, vector<1x256xf32> -> vector<1x256xf32>
    %83 = vector.broadcast %81 : vector<1x256xf32> to vector<64x256xf32>
    %84 = arith.mulf %56, %83 : vector<64x256xf32>
    %85 = vector.broadcast %82 : vector<1x256xf32> to vector<64x256xf32>
    %86 = arith.addf %84, %85 : vector<64x256xf32>
    %cst_60 = arith.constant 0.000000e+00 : f32
    %87 = vector.broadcast %cst_60 : f32 to vector<64x256xf32>
    %88 = arith.maximumf %86, %87 : vector<64x256xf32>
    %89 = vector.extract_strided_slice %88 {offsets = [0, 0], sizes = [32, 256], strides = [1, 1]} : vector<64x256xf32> to vector<32x256xf32>
    %c0_61 = arith.constant 0 : index
    %c0_62 = arith.constant 0 : index
    %90 = vector.load %arg11[%c0_61, %c0_62] : memref<16x32xf32, #tpu.memory_space<vmem>>, vector<16x32xf32>
    %cst_63 = arith.constant 0.000000e+00 : f32
    %91 = vector.broadcast %cst_63 : f32 to vector<1x256xf32>
    %92 = vector.extract_strided_slice %89 {offsets = [1, 0], sizes = [31, 256], strides = [1, 1]} : vector<32x256xf32> to vector<31x256xf32>
    %93 = tpu.concatenate %92, %91 in 0 : vector<31x256xf32>, vector<1x256xf32> -> vector<32x256xf32>
    %94 = vector.extract_strided_slice %89 {offsets = [0, 0], sizes = [31, 256], strides = [1, 1]} : vector<32x256xf32> to vector<31x256xf32>
    %95 = tpu.concatenate %91, %94 in 0 : vector<1x256xf32>, vector<31x256xf32> -> vector<32x256xf32>
    %96 = arith.maximumf %89, %93 : vector<32x256xf32>
    %97 = arith.maximumf %96, %95 : vector<32x256xf32>
    %cst_64 = arith.constant dense<0.000000e+00> : vector<16x256xf32>
    %98 = tpu.matmul %90, %97, %cst_64 {dimension_numbers = #tpu.dot_dimension_numbers<[1], [0], [0], [1], [0, 0, 1, 1], [], []>} : vector<16x32xf32>, vector<32x256xf32>, vector<16x256xf32> -> vector<16x256xf32>
    %cst_65 = arith.constant 0.000000e+00 : f32
    %99 = vector.broadcast %cst_65 : f32 to vector<16x8xf32>
    %100 = vector.extract_strided_slice %98 {offsets = [0, 8], sizes = [16, 248], strides = [1, 1]} : vector<16x256xf32> to vector<16x248xf32>
    %101 = tpu.concatenate %100, %99 in 1 : vector<16x248xf32>, vector<16x8xf32> -> vector<16x256xf32>
    %102 = vector.extract_strided_slice %98 {offsets = [0, 0], sizes = [16, 248], strides = [1, 1]} : vector<16x256xf32> to vector<16x248xf32>
    %103 = tpu.concatenate %99, %102 in 1 : vector<16x8xf32>, vector<16x248xf32> -> vector<16x256xf32>
    %104 = arith.maximumf %98, %101 : vector<16x256xf32>
    %105 = arith.maximumf %104, %103 : vector<16x256xf32>
    %cst_66 = arith.constant 0.000000e+00 : f32
    %106 = vector.broadcast %cst_66 : f32 to vector<2x256xf32>
    %cst_67 = arith.constant 0.000000e+00 : f32
    %107 = vector.broadcast %cst_67 : f32 to vector<2x256xf32>
    %108 = tpu.concatenate %106, %105, %107 in 0 : vector<2x256xf32>, vector<16x256xf32>, vector<2x256xf32> -> vector<20x256xf32>
    %cst_68 = arith.constant 0.000000e+00 : f32
    %109 = vector.broadcast %cst_68 : f32 to vector<16x256xf32>
    %110 = vector.extract_strided_slice %108 {offsets = [0, 0], sizes = [16, 256], strides = [1, 1]} : vector<20x256xf32> to vector<16x256xf32>
    %c0_69 = arith.constant 0 : index
    %c0_70 = arith.constant 0 : index
    %c0_71 = arith.constant 0 : index
    %111 = vector.load %arg2[%c0_69, %c0_70, %c0_71] : memref<5x256x256xf32, #tpu.memory_space<vmem>>, vector<1x256x256xf32>
    %112 = vector.shape_cast %111 : vector<1x256x256xf32> to vector<256x256xf32>
    %cst_72 = arith.constant dense<0.000000e+00> : vector<16x256xf32>
    %113 = tpu.matmul %110, %112, %cst_72 {dimension_numbers = #tpu.dot_dimension_numbers<[1], [0], [0], [1], [0, 0, 1, 1], [], []>} : vector<16x256xf32>, vector<256x256xf32>, vector<16x256xf32> -> vector<16x256xf32>
    %114 = arith.addf %109, %113 : vector<16x256xf32>
    %115 = vector.extract_strided_slice %108 {offsets = [1, 0], sizes = [16, 256], strides = [1, 1]} : vector<20x256xf32> to vector<16x256xf32>
    %c1_73 = arith.constant 1 : index
    %c0_74 = arith.constant 0 : index
    %c0_75 = arith.constant 0 : index
    %116 = vector.load %arg2[%c1_73, %c0_74, %c0_75] : memref<5x256x256xf32, #tpu.memory_space<vmem>>, vector<1x256x256xf32>
    %117 = vector.shape_cast %116 : vector<1x256x256xf32> to vector<256x256xf32>
    %cst_76 = arith.constant dense<0.000000e+00> : vector<16x256xf32>
    %118 = tpu.matmul %115, %117, %cst_76 {dimension_numbers = #tpu.dot_dimension_numbers<[1], [0], [0], [1], [0, 0, 1, 1], [], []>} : vector<16x256xf32>, vector<256x256xf32>, vector<16x256xf32> -> vector<16x256xf32>
    %119 = arith.addf %114, %118 : vector<16x256xf32>
    %120 = vector.extract_strided_slice %108 {offsets = [2, 0], sizes = [16, 256], strides = [1, 1]} : vector<20x256xf32> to vector<16x256xf32>
    %c2_77 = arith.constant 2 : index
    %c0_78 = arith.constant 0 : index
    %c0_79 = arith.constant 0 : index
    %121 = vector.load %arg2[%c2_77, %c0_78, %c0_79] : memref<5x256x256xf32, #tpu.memory_space<vmem>>, vector<1x256x256xf32>
    %122 = vector.shape_cast %121 : vector<1x256x256xf32> to vector<256x256xf32>
    %cst_80 = arith.constant dense<0.000000e+00> : vector<16x256xf32>
    %123 = tpu.matmul %120, %122, %cst_80 {dimension_numbers = #tpu.dot_dimension_numbers<[1], [0], [0], [1], [0, 0, 1, 1], [], []>} : vector<16x256xf32>, vector<256x256xf32>, vector<16x256xf32> -> vector<16x256xf32>
    %124 = arith.addf %119, %123 : vector<16x256xf32>
    %125 = vector.extract_strided_slice %108 {offsets = [3, 0], sizes = [16, 256], strides = [1, 1]} : vector<20x256xf32> to vector<16x256xf32>
    %c3_81 = arith.constant 3 : index
    %c0_82 = arith.constant 0 : index
    %c0_83 = arith.constant 0 : index
    %126 = vector.load %arg2[%c3_81, %c0_82, %c0_83] : memref<5x256x256xf32, #tpu.memory_space<vmem>>, vector<1x256x256xf32>
    %127 = vector.shape_cast %126 : vector<1x256x256xf32> to vector<256x256xf32>
    %cst_84 = arith.constant dense<0.000000e+00> : vector<16x256xf32>
    %128 = tpu.matmul %125, %127, %cst_84 {dimension_numbers = #tpu.dot_dimension_numbers<[1], [0], [0], [1], [0, 0, 1, 1], [], []>} : vector<16x256xf32>, vector<256x256xf32>, vector<16x256xf32> -> vector<16x256xf32>
    %129 = arith.addf %124, %128 : vector<16x256xf32>
    %130 = vector.extract_strided_slice %108 {offsets = [4, 0], sizes = [16, 256], strides = [1, 1]} : vector<20x256xf32> to vector<16x256xf32>
    %c4_85 = arith.constant 4 : index
    %c0_86 = arith.constant 0 : index
    %c0_87 = arith.constant 0 : index
    %131 = vector.load %arg2[%c4_85, %c0_86, %c0_87] : memref<5x256x256xf32, #tpu.memory_space<vmem>>, vector<1x256x256xf32>
    %132 = vector.shape_cast %131 : vector<1x256x256xf32> to vector<256x256xf32>
    %cst_88 = arith.constant dense<0.000000e+00> : vector<16x256xf32>
    %133 = tpu.matmul %130, %132, %cst_88 {dimension_numbers = #tpu.dot_dimension_numbers<[1], [0], [0], [1], [0, 0, 1, 1], [], []>} : vector<16x256xf32>, vector<256x256xf32>, vector<16x256xf32> -> vector<16x256xf32>
    %134 = arith.addf %129, %133 : vector<16x256xf32>
    %135 = vector.extract_strided_slice %88 {offsets = [32, 0], sizes = [32, 256], strides = [1, 1]} : vector<64x256xf32> to vector<32x256xf32>
    %c0_89 = arith.constant 0 : index
    %c0_90 = arith.constant 0 : index
    %136 = vector.load %arg11[%c0_89, %c0_90] : memref<16x32xf32, #tpu.memory_space<vmem>>, vector<16x32xf32>
    %cst_91 = arith.constant 0.000000e+00 : f32
    %137 = vector.broadcast %cst_91 : f32 to vector<1x256xf32>
    %138 = vector.extract_strided_slice %135 {offsets = [1, 0], sizes = [31, 256], strides = [1, 1]} : vector<32x256xf32> to vector<31x256xf32>
    %139 = tpu.concatenate %138, %137 in 0 : vector<31x256xf32>, vector<1x256xf32> -> vector<32x256xf32>
    %140 = vector.extract_strided_slice %135 {offsets = [0, 0], sizes = [31, 256], strides = [1, 1]} : vector<32x256xf32> to vector<31x256xf32>
    %141 = tpu.concatenate %137, %140 in 0 : vector<1x256xf32>, vector<31x256xf32> -> vector<32x256xf32>
    %142 = arith.maximumf %135, %139 : vector<32x256xf32>
    %143 = arith.maximumf %142, %141 : vector<32x256xf32>
    %cst_92 = arith.constant dense<0.000000e+00> : vector<16x256xf32>
    %144 = tpu.matmul %136, %143, %cst_92 {dimension_numbers = #tpu.dot_dimension_numbers<[1], [0], [0], [1], [0, 0, 1, 1], [], []>} : vector<16x32xf32>, vector<32x256xf32>, vector<16x256xf32> -> vector<16x256xf32>
    %cst_93 = arith.constant 0.000000e+00 : f32
    %145 = vector.broadcast %cst_93 : f32 to vector<16x8xf32>
    %146 = vector.extract_strided_slice %144 {offsets = [0, 8], sizes = [16, 248], strides = [1, 1]} : vector<16x256xf32> to vector<16x248xf32>
    %147 = tpu.concatenate %146, %145 in 1 : vector<16x248xf32>, vector<16x8xf32> -> vector<16x256xf32>
    %148 = vector.extract_strided_slice %144 {offsets = [0, 0], sizes = [16, 248], strides = [1, 1]} : vector<16x256xf32> to vector<16x248xf32>
    %149 = tpu.concatenate %145, %148 in 1 : vector<16x8xf32>, vector<16x248xf32> -> vector<16x256xf32>
    %150 = arith.maximumf %144, %147 : vector<16x256xf32>
    %151 = arith.maximumf %150, %149 : vector<16x256xf32>
    %cst_94 = arith.constant 0.000000e+00 : f32
    %152 = vector.broadcast %cst_94 : f32 to vector<2x256xf32>
    %cst_95 = arith.constant 0.000000e+00 : f32
    %153 = vector.broadcast %cst_95 : f32 to vector<2x256xf32>
    %154 = tpu.concatenate %152, %151, %153 in 0 : vector<2x256xf32>, vector<16x256xf32>, vector<2x256xf32> -> vector<20x256xf32>
    %cst_96 = arith.constant 0.000000e+00 : f32
    %155 = vector.broadcast %cst_96 : f32 to vector<16x256xf32>
    %156 = vector.extract_strided_slice %154 {offsets = [0, 0], sizes = [16, 256], strides = [1, 1]} : vector<20x256xf32> to vector<16x256xf32>
    %c0_97 = arith.constant 0 : index
    %c0_98 = arith.constant 0 : index
    %c0_99 = arith.constant 0 : index
    %157 = vector.load %arg2[%c0_97, %c0_98, %c0_99] : memref<5x256x256xf32, #tpu.memory_space<vmem>>, vector<1x256x256xf32>
    %158 = vector.shape_cast %157 : vector<1x256x256xf32> to vector<256x256xf32>
    %cst_100 = arith.constant dense<0.000000e+00> : vector<16x256xf32>
    %159 = tpu.matmul %156, %158, %cst_100 {dimension_numbers = #tpu.dot_dimension_numbers<[1], [0], [0], [1], [0, 0, 1, 1], [], []>} : vector<16x256xf32>, vector<256x256xf32>, vector<16x256xf32> -> vector<16x256xf32>
    %160 = arith.addf %155, %159 : vector<16x256xf32>
    %161 = vector.extract_strided_slice %154 {offsets = [1, 0], sizes = [16, 256], strides = [1, 1]} : vector<20x256xf32> to vector<16x256xf32>
    %c1_101 = arith.constant 1 : index
    %c0_102 = arith.constant 0 : index
    %c0_103 = arith.constant 0 : index
    %162 = vector.load %arg2[%c1_101, %c0_102, %c0_103] : memref<5x256x256xf32, #tpu.memory_space<vmem>>, vector<1x256x256xf32>
    %163 = vector.shape_cast %162 : vector<1x256x256xf32> to vector<256x256xf32>
    %cst_104 = arith.constant dense<0.000000e+00> : vector<16x256xf32>
    %164 = tpu.matmul %161, %163, %cst_104 {dimension_numbers = #tpu.dot_dimension_numbers<[1], [0], [0], [1], [0, 0, 1, 1], [], []>} : vector<16x256xf32>, vector<256x256xf32>, vector<16x256xf32> -> vector<16x256xf32>
    %165 = arith.addf %160, %164 : vector<16x256xf32>
    %166 = vector.extract_strided_slice %154 {offsets = [2, 0], sizes = [16, 256], strides = [1, 1]} : vector<20x256xf32> to vector<16x256xf32>
    %c2_105 = arith.constant 2 : index
    %c0_106 = arith.constant 0 : index
    %c0_107 = arith.constant 0 : index
    %167 = vector.load %arg2[%c2_105, %c0_106, %c0_107] : memref<5x256x256xf32, #tpu.memory_space<vmem>>, vector<1x256x256xf32>
    %168 = vector.shape_cast %167 : vector<1x256x256xf32> to vector<256x256xf32>
    %cst_108 = arith.constant dense<0.000000e+00> : vector<16x256xf32>
    %169 = tpu.matmul %166, %168, %cst_108 {dimension_numbers = #tpu.dot_dimension_numbers<[1], [0], [0], [1], [0, 0, 1, 1], [], []>} : vector<16x256xf32>, vector<256x256xf32>, vector<16x256xf32> -> vector<16x256xf32>
    %170 = arith.addf %165, %169 : vector<16x256xf32>
    %171 = vector.extract_strided_slice %154 {offsets = [3, 0], sizes = [16, 256], strides = [1, 1]} : vector<20x256xf32> to vector<16x256xf32>
    %c3_109 = arith.constant 3 : index
    %c0_110 = arith.constant 0 : index
    %c0_111 = arith.constant 0 : index
    %172 = vector.load %arg2[%c3_109, %c0_110, %c0_111] : memref<5x256x256xf32, #tpu.memory_space<vmem>>, vector<1x256x256xf32>
    %173 = vector.shape_cast %172 : vector<1x256x256xf32> to vector<256x256xf32>
    %cst_112 = arith.constant dense<0.000000e+00> : vector<16x256xf32>
    %174 = tpu.matmul %171, %173, %cst_112 {dimension_numbers = #tpu.dot_dimension_numbers<[1], [0], [0], [1], [0, 0, 1, 1], [], []>} : vector<16x256xf32>, vector<256x256xf32>, vector<16x256xf32> -> vector<16x256xf32>
    %175 = arith.addf %170, %174 : vector<16x256xf32>
    %176 = vector.extract_strided_slice %154 {offsets = [4, 0], sizes = [16, 256], strides = [1, 1]} : vector<20x256xf32> to vector<16x256xf32>
    %c4_113 = arith.constant 4 : index
    %c0_114 = arith.constant 0 : index
    %c0_115 = arith.constant 0 : index
    %177 = vector.load %arg2[%c4_113, %c0_114, %c0_115] : memref<5x256x256xf32, #tpu.memory_space<vmem>>, vector<1x256x256xf32>
    %178 = vector.shape_cast %177 : vector<1x256x256xf32> to vector<256x256xf32>
    %cst_116 = arith.constant dense<0.000000e+00> : vector<16x256xf32>
    %179 = tpu.matmul %176, %178, %cst_116 {dimension_numbers = #tpu.dot_dimension_numbers<[1], [0], [0], [1], [0, 0, 1, 1], [], []>} : vector<16x256xf32>, vector<256x256xf32>, vector<16x256xf32> -> vector<16x256xf32>
    %180 = arith.addf %175, %179 : vector<16x256xf32>
    %181 = tpu.concatenate %134, %180 in 0 : vector<16x256xf32>, vector<16x256xf32> -> vector<32x256xf32>
    %c0_117 = arith.constant 0 : index
    %c0_118 = arith.constant 0 : index
    %182 = vector.load %arg5[%c0_117, %c0_118] : memref<1x16xf32, #tpu.memory_space<vmem>>, vector<1x16xf32>
    %c0_119 = arith.constant 0 : index
    %c0_120 = arith.constant 0 : index
    %183 = vector.load %arg6[%c0_119, %c0_120] : memref<1x16xf32, #tpu.memory_space<vmem>>, vector<1x16xf32>
    %c0_121 = arith.constant 0 : index
    %c0_122 = arith.constant 0 : index
    %184 = vector.load %arg9[%c0_121, %c0_122] : memref<256x16xf32, #tpu.memory_space<vmem>>, vector<256x16xf32>
    %c0_123 = arith.constant 0 : index
    %c0_124 = arith.constant 0 : index
    %185 = vector.load %arg10[%c0_123, %c0_124] : memref<16x256xf32, #tpu.memory_space<vmem>>, vector<16x256xf32>
    %cst_125 = arith.constant dense<0.000000e+00> : vector<256xf32>
    %186 = vector.multi_reduction <add>, %181, %cst_125 [0] : vector<32x256xf32> to vector<256xf32>
    %187 = vector.shape_cast %186 : vector<256xf32> to vector<1x256xf32>
    %cst_126 = arith.constant dense<0.000000e+00> : vector<1x16xf32>
    %188 = tpu.matmul %187, %184, %cst_126 {dimension_numbers = #tpu.dot_dimension_numbers<[1], [0], [0], [1], [0, 0, 1, 1], [], []>} : vector<1x256xf32>, vector<256x16xf32>, vector<1x16xf32> -> vector<1x16xf32>
    %cst_127 = arith.constant 0.001953125 : f32
    %189 = vector.broadcast %cst_127 : f32 to vector<1x16xf32>
    %190 = arith.mulf %188, %189 : vector<1x16xf32>
    %cst_128 = arith.constant dense<0.000000e+00> : vector<1x256xf32>
    %191 = tpu.matmul %190, %185, %cst_128 {dimension_numbers = #tpu.dot_dimension_numbers<[1], [0], [0], [1], [0, 0, 1, 1], [], []>} : vector<1x16xf32>, vector<16x256xf32>, vector<1x256xf32> -> vector<1x256xf32>
    %192 = vector.broadcast %191 : vector<1x256xf32> to vector<32x256xf32>
    %193 = arith.subf %181, %192 : vector<32x256xf32>
    %194 = arith.mulf %193, %193 : vector<32x256xf32>
    %cst_129 = arith.constant dense<0.000000e+00> : vector<256xf32>
    %195 = vector.multi_reduction <add>, %194, %cst_129 [0] : vector<32x256xf32> to vector<256xf32>
    %196 = vector.shape_cast %195 : vector<256xf32> to vector<1x256xf32>
    %cst_130 = arith.constant dense<0.000000e+00> : vector<1x16xf32>
    %197 = tpu.matmul %196, %184, %cst_130 {dimension_numbers = #tpu.dot_dimension_numbers<[1], [0], [0], [1], [0, 0, 1, 1], [], []>} : vector<1x256xf32>, vector<256x16xf32>, vector<1x16xf32> -> vector<1x16xf32>
    %cst_131 = arith.constant 0.001953125 : f32
    %198 = vector.broadcast %cst_131 : f32 to vector<1x16xf32>
    %199 = arith.mulf %197, %198 : vector<1x16xf32>
    %cst_132 = arith.constant 9.99999974E-6 : f32
    %200 = vector.broadcast %cst_132 : f32 to vector<1x16xf32>
    %201 = arith.addf %199, %200 : vector<1x16xf32>
    %202 = math.rsqrt %201 : vector<1x16xf32>
    %203 = arith.mulf %182, %202 : vector<1x16xf32>
    %204 = arith.mulf %190, %203 : vector<1x16xf32>
    %205 = arith.subf %183, %204 : vector<1x16xf32>
    %cst_133 = arith.constant dense<0.000000e+00> : vector<1x256xf32>
    %206 = tpu.matmul %203, %185, %cst_133 {dimension_numbers = #tpu.dot_dimension_numbers<[1], [0], [0], [1], [0, 0, 1, 1], [], []>} : vector<1x16xf32>, vector<16x256xf32>, vector<1x256xf32> -> vector<1x256xf32>
    %cst_134 = arith.constant dense<0.000000e+00> : vector<1x256xf32>
    %207 = tpu.matmul %205, %185, %cst_134 {dimension_numbers = #tpu.dot_dimension_numbers<[1], [0], [0], [1], [0, 0, 1, 1], [], []>} : vector<1x16xf32>, vector<16x256xf32>, vector<1x256xf32> -> vector<1x256xf32>
    %208 = vector.broadcast %206 : vector<1x256xf32> to vector<32x256xf32>
    %209 = arith.mulf %181, %208 : vector<32x256xf32>
    %210 = vector.broadcast %207 : vector<1x256xf32> to vector<32x256xf32>
    %211 = arith.addf %209, %210 : vector<32x256xf32>
    %cst_135 = arith.constant 0.000000e+00 : f32
    %212 = vector.broadcast %cst_135 : f32 to vector<32x256xf32>
    %213 = arith.maximumf %211, %212 : vector<32x256xf32>
    %214 = vector.extract_strided_slice %213 {offsets = [0, 0], sizes = [16, 256], strides = [1, 1]} : vector<32x256xf32> to vector<16x256xf32>
    %c0_136 = arith.constant 0 : index
    %c0_137 = arith.constant 0 : index
    %215 = vector.load %arg12[%c0_136, %c0_137] : memref<8x16xf32, #tpu.memory_space<vmem>>, vector<8x16xf32>
    %cst_138 = arith.constant 0.000000e+00 : f32
    %216 = vector.broadcast %cst_138 : f32 to vector<1x256xf32>
    %217 = vector.extract_strided_slice %214 {offsets = [1, 0], sizes = [15, 256], strides = [1, 1]} : vector<16x256xf32> to vector<15x256xf32>
    %218 = tpu.concatenate %217, %216 in 0 : vector<15x256xf32>, vector<1x256xf32> -> vector<16x256xf32>
    %219 = vector.extract_strided_slice %214 {offsets = [0, 0], sizes = [15, 256], strides = [1, 1]} : vector<16x256xf32> to vector<15x256xf32>
    %220 = tpu.concatenate %216, %219 in 0 : vector<1x256xf32>, vector<15x256xf32> -> vector<16x256xf32>
    %221 = arith.maximumf %214, %218 : vector<16x256xf32>
    %222 = arith.maximumf %221, %220 : vector<16x256xf32>
    %cst_139 = arith.constant dense<0.000000e+00> : vector<8x256xf32>
    %223 = tpu.matmul %215, %222, %cst_139 {dimension_numbers = #tpu.dot_dimension_numbers<[1], [0], [0], [1], [0, 0, 1, 1], [], []>} : vector<8x16xf32>, vector<16x256xf32>, vector<8x256xf32> -> vector<8x256xf32>
    %cst_140 = arith.constant 0.000000e+00 : f32
    %224 = vector.broadcast %cst_140 : f32 to vector<8x16xf32>
    %225 = vector.extract_strided_slice %223 {offsets = [0, 16], sizes = [8, 240], strides = [1, 1]} : vector<8x256xf32> to vector<8x240xf32>
    %226 = tpu.concatenate %225, %224 in 1 : vector<8x240xf32>, vector<8x16xf32> -> vector<8x256xf32>
    %227 = vector.extract_strided_slice %223 {offsets = [0, 0], sizes = [8, 240], strides = [1, 1]} : vector<8x256xf32> to vector<8x240xf32>
    %228 = tpu.concatenate %224, %227 in 1 : vector<8x16xf32>, vector<8x240xf32> -> vector<8x256xf32>
    %229 = arith.maximumf %223, %226 : vector<8x256xf32>
    %230 = arith.maximumf %229, %228 : vector<8x256xf32>
    %cst_141 = arith.constant 0.000000e+00 : f32
    %231 = vector.broadcast %cst_141 : f32 to vector<1x64xf32>
    %232 = vector.extract_strided_slice %230 {offsets = [0, 0], sizes = [1, 256], strides = [1, 1]} : vector<8x256xf32> to vector<1x256xf32>
    %c0_142 = arith.constant 0 : index
    %c0_143 = arith.constant 0 : index
    %c0_144 = arith.constant 0 : index
    %233 = vector.load %arg13[%c0_142, %c0_143, %c0_144] : memref<8x256x64xf32, #tpu.memory_space<vmem>>, vector<1x256x64xf32>
    %234 = vector.shape_cast %233 : vector<1x256x64xf32> to vector<256x64xf32>
    %cst_145 = arith.constant dense<0.000000e+00> : vector<1x64xf32>
    %235 = tpu.matmul %232, %234, %cst_145 {dimension_numbers = #tpu.dot_dimension_numbers<[1], [0], [0], [1], [0, 0, 1, 1], [], []>} : vector<1x256xf32>, vector<256x64xf32>, vector<1x64xf32> -> vector<1x64xf32>
    %236 = arith.addf %231, %235 : vector<1x64xf32>
    %237 = vector.extract_strided_slice %230 {offsets = [1, 0], sizes = [1, 256], strides = [1, 1]} : vector<8x256xf32> to vector<1x256xf32>
    %c1_146 = arith.constant 1 : index
    %c0_147 = arith.constant 0 : index
    %c0_148 = arith.constant 0 : index
    %238 = vector.load %arg13[%c1_146, %c0_147, %c0_148] : memref<8x256x64xf32, #tpu.memory_space<vmem>>, vector<1x256x64xf32>
    %239 = vector.shape_cast %238 : vector<1x256x64xf32> to vector<256x64xf32>
    %cst_149 = arith.constant dense<0.000000e+00> : vector<1x64xf32>
    %240 = tpu.matmul %237, %239, %cst_149 {dimension_numbers = #tpu.dot_dimension_numbers<[1], [0], [0], [1], [0, 0, 1, 1], [], []>} : vector<1x256xf32>, vector<256x64xf32>, vector<1x64xf32> -> vector<1x64xf32>
    %241 = arith.addf %236, %240 : vector<1x64xf32>
    %242 = vector.extract_strided_slice %230 {offsets = [2, 0], sizes = [1, 256], strides = [1, 1]} : vector<8x256xf32> to vector<1x256xf32>
    %c2_150 = arith.constant 2 : index
    %c0_151 = arith.constant 0 : index
    %c0_152 = arith.constant 0 : index
    %243 = vector.load %arg13[%c2_150, %c0_151, %c0_152] : memref<8x256x64xf32, #tpu.memory_space<vmem>>, vector<1x256x64xf32>
    %244 = vector.shape_cast %243 : vector<1x256x64xf32> to vector<256x64xf32>
    %cst_153 = arith.constant dense<0.000000e+00> : vector<1x64xf32>
    %245 = tpu.matmul %242, %244, %cst_153 {dimension_numbers = #tpu.dot_dimension_numbers<[1], [0], [0], [1], [0, 0, 1, 1], [], []>} : vector<1x256xf32>, vector<256x64xf32>, vector<1x64xf32> -> vector<1x64xf32>
    %246 = arith.addf %241, %245 : vector<1x64xf32>
    %247 = vector.extract_strided_slice %230 {offsets = [3, 0], sizes = [1, 256], strides = [1, 1]} : vector<8x256xf32> to vector<1x256xf32>
    %c3_154 = arith.constant 3 : index
    %c0_155 = arith.constant 0 : index
    %c0_156 = arith.constant 0 : index
    %248 = vector.load %arg13[%c3_154, %c0_155, %c0_156] : memref<8x256x64xf32, #tpu.memory_space<vmem>>, vector<1x256x64xf32>
    %249 = vector.shape_cast %248 : vector<1x256x64xf32> to vector<256x64xf32>
    %cst_157 = arith.constant dense<0.000000e+00> : vector<1x64xf32>
    %250 = tpu.matmul %247, %249, %cst_157 {dimension_numbers = #tpu.dot_dimension_numbers<[1], [0], [0], [1], [0, 0, 1, 1], [], []>} : vector<1x256xf32>, vector<256x64xf32>, vector<1x64xf32> -> vector<1x64xf32>
    %251 = arith.addf %246, %250 : vector<1x64xf32>
    %252 = vector.extract_strided_slice %230 {offsets = [4, 0], sizes = [1, 256], strides = [1, 1]} : vector<8x256xf32> to vector<1x256xf32>
    %c4_158 = arith.constant 4 : index
    %c0_159 = arith.constant 0 : index
    %c0_160 = arith.constant 0 : index
    %253 = vector.load %arg13[%c4_158, %c0_159, %c0_160] : memref<8x256x64xf32, #tpu.memory_space<vmem>>, vector<1x256x64xf32>
    %254 = vector.shape_cast %253 : vector<1x256x64xf32> to vector<256x64xf32>
    %cst_161 = arith.constant dense<0.000000e+00> : vector<1x64xf32>
    %255 = tpu.matmul %252, %254, %cst_161 {dimension_numbers = #tpu.dot_dimension_numbers<[1], [0], [0], [1], [0, 0, 1, 1], [], []>} : vector<1x256xf32>, vector<256x64xf32>, vector<1x64xf32> -> vector<1x64xf32>
    %256 = arith.addf %251, %255 : vector<1x64xf32>
    %257 = vector.extract_strided_slice %230 {offsets = [5, 0], sizes = [1, 256], strides = [1, 1]} : vector<8x256xf32> to vector<1x256xf32>
    %c5 = arith.constant 5 : index
    %c0_162 = arith.constant 0 : index
    %c0_163 = arith.constant 0 : index
    %258 = vector.load %arg13[%c5, %c0_162, %c0_163] : memref<8x256x64xf32, #tpu.memory_space<vmem>>, vector<1x256x64xf32>
    %259 = vector.shape_cast %258 : vector<1x256x64xf32> to vector<256x64xf32>
    %cst_164 = arith.constant dense<0.000000e+00> : vector<1x64xf32>
    %260 = tpu.matmul %257, %259, %cst_164 {dimension_numbers = #tpu.dot_dimension_numbers<[1], [0], [0], [1], [0, 0, 1, 1], [], []>} : vector<1x256xf32>, vector<256x64xf32>, vector<1x64xf32> -> vector<1x64xf32>
    %261 = arith.addf %256, %260 : vector<1x64xf32>
    %262 = vector.extract_strided_slice %230 {offsets = [6, 0], sizes = [1, 256], strides = [1, 1]} : vector<8x256xf32> to vector<1x256xf32>
    %c6 = arith.constant 6 : index
    %c0_165 = arith.constant 0 : index
    %c0_166 = arith.constant 0 : index
    %263 = vector.load %arg13[%c6, %c0_165, %c0_166] : memref<8x256x64xf32, #tpu.memory_space<vmem>>, vector<1x256x64xf32>
    %264 = vector.shape_cast %263 : vector<1x256x64xf32> to vector<256x64xf32>
    %cst_167 = arith.constant dense<0.000000e+00> : vector<1x64xf32>
    %265 = tpu.matmul %262, %264, %cst_167 {dimension_numbers = #tpu.dot_dimension_numbers<[1], [0], [0], [1], [0, 0, 1, 1], [], []>} : vector<1x256xf32>, vector<256x64xf32>, vector<1x64xf32> -> vector<1x64xf32>
    %266 = arith.addf %261, %265 : vector<1x64xf32>
    %267 = vector.extract_strided_slice %230 {offsets = [7, 0], sizes = [1, 256], strides = [1, 1]} : vector<8x256xf32> to vector<1x256xf32>
    %c7 = arith.constant 7 : index
    %c0_168 = arith.constant 0 : index
    %c0_169 = arith.constant 0 : index
    %268 = vector.load %arg13[%c7, %c0_168, %c0_169] : memref<8x256x64xf32, #tpu.memory_space<vmem>>, vector<1x256x64xf32>
    %269 = vector.shape_cast %268 : vector<1x256x64xf32> to vector<256x64xf32>
    %cst_170 = arith.constant dense<0.000000e+00> : vector<1x64xf32>
    %270 = tpu.matmul %267, %269, %cst_170 {dimension_numbers = #tpu.dot_dimension_numbers<[1], [0], [0], [1], [0, 0, 1, 1], [], []>} : vector<1x256xf32>, vector<256x64xf32>, vector<1x64xf32> -> vector<1x64xf32>
    %271 = arith.addf %266, %270 : vector<1x64xf32>
    %272 = vector.extract_strided_slice %213 {offsets = [16, 0], sizes = [16, 256], strides = [1, 1]} : vector<32x256xf32> to vector<16x256xf32>
    %c0_171 = arith.constant 0 : index
    %c0_172 = arith.constant 0 : index
    %273 = vector.load %arg12[%c0_171, %c0_172] : memref<8x16xf32, #tpu.memory_space<vmem>>, vector<8x16xf32>
    %cst_173 = arith.constant 0.000000e+00 : f32
    %274 = vector.broadcast %cst_173 : f32 to vector<1x256xf32>
    %275 = vector.extract_strided_slice %272 {offsets = [1, 0], sizes = [15, 256], strides = [1, 1]} : vector<16x256xf32> to vector<15x256xf32>
    %276 = tpu.concatenate %275, %274 in 0 : vector<15x256xf32>, vector<1x256xf32> -> vector<16x256xf32>
    %277 = vector.extract_strided_slice %272 {offsets = [0, 0], sizes = [15, 256], strides = [1, 1]} : vector<16x256xf32> to vector<15x256xf32>
    %278 = tpu.concatenate %274, %277 in 0 : vector<1x256xf32>, vector<15x256xf32> -> vector<16x256xf32>
    %279 = arith.maximumf %272, %276 : vector<16x256xf32>
    %280 = arith.maximumf %279, %278 : vector<16x256xf32>
    %cst_174 = arith.constant dense<0.000000e+00> : vector<8x256xf32>
    %281 = tpu.matmul %273, %280, %cst_174 {dimension_numbers = #tpu.dot_dimension_numbers<[1], [0], [0], [1], [0, 0, 1, 1], [], []>} : vector<8x16xf32>, vector<16x256xf32>, vector<8x256xf32> -> vector<8x256xf32>
    %cst_175 = arith.constant 0.000000e+00 : f32
    %282 = vector.broadcast %cst_175 : f32 to vector<8x16xf32>
    %283 = vector.extract_strided_slice %281 {offsets = [0, 16], sizes = [8, 240], strides = [1, 1]} : vector<8x256xf32> to vector<8x240xf32>
    %284 = tpu.concatenate %283, %282 in 1 : vector<8x240xf32>, vector<8x16xf32> -> vector<8x256xf32>
    %285 = vector.extract_strided_slice %281 {offsets = [0, 0], sizes = [8, 240], strides = [1, 1]} : vector<8x256xf32> to vector<8x240xf32>
    %286 = tpu.concatenate %282, %285 in 1 : vector<8x16xf32>, vector<8x240xf32> -> vector<8x256xf32>
    %287 = arith.maximumf %281, %284 : vector<8x256xf32>
    %288 = arith.maximumf %287, %286 : vector<8x256xf32>
    %cst_176 = arith.constant 0.000000e+00 : f32
    %289 = vector.broadcast %cst_176 : f32 to vector<1x64xf32>
    %290 = vector.extract_strided_slice %288 {offsets = [0, 0], sizes = [1, 256], strides = [1, 1]} : vector<8x256xf32> to vector<1x256xf32>
    %c0_177 = arith.constant 0 : index
    %c0_178 = arith.constant 0 : index
    %c0_179 = arith.constant 0 : index
    %291 = vector.load %arg13[%c0_177, %c0_178, %c0_179] : memref<8x256x64xf32, #tpu.memory_space<vmem>>, vector<1x256x64xf32>
    %292 = vector.shape_cast %291 : vector<1x256x64xf32> to vector<256x64xf32>
    %cst_180 = arith.constant dense<0.000000e+00> : vector<1x64xf32>
    %293 = tpu.matmul %290, %292, %cst_180 {dimension_numbers = #tpu.dot_dimension_numbers<[1], [0], [0], [1], [0, 0, 1, 1], [], []>} : vector<1x256xf32>, vector<256x64xf32>, vector<1x64xf32> -> vector<1x64xf32>
    %294 = arith.addf %289, %293 : vector<1x64xf32>
    %295 = vector.extract_strided_slice %288 {offsets = [1, 0], sizes = [1, 256], strides = [1, 1]} : vector<8x256xf32> to vector<1x256xf32>
    %c1_181 = arith.constant 1 : index
    %c0_182 = arith.constant 0 : index
    %c0_183 = arith.constant 0 : index
    %296 = vector.load %arg13[%c1_181, %c0_182, %c0_183] : memref<8x256x64xf32, #tpu.memory_space<vmem>>, vector<1x256x64xf32>
    %297 = vector.shape_cast %296 : vector<1x256x64xf32> to vector<256x64xf32>
    %cst_184 = arith.constant dense<0.000000e+00> : vector<1x64xf32>
    %298 = tpu.matmul %295, %297, %cst_184 {dimension_numbers = #tpu.dot_dimension_numbers<[1], [0], [0], [1], [0, 0, 1, 1], [], []>} : vector<1x256xf32>, vector<256x64xf32>, vector<1x64xf32> -> vector<1x64xf32>
    %299 = arith.addf %294, %298 : vector<1x64xf32>
    %300 = vector.extract_strided_slice %288 {offsets = [2, 0], sizes = [1, 256], strides = [1, 1]} : vector<8x256xf32> to vector<1x256xf32>
    %c2_185 = arith.constant 2 : index
    %c0_186 = arith.constant 0 : index
    %c0_187 = arith.constant 0 : index
    %301 = vector.load %arg13[%c2_185, %c0_186, %c0_187] : memref<8x256x64xf32, #tpu.memory_space<vmem>>, vector<1x256x64xf32>
    %302 = vector.shape_cast %301 : vector<1x256x64xf32> to vector<256x64xf32>
    %cst_188 = arith.constant dense<0.000000e+00> : vector<1x64xf32>
    %303 = tpu.matmul %300, %302, %cst_188 {dimension_numbers = #tpu.dot_dimension_numbers<[1], [0], [0], [1], [0, 0, 1, 1], [], []>} : vector<1x256xf32>, vector<256x64xf32>, vector<1x64xf32> -> vector<1x64xf32>
    %304 = arith.addf %299, %303 : vector<1x64xf32>
    %305 = vector.extract_strided_slice %288 {offsets = [3, 0], sizes = [1, 256], strides = [1, 1]} : vector<8x256xf32> to vector<1x256xf32>
    %c3_189 = arith.constant 3 : index
    %c0_190 = arith.constant 0 : index
    %c0_191 = arith.constant 0 : index
    %306 = vector.load %arg13[%c3_189, %c0_190, %c0_191] : memref<8x256x64xf32, #tpu.memory_space<vmem>>, vector<1x256x64xf32>
    %307 = vector.shape_cast %306 : vector<1x256x64xf32> to vector<256x64xf32>
    %cst_192 = arith.constant dense<0.000000e+00> : vector<1x64xf32>
    %308 = tpu.matmul %305, %307, %cst_192 {dimension_numbers = #tpu.dot_dimension_numbers<[1], [0], [0], [1], [0, 0, 1, 1], [], []>} : vector<1x256xf32>, vector<256x64xf32>, vector<1x64xf32> -> vector<1x64xf32>
    %309 = arith.addf %304, %308 : vector<1x64xf32>
    %310 = vector.extract_strided_slice %288 {offsets = [4, 0], sizes = [1, 256], strides = [1, 1]} : vector<8x256xf32> to vector<1x256xf32>
    %c4_193 = arith.constant 4 : index
    %c0_194 = arith.constant 0 : index
    %c0_195 = arith.constant 0 : index
    %311 = vector.load %arg13[%c4_193, %c0_194, %c0_195] : memref<8x256x64xf32, #tpu.memory_space<vmem>>, vector<1x256x64xf32>
    %312 = vector.shape_cast %311 : vector<1x256x64xf32> to vector<256x64xf32>
    %cst_196 = arith.constant dense<0.000000e+00> : vector<1x64xf32>
    %313 = tpu.matmul %310, %312, %cst_196 {dimension_numbers = #tpu.dot_dimension_numbers<[1], [0], [0], [1], [0, 0, 1, 1], [], []>} : vector<1x256xf32>, vector<256x64xf32>, vector<1x64xf32> -> vector<1x64xf32>
    %314 = arith.addf %309, %313 : vector<1x64xf32>
    %315 = vector.extract_strided_slice %288 {offsets = [5, 0], sizes = [1, 256], strides = [1, 1]} : vector<8x256xf32> to vector<1x256xf32>
    %c5_197 = arith.constant 5 : index
    %c0_198 = arith.constant 0 : index
    %c0_199 = arith.constant 0 : index
    %316 = vector.load %arg13[%c5_197, %c0_198, %c0_199] : memref<8x256x64xf32, #tpu.memory_space<vmem>>, vector<1x256x64xf32>
    %317 = vector.shape_cast %316 : vector<1x256x64xf32> to vector<256x64xf32>
    %cst_200 = arith.constant dense<0.000000e+00> : vector<1x64xf32>
    %318 = tpu.matmul %315, %317, %cst_200 {dimension_numbers = #tpu.dot_dimension_numbers<[1], [0], [0], [1], [0, 0, 1, 1], [], []>} : vector<1x256xf32>, vector<256x64xf32>, vector<1x64xf32> -> vector<1x64xf32>
    %319 = arith.addf %314, %318 : vector<1x64xf32>
    %320 = vector.extract_strided_slice %288 {offsets = [6, 0], sizes = [1, 256], strides = [1, 1]} : vector<8x256xf32> to vector<1x256xf32>
    %c6_201 = arith.constant 6 : index
    %c0_202 = arith.constant 0 : index
    %c0_203 = arith.constant 0 : index
    %321 = vector.load %arg13[%c6_201, %c0_202, %c0_203] : memref<8x256x64xf32, #tpu.memory_space<vmem>>, vector<1x256x64xf32>
    %322 = vector.shape_cast %321 : vector<1x256x64xf32> to vector<256x64xf32>
    %cst_204 = arith.constant dense<0.000000e+00> : vector<1x64xf32>
    %323 = tpu.matmul %320, %322, %cst_204 {dimension_numbers = #tpu.dot_dimension_numbers<[1], [0], [0], [1], [0, 0, 1, 1], [], []>} : vector<1x256xf32>, vector<256x64xf32>, vector<1x64xf32> -> vector<1x64xf32>
    %324 = arith.addf %319, %323 : vector<1x64xf32>
    %325 = vector.extract_strided_slice %288 {offsets = [7, 0], sizes = [1, 256], strides = [1, 1]} : vector<8x256xf32> to vector<1x256xf32>
    %c7_205 = arith.constant 7 : index
    %c0_206 = arith.constant 0 : index
    %c0_207 = arith.constant 0 : index
    %326 = vector.load %arg13[%c7_205, %c0_206, %c0_207] : memref<8x256x64xf32, #tpu.memory_space<vmem>>, vector<1x256x64xf32>
    %327 = vector.shape_cast %326 : vector<1x256x64xf32> to vector<256x64xf32>
    %cst_208 = arith.constant dense<0.000000e+00> : vector<1x64xf32>
    %328 = tpu.matmul %325, %327, %cst_208 {dimension_numbers = #tpu.dot_dimension_numbers<[1], [0], [0], [1], [0, 0, 1, 1], [], []>} : vector<1x256xf32>, vector<256x64xf32>, vector<1x64xf32> -> vector<1x64xf32>
    %329 = arith.addf %324, %328 : vector<1x64xf32>
    %330 = tpu.concatenate %271, %329 in 0 : vector<1x64xf32>, vector<1x64xf32> -> vector<2x64xf32>
    %cst_209 = arith.constant 0.000000e+00 : f32
    %331 = vector.broadcast %cst_209 : f32 to vector<2x64xf32>
    %332 = arith.maximumf %330, %331 : vector<2x64xf32>
    %c0_210 = arith.constant 0 : index
    %c0_211 = arith.constant 0 : index
    %333 = vector.load %arg14[%c0_210, %c0_211] : memref<64x32xf32, #tpu.memory_space<vmem>>, vector<64x32xf32>
    %cst_212 = arith.constant dense<0.000000e+00> : vector<2x32xf32>
    %334 = tpu.matmul %332, %333, %cst_212 {dimension_numbers = #tpu.dot_dimension_numbers<[1], [0], [0], [1], [0, 0, 1, 1], [], []>} : vector<2x64xf32>, vector<64x32xf32>, vector<2x32xf32> -> vector<2x32xf32>
    %cst_213 = arith.constant 0.000000e+00 : f32
    %335 = vector.broadcast %cst_213 : f32 to vector<2x32xf32>
    %336 = arith.maximumf %334, %335 : vector<2x32xf32>
    %c0_214 = arith.constant 0 : index
    %c0_215 = arith.constant 0 : index
    %337 = vector.load %arg15[%c0_214, %c0_215] : memref<32x10xf32, #tpu.memory_space<vmem>>, vector<32x10xf32>
    %cst_216 = arith.constant dense<0.000000e+00> : vector<2x10xf32>
    %338 = tpu.matmul %336, %337, %cst_216 {dimension_numbers = #tpu.dot_dimension_numbers<[1], [0], [0], [1], [0, 0, 1, 1], [], []>} : vector<2x32xf32>, vector<32x10xf32>, vector<2x10xf32> -> vector<2x10xf32>
    %c0_217 = arith.constant 0 : index
    %c0_218 = arith.constant 0 : index
    %339 = vector.load %arg16[%c0_217, %c0_218] : memref<2x10xf32, #tpu.memory_space<vmem>>, vector<2x10xf32>
    tpu.vector_store %arg16[%c0_217, %c0_218], %338 {strides = array<i32>} : memref<2x10xf32, #tpu.memory_space<vmem>>, vector<2x10xf32>,
    return
  }
}

</mosaic_0001>

<llo_original>
// kernel: learner_forward.1
$region0: #{learner_forward.1}
  #allocation0 [shape = 'u32[]', space=smem, size = 0x4, offset = 0x4, fixed_abs, tag = 'smem constant byte address 0x4 - core index']
  #allocation1 [shape = 'u32[144,128]{1,0:T(1,128)}', space=vmem, size = 0x12000, scoped, tag = 'internal scratch']
  %s0 = inlined_call_operand.vmem [shape: f32[2,36,108], index: 0, kind: input, shape index: {}]
  %s1 = inlined_call_operand.vmem [shape: f32[5,108,256], index: 1, kind: input, shape index: {}]
  %s2 = inlined_call_operand.vmem [shape: f32[5,256,256], index: 2, kind: input, shape index: {}]
  %s3 = inlined_call_operand.vmem [shape: f32[1,8], index: 3, kind: input, shape index: {}]
  %s4 = inlined_call_operand.vmem [shape: f32[1,8], index: 4, kind: input, shape index: {}]
  %s5 = inlined_call_operand.vmem [shape: f32[1,16], index: 5, kind: input, shape index: {}]
  %s6 = inlined_call_operand.vmem [shape: f32[1,16], index: 6, kind: input, shape index: {}]
  %s7 = inlined_call_operand.vmem [shape: f32[256,8], index: 7, kind: input, shape index: {}]
  %s8 = inlined_call_operand.vmem [shape: f32[8,256], index: 8, kind: input, shape index: {}]
  %s9 = inlined_call_operand.vmem [shape: f32[256,16], index: 9, kind: input, shape index: {}]
  %s10 = inlined_call_operand.vmem [shape: f32[16,256], index: 10, kind: input, shape index: {}]
  %s11 = inlined_call_operand.vmem [shape: f32[16,32], index: 11, kind: input, shape index: {}]
  %s12 = inlined_call_operand.vmem [shape: f32[8,16], index: 12, kind: input, shape index: {}]
  %s13 = inlined_call_operand.vmem [shape: f32[8,256,64], index: 13, kind: input, shape index: {}]
  %s14 = inlined_call_operand.vmem [shape: f32[64,32], index: 14, kind: input, shape index: {}]
  %s15 = inlined_call_operand.vmem [shape: f32[32,10], index: 15, kind: input, shape index: {}]
  %s16 = inlined_call_operand.hbm [shape: f32[2,10], index: 16, kind: output, shape index: {}]
  %s17 = sld [smem:[#allocation0]]
  $region74: #{learner_forward.1} parent=0
    _
  %s19 = ssub.s32 1, %s17
  %s20 = scalar_select 0, %s19, %s17
  $region1: #{learner_forward.1} parent=0
    #allocation2 [shape = 'u8[1024]{0}', space=vmem, size = 0x400, scoped, tag = 'output window, operand 0, single buffered']
    #allocation3 [shape = 's32[1]{0}', space=sflag, size = 0x4, scoped, tag = 'scoped memory for learner_forward.1']
    %21 = vsyncpa [#allocation3], 0
    // Predicated region
    $region2: #{learner_forward.1} parent=1 // pred_check
      _
    $region3: #{learner_forward.1} parent=1 // pred_check_branch
      %23 = sbr.rel (0) target = $region5
    $region4: #{learner_forward.1} parent=1 // pred_region
      _
    $region5: #{learner_forward.1} parent=1 // pred_fallthru
      _
    // Predicated region
    $region6: #{learner_forward.1} parent=1 // pred_check
      _
    $region7: #{learner_forward.1} parent=1 // pred_check_branch
      %25 = sbr.rel (0) target = $region9
    $region8: #{learner_forward.1} parent=1 // pred_region
      _
    $region9: #{learner_forward.1} parent=1 // pred_fallthru
      _
    // Predicated region
    $region10: #{learner_forward.1} parent=1 // pred_check
      _
    $region11: #{learner_forward.1} parent=1 // pred_check_branch
      %27 = sbr.rel (0) target = $region13
    $region12: #{learner_forward.1} parent=1 // pred_region
      _
    $region13: #{learner_forward.1} parent=1 // pred_fallthru
      _
    // Predicated region
    $region14: #{learner_forward.1} parent=1 // pred_check
      _
    $region15: #{learner_forward.1} parent=1 // pred_check_branch
      %29 = sbr.rel (0) target = $region17
    $region16: #{learner_forward.1} parent=1 // pred_region
      _
    $region17: #{learner_forward.1} parent=1 // pred_fallthru
      _
    // Predicated region
    $region18: #{learner_forward.1} parent=1 // pred_check
      _
    $region19: #{learner_forward.1} parent=1 // pred_check_branch
      %31 = sbr.rel (0) target = $region21
    $region20: #{learner_forward.1} parent=1 // pred_region
      _
    $region21: #{learner_forward.1} parent=1 // pred_fallthru
      _
    // Predicated region
    $region22: #{learner_forward.1} parent=1 // pred_check
      _
    $region23: #{learner_forward.1} parent=1 // pred_check_branch
      %33 = sbr.rel (0) target = $region25
    $region24: #{learner_forward.1} parent=1 // pred_region
      _
    $region25: #{learner_forward.1} parent=1 // pred_fallthru
      _
    // Predicated region
    $region26: #{learner_forward.1} parent=1 // pred_check
      _
    $region27: #{learner_forward.1} parent=1 // pred_check_branch
      %35 = sbr.rel (0) target = $region29
    $region28: #{learner_forward.1} parent=1 // pred_region
      _
    $region29: #{learner_forward.1} parent=1 // pred_fallthru
      _
    // Predicated region
    $region30: #{learner_forward.1} parent=1 // pred_check
      _
    $region31: #{learner_forward.1} parent=1 // pred_check_branch
      %37 = sbr.rel (0) target = $region33
    $region32: #{learner_forward.1} parent=1 // pred_region
      _
    $region33: #{learner_forward.1} parent=1 // pred_fallthru
      _
    // Predicated region
    $region34: #{learner_forward.1} parent=1 // pred_check
      _
    $region35: #{learner_forward.1} parent=1 // pred_check_branch
      %39 = sbr.rel (0) target = $region37
    $region36: #{learner_forward.1} parent=1 // pred_region
      _
    $region37: #{learner_forward.1} parent=1 // pred_fallthru
      _
    // Predicated region
    $region38: #{learner_forward.1} parent=1 // pred_check
      _
    $region39: #{learner_forward.1} parent=1 // pred_check_branch
      %41 = sbr.rel (0) target = $region41
    $region40: #{learner_forward.1} parent=1 // pred_region
      _
    $region41: #{learner_forward.1} parent=1 // pred_fallthru
      _
    // Predicated region
    $region42: #{learner_forward.1} parent=1 // pred_check
      _
    $region43: #{learner_forward.1} parent=1 // pred_check_branch
      %43 = sbr.rel (0) target = $region45
    $region44: #{learner_forward.1} parent=1 // pred_region
      _
    $region45: #{learner_forward.1} parent=1 // pred_fallthru
      _
    // Predicated region
    $region46: #{learner_forward.1} parent=1 // pred_check
      _
    $region47: #{learner_forward.1} parent=1 // pred_check_branch
      %45 = sbr.rel (0) target = $region49
    $region48: #{learner_forward.1} parent=1 // pred_region
      _
    $region49: #{learner_forward.1} parent=1 // pred_fallthru
      _
    // Predicated region
    $region50: #{learner_forward.1} parent=1 // pred_check
      _
    $region51: #{learner_forward.1} parent=1 // pred_check_branch
      %47 = sbr.rel (0) target = $region53
    $region52: #{learner_forward.1} parent=1 // pred_region
      _
    $region53: #{learner_forward.1} parent=1 // pred_fallthru
      _
    // Predicated region
    $region54: #{learner_forward.1} parent=1 // pred_check
      _
    $region55: #{learner_forward.1} parent=1 // pred_check_branch
      %49 = sbr.rel (0) target = $region57
    $region56: #{learner_forward.1} parent=1 // pred_region
      _
    $region57: #{learner_forward.1} parent=1 // pred_fallthru
      _
    // Predicated region
    $region58: #{learner_forward.1} parent=1 // pred_check
      _
    $region59: #{learner_forward.1} parent=1 // pred_check_branch
      %51 = sbr.rel (0) target = $region61
    $region60: #{learner_forward.1} parent=1 // pred_region
      _
    $region61: #{learner_forward.1} parent=1 // pred_fallthru
      _
    // Predicated region
    $region62: #{learner_forward.1} parent=1 // pred_check
      _
    $region63: #{learner_forward.1} parent=1 // pred_check_branch
      %53 = sbr.rel (0) target = $region65
    $region64: #{learner_forward.1} parent=1 // pred_region
      _
    $region65: #{learner_forward.1} parent=1 // pred_fallthru
      _
    %v54 = vld [vmem:[%s0] sm:$0xff]
    %v55 = vld [vmem:[%s0 + $0x8] sm:$0xff]
    %v56 = vld [vmem:[%s0 + $0x10] sm:$0xff]
    %v57 = vld [vmem:[%s0 + $0x18] sm:$0xff]
    %v58 = vld [vmem:[%s0 + $0x20] sm:$0xf]
    %v59 = vld [vmem:[%s1] sm:$0xff]
    %v60 = vld [vmem:[%s1 + $0x8] sm:$0xff]
    %v61 = vld [vmem:[%s1 + $0x10] sm:$0xff]
    %v62 = vld [vmem:[%s1 + $0x18] sm:$0xff]
    %v63 = vld [vmem:[%s1 + $0x20] sm:$0xff]
    %v64 = vld [vmem:[%s1 + $0x28] sm:$0xff]
    %v65 = vld [vmem:[%s1 + $0x30] sm:$0xff]
    %v66 = vld [vmem:[%s1 + $0x38] sm:$0xff]
    %v67 = vld [vmem:[%s1 + $0x40] sm:$0xff]
    %v68 = vld [vmem:[%s1 + $0x48] sm:$0xff]
    %v69 = vld [vmem:[%s1 + $0x50] sm:$0xff]
    %v70 = vld [vmem:[%s1 + $0x58] sm:$0xff]
    %v71 = vld [vmem:[%s1 + $0x60] sm:$0xff]
    %v72 = vld [vmem:[%s1 + $0x68] sm:$0xff]
    %v73 = vld [vmem:[%s1 + $0x70] sm:$0xff]
    %v74 = vld [vmem:[%s1 + $0x78] sm:$0xff]
    %v75 = vld [vmem:[%s1 + $0x80] sm:$0xff]
    %v76 = vld [vmem:[%s1 + $0x88] sm:$0xff]
    %v77 = vld [vmem:[%s1 + $0x90] sm:$0xff]
    %v78 = vld [vmem:[%s1 + $0x98] sm:$0xff]
    %v79 = vld [vmem:[%s1 + $0xa0] sm:$0xff]
    %v80 = vld [vmem:[%s1 + $0xa8] sm:$0xff]
    %v81 = vld [vmem:[%s1 + $0xb0] sm:$0xff]
    %v82 = vld [vmem:[%s1 + $0xb8] sm:$0xff]
    %v83 = vld [vmem:[%s1 + $0xc0] sm:$0xff]
    %v84 = vld [vmem:[%s1 + $0xc8] sm:$0xff]
    %v85 = vld [vmem:[%s1 + $0xd0] sm:$0xf]
    %v86 = vld [vmem:[%s1 + $0xd8] sm:$0xf]
    %s87 = scalar_lea.vmem %s1, 224
    %v88 = vld [vmem:[%s87] sm:$0xff]
    %v89 = vld [vmem:[%s87 + $0x8] sm:$0xff]
    %v90 = vld [vmem:[%s87 + $0x10] sm:$0xff]
    %v91 = vld [vmem:[%s87 + $0x18] sm:$0xff]
    %v92 = vld [vmem:[%s87 + $0x20] sm:$0xff]
    %v93 = vld [vmem:[%s87 + $0x28] sm:$0xff]
    %v94 = vld [vmem:[%s87 + $0x30] sm:$0xff]
    %v95 = vld [vmem:[%s87 + $0x38] sm:$0xff]
    %v96 = vld [vmem:[%s87 + $0x40] sm:$0xff]
    %v97 = vld [vmem:[%s87 + $0x48] sm:$0xff]
    %v98 = vld [vmem:[%s87 + $0x50] sm:$0xff]
    %v99 = vld [vmem:[%s87 + $0x58] sm:$0xff]
    %v100 = vld [vmem:[%s87 + $0x60] sm:$0xff]
    %v101 = vld [vmem:[%s87 + $0x68] sm:$0xff]
    %v102 = vld [vmem:[%s87 + $0x70] sm:$0xff]
    %v103 = vld [vmem:[%s87 + $0x78] sm:$0xff]
    %v104 = vld [vmem:[%s87 + $0x80] sm:$0xff]
    %v105 = vld [vmem:[%s87 + $0x88] sm:$0xff]
    %v106 = vld [vmem:[%s87 + $0x90] sm:$0xff]
    %v107 = vld [vmem:[%s87 + $0x98] sm:$0xff]
    %v108 = vld [vmem:[%s87 + $0xa0] sm:$0xff]
    %v109 = vld [vmem:[%s87 + $0xa8] sm:$0xff]
    %v110 = vld [vmem:[%s87 + $0xb0] sm:$0xff]
    %v111 = vld [vmem:[%s87 + $0xb8] sm:$0xff]
    %v112 = vld [vmem:[%s87 + $0xc0] sm:$0xff]
    %v113 = vld [vmem:[%s87 + $0xc8] sm:$0xff]
    %v114 = vld [vmem:[%s87 + $0xd0] sm:$0xf]
    %v115 = vld [vmem:[%s87 + $0xd8] sm:$0xf]
    %vm121 = vcmask 1046528
    %v122 = vrot.slane %v54, 1
    %v123 = vrot.slane %v55, 1
    %v124 = vsel %vm121, %v122, %v123
    %v125 = vrot.slane %v56, 1
    %v126 = vsel %vm121, %v123, %v125
    %v127 = vrot.slane %v57, 1
    %v128 = vsel %vm121, %v125, %v127
    %v129 = vrot.slane %v58, 1
    %v130 = vsel %vm121, %v127, %v129
    %vm131 = vcmask 883712
    %v132 = vsel %vm131, %v124, 0
    %v134 = vsel %vm131, %v126, 0
    %v136 = vsel %vm131, %v128, 0
    %v138 = vsel %vm131, %v130, 0
    %vm140 = vcmask 1043456
    %v142 = vsel %vm140, %v114, 0
    %v145 = vsel %vm140, %v115, 0
    %147 = vmatprep.subr.mxu0 0.0
    %148 = vmatpush1.msra.mxu0 0.0
    %149 = vmatprep.subr.mxu0 0.0
    %150 = vmatpush1.msra.mxu0 0.0
    %151 = vmatprep.subr.mxu0 %v145
    %152 = vmatpush1.msra.mxu0 %v142
    %153 = vmatprep.subr.mxu0 %v113
    %154 = vmatpush1.msra.mxu0 %v112
    %155 = vmatprep.subr.mxu0 %v111
    %156 = vmatpush1.msra.mxu0 %v110
    %157 = vmatprep.subr.mxu0 %v109
    %158 = vmatpush1.msra.mxu0 %v108
    %159 = vmatprep.subr.mxu0 %v107
    %160 = vmatpush1.msra.mxu0 %v106
    %161 = vmatprep.subr.mxu0 %v105
    %162 = vmatpush1.msra.mxu0 %v104
    %163 = vmatprep.subr.mxu0 %v103
    %164 = vmatpush1.msra.mxu0 %v102
    %165 = vmatprep.subr.mxu0 %v101
    %166 = vmatpush1.msra.mxu0 %v100
    %167 = vmatprep.subr.mxu0 %v99
    %168 = vmatpush1.msra.mxu0 %v98
    %169 = vmatprep.subr.mxu0 %v97
    %170 = vmatpush1.msra.mxu0 %v96
    %171 = vmatprep.subr.mxu0 %v95
    %172 = vmatpush1.msra.mxu0 %v94
    %173 = vmatprep.subr.mxu0 %v93
    %174 = vmatpush1.msra.mxu0 %v92
    %175 = vmatprep.subr.mxu0 %v91
    %176 = vmatpush1.msra.mxu0 %v90
    %177 = vmatprep.subr.mxu0 %v89
    %178 = vmatpush1.msra.mxu0 %v88
    %179 = vmatprep.subr.mxu0 0.0
    %180 = vmatpush2.msra.mxu0 0.0
    %181 = vmatprep.subr.mxu0 0.0
    %182 = vmatpush2.msra.mxu0 0.0
    %183 = vmatprep.subr.mxu0 0.0
    %184 = vmatpush2.msra.mxu0 0.0
    %185 = vmatprep.subr.mxu0 0.0
    %186 = vmatpush2.msra.mxu0 0.0
    %187 = vmatprep.subr.mxu0 0.0
    %188 = vmatpush2.msra.mxu0 0.0
    %189 = vmatprep.subr.mxu0 0.0
    %190 = vmatpush2.msra.mxu0 0.0
    %191 = vmatprep.subr.mxu0 0.0
    %192 = vmatpush2.msra.mxu0 0.0
    %193 = vmatprep.subr.mxu0 0.0
    %194 = vmatpush2.msra.mxu0 0.0
    %195 = vmatprep.subr.mxu0 0.0
    %196 = vmatpush2.msra.mxu0 0.0
    %197 = vmatprep.subr.mxu0 0.0
    %198 = vmatpush2.msra.mxu0 0.0
    %199 = vmatprep.subr.mxu0 0.0
    %200 = vmatpush2.msra.mxu0 0.0
    %201 = vmatprep.subr.mxu0 0.0
    %202 = vmatpush2.msra.mxu0 0.0
    %203 = vmatprep.subr.mxu0 0.0
    %204 = vmatpush2.msra.mxu0 0.0
    %205 = vmatprep.subr.mxu0 0.0
    %206 = vmatpush2.msra.mxu0 0.0
    %207 = vmatprep.subr.mxu0 0.0
    %208 = vmatpush2.msra.mxu0 0.0
    %209 = vmatprep.subr.mxu0 0.0
    %210 = vmatpush2.msra.mxu0 0.0
    %211 = vmatprep.mubr.f32.mxu0 0.0
    %212 = vmatmul.mubr.f32.gmra.mxu0 %v132
    %v213 = vpop.f32.mrf.mxu0
    %v214 = vadd.f32 0.0, %v213
    %v215 = vpop.f32.mrf.mxu0
    %v216 = vadd.f32 0.0, %v215
    %217 = vmatprep.mubr.f32.mxu0 0.0
    %218 = vmatmul.mubr.f32.gmra.mxu0 %v134
    %v219 = vpop.f32.mrf.mxu0
    %v220 = vadd.f32 0.0, %v219
    %v221 = vpop.f32.mrf.mxu0
    %v222 = vadd.f32 0.0, %v221
    %223 = vmatprep.mubr.f32.mxu0 0.0
    %224 = vmatmul.mubr.f32.gmra.mxu0 %v136
    %v225 = vpop.f32.mrf.mxu0
    %v226 = vadd.f32 0.0, %v225
    %v227 = vpop.f32.mrf.mxu0
    %v228 = vadd.f32 0.0, %v227
    %229 = vmatprep.mubr.f32.mxu0 0.0
    %230 = vmatmul.mubr.f32.gmra.mxu0 %v138
    %v231 = vpop.f32.mrf.mxu0
    %v232 = vadd.f32 0.0, %v231
    %v233 = vpop.f32.mrf.mxu0
    %v234 = vadd.f32 0.0, %v233
    %235 = vdwg.mxu0
    %v236 = vsel %vm131, %v54, 0
    %v238 = vsel %vm131, %v55, 0
    %v240 = vsel %vm131, %v56, 0
    %v242 = vsel %vm131, %v57, 0
    %v245 = vsel %vm140, %v85, 0
    %v248 = vsel %vm140, %v86, 0
    %250 = vmatprep.subr.mxu0 0.0
    %251 = vmatpush1.msra.mxu0 0.0
    %252 = vmatprep.subr.mxu0 0.0
    %253 = vmatpush1.msra.mxu0 0.0
    %254 = vmatprep.subr.mxu0 %v248
    %255 = vmatpush1.msra.mxu0 %v245
    %256 = vmatprep.subr.mxu0 %v84
    %257 = vmatpush1.msra.mxu0 %v83
    %258 = vmatprep.subr.mxu0 %v82
    %259 = vmatpush1.msra.mxu0 %v81
    %260 = vmatprep.subr.mxu0 %v80
    %261 = vmatpush1.msra.mxu0 %v79
    %262 = vmatprep.subr.mxu0 %v78
    %263 = vmatpush1.msra.mxu0 %v77
    %264 = vmatprep.subr.mxu0 %v76
    %265 = vmatpush1.msra.mxu0 %v75
    %266 = vmatprep.subr.mxu0 %v74
    %267 = vmatpush1.msra.mxu0 %v73
    %268 = vmatprep.subr.mxu0 %v72
    %269 = vmatpush1.msra.mxu0 %v71
    %270 = vmatprep.subr.mxu0 %v70
    %271 = vmatpush1.msra.mxu0 %v69
    %272 = vmatprep.subr.mxu0 %v68
    %273 = vmatpush1.msra.mxu0 %v67
    %274 = vmatprep.subr.mxu0 %v66
    %275 = vmatpush1.msra.mxu0 %v65
    %276 = vmatprep.subr.mxu0 %v64
    %277 = vmatpush1.msra.mxu0 %v63
    %278 = vmatprep.subr.mxu0 %v62
    %279 = vmatpush1.msra.mxu0 %v61
    %280 = vmatprep.subr.mxu0 %v60
    %281 = vmatpush1.msra.mxu0 %v59
    %282 = vmatprep.subr.mxu0 0.0
    %283 = vmatpush2.msra.mxu0 0.0
    %284 = vmatprep.subr.mxu0 0.0
    %285 = vmatpush2.msra.mxu0 0.0
    %286 = vmatprep.subr.mxu0 0.0
    %287 = vmatpush2.msra.mxu0 0.0
    %288 = vmatprep.subr.mxu0 0.0
    %289 = vmatpush2.msra.mxu0 0.0
    %290 = vmatprep.subr.mxu0 0.0
    %291 = vmatpush2.msra.mxu0 0.0
    %292 = vmatprep.subr.mxu0 0.0
    %293 = vmatpush2.msra.mxu0 0.0
    %294 = vmatprep.subr.mxu0 0.0
    %295 = vmatpush2.msra.mxu0 0.0
    %296 = vmatprep.subr.mxu0 0.0
    %297 = vmatpush2.msra.mxu0 0.0
    %298 = vmatprep.subr.mxu0 0.0
    %299 = vmatpush2.msra.mxu0 0.0
    %300 = vmatprep.subr.mxu0 0.0
    %301 = vmatpush2.msra.mxu0 0.0
    %302 = vmatprep.subr.mxu0 0.0
    %303 = vmatpush2.msra.mxu0 0.0
    %304 = vmatprep.subr.mxu0 0.0
    %305 = vmatpush2.msra.mxu0 0.0
    %306 = vmatprep.subr.mxu0 0.0
    %307 = vmatpush2.msra.mxu0 0.0
    %308 = vmatprep.subr.mxu0 0.0
    %309 = vmatpush2.msra.mxu0 0.0
    %310 = vmatprep.subr.mxu0 0.0
    %311 = vmatpush2.msra.mxu0 0.0
    %312 = vmatprep.subr.mxu0 0.0
    %313 = vmatpush2.msra.mxu0 0.0
    %314 = vmatprep.mubr.f32.mxu0 0.0
    %315 = vmatmul.mubr.f32.gmra.mxu0 %v236
    %v316 = vpop.f32.mrf.mxu0
    %v317 = vadd.f32 %v214, %v316
    %v318 = vpop.f32.mrf.mxu0
    %v319 = vadd.f32 %v216, %v318
    %320 = vmatprep.mubr.f32.mxu0 0.0
    %321 = vmatmul.mubr.f32.gmra.mxu0 %v238
    %v322 = vpop.f32.mrf.mxu0
    %v323 = vadd.f32 %v220, %v322
    %v324 = vpop.f32.mrf.mxu0
    %v325 = vadd.f32 %v222, %v324
    %326 = vmatprep.mubr.f32.mxu0 0.0
    %327 = vmatmul.mubr.f32.gmra.mxu0 %v240
    %v328 = vpop.f32.mrf.mxu0
    %v329 = vadd.f32 %v226, %v328
    %v330 = vpop.f32.mrf.mxu0
    %v331 = vadd.f32 %v228, %v330
    %332 = vmatprep.mubr.f32.mxu0 0.0
    %333 = vmatmul.mubr.f32.gmra.mxu0 %v242
    %v334 = vpop.f32.mrf.mxu0
    %v335 = vadd.f32 %v232, %v334
    %v336 = vpop.f32.mrf.mxu0
    %v337 = vadd.f32 %v234, %v336
    %338 = vdwg.mxu0
    %s339 = scalar_lea.vmem %s1, 448
    %v340 = vld [vmem:[%s339] sm:$0xff]
    %v341 = vld [vmem:[%s339 + $0x8] sm:$0xff]
    %v342 = vld [vmem:[%s339 + $0x10] sm:$0xff]
    %v343 = vld [vmem:[%s339 + $0x18] sm:$0xff]
    %v344 = vld [vmem:[%s339 + $0x20] sm:$0xff]
    %v345 = vld [vmem:[%s339 + $0x28] sm:$0xff]
    %v346 = vld [vmem:[%s339 + $0x30] sm:$0xff]
    %v347 = vld [vmem:[%s339 + $0x38] sm:$0xff]
    %v348 = vld [vmem:[%s339 + $0x40] sm:$0xff]
    %v349 = vld [vmem:[%s339 + $0x48] sm:$0xff]
    %v350 = vld [vmem:[%s339 + $0x50] sm:$0xff]
    %v351 = vld [vmem:[%s339 + $0x58] sm:$0xff]
    %v352 = vld [vmem:[%s339 + $0x60] sm:$0xff]
    %v353 = vld [vmem:[%s339 + $0x68] sm:$0xff]
    %v354 = vld [vmem:[%s339 + $0x70] sm:$0xff]
    %v355 = vld [vmem:[%s339 + $0x78] sm:$0xff]
    %v356 = vld [vmem:[%s339 + $0x80] sm:$0xff]
    %v357 = vld [vmem:[%s339 + $0x88] sm:$0xff]
    %v358 = vld [vmem:[%s339 + $0x90] sm:$0xff]
    %v359 = vld [vmem:[%s339 + $0x98] sm:$0xff]
    %v360 = vld [vmem:[%s339 + $0xa0] sm:$0xff]
    %v361 = vld [vmem:[%s339 + $0xa8] sm:$0xff]
    %v362 = vld [vmem:[%s339 + $0xb0] sm:$0xff]
    %v363 = vld [vmem:[%s339 + $0xb8] sm:$0xff]
    %v364 = vld [vmem:[%s339 + $0xc0] sm:$0xff]
    %v365 = vld [vmem:[%s339 + $0xc8] sm:$0xff]
    %v366 = vld [vmem:[%s339 + $0xd0] sm:$0xf]
    %v367 = vld [vmem:[%s339 + $0xd8] sm:$0xf]
    %vm368 = vcmask 1045504
    %v369 = vrot.slane %v54, 2
    %v370 = vrot.slane %v55, 2
    %v371 = vsel %vm368, %v369, %v370
    %v372 = vrot.slane %v56, 2
    %v373 = vsel %vm368, %v370, %v372
    %v374 = vrot.slane %v57, 2
    %v375 = vsel %vm368, %v372, %v374
    %v376 = vrot.slane %v58, 2
    %v377 = vsel %vm368, %v374, %v376
    %v378 = vsel %vm131, %v371, 0
    %v380 = vsel %vm131, %v373, 0
    %v382 = vsel %vm131, %v375, 0
    %v384 = vsel %vm131, %v377, 0
    %v387 = vsel %vm140, %v366, 0
    %v390 = vsel %vm140, %v367, 0
    %392 = vmatprep.subr.mxu0 0.0
    %393 = vmatpush1.msra.mxu0 0.0
    %394 = vmatprep.subr.mxu0 0.0
    %395 = vmatpush1.msra.mxu0 0.0
    %396 = vmatprep.subr.mxu0 %v390
    %397 = vmatpush1.msra.mxu0 %v387
    %398 = vmatprep.subr.mxu0 %v365
    %399 = vmatpush1.msra.mxu0 %v364
    %400 = vmatprep.subr.mxu0 %v363
    %401 = vmatpush1.msra.mxu0 %v362
    %402 = vmatprep.subr.mxu0 %v361
    %403 = vmatpush1.msra.mxu0 %v360
    %404 = vmatprep.subr.mxu0 %v359
    %405 = vmatpush1.msra.mxu0 %v358
    %406 = vmatprep.subr.mxu0 %v357
    %407 = vmatpush1.msra.mxu0 %v356
    %408 = vmatprep.subr.mxu0 %v355
    %409 = vmatpush1.msra.mxu0 %v354
    %410 = vmatprep.subr.mxu0 %v353
    %411 = vmatpush1.msra.mxu0 %v352
    %412 = vmatprep.subr.mxu0 %v351
    %413 = vmatpush1.msra.mxu0 %v350
    %414 = vmatprep.subr.mxu0 %v349
    %415 = vmatpush1.msra.mxu0 %v348
    %416 = vmatprep.subr.mxu0 %v347
    %417 = vmatpush1.msra.mxu0 %v346
    %418 = vmatprep.subr.mxu0 %v345
    %419 = vmatpush1.msra.mxu0 %v344
    %420 = vmatprep.subr.mxu0 %v343
    %421 = vmatpush1.msra.mxu0 %v342
    %422 = vmatprep.subr.mxu0 %v341
    %423 = vmatpush1.msra.mxu0 %v340
    %424 = vmatprep.subr.mxu0 0.0
    %425 = vmatpush2.msra.mxu0 0.0
    %426 = vmatprep.subr.mxu0 0.0
    %427 = vmatpush2.msra.mxu0 0.0
    %428 = vmatprep.subr.mxu0 0.0
    %429 = vmatpush2.msra.mxu0 0.0
    %430 = vmatprep.subr.mxu0 0.0
    %431 = vmatpush2.msra.mxu0 0.0
    %432 = vmatprep.subr.mxu0 0.0
    %433 = vmatpush2.msra.mxu0 0.0
    %434 = vmatprep.subr.mxu0 0.0
    %435 = vmatpush2.msra.mxu0 0.0
    %436 = vmatprep.subr.mxu0 0.0
    %437 = vmatpush2.msra.mxu0 0.0
    %438 = vmatprep.subr.mxu0 0.0
    %439 = vmatpush2.msra.mxu0 0.0
    %440 = vmatprep.subr.mxu0 0.0
    %441 = vmatpush2.msra.mxu0 0.0
    %442 = vmatprep.subr.mxu0 0.0
    %443 = vmatpush2.msra.mxu0 0.0
    %444 = vmatprep.subr.mxu0 0.0
    %445 = vmatpush2.msra.mxu0 0.0
    %446 = vmatprep.subr.mxu0 0.0
    %447 = vmatpush2.msra.mxu0 0.0
    %448 = vmatprep.subr.mxu0 0.0
    %449 = vmatpush2.msra.mxu0 0.0
    %450 = vmatprep.subr.mxu0 0.0
    %451 = vmatpush2.msra.mxu0 0.0
    %452 = vmatprep.subr.mxu0 0.0
    %453 = vmatpush2.msra.mxu0 0.0
    %454 = vmatprep.subr.mxu0 0.0
    %455 = vmatpush2.msra.mxu0 0.0
    %456 = vmatprep.mubr.f32.mxu0 0.0
    %457 = vmatmul.mubr.f32.gmra.mxu0 %v378
    %v458 = vpop.f32.mrf.mxu0
    %v459 = vadd.f32 0.0, %v458
    %v460 = vpop.f32.mrf.mxu0
    %v461 = vadd.f32 0.0, %v460
    %462 = vmatprep.mubr.f32.mxu0 0.0
    %463 = vmatmul.mubr.f32.gmra.mxu0 %v380
    %v464 = vpop.f32.mrf.mxu0
    %v465 = vadd.f32 0.0, %v464
    %v466 = vpop.f32.mrf.mxu0
    %v467 = vadd.f32 0.0, %v466
    %468 = vmatprep.mubr.f32.mxu0 0.0
    %469 = vmatmul.mubr.f32.gmra.mxu0 %v382
    %v470 = vpop.f32.mrf.mxu0
    %v471 = vadd.f32 0.0, %v470
    %v472 = vpop.f32.mrf.mxu0
    %v473 = vadd.f32 0.0, %v472
    %474 = vmatprep.mubr.f32.mxu0 0.0
    %475 = vmatmul.mubr.f32.gmra.mxu0 %v384
    %v476 = vpop.f32.mrf.mxu0
    %v477 = vadd.f32 0.0, %v476
    %v478 = vpop.f32.mrf.mxu0
    %v479 = vadd.f32 0.0, %v478
    %480 = vdwg.mxu0
    %v481 = vadd.f32 %v317, %v459
    %v482 = vadd.f32 %v319, %v461
    %v483 = vadd.f32 %v323, %v465
    %v484 = vadd.f32 %v325, %v467
    %v485 = vadd.f32 %v329, %v471
    %v486 = vadd.f32 %v331, %v473
    %v487 = vadd.f32 %v335, %v477
    %v488 = vadd.f32 %v337, %v479
    %s489 = scalar_lea.vmem %s1, 672
    %v490 = vld [vmem:[%s489] sm:$0xff]
    %v491 = vld [vmem:[%s489 + $0x8] sm:$0xff]
    %v492 = vld [vmem:[%s489 + $0x10] sm:$0xff]
    %v493 = vld [vmem:[%s489 + $0x18] sm:$0xff]
    %v494 = vld [vmem:[%s489 + $0x20] sm:$0xff]
    %v495 = vld [vmem:[%s489 + $0x28] sm:$0xff]
    %v496 = vld [vmem:[%s489 + $0x30] sm:$0xff]
    %v497 = vld [vmem:[%s489 + $0x38] sm:$0xff]
    %v498 = vld [vmem:[%s489 + $0x40] sm:$0xff]
    %v499 = vld [vmem:[%s489 + $0x48] sm:$0xff]
    %v500 = vld [vmem:[%s489 + $0x50] sm:$0xff]
    %v501 = vld [vmem:[%s489 + $0x58] sm:$0xff]
    %v502 = vld [vmem:[%s489 + $0x60] sm:$0xff]
    %v503 = vld [vmem:[%s489 + $0x68] sm:$0xff]
    %v504 = vld [vmem:[%s489 + $0x70] sm:$0xff]
    %v505 = vld [vmem:[%s489 + $0x78] sm:$0xff]
    %v506 = vld [vmem:[%s489 + $0x80] sm:$0xff]
    %v507 = vld [vmem:[%s489 + $0x88] sm:$0xff]
    %v508 = vld [vmem:[%s489 + $0x90] sm:$0xff]
    %v509 = vld [vmem:[%s489 + $0x98] sm:$0xff]
    %v510 = vld [vmem:[%s489 + $0xa0] sm:$0xff]
    %v511 = vld [vmem:[%s489 + $0xa8] sm:$0xff]
    %v512 = vld [vmem:[%s489 + $0xb0] sm:$0xff]
    %v513 = vld [vmem:[%s489 + $0xb8] sm:$0xff]
    %v514 = vld [vmem:[%s489 + $0xc0] sm:$0xff]
    %v515 = vld [vmem:[%s489 + $0xc8] sm:$0xff]
    %v516 = vld [vmem:[%s489 + $0xd0] sm:$0xf]
    %v517 = vld [vmem:[%s489 + $0xd8] sm:$0xf]
    %vm518 = vcmask 1044480
    %v519 = vrot.slane %v54, 3
    %v520 = vrot.slane %v55, 3
    %v521 = vsel %vm518, %v519, %v520
    %v522 = vrot.slane %v56, 3
    %v523 = vsel %vm518, %v520, %v522
    %v524 = vrot.slane %v57, 3
    %v525 = vsel %vm518, %v522, %v524
    %v526 = vrot.slane %v58, 3
    %v527 = vsel %vm518, %v524, %v526
    %v528 = vsel %vm131, %v521, 0
    %v530 = vsel %vm131, %v523, 0
    %v532 = vsel %vm131, %v525, 0
    %v534 = vsel %vm131, %v527, 0
    %v537 = vsel %vm140, %v516, 0
    %v540 = vsel %vm140, %v517, 0
    %542 = vmatprep.subr.mxu0 0.0
    %543 = vmatpush1.msra.mxu0 0.0
    %544 = vmatprep.subr.mxu0 0.0
    %545 = vmatpush1.msra.mxu0 0.0
    %546 = vmatprep.subr.mxu0 %v540
    %547 = vmatpush1.msra.mxu0 %v537
    %548 = vmatprep.subr.mxu0 %v515
    %549 = vmatpush1.msra.mxu0 %v514
    %550 = vmatprep.subr.mxu0 %v513
    %551 = vmatpush1.msra.mxu0 %v512
    %552 = vmatprep.subr.mxu0 %v511
    %553 = vmatpush1.msra.mxu0 %v510
    %554 = vmatprep.subr.mxu0 %v509
    %555 = vmatpush1.msra.mxu0 %v508
    %556 = vmatprep.subr.mxu0 %v507
    %557 = vmatpush1.msra.mxu0 %v506
    %558 = vmatprep.subr.mxu0 %v505
    %559 = vmatpush1.msra.mxu0 %v504
    %560 = vmatprep.subr.mxu0 %v503
    %561 = vmatpush1.msra.mxu0 %v502
    %562 = vmatprep.subr.mxu0 %v501
    %563 = vmatpush1.msra.mxu0 %v500
    %564 = vmatprep.subr.mxu0 %v499
    %565 = vmatpush1.msra.mxu0 %v498
    %566 = vmatprep.subr.mxu0 %v497
    %567 = vmatpush1.msra.mxu0 %v496
    %568 = vmatprep.subr.mxu0 %v495
    %569 = vmatpush1.msra.mxu0 %v494
    %570 = vmatprep.subr.mxu0 %v493
    %571 = vmatpush1.msra.mxu0 %v492
    %572 = vmatprep.subr.mxu0 %v491
    %573 = vmatpush1.msra.mxu0 %v490
    %574 = vmatprep.subr.mxu0 0.0
    %575 = vmatpush2.msra.mxu0 0.0
    %576 = vmatprep.subr.mxu0 0.0
    %577 = vmatpush2.msra.mxu0 0.0
    %578 = vmatprep.subr.mxu0 0.0
    %579 = vmatpush2.msra.mxu0 0.0
    %580 = vmatprep.subr.mxu0 0.0
    %581 = vmatpush2.msra.mxu0 0.0
    %582 = vmatprep.subr.mxu0 0.0
    %583 = vmatpush2.msra.mxu0 0.0
    %584 = vmatprep.subr.mxu0 0.0
    %585 = vmatpush2.msra.mxu0 0.0
    %586 = vmatprep.subr.mxu0 0.0
    %587 = vmatpush2.msra.mxu0 0.0
    %588 = vmatprep.subr.mxu0 0.0
    %589 = vmatpush2.msra.mxu0 0.0
    %590 = vmatprep.subr.mxu0 0.0
    %591 = vmatpush2.msra.mxu0 0.0
    %592 = vmatprep.subr.mxu0 0.0
    %593 = vmatpush2.msra.mxu0 0.0
    %594 = vmatprep.subr.mxu0 0.0
    %595 = vmatpush2.msra.mxu0 0.0
    %596 = vmatprep.subr.mxu0 0.0
    %597 = vmatpush2.msra.mxu0 0.0
    %598 = vmatprep.subr.mxu0 0.0
    %599 = vmatpush2.msra.mxu0 0.0
    %600 = vmatprep.subr.mxu0 0.0
    %601 = vmatpush2.msra.mxu0 0.0
    %602 = vmatprep.subr.mxu0 0.0
    %603 = vmatpush2.msra.mxu0 0.0
    %604 = vmatprep.subr.mxu0 0.0
    %605 = vmatpush2.msra.mxu0 0.0
    %606 = vmatprep.mubr.f32.mxu0 0.0
    %607 = vmatmul.mubr.f32.gmra.mxu0 %v528
    %v608 = vpop.f32.mrf.mxu0
    %v609 = vadd.f32 0.0, %v608
    %v610 = vpop.f32.mrf.mxu0
    %v611 = vadd.f32 0.0, %v610
    %612 = vmatprep.mubr.f32.mxu0 0.0
    %613 = vmatmul.mubr.f32.gmra.mxu0 %v530
    %v614 = vpop.f32.mrf.mxu0
    %v615 = vadd.f32 0.0, %v614
    %v616 = vpop.f32.mrf.mxu0
    %v617 = vadd.f32 0.0, %v616
    %618 = vmatprep.mubr.f32.mxu0 0.0
    %619 = vmatmul.mubr.f32.gmra.mxu0 %v532
    %v620 = vpop.f32.mrf.mxu0
    %v621 = vadd.f32 0.0, %v620
    %v622 = vpop.f32.mrf.mxu0
    %v623 = vadd.f32 0.0, %v622
    %624 = vmatprep.mubr.f32.mxu0 0.0
    %625 = vmatmul.mubr.f32.gmra.mxu0 %v534
    %v626 = vpop.f32.mrf.mxu0
    %v627 = vadd.f32 0.0, %v626
    %v628 = vpop.f32.mrf.mxu0
    %v629 = vadd.f32 0.0, %v628
    %630 = vdwg.mxu0
    %v631 = vadd.f32 %v481, %v609
    %v632 = vadd.f32 %v482, %v611
    %v633 = vadd.f32 %v483, %v615
    %v634 = vadd.f32 %v484, %v617
    %v635 = vadd.f32 %v485, %v621
    %v636 = vadd.f32 %v486, %v623
    %v637 = vadd.f32 %v487, %v627
    %v638 = vadd.f32 %v488, %v629
    %s639 = scalar_lea.vmem %s1, 896
    %v640 = vld [vmem:[%s639] sm:$0xff]
    %v641 = vld [vmem:[%s639 + $0x8] sm:$0xff]
    %v642 = vld [vmem:[%s639 + $0x10] sm:$0xff]
    %v643 = vld [vmem:[%s639 + $0x18] sm:$0xff]
    %v644 = vld [vmem:[%s639 + $0x20] sm:$0xff]
    %v645 = vld [vmem:[%s639 + $0x28] sm:$0xff]
    %v646 = vld [vmem:[%s639 + $0x30] sm:$0xff]
    %v647 = vld [vmem:[%s639 + $0x38] sm:$0xff]
    %v648 = vld [vmem:[%s639 + $0x40] sm:$0xff]
    %v649 = vld [vmem:[%s639 + $0x48] sm:$0xff]
    %v650 = vld [vmem:[%s639 + $0x50] sm:$0xff]
    %v651 = vld [vmem:[%s639 + $0x58] sm:$0xff]
    %v652 = vld [vmem:[%s639 + $0x60] sm:$0xff]
    %v653 = vld [vmem:[%s639 + $0x68] sm:$0xff]
    %v654 = vld [vmem:[%s639 + $0x70] sm:$0xff]
    %v655 = vld [vmem:[%s639 + $0x78] sm:$0xff]
    %v656 = vld [vmem:[%s639 + $0x80] sm:$0xff]
    %v657 = vld [vmem:[%s639 + $0x88] sm:$0xff]
    %v658 = vld [vmem:[%s639 + $0x90] sm:$0xff]
    %v659 = vld [vmem:[%s639 + $0x98] sm:$0xff]
    %v660 = vld [vmem:[%s639 + $0xa0] sm:$0xff]
    %v661 = vld [vmem:[%s639 + $0xa8] sm:$0xff]
    %v662 = vld [vmem:[%s639 + $0xb0] sm:$0xff]
    %v663 = vld [vmem:[%s639 + $0xb8] sm:$0xff]
    %v664 = vld [vmem:[%s639 + $0xc0] sm:$0xff]
    %v665 = vld [vmem:[%s639 + $0xc8] sm:$0xff]
    %v666 = vld [vmem:[%s639 + $0xd0] sm:$0xf]
    %v667 = vld [vmem:[%s639 + $0xd8] sm:$0xf]
    %v668 = vrot.slane %v54, 4
    %v669 = vrot.slane %v55, 4
    %v670 = vsel %vm140, %v668, %v669
    %v671 = vrot.slane %v56, 4
    %v672 = vsel %vm140, %v669, %v671
    %v673 = vrot.slane %v57, 4
    %v674 = vsel %vm140, %v671, %v673
    %v675 = vrot.slane %v58, 4
    %v676 = vsel %vm140, %v673, %v675
    %v677 = vsel %vm131, %v670, 0
    %v679 = vsel %vm131, %v672, 0
    %v681 = vsel %vm131, %v674, 0
    %v683 = vsel %vm131, %v676, 0
    %v686 = vsel %vm140, %v666, 0
    %v689 = vsel %vm140, %v667, 0
    %691 = vmatprep.subr.mxu0 0.0
    %692 = vmatpush1.msra.mxu0 0.0
    %693 = vmatprep.subr.mxu0 0.0
    %694 = vmatpush1.msra.mxu0 0.0
    %695 = vmatprep.subr.mxu0 %v689
    %696 = vmatpush1.msra.mxu0 %v686
    %697 = vmatprep.subr.mxu0 %v665
    %698 = vmatpush1.msra.mxu0 %v664
    %699 = vmatprep.subr.mxu0 %v663
    %700 = vmatpush1.msra.mxu0 %v662
    %701 = vmatprep.subr.mxu0 %v661
    %702 = vmatpush1.msra.mxu0 %v660
    %703 = vmatprep.subr.mxu0 %v659
    %704 = vmatpush1.msra.mxu0 %v658
    %705 = vmatprep.subr.mxu0 %v657
    %706 = vmatpush1.msra.mxu0 %v656
    %707 = vmatprep.subr.mxu0 %v655
    %708 = vmatpush1.msra.mxu0 %v654
    %709 = vmatprep.subr.mxu0 %v653
    %710 = vmatpush1.msra.mxu0 %v652
    %711 = vmatprep.subr.mxu0 %v651
    %712 = vmatpush1.msra.mxu0 %v650
    %713 = vmatprep.subr.mxu0 %v649
    %714 = vmatpush1.msra.mxu0 %v648
    %715 = vmatprep.subr.mxu0 %v647
    %716 = vmatpush1.msra.mxu0 %v646
    %717 = vmatprep.subr.mxu0 %v645
    %718 = vmatpush1.msra.mxu0 %v644
    %719 = vmatprep.subr.mxu0 %v643
    %720 = vmatpush1.msra.mxu0 %v642
    %721 = vmatprep.subr.mxu0 %v641
    %722 = vmatpush1.msra.mxu0 %v640
    %723 = vmatprep.subr.mxu0 0.0
    %724 = vmatpush2.msra.mxu0 0.0
    %725 = vmatprep.subr.mxu0 0.0
    %726 = vmatpush2.msra.mxu0 0.0
    %727 = vmatprep.subr.mxu0 0.0
    %728 = vmatpush2.msra.mxu0 0.0
    %729 = vmatprep.subr.mxu0 0.0
    %730 = vmatpush2.msra.mxu0 0.0
    %731 = vmatprep.subr.mxu0 0.0
    %732 = vmatpush2.msra.mxu0 0.0
    %733 = vmatprep.subr.mxu0 0.0
    %734 = vmatpush2.msra.mxu0 0.0
    %735 = vmatprep.subr.mxu0 0.0
    %736 = vmatpush2.msra.mxu0 0.0
    %737 = vmatprep.subr.mxu0 0.0
    %738 = vmatpush2.msra.mxu0 0.0
    %739 = vmatprep.subr.mxu0 0.0
    %740 = vmatpush2.msra.mxu0 0.0
    %741 = vmatprep.subr.mxu0 0.0
    %742 = vmatpush2.msra.mxu0 0.0
    %743 = vmatprep.subr.mxu0 0.0
    %744 = vmatpush2.msra.mxu0 0.0
    %745 = vmatprep.subr.mxu0 0.0
    %746 = vmatpush2.msra.mxu0 0.0
    %747 = vmatprep.subr.mxu0 0.0
    %748 = vmatpush2.msra.mxu0 0.0
    %749 = vmatprep.subr.mxu0 0.0
    %750 = vmatpush2.msra.mxu0 0.0
    %751 = vmatprep.subr.mxu0 0.0
    %752 = vmatpush2.msra.mxu0 0.0
    %753 = vmatprep.subr.mxu0 0.0
    %754 = vmatpush2.msra.mxu0 0.0
    %755 = vmatprep.mubr.f32.mxu0 0.0
    %756 = vmatmul.mubr.f32.gmra.mxu0 %v677
    %v757 = vpop.f32.mrf.mxu0
    %v758 = vadd.f32 0.0, %v757
    %v759 = vpop.f32.mrf.mxu0
    %v760 = vadd.f32 0.0, %v759
    %761 = vmatprep.mubr.f32.mxu0 0.0
    %762 = vmatmul.mubr.f32.gmra.mxu0 %v679
    %v763 = vpop.f32.mrf.mxu0
    %v764 = vadd.f32 0.0, %v763
    %v765 = vpop.f32.mrf.mxu0
    %v766 = vadd.f32 0.0, %v765
    %767 = vmatprep.mubr.f32.mxu0 0.0
    %768 = vmatmul.mubr.f32.gmra.mxu0 %v681
    %v769 = vpop.f32.mrf.mxu0
    %v770 = vadd.f32 0.0, %v769
    %v771 = vpop.f32.mrf.mxu0
    %v772 = vadd.f32 0.0, %v771
    %773 = vmatprep.mubr.f32.mxu0 0.0
    %774 = vmatmul.mubr.f32.gmra.mxu0 %v683
    %v775 = vpop.f32.mrf.mxu0
    %v776 = vadd.f32 0.0, %v775
    %v777 = vpop.f32.mrf.mxu0
    %v778 = vadd.f32 0.0, %v777
    %779 = vdwg.mxu0
    %v780 = vadd.f32 %v631, %v758
    %v781 = vadd.f32 %v632, %v760
    %v782 = vadd.f32 %v633, %v764
    %v783 = vadd.f32 %v634, %v766
    %v784 = vadd.f32 %v635, %v770
    %v785 = vadd.f32 %v636, %v772
    %v786 = vadd.f32 %v637, %v776
    %v787 = vadd.f32 %v638, %v778
    %s788 = scalar_lea.vmem %s0, 40
    %v789 = vld [vmem:[%s788] sm:$0xff]
    %v790 = vld [vmem:[%s788 + $0x8] sm:$0xff]
    %v791 = vld [vmem:[%s788 + $0x10] sm:$0xff]
    %v792 = vld [vmem:[%s788 + $0x18] sm:$0xff]
    %v793 = vld [vmem:[%s788 + $0x20] sm:$0xf]
    %v799 = vrot.slane %v789, 1
    %v800 = vrot.slane %v790, 1
    %v801 = vsel %vm121, %v799, %v800
    %v802 = vrot.slane %v791, 1
    %v803 = vsel %vm121, %v800, %v802
    %v804 = vrot.slane %v792, 1
    %v805 = vsel %vm121, %v802, %v804
    %v806 = vrot.slane %v793, 1
    %v807 = vsel %vm121, %v804, %v806
    %v808 = vsel %vm131, %v801, 0
    %v810 = vsel %vm131, %v803, 0
    %v812 = vsel %vm131, %v805, 0
    %v814 = vsel %vm131, %v807, 0
    %816 = vmatprep.subr.mxu0 0.0
    %817 = vmatpush1.msra.mxu0 0.0
    %818 = vmatprep.subr.mxu0 0.0
    %819 = vmatpush1.msra.mxu0 0.0
    %820 = vmatprep.subr.mxu0 %v145
    %821 = vmatpush1.msra.mxu0 %v142
    %822 = vmatprep.subr.mxu0 %v113
    %823 = vmatpush1.msra.mxu0 %v112
    %824 = vmatprep.subr.mxu0 %v111
    %825 = vmatpush1.msra.mxu0 %v110
    %826 = vmatprep.subr.mxu0 %v109
    %827 = vmatpush1.msra.mxu0 %v108
    %828 = vmatprep.subr.mxu0 %v107
    %829 = vmatpush1.msra.mxu0 %v106
    %830 = vmatprep.subr.mxu0 %v105
    %831 = vmatpush1.msra.mxu0 %v104
    %832 = vmatprep.subr.mxu0 %v103
    %833 = vmatpush1.msra.mxu0 %v102
    %834 = vmatprep.subr.mxu0 %v101
    %835 = vmatpush1.msra.mxu0 %v100
    %836 = vmatprep.subr.mxu0 %v99
    %837 = vmatpush1.msra.mxu0 %v98
    %838 = vmatprep.subr.mxu0 %v97
    %839 = vmatpush1.msra.mxu0 %v96
    %840 = vmatprep.subr.mxu0 %v95
    %841 = vmatpush1.msra.mxu0 %v94
    %842 = vmatprep.subr.mxu0 %v93
    %843 = vmatpush1.msra.mxu0 %v92
    %844 = vmatprep.subr.mxu0 %v91
    %845 = vmatpush1.msra.mxu0 %v90
    %846 = vmatprep.subr.mxu0 %v89
    %847 = vmatpush1.msra.mxu0 %v88
    %848 = vmatprep.subr.mxu0 0.0
    %849 = vmatpush2.msra.mxu0 0.0
    %850 = vmatprep.subr.mxu0 0.0
    %851 = vmatpush2.msra.mxu0 0.0
    %852 = vmatprep.subr.mxu0 0.0
    %853 = vmatpush2.msra.mxu0 0.0
    %854 = vmatprep.subr.mxu0 0.0
    %855 = vmatpush2.msra.mxu0 0.0
    %856 = vmatprep.subr.mxu0 0.0
    %857 = vmatpush2.msra.mxu0 0.0
    %858 = vmatprep.subr.mxu0 0.0
    %859 = vmatpush2.msra.mxu0 0.0
    %860 = vmatprep.subr.mxu0 0.0
    %861 = vmatpush2.msra.mxu0 0.0
    %862 = vmatprep.subr.mxu0 0.0
    %863 = vmatpush2.msra.mxu0 0.0
    %864 = vmatprep.subr.mxu0 0.0
    %865 = vmatpush2.msra.mxu0 0.0
    %866 = vmatprep.subr.mxu0 0.0
    %867 = vmatpush2.msra.mxu0 0.0
    %868 = vmatprep.subr.mxu0 0.0
    %869 = vmatpush2.msra.mxu0 0.0
    %870 = vmatprep.subr.mxu0 0.0
    %871 = vmatpush2.msra.mxu0 0.0
    %872 = vmatprep.subr.mxu0 0.0
    %873 = vmatpush2.msra.mxu0 0.0
    %874 = vmatprep.subr.mxu0 0.0
    %875 = vmatpush2.msra.mxu0 0.0
    %876 = vmatprep.subr.mxu0 0.0
    %877 = vmatpush2.msra.mxu0 0.0
    %878 = vmatprep.subr.mxu0 0.0
    %879 = vmatpush2.msra.mxu0 0.0
    %880 = vmatprep.mubr.f32.mxu0 0.0
    %881 = vmatmul.mubr.f32.gmra.mxu0 %v808
    %v882 = vpop.f32.mrf.mxu0
    %v883 = vadd.f32 0.0, %v882
    %v884 = vpop.f32.mrf.mxu0
    %v885 = vadd.f32 0.0, %v884
    %886 = vmatprep.mubr.f32.mxu0 0.0
    %887 = vmatmul.mubr.f32.gmra.mxu0 %v810
    %v888 = vpop.f32.mrf.mxu0
    %v889 = vadd.f32 0.0, %v888
    %v890 = vpop.f32.mrf.mxu0
    %v891 = vadd.f32 0.0, %v890
    %892 = vmatprep.mubr.f32.mxu0 0.0
    %893 = vmatmul.mubr.f32.gmra.mxu0 %v812
    %v894 = vpop.f32.mrf.mxu0
    %v895 = vadd.f32 0.0, %v894
    %v896 = vpop.f32.mrf.mxu0
    %v897 = vadd.f32 0.0, %v896
    %898 = vmatprep.mubr.f32.mxu0 0.0
    %899 = vmatmul.mubr.f32.gmra.mxu0 %v814
    %v900 = vpop.f32.mrf.mxu0
    %v901 = vadd.f32 0.0, %v900
    %v902 = vpop.f32.mrf.mxu0
    %v903 = vadd.f32 0.0, %v902
    %904 = vdwg.mxu0
    %v905 = vsel %vm131, %v789, 0
    %v907 = vsel %vm131, %v790, 0
    %v909 = vsel %vm131, %v791, 0
    %v911 = vsel %vm131, %v792, 0
    %913 = vmatprep.subr.mxu0 0.0
    %914 = vmatpush1.msra.mxu0 0.0
    %915 = vmatprep.subr.mxu0 0.0
    %916 = vmatpush1.msra.mxu0 0.0
    %917 = vmatprep.subr.mxu0 %v248
    %918 = vmatpush1.msra.mxu0 %v245
    %919 = vmatprep.subr.mxu0 %v84
    %920 = vmatpush1.msra.mxu0 %v83
    %921 = vmatprep.subr.mxu0 %v82
    %922 = vmatpush1.msra.mxu0 %v81
    %923 = vmatprep.subr.mxu0 %v80
    %924 = vmatpush1.msra.mxu0 %v79
    %925 = vmatprep.subr.mxu0 %v78
    %926 = vmatpush1.msra.mxu0 %v77
    %927 = vmatprep.subr.mxu0 %v76
    %928 = vmatpush1.msra.mxu0 %v75
    %929 = vmatprep.subr.mxu0 %v74
    %930 = vmatpush1.msra.mxu0 %v73
    %931 = vmatprep.subr.mxu0 %v72
    %932 = vmatpush1.msra.mxu0 %v71
    %933 = vmatprep.subr.mxu0 %v70
    %934 = vmatpush1.msra.mxu0 %v69
    %935 = vmatprep.subr.mxu0 %v68
    %936 = vmatpush1.msra.mxu0 %v67
    %937 = vmatprep.subr.mxu0 %v66
    %938 = vmatpush1.msra.mxu0 %v65
    %939 = vmatprep.subr.mxu0 %v64
    %940 = vmatpush1.msra.mxu0 %v63
    %941 = vmatprep.subr.mxu0 %v62
    %942 = vmatpush1.msra.mxu0 %v61
    %943 = vmatprep.subr.mxu0 %v60
    %944 = vmatpush1.msra.mxu0 %v59
    %945 = vmatprep.subr.mxu0 0.0
    %946 = vmatpush2.msra.mxu0 0.0
    %947 = vmatprep.subr.mxu0 0.0
    %948 = vmatpush2.msra.mxu0 0.0
    %949 = vmatprep.subr.mxu0 0.0
    %950 = vmatpush2.msra.mxu0 0.0
    %951 = vmatprep.subr.mxu0 0.0
    %952 = vmatpush2.msra.mxu0 0.0
    %953 = vmatprep.subr.mxu0 0.0
    %954 = vmatpush2.msra.mxu0 0.0
    %955 = vmatprep.subr.mxu0 0.0
    %956 = vmatpush2.msra.mxu0 0.0
    %957 = vmatprep.subr.mxu0 0.0
    %958 = vmatpush2.msra.mxu0 0.0
    %959 = vmatprep.subr.mxu0 0.0
    %960 = vmatpush2.msra.mxu0 0.0
    %961 = vmatprep.subr.mxu0 0.0
    %962 = vmatpush2.msra.mxu0 0.0
    %963 = vmatprep.subr.mxu0 0.0
    %964 = vmatpush2.msra.mxu0 0.0
    %965 = vmatprep.subr.mxu0 0.0
    %966 = vmatpush2.msra.mxu0 0.0
    %967 = vmatprep.subr.mxu0 0.0
    %968 = vmatpush2.msra.mxu0 0.0
    %969 = vmatprep.subr.mxu0 0.0
    %970 = vmatpush2.msra.mxu0 0.0
    %971 = vmatprep.subr.mxu0 0.0
    %972 = vmatpush2.msra.mxu0 0.0
    %973 = vmatprep.subr.mxu0 0.0
    %974 = vmatpush2.msra.mxu0 0.0
    %975 = vmatprep.subr.mxu0 0.0
    %976 = vmatpush2.msra.mxu0 0.0
    %977 = vmatprep.mubr.f32.mxu0 0.0
    %978 = vmatmul.mubr.f32.gmra.mxu0 %v905
    %v979 = vpop.f32.mrf.mxu0
    %v980 = vadd.f32 %v883, %v979
    %v981 = vpop.f32.mrf.mxu0
    %v982 = vadd.f32 %v885, %v981
    %983 = vmatprep.mubr.f32.mxu0 0.0
    %984 = vmatmul.mubr.f32.gmra.mxu0 %v907
    %v985 = vpop.f32.mrf.mxu0
    %v986 = vadd.f32 %v889, %v985
    %v987 = vpop.f32.mrf.mxu0
    %v988 = vadd.f32 %v891, %v987
    %989 = vmatprep.mubr.f32.mxu0 0.0
    %990 = vmatmul.mubr.f32.gmra.mxu0 %v909
    %v991 = vpop.f32.mrf.mxu0
    %v992 = vadd.f32 %v895, %v991
    %v993 = vpop.f32.mrf.mxu0
    %v994 = vadd.f32 %v897, %v993
    %995 = vmatprep.mubr.f32.mxu0 0.0
    %996 = vmatmul.mubr.f32.gmra.mxu0 %v911
    %v997 = vpop.f32.mrf.mxu0
    %v998 = vadd.f32 %v901, %v997
    %v999 = vpop.f32.mrf.mxu0
    %v1000 = vadd.f32 %v903, %v999
    %1001 = vdwg.mxu0
    %v1002 = vrot.slane %v789, 2
    %v1003 = vrot.slane %v790, 2
    %v1004 = vsel %vm368, %v1002, %v1003
    %v1005 = vrot.slane %v791, 2
    %v1006 = vsel %vm368, %v1003, %v1005
    %v1007 = vrot.slane %v792, 2
    %v1008 = vsel %vm368, %v1005, %v1007
    %v1009 = vrot.slane %v793, 2
    %v1010 = vsel %vm368, %v1007, %v1009
    %v1011 = vsel %vm131, %v1004, 0
    %v1013 = vsel %vm131, %v1006, 0
    %v1015 = vsel %vm131, %v1008, 0
    %v1017 = vsel %vm131, %v1010, 0
    %1019 = vmatprep.subr.mxu0 0.0
    %1020 = vmatpush1.msra.mxu0 0.0
    %1021 = vmatprep.subr.mxu0 0.0
    %1022 = vmatpush1.msra.mxu0 0.0
    %1023 = vmatprep.subr.mxu0 %v390
    %1024 = vmatpush1.msra.mxu0 %v387
    %1025 = vmatprep.subr.mxu0 %v365
    %1026 = vmatpush1.msra.mxu0 %v364
    %1027 = vmatprep.subr.mxu0 %v363
    %1028 = vmatpush1.msra.mxu0 %v362
    %1029 = vmatprep.subr.mxu0 %v361
    %1030 = vmatpush1.msra.mxu0 %v360
    %1031 = vmatprep.subr.mxu0 %v359
    %1032 = vmatpush1.msra.mxu0 %v358
    %1033 = vmatprep.subr.mxu0 %v357
    %1034 = vmatpush1.msra.mxu0 %v356
    %1035 = vmatprep.subr.mxu0 %v355
    %1036 = vmatpush1.msra.mxu0 %v354
    %1037 = vmatprep.subr.mxu0 %v353
    %1038 = vmatpush1.msra.mxu0 %v352
    %1039 = vmatprep.subr.mxu0 %v351
    %1040 = vmatpush1.msra.mxu0 %v350
    %1041 = vmatprep.subr.mxu0 %v349
    %1042 = vmatpush1.msra.mxu0 %v348
    %1043 = vmatprep.subr.mxu0 %v347
    %1044 = vmatpush1.msra.mxu0 %v346
    %1045 = vmatprep.subr.mxu0 %v345
    %1046 = vmatpush1.msra.mxu0 %v344
    %1047 = vmatprep.subr.mxu0 %v343
    %1048 = vmatpush1.msra.mxu0 %v342
    %1049 = vmatprep.subr.mxu0 %v341
    %1050 = vmatpush1.msra.mxu0 %v340
    %1051 = vmatprep.subr.mxu0 0.0
    %1052 = vmatpush2.msra.mxu0 0.0
    %1053 = vmatprep.subr.mxu0 0.0
    %1054 = vmatpush2.msra.mxu0 0.0
    %1055 = vmatprep.subr.mxu0 0.0
    %1056 = vmatpush2.msra.mxu0 0.0
    %1057 = vmatprep.subr.mxu0 0.0
    %1058 = vmatpush2.msra.mxu0 0.0
    %1059 = vmatprep.subr.mxu0 0.0
    %1060 = vmatpush2.msra.mxu0 0.0
    %1061 = vmatprep.subr.mxu0 0.0
    %1062 = vmatpush2.msra.mxu0 0.0
    %1063 = vmatprep.subr.mxu0 0.0
    %1064 = vmatpush2.msra.mxu0 0.0
    %1065 = vmatprep.subr.mxu0 0.0
    %1066 = vmatpush2.msra.mxu0 0.0
    %1067 = vmatprep.subr.mxu0 0.0
    %1068 = vmatpush2.msra.mxu0 0.0
    %1069 = vmatprep.subr.mxu0 0.0
    %1070 = vmatpush2.msra.mxu0 0.0
    %1071 = vmatprep.subr.mxu0 0.0
    %1072 = vmatpush2.msra.mxu0 0.0
    %1073 = vmatprep.subr.mxu0 0.0
    %1074 = vmatpush2.msra.mxu0 0.0
    %1075 = vmatprep.subr.mxu0 0.0
    %1076 = vmatpush2.msra.mxu0 0.0
    %1077 = vmatprep.subr.mxu0 0.0
    %1078 = vmatpush2.msra.mxu0 0.0
    %1079 = vmatprep.subr.mxu0 0.0
    %1080 = vmatpush2.msra.mxu0 0.0
    %1081 = vmatprep.subr.mxu0 0.0
    %1082 = vmatpush2.msra.mxu0 0.0
    %1083 = vmatprep.mubr.f32.mxu0 0.0
    %1084 = vmatmul.mubr.f32.gmra.mxu0 %v1011
    %v1085 = vpop.f32.mrf.mxu0
    %v1086 = vadd.f32 0.0, %v1085
    %v1087 = vpop.f32.mrf.mxu0
    %v1088 = vadd.f32 0.0, %v1087
    %1089 = vmatprep.mubr.f32.mxu0 0.0
    %1090 = vmatmul.mubr.f32.gmra.mxu0 %v1013
    %v1091 = vpop.f32.mrf.mxu0
    %v1092 = vadd.f32 0.0, %v1091
    %v1093 = vpop.f32.mrf.mxu0
    %v1094 = vadd.f32 0.0, %v1093
    %1095 = vmatprep.mubr.f32.mxu0 0.0
    %1096 = vmatmul.mubr.f32.gmra.mxu0 %v1015
    %v1097 = vpop.f32.mrf.mxu0
    %v1098 = vadd.f32 0.0, %v1097
    %v1099 = vpop.f32.mrf.mxu0
    %v1100 = vadd.f32 0.0, %v1099
    %1101 = vmatprep.mubr.f32.mxu0 0.0
    %1102 = vmatmul.mubr.f32.gmra.mxu0 %v1017
    %v1103 = vpop.f32.mrf.mxu0
    %v1104 = vadd.f32 0.0, %v1103
    %v1105 = vpop.f32.mrf.mxu0
    %v1106 = vadd.f32 0.0, %v1105
    %1107 = vdwg.mxu0
    %v1108 = vadd.f32 %v980, %v1086
    %v1109 = vadd.f32 %v982, %v1088
    %v1110 = vadd.f32 %v986, %v1092
    %v1111 = vadd.f32 %v988, %v1094
    %v1112 = vadd.f32 %v992, %v1098
    %v1113 = vadd.f32 %v994, %v1100
    %v1114 = vadd.f32 %v998, %v1104
    %v1115 = vadd.f32 %v1000, %v1106
    %v1116 = vrot.slane %v789, 3
    %v1117 = vrot.slane %v790, 3
    %v1118 = vsel %vm518, %v1116, %v1117
    %v1119 = vrot.slane %v791, 3
    %v1120 = vsel %vm518, %v1117, %v1119
    %v1121 = vrot.slane %v792, 3
    %v1122 = vsel %vm518, %v1119, %v1121
    %v1123 = vrot.slane %v793, 3
    %v1124 = vsel %vm518, %v1121, %v1123
    %v1125 = vsel %vm131, %v1118, 0
    %v1127 = vsel %vm131, %v1120, 0
    %v1129 = vsel %vm131, %v1122, 0
    %v1131 = vsel %vm131, %v1124, 0
    %1133 = vmatprep.subr.mxu0 0.0
    %1134 = vmatpush1.msra.mxu0 0.0
    %1135 = vmatprep.subr.mxu0 0.0
    %1136 = vmatpush1.msra.mxu0 0.0
    %1137 = vmatprep.subr.mxu0 %v540
    %1138 = vmatpush1.msra.mxu0 %v537
    %1139 = vmatprep.subr.mxu0 %v515
    %1140 = vmatpush1.msra.mxu0 %v514
    %1141 = vmatprep.subr.mxu0 %v513
    %1142 = vmatpush1.msra.mxu0 %v512
    %1143 = vmatprep.subr.mxu0 %v511
    %1144 = vmatpush1.msra.mxu0 %v510
    %1145 = vmatprep.subr.mxu0 %v509
    %1146 = vmatpush1.msra.mxu0 %v508
    %1147 = vmatprep.subr.mxu0 %v507
    %1148 = vmatpush1.msra.mxu0 %v506
    %1149 = vmatprep.subr.mxu0 %v505
    %1150 = vmatpush1.msra.mxu0 %v504
    %1151 = vmatprep.subr.mxu0 %v503
    %1152 = vmatpush1.msra.mxu0 %v502
    %1153 = vmatprep.subr.mxu0 %v501
    %1154 = vmatpush1.msra.mxu0 %v500
    %1155 = vmatprep.subr.mxu0 %v499
    %1156 = vmatpush1.msra.mxu0 %v498
    %1157 = vmatprep.subr.mxu0 %v497
    %1158 = vmatpush1.msra.mxu0 %v496
    %1159 = vmatprep.subr.mxu0 %v495
    %1160 = vmatpush1.msra.mxu0 %v494
    %1161 = vmatprep.subr.mxu0 %v493
    %1162 = vmatpush1.msra.mxu0 %v492
    %1163 = vmatprep.subr.mxu0 %v491
    %1164 = vmatpush1.msra.mxu0 %v490
    %1165 = vmatprep.subr.mxu0 0.0
    %1166 = vmatpush2.msra.mxu0 0.0
    %1167 = vmatprep.subr.mxu0 0.0
    %1168 = vmatpush2.msra.mxu0 0.0
    %1169 = vmatprep.subr.mxu0 0.0
    %1170 = vmatpush2.msra.mxu0 0.0
    %1171 = vmatprep.subr.mxu0 0.0
    %1172 = vmatpush2.msra.mxu0 0.0
    %1173 = vmatprep.subr.mxu0 0.0
    %1174 = vmatpush2.msra.mxu0 0.0
    %1175 = vmatprep.subr.mxu0 0.0
    %1176 = vmatpush2.msra.mxu0 0.0
    %1177 = vmatprep.subr.mxu0 0.0
    %1178 = vmatpush2.msra.mxu0 0.0
    %1179 = vmatprep.subr.mxu0 0.0
    %1180 = vmatpush2.msra.mxu0 0.0
    %1181 = vmatprep.subr.mxu0 0.0
    %1182 = vmatpush2.msra.mxu0 0.0
    %1183 = vmatprep.subr.mxu0 0.0
    %1184 = vmatpush2.msra.mxu0 0.0
    %1185 = vmatprep.subr.mxu0 0.0
    %1186 = vmatpush2.msra.mxu0 0.0
    %1187 = vmatprep.subr.mxu0 0.0
    %1188 = vmatpush2.msra.mxu0 0.0
    %1189 = vmatprep.subr.mxu0 0.0
    %1190 = vmatpush2.msra.mxu0 0.0
    %1191 = vmatprep.subr.mxu0 0.0
    %1192 = vmatpush2.msra.mxu0 0.0
    %1193 = vmatprep.subr.mxu0 0.0
    %1194 = vmatpush2.msra.mxu0 0.0
    %1195 = vmatprep.subr.mxu0 0.0
    %1196 = vmatpush2.msra.mxu0 0.0
    %1197 = vmatprep.mubr.f32.mxu0 0.0
    %1198 = vmatmul.mubr.f32.gmra.mxu0 %v1125
    %v1199 = vpop.f32.mrf.mxu0
    %v1200 = vadd.f32 0.0, %v1199
    %v1201 = vpop.f32.mrf.mxu0
    %v1202 = vadd.f32 0.0, %v1201
    %1203 = vmatprep.mubr.f32.mxu0 0.0
    %1204 = vmatmul.mubr.f32.gmra.mxu0 %v1127
    %v1205 = vpop.f32.mrf.mxu0
    %v1206 = vadd.f32 0.0, %v1205
    %v1207 = vpop.f32.mrf.mxu0
    %v1208 = vadd.f32 0.0, %v1207
    %1209 = vmatprep.mubr.f32.mxu0 0.0
    %1210 = vmatmul.mubr.f32.gmra.mxu0 %v1129
    %v1211 = vpop.f32.mrf.mxu0
    %v1212 = vadd.f32 0.0, %v1211
    %v1213 = vpop.f32.mrf.mxu0
    %v1214 = vadd.f32 0.0, %v1213
    %1215 = vmatprep.mubr.f32.mxu0 0.0
    %1216 = vmatmul.mubr.f32.gmra.mxu0 %v1131
    %v1217 = vpop.f32.mrf.mxu0
    %v1218 = vadd.f32 0.0, %v1217
    %v1219 = vpop.f32.mrf.mxu0
    %v1220 = vadd.f32 0.0, %v1219
    %1221 = vdwg.mxu0
    %v1222 = vadd.f32 %v1108, %v1200
    %v1223 = vadd.f32 %v1109, %v1202
    %v1224 = vadd.f32 %v1110, %v1206
    %v1225 = vadd.f32 %v1111, %v1208
    %v1226 = vadd.f32 %v1112, %v1212
    %v1227 = vadd.f32 %v1113, %v1214
    %v1228 = vadd.f32 %v1114, %v1218
    %v1229 = vadd.f32 %v1115, %v1220
    %v1230 = vrot.slane %v789, 4
    %v1231 = vrot.slane %v790, 4
    %v1232 = vsel %vm140, %v1230, %v1231
    %v1233 = vrot.slane %v791, 4
    %v1234 = vsel %vm140, %v1231, %v1233
    %v1235 = vrot.slane %v792, 4
    %v1236 = vsel %vm140, %v1233, %v1235
    %v1237 = vrot.slane %v793, 4
    %v1238 = vsel %vm140, %v1235, %v1237
    %v1239 = vsel %vm131, %v1232, 0
    %v1241 = vsel %vm131, %v1234, 0
    %v1243 = vsel %vm131, %v1236, 0
    %v1245 = vsel %vm131, %v1238, 0
    %1247 = vmatprep.subr.mxu0 0.0
    %1248 = vmatpush1.msra.mxu0 0.0
    %1249 = vmatprep.subr.mxu0 0.0
    %1250 = vmatpush1.msra.mxu0 0.0
    %1251 = vmatprep.subr.mxu0 %v689
    %1252 = vmatpush1.msra.mxu0 %v686
    %1253 = vmatprep.subr.mxu0 %v665
    %1254 = vmatpush1.msra.mxu0 %v664
    %1255 = vmatprep.subr.mxu0 %v663
    %1256 = vmatpush1.msra.mxu0 %v662
    %1257 = vmatprep.subr.mxu0 %v661
    %1258 = vmatpush1.msra.mxu0 %v660
    %1259 = vmatprep.subr.mxu0 %v659
    %1260 = vmatpush1.msra.mxu0 %v658
    %1261 = vmatprep.subr.mxu0 %v657
    %1262 = vmatpush1.msra.mxu0 %v656
    %1263 = vmatprep.subr.mxu0 %v655
    %1264 = vmatpush1.msra.mxu0 %v654
    %1265 = vmatprep.subr.mxu0 %v653
    %1266 = vmatpush1.msra.mxu0 %v652
    %1267 = vmatprep.subr.mxu0 %v651
    %1268 = vmatpush1.msra.mxu0 %v650
    %1269 = vmatprep.subr.mxu0 %v649
    %1270 = vmatpush1.msra.mxu0 %v648
    %1271 = vmatprep.subr.mxu0 %v647
    %1272 = vmatpush1.msra.mxu0 %v646
    %1273 = vmatprep.subr.mxu0 %v645
    %1274 = vmatpush1.msra.mxu0 %v644
    %1275 = vmatprep.subr.mxu0 %v643
    %1276 = vmatpush1.msra.mxu0 %v642
    %1277 = vmatprep.subr.mxu0 %v641
    %1278 = vmatpush1.msra.mxu0 %v640
    %1279 = vmatprep.subr.mxu0 0.0
    %1280 = vmatpush2.msra.mxu0 0.0
    %1281 = vmatprep.subr.mxu0 0.0
    %1282 = vmatpush2.msra.mxu0 0.0
    %1283 = vmatprep.subr.mxu0 0.0
    %1284 = vmatpush2.msra.mxu0 0.0
    %1285 = vmatprep.subr.mxu0 0.0
    %1286 = vmatpush2.msra.mxu0 0.0
    %1287 = vmatprep.subr.mxu0 0.0
    %1288 = vmatpush2.msra.mxu0 0.0
    %1289 = vmatprep.subr.mxu0 0.0
    %1290 = vmatpush2.msra.mxu0 0.0
    %1291 = vmatprep.subr.mxu0 0.0
    %1292 = vmatpush2.msra.mxu0 0.0
    %1293 = vmatprep.subr.mxu0 0.0
    %1294 = vmatpush2.msra.mxu0 0.0
    %1295 = vmatprep.subr.mxu0 0.0
    %1296 = vmatpush2.msra.mxu0 0.0
    %1297 = vmatprep.subr.mxu0 0.0
    %1298 = vmatpush2.msra.mxu0 0.0
    %1299 = vmatprep.subr.mxu0 0.0
    %1300 = vmatpush2.msra.mxu0 0.0
    %1301 = vmatprep.subr.mxu0 0.0
    %1302 = vmatpush2.msra.mxu0 0.0
    %1303 = vmatprep.subr.mxu0 0.0
    %1304 = vmatpush2.msra.mxu0 0.0
    %1305 = vmatprep.subr.mxu0 0.0
    %1306 = vmatpush2.msra.mxu0 0.0
    %1307 = vmatprep.subr.mxu0 0.0
    %1308 = vmatpush2.msra.mxu0 0.0
    %1309 = vmatprep.subr.mxu0 0.0
    %1310 = vmatpush2.msra.mxu0 0.0
    %1311 = vmatprep.mubr.f32.mxu0 0.0
    %1312 = vmatmul.mubr.f32.gmra.mxu0 %v1239
    %v1313 = vpop.f32.mrf.mxu0
    %v1314 = vadd.f32 0.0, %v1313
    %v1315 = vpop.f32.mrf.mxu0
    %v1316 = vadd.f32 0.0, %v1315
    %1317 = vmatprep.mubr.f32.mxu0 0.0
    %1318 = vmatmul.mubr.f32.gmra.mxu0 %v1241
    %v1319 = vpop.f32.mrf.mxu0
    %v1320 = vadd.f32 0.0, %v1319
    %v1321 = vpop.f32.mrf.mxu0
    %v1322 = vadd.f32 0.0, %v1321
    %1323 = vmatprep.mubr.f32.mxu0 0.0
    %1324 = vmatmul.mubr.f32.gmra.mxu0 %v1243
    %v1325 = vpop.f32.mrf.mxu0
    %v1326 = vadd.f32 0.0, %v1325
    %v1327 = vpop.f32.mrf.mxu0
    %v1328 = vadd.f32 0.0, %v1327
    %1329 = vmatprep.mubr.f32.mxu0 0.0
    %1330 = vmatmul.mubr.f32.gmra.mxu0 %v1245
    %v1331 = vpop.f32.mrf.mxu0
    %v1332 = vadd.f32 0.0, %v1331
    %v1333 = vpop.f32.mrf.mxu0
    %v1334 = vadd.f32 0.0, %v1333
    %1335 = vdwg.mxu0
    %v1336 = vadd.f32 %v1222, %v1314
    %v1337 = vadd.f32 %v1223, %v1316
    %v1338 = vadd.f32 %v1224, %v1320
    %v1339 = vadd.f32 %v1225, %v1322
    %v1340 = vadd.f32 %v1226, %v1326
    %v1341 = vadd.f32 %v1227, %v1328
    %v1342 = vadd.f32 %v1228, %v1332
    %v1343 = vadd.f32 %v1229, %v1334
    %v1344 = vld [vmem:[%s3] sm:$0x1]
    %v1345 = vld [vmem:[%s4] sm:$0x1]
    %v1346 = vld [vmem:[%s7] sm:$0xff]
    %v1347 = vld [vmem:[%s7 + $0x8] sm:$0xff]
    %v1348 = vld [vmem:[%s7 + $0x10] sm:$0xff]
    %v1349 = vld [vmem:[%s7 + $0x18] sm:$0xff]
    %v1350 = vld [vmem:[%s7 + $0x20] sm:$0xff]
    %v1351 = vld [vmem:[%s7 + $0x28] sm:$0xff]
    %v1352 = vld [vmem:[%s7 + $0x30] sm:$0xff]
    %v1353 = vld [vmem:[%s7 + $0x38] sm:$0xff]
    %v1354 = vld [vmem:[%s7 + $0x40] sm:$0xff]
    %v1355 = vld [vmem:[%s7 + $0x48] sm:$0xff]
    %v1356 = vld [vmem:[%s7 + $0x50] sm:$0xff]
    %v1357 = vld [vmem:[%s7 + $0x58] sm:$0xff]
    %v1358 = vld [vmem:[%s7 + $0x60] sm:$0xff]
    %v1359 = vld [vmem:[%s7 + $0x68] sm:$0xff]
    %v1360 = vld [vmem:[%s7 + $0x70] sm:$0xff]
    %v1361 = vld [vmem:[%s7 + $0x78] sm:$0xff]
    %v1362 = vld [vmem:[%s7 + $0x80] sm:$0xff]
    %v1363 = vld [vmem:[%s7 + $0x88] sm:$0xff]
    %v1364 = vld [vmem:[%s7 + $0x90] sm:$0xff]
    %v1365 = vld [vmem:[%s7 + $0x98] sm:$0xff]
    %v1366 = vld [vmem:[%s7 + $0xa0] sm:$0xff]
    %v1367 = vld [vmem:[%s7 + $0xa8] sm:$0xff]
    %v1368 = vld [vmem:[%s7 + $0xb0] sm:$0xff]
    %v1369 = vld [vmem:[%s7 + $0xb8] sm:$0xff]
    %v1370 = vld [vmem:[%s7 + $0xc0] sm:$0xff]
    %v1371 = vld [vmem:[%s7 + $0xc8] sm:$0xff]
    %v1372 = vld [vmem:[%s7 + $0xd0] sm:$0xff]
    %v1373 = vld [vmem:[%s7 + $0xd8] sm:$0xff]
    %v1374 = vld [vmem:[%s7 + $0xe0] sm:$0xff]
    %v1375 = vld [vmem:[%s7 + $0xe8] sm:$0xff]
    %v1376 = vld [vmem:[%s7 + $0xf0] sm:$0xff]
    %v1377 = vld [vmem:[%s7 + $0xf8] sm:$0xff]
    %v1378 = vld [vmem:[%s8] sm:$0xff]
    %v1379 = vld [vmem:[%s8 + $0x8] sm:$0xff]
    %v1380 = vadd.f32 %v780, %v782
    %v1381 = vadd.f32 %v1380, %v784
    %v1382 = vadd.f32 %v1381, %v786
    %v1383 = vadd.f32 %v1382, %v1336
    %v1384 = vadd.f32 %v1383, %v1338
    %v1385 = vadd.f32 %v1384, %v1340
    %v1386 = vadd.f32 %v1385, %v1342
    %v1387 = vrot.slane %v1386, 4
    %v1388 = vadd.f32 %v1386, %v1387
    %v1389 = vrot.slane %v1388, 2
    %v1390 = vadd.f32 %v1388, %v1389
    %v1391 = vrot.slane %v1390, 1
    %v1392 = vadd.f32 %v1390, %v1391
    %v1393 = vadd.f32 %v781, %v783
    %v1394 = vadd.f32 %v1393, %v785
    %v1395 = vadd.f32 %v1394, %v787
    %v1396 = vadd.f32 %v1395, %v1337
    %v1397 = vadd.f32 %v1396, %v1339
    %v1398 = vadd.f32 %v1397, %v1341
    %v1399 = vadd.f32 %v1398, %v1343
    %v1400 = vrot.slane %v1399, 4
    %v1401 = vadd.f32 %v1399, %v1400
    %v1402 = vrot.slane %v1401, 2
    %v1403 = vadd.f32 %v1401, %v1402
    %v1404 = vrot.slane %v1403, 1
    %v1405 = vadd.f32 %v1403, %v1404
    %1406 = vmatprep.subr.mxu0 0.0
    %1407 = vmatpush1.msra.mxu0 %v1361
    %1408 = vmatprep.subr.mxu0 0.0
    %1409 = vmatpush1.msra.mxu0 %v1360
    %1410 = vmatprep.subr.mxu0 0.0
    %1411 = vmatpush1.msra.mxu0 %v1359
    %1412 = vmatprep.subr.mxu0 0.0
    %1413 = vmatpush1.msra.mxu0 %v1358
    %1414 = vmatprep.subr.mxu0 0.0
    %1415 = vmatpush1.msra.mxu0 %v1357
    %1416 = vmatprep.subr.mxu0 0.0
    %1417 = vmatpush1.msra.mxu0 %v1356
    %1418 = vmatprep.subr.mxu0 0.0
    %1419 = vmatpush1.msra.mxu0 %v1355
    %1420 = vmatprep.subr.mxu0 0.0
    %1421 = vmatpush1.msra.mxu0 %v1354
    %1422 = vmatprep.subr.mxu0 0.0
    %1423 = vmatpush1.msra.mxu0 %v1353
    %1424 = vmatprep.subr.mxu0 0.0
    %1425 = vmatpush1.msra.mxu0 %v1352
    %1426 = vmatprep.subr.mxu0 0.0
    %1427 = vmatpush1.msra.mxu0 %v1351
    %1428 = vmatprep.subr.mxu0 0.0
    %1429 = vmatpush1.msra.mxu0 %v1350
    %1430 = vmatprep.subr.mxu0 0.0
    %1431 = vmatpush1.msra.mxu0 %v1349
    %1432 = vmatprep.subr.mxu0 0.0
    %1433 = vmatpush1.msra.mxu0 %v1348
    %1434 = vmatprep.subr.mxu0 0.0
    %1435 = vmatpush1.msra.mxu0 %v1347
    %1436 = vmatprep.subr.mxu0 0.0
    %1437 = vmatpush1.msra.mxu0 %v1346
    %1438 = vmatprep.subr.mxu0 0.0
    %1439 = vmatpush2.msra.mxu0 %v1377
    %1440 = vmatprep.subr.mxu0 0.0
    %1441 = vmatpush2.msra.mxu0 %v1376
    %1442 = vmatprep.subr.mxu0 0.0
    %1443 = vmatpush2.msra.mxu0 %v1375
    %1444 = vmatprep.subr.mxu0 0.0
    %1445 = vmatpush2.msra.mxu0 %v1374
    %1446 = vmatprep.subr.mxu0 0.0
    %1447 = vmatpush2.msra.mxu0 %v1373
    %1448 = vmatprep.subr.mxu0 0.0
    %1449 = vmatpush2.msra.mxu0 %v1372
    %1450 = vmatprep.subr.mxu0 0.0
    %1451 = vmatpush2.msra.mxu0 %v1371
    %1452 = vmatprep.subr.mxu0 0.0
    %1453 = vmatpush2.msra.mxu0 %v1370
    %1454 = vmatprep.subr.mxu0 0.0
    %1455 = vmatpush2.msra.mxu0 %v1369
    %1456 = vmatprep.subr.mxu0 0.0
    %1457 = vmatpush2.msra.mxu0 %v1368
    %1458 = vmatprep.subr.mxu0 0.0
    %1459 = vmatpush2.msra.mxu0 %v1367
    %1460 = vmatprep.subr.mxu0 0.0
    %1461 = vmatpush2.msra.mxu0 %v1366
    %1462 = vmatprep.subr.mxu0 0.0
    %1463 = vmatpush2.msra.mxu0 %v1365
    %1464 = vmatprep.subr.mxu0 0.0
    %1465 = vmatpush2.msra.mxu0 %v1364
    %1466 = vmatprep.subr.mxu0 0.0
    %1467 = vmatpush2.msra.mxu0 %v1363
    %1468 = vmatprep.subr.mxu0 0.0
    %1469 = vmatpush2.msra.mxu0 %v1362
    %1470 = vmatprep.mubr.f32.mxu0 %v1405
    %1471 = vmatmul.mubr.f32.gmra.mxu0 %v1392
    %v1472 = vpop.f32.mrf.mxu0
    %v1473 = vadd.f32 0.0, %v1472
    %v1474 = vpop.f32.mrf.mxu0
    %1475 = vdwg.mxu0
    %v1476 = vmul.f32 %v1473, 0.00048828125
    %vm1477 = vcmask 64512
    %v1479 = vsel %vm1477, %v1476, 0
    %1481 = vmatprep.subr.mxu0 0.0
    %1482 = vmatpush1.msra.mxu0 0.0
    %1483 = vmatprep.subr.mxu0 0.0
    %1484 = vmatpush1.msra.mxu0 0.0
    %1485 = vmatprep.subr.mxu0 0.0
    %1486 = vmatpush1.msra.mxu0 0.0
    %1487 = vmatprep.subr.mxu0 0.0
    %1488 = vmatpush1.msra.mxu0 0.0
    %1489 = vmatprep.subr.mxu0 0.0
    %1490 = vmatpush1.msra.mxu0 0.0
    %1491 = vmatprep.subr.mxu0 0.0
    %1492 = vmatpush1.msra.mxu0 0.0
    %1493 = vmatprep.subr.mxu0 0.0
    %1494 = vmatpush1.msra.mxu0 0.0
    %1495 = vmatprep.subr.mxu0 0.0
    %1496 = vmatpush1.msra.mxu0 0.0
    %1497 = vmatprep.subr.mxu0 0.0
    %1498 = vmatpush1.msra.mxu0 0.0
    %1499 = vmatprep.subr.mxu0 0.0
    %1500 = vmatpush1.msra.mxu0 0.0
    %1501 = vmatprep.subr.mxu0 0.0
    %1502 = vmatpush1.msra.mxu0 0.0
    %1503 = vmatprep.subr.mxu0 0.0
    %1504 = vmatpush1.msra.mxu0 0.0
    %1505 = vmatprep.subr.mxu0 0.0
    %1506 = vmatpush1.msra.mxu0 0.0
    %1507 = vmatprep.subr.mxu0 0.0
    %1508 = vmatpush1.msra.mxu0 0.0
    %1509 = vmatprep.subr.mxu0 0.0
    %1510 = vmatpush1.msra.mxu0 0.0
    %1511 = vmatprep.subr.mxu0 %v1379
    %1512 = vmatpush1.msra.mxu0 %v1378
    %1513 = vmatprep.subr.mxu0 0.0
    %1514 = vmatpush2.msra.mxu0 0.0
    %1515 = vmatprep.subr.mxu0 0.0
    %1516 = vmatpush2.msra.mxu0 0.0
    %1517 = vmatprep.subr.mxu0 0.0
    %1518 = vmatpush2.msra.mxu0 0.0
    %1519 = vmatprep.subr.mxu0 0.0
    %1520 = vmatpush2.msra.mxu0 0.0
    %1521 = vmatprep.subr.mxu0 0.0
    %1522 = vmatpush2.msra.mxu0 0.0
    %1523 = vmatprep.subr.mxu0 0.0
    %1524 = vmatpush2.msra.mxu0 0.0
    %1525 = vmatprep.subr.mxu0 0.0
    %1526 = vmatpush2.msra.mxu0 0.0
    %1527 = vmatprep.subr.mxu0 0.0
    %1528 = vmatpush2.msra.mxu0 0.0
    %1529 = vmatprep.subr.mxu0 0.0
    %1530 = vmatpush2.msra.mxu0 0.0
    %1531 = vmatprep.subr.mxu0 0.0
    %1532 = vmatpush2.msra.mxu0 0.0
    %1533 = vmatprep.subr.mxu0 0.0
    %1534 = vmatpush2.msra.mxu0 0.0
    %1535 = vmatprep.subr.mxu0 0.0
    %1536 = vmatpush2.msra.mxu0 0.0
    %1537 = vmatprep.subr.mxu0 0.0
    %1538 = vmatpush2.msra.mxu0 0.0
    %1539 = vmatprep.subr.mxu0 0.0
    %1540 = vmatpush2.msra.mxu0 0.0
    %1541 = vmatprep.subr.mxu0 0.0
    %1542 = vmatpush2.msra.mxu0 0.0
    %1543 = vmatprep.subr.mxu0 0.0
    %1544 = vmatpush2.msra.mxu0 0.0
    %1545 = vmatprep.mubr.f32.mxu0 0.0
    %1546 = vmatmul.mubr.f32.gmra.mxu0 %v1479
    %v1547 = vpop.f32.mrf.mxu0
    %v1548 = vadd.f32 0.0, %v1547
    %v1549 = vpop.f32.mrf.mxu0
    %v1550 = vadd.f32 0.0, %v1549
    %1551 = vdwg.mxu0
    %v1552 = vlaneseq
    %v1553 = vshrl.u32 %v1552, 7
    %v1554 = vsub.s32 0, %v1553
    %v1555 = vrot.slane %v1548, %v1554
    %v1556 = vlaneseq
    %v1557 = vshrl.u32 %v1556, 7
    %v1558 = vsub.s32 0, %v1557
    %v1559 = vrot.slane %v1550, %v1558
    %v1560 = vsub.f32 %v780, %v1555
    %v1561 = vsub.f32 %v781, %v1559
    %v1562 = vsub.f32 %v782, %v1555
    %v1563 = vsub.f32 %v783, %v1559
    %v1564 = vsub.f32 %v784, %v1555
    %v1565 = vsub.f32 %v785, %v1559
    %v1566 = vsub.f32 %v786, %v1555
    %v1567 = vsub.f32 %v787, %v1559
    %v1568 = vsub.f32 %v1336, %v1555
    %v1569 = vsub.f32 %v1337, %v1559
    %v1570 = vsub.f32 %v1338, %v1555
    %v1571 = vsub.f32 %v1339, %v1559
    %v1572 = vsub.f32 %v1340, %v1555
    %v1573 = vsub.f32 %v1341, %v1559
    %v1574 = vsub.f32 %v1342, %v1555
    %v1575 = vsub.f32 %v1343, %v1559
    %v1576 = vmul.f32 %v1560, %v1560
    %v1577 = vmul.f32 %v1561, %v1561
    %v1578 = vmul.f32 %v1562, %v1562
    %v1579 = vmul.f32 %v1563, %v1563
    %v1580 = vmul.f32 %v1564, %v1564
    %v1581 = vmul.f32 %v1565, %v1565
    %v1582 = vmul.f32 %v1566, %v1566
    %v1583 = vmul.f32 %v1567, %v1567
    %v1584 = vmul.f32 %v1568, %v1568
    %v1585 = vmul.f32 %v1569, %v1569
    %v1586 = vmul.f32 %v1570, %v1570
    %v1587 = vmul.f32 %v1571, %v1571
    %v1588 = vmul.f32 %v1572, %v1572
    %v1589 = vmul.f32 %v1573, %v1573
    %v1590 = vmul.f32 %v1574, %v1574
    %v1591 = vmul.f32 %v1575, %v1575
    %v1592 = vadd.f32 %v1576, %v1578
    %v1593 = vadd.f32 %v1592, %v1580
    %v1594 = vadd.f32 %v1593, %v1582
    %v1595 = vadd.f32 %v1594, %v1584
    %v1596 = vadd.f32 %v1595, %v1586
    %v1597 = vadd.f32 %v1596, %v1588
    %v1598 = vadd.f32 %v1597, %v1590
    %v1599 = vrot.slane %v1598, 4
    %v1600 = vadd.f32 %v1598, %v1599
    %v1601 = vrot.slane %v1600, 2
    %v1602 = vadd.f32 %v1600, %v1601
    %v1603 = vrot.slane %v1602, 1
    %v1604 = vadd.f32 %v1602, %v1603
    %v1605 = vadd.f32 %v1577, %v1579
    %v1606 = vadd.f32 %v1605, %v1581
    %v1607 = vadd.f32 %v1606, %v1583
    %v1608 = vadd.f32 %v1607, %v1585
    %v1609 = vadd.f32 %v1608, %v1587
    %v1610 = vadd.f32 %v1609, %v1589
    %v1611 = vadd.f32 %v1610, %v1591
    %v1612 = vrot.slane %v1611, 4
    %v1613 = vadd.f32 %v1611, %v1612
    %v1614 = vrot.slane %v1613, 2
    %v1615 = vadd.f32 %v1613, %v1614
    %v1616 = vrot.slane %v1615, 1
    %v1617 = vadd.f32 %v1615, %v1616
    %1618 = vmatprep.subr.mxu0 0.0
    %1619 = vmatpush1.msra.mxu0 %v1361
    %1620 = vmatprep.subr.mxu0 0.0
    %1621 = vmatpush1.msra.mxu0 %v1360
    %1622 = vmatprep.subr.mxu0 0.0
    %1623 = vmatpush1.msra.mxu0 %v1359
    %1624 = vmatprep.subr.mxu0 0.0
    %1625 = vmatpush1.msra.mxu0 %v1358
    %1626 = vmatprep.subr.mxu0 0.0
    %1627 = vmatpush1.msra.mxu0 %v1357
    %1628 = vmatprep.subr.mxu0 0.0
    %1629 = vmatpush1.msra.mxu0 %v1356
    %1630 = vmatprep.subr.mxu0 0.0
    %1631 = vmatpush1.msra.mxu0 %v1355
    %1632 = vmatprep.subr.mxu0 0.0
    %1633 = vmatpush1.msra.mxu0 %v1354
    %1634 = vmatprep.subr.mxu0 0.0
    %1635 = vmatpush1.msra.mxu0 %v1353
    %1636 = vmatprep.subr.mxu0 0.0
    %1637 = vmatpush1.msra.mxu0 %v1352
    %1638 = vmatprep.subr.mxu0 0.0
    %1639 = vmatpush1.msra.mxu0 %v1351
    %1640 = vmatprep.subr.mxu0 0.0
    %1641 = vmatpush1.msra.mxu0 %v1350
    %1642 = vmatprep.subr.mxu0 0.0
    %1643 = vmatpush1.msra.mxu0 %v1349
    %1644 = vmatprep.subr.mxu0 0.0
    %1645 = vmatpush1.msra.mxu0 %v1348
    %1646 = vmatprep.subr.mxu0 0.0
    %1647 = vmatpush1.msra.mxu0 %v1347
    %1648 = vmatprep.subr.mxu0 0.0
    %1649 = vmatpush1.msra.mxu0 %v1346
    %1650 = vmatprep.subr.mxu0 0.0
    %1651 = vmatpush2.msra.mxu0 %v1377
    %1652 = vmatprep.subr.mxu0 0.0
    %1653 = vmatpush2.msra.mxu0 %v1376
    %1654 = vmatprep.subr.mxu0 0.0
    %1655 = vmatpush2.msra.mxu0 %v1375
    %1656 = vmatprep.subr.mxu0 0.0
    %1657 = vmatpush2.msra.mxu0 %v1374
    %1658 = vmatprep.subr.mxu0 0.0
    %1659 = vmatpush2.msra.mxu0 %v1373
    %1660 = vmatprep.subr.mxu0 0.0
    %1661 = vmatpush2.msra.mxu0 %v1372
    %1662 = vmatprep.subr.mxu0 0.0
    %1663 = vmatpush2.msra.mxu0 %v1371
    %1664 = vmatprep.subr.mxu0 0.0
    %1665 = vmatpush2.msra.mxu0 %v1370
    %1666 = vmatprep.subr.mxu0 0.0
    %1667 = vmatpush2.msra.mxu0 %v1369
    %1668 = vmatprep.subr.mxu0 0.0
    %1669 = vmatpush2.msra.mxu0 %v1368
    %1670 = vmatprep.subr.mxu0 0.0
    %1671 = vmatpush2.msra.mxu0 %v1367
    %1672 = vmatprep.subr.mxu0 0.0
    %1673 = vmatpush2.msra.mxu0 %v1366
    %1674 = vmatprep.subr.mxu0 0.0
    %1675 = vmatpush2.msra.mxu0 %v1365
    %1676 = vmatprep.subr.mxu0 0.0
    %1677 = vmatpush2.msra.mxu0 %v1364
    %1678 = vmatprep.subr.mxu0 0.0
    %1679 = vmatpush2.msra.mxu0 %v1363
    %1680 = vmatprep.subr.mxu0 0.0
    %1681 = vmatpush2.msra.mxu0 %v1362
    %1682 = vmatprep.mubr.f32.mxu0 %v1617
    %1683 = vmatmul.mubr.f32.gmra.mxu0 %v1604
    %v1684 = vpop.f32.mrf.mxu0
    %v1685 = vadd.f32 0.0, %v1684
    %v1686 = vpop.f32.mrf.mxu0
    %1687 = vdwg.mxu0
    %v1688 = vmul.f32 %v1685, 0.00048828125
    %v1689 = vadd.f32 %v1688, 1e-05
    %v1690 = vrsqrt.pop %v1689
    %v1691 = vmul.f32 %v1344, %v1690
    %v1692 = vmul.f32 %v1476, %v1691
    %v1693 = vsub.f32 %v1345, %v1692
    %v1695 = vsel %vm1477, %v1691, 0
    %1697 = vmatprep.subr.mxu0 0.0
    %1698 = vmatpush1.msra.mxu0 0.0
    %1699 = vmatprep.subr.mxu0 0.0
    %1700 = vmatpush1.msra.mxu0 0.0
    %1701 = vmatprep.subr.mxu0 0.0
    %1702 = vmatpush1.msra.mxu0 0.0
    %1703 = vmatprep.subr.mxu0 0.0
    %1704 = vmatpush1.msra.mxu0 0.0
    %1705 = vmatprep.subr.mxu0 0.0
    %1706 = vmatpush1.msra.mxu0 0.0
    %1707 = vmatprep.subr.mxu0 0.0
    %1708 = vmatpush1.msra.mxu0 0.0
    %1709 = vmatprep.subr.mxu0 0.0
    %1710 = vmatpush1.msra.mxu0 0.0
    %1711 = vmatprep.subr.mxu0 0.0
    %1712 = vmatpush1.msra.mxu0 0.0
    %1713 = vmatprep.subr.mxu0 0.0
    %1714 = vmatpush1.msra.mxu0 0.0
    %1715 = vmatprep.subr.mxu0 0.0
    %1716 = vmatpush1.msra.mxu0 0.0
    %1717 = vmatprep.subr.mxu0 0.0
    %1718 = vmatpush1.msra.mxu0 0.0
    %1719 = vmatprep.subr.mxu0 0.0
    %1720 = vmatpush1.msra.mxu0 0.0
    %1721 = vmatprep.subr.mxu0 0.0
    %1722 = vmatpush1.msra.mxu0 0.0
    %1723 = vmatprep.subr.mxu0 0.0
    %1724 = vmatpush1.msra.mxu0 0.0
    %1725 = vmatprep.subr.mxu0 0.0
    %1726 = vmatpush1.msra.mxu0 0.0
    %1727 = vmatprep.subr.mxu0 %v1379
    %1728 = vmatpush1.msra.mxu0 %v1378
    %1729 = vmatprep.subr.mxu0 0.0
    %1730 = vmatpush2.msra.mxu0 0.0
    %1731 = vmatprep.subr.mxu0 0.0
    %1732 = vmatpush2.msra.mxu0 0.0
    %1733 = vmatprep.subr.mxu0 0.0
    %1734 = vmatpush2.msra.mxu0 0.0
    %1735 = vmatprep.subr.mxu0 0.0
    %1736 = vmatpush2.msra.mxu0 0.0
    %1737 = vmatprep.subr.mxu0 0.0
    %1738 = vmatpush2.msra.mxu0 0.0
    %1739 = vmatprep.subr.mxu0 0.0
    %1740 = vmatpush2.msra.mxu0 0.0
    %1741 = vmatprep.subr.mxu0 0.0
    %1742 = vmatpush2.msra.mxu0 0.0
    %1743 = vmatprep.subr.mxu0 0.0
    %1744 = vmatpush2.msra.mxu0 0.0
    %1745 = vmatprep.subr.mxu0 0.0
    %1746 = vmatpush2.msra.mxu0 0.0
    %1747 = vmatprep.subr.mxu0 0.0
    %1748 = vmatpush2.msra.mxu0 0.0
    %1749 = vmatprep.subr.mxu0 0.0
    %1750 = vmatpush2.msra.mxu0 0.0
    %1751 = vmatprep.subr.mxu0 0.0
    %1752 = vmatpush2.msra.mxu0 0.0
    %1753 = vmatprep.subr.mxu0 0.0
    %1754 = vmatpush2.msra.mxu0 0.0
    %1755 = vmatprep.subr.mxu0 0.0
    %1756 = vmatpush2.msra.mxu0 0.0
    %1757 = vmatprep.subr.mxu0 0.0
    %1758 = vmatpush2.msra.mxu0 0.0
    %1759 = vmatprep.subr.mxu0 0.0
    %1760 = vmatpush2.msra.mxu0 0.0
    %1761 = vmatprep.mubr.f32.mxu0 0.0
    %1762 = vmatmul.mubr.f32.gmra.mxu0 %v1695
    %v1763 = vpop.f32.mrf.mxu0
    %v1764 = vadd.f32 0.0, %v1763
    %v1765 = vpop.f32.mrf.mxu0
    %v1766 = vadd.f32 0.0, %v1765
    %1767 = vdwg.mxu0
    %v1769 = vsel %vm1477, %v1693, 0
    %1771 = vmatprep.subr.mxu0 0.0
    %1772 = vmatpush1.msra.mxu0 0.0
    %1773 = vmatprep.subr.mxu0 0.0
    %1774 = vmatpush1.msra.mxu0 0.0
    %1775 = vmatprep.subr.mxu0 0.0
    %1776 = vmatpush1.msra.mxu0 0.0
    %1777 = vmatprep.subr.mxu0 0.0
    %1778 = vmatpush1.msra.mxu0 0.0
    %1779 = vmatprep.subr.mxu0 0.0
    %1780 = vmatpush1.msra.mxu0 0.0
    %1781 = vmatprep.subr.mxu0 0.0
    %1782 = vmatpush1.msra.mxu0 0.0
    %1783 = vmatprep.subr.mxu0 0.0
    %1784 = vmatpush1.msra.mxu0 0.0
    %1785 = vmatprep.subr.mxu0 0.0
    %1786 = vmatpush1.msra.mxu0 0.0
    %1787 = vmatprep.subr.mxu0 0.0
    %1788 = vmatpush1.msra.mxu0 0.0
    %1789 = vmatprep.subr.mxu0 0.0
    %1790 = vmatpush1.msra.mxu0 0.0
    %1791 = vmatprep.subr.mxu0 0.0
    %1792 = vmatpush1.msra.mxu0 0.0
    %1793 = vmatprep.subr.mxu0 0.0
    %1794 = vmatpush1.msra.mxu0 0.0
    %1795 = vmatprep.subr.mxu0 0.0
    %1796 = vmatpush1.msra.mxu0 0.0
    %1797 = vmatprep.subr.mxu0 0.0
    %1798 = vmatpush1.msra.mxu0 0.0
    %1799 = vmatprep.subr.mxu0 0.0
    %1800 = vmatpush1.msra.mxu0 0.0
    %1801 = vmatprep.subr.mxu0 %v1379
    %1802 = vmatpush1.msra.mxu0 %v1378
    %1803 = vmatprep.subr.mxu0 0.0
    %1804 = vmatpush2.msra.mxu0 0.0
    %1805 = vmatprep.subr.mxu0 0.0
    %1806 = vmatpush2.msra.mxu0 0.0
    %1807 = vmatprep.subr.mxu0 0.0
    %1808 = vmatpush2.msra.mxu0 0.0
    %1809 = vmatprep.subr.mxu0 0.0
    %1810 = vmatpush2.msra.mxu0 0.0
    %1811 = vmatprep.subr.mxu0 0.0
    %1812 = vmatpush2.msra.mxu0 0.0
    %1813 = vmatprep.subr.mxu0 0.0
    %1814 = vmatpush2.msra.mxu0 0.0
    %1815 = vmatprep.subr.mxu0 0.0
    %1816 = vmatpush2.msra.mxu0 0.0
    %1817 = vmatprep.subr.mxu0 0.0
    %1818 = vmatpush2.msra.mxu0 0.0
    %1819 = vmatprep.subr.mxu0 0.0
    %1820 = vmatpush2.msra.mxu0 0.0
    %1821 = vmatprep.subr.mxu0 0.0
    %1822 = vmatpush2.msra.mxu0 0.0
    %1823 = vmatprep.subr.mxu0 0.0
    %1824 = vmatpush2.msra.mxu0 0.0
    %1825 = vmatprep.subr.mxu0 0.0
    %1826 = vmatpush2.msra.mxu0 0.0
    %1827 = vmatprep.subr.mxu0 0.0
    %1828 = vmatpush2.msra.mxu0 0.0
    %1829 = vmatprep.subr.mxu0 0.0
    %1830 = vmatpush2.msra.mxu0 0.0
    %1831 = vmatprep.subr.mxu0 0.0
    %1832 = vmatpush2.msra.mxu0 0.0
    %1833 = vmatprep.subr.mxu0 0.0
    %1834 = vmatpush2.msra.mxu0 0.0
    %1835 = vmatprep.mubr.f32.mxu0 0.0
    %1836 = vmatmul.mubr.f32.gmra.mxu0 %v1769
    %v1837 = vpop.f32.mrf.mxu0
    %v1838 = vadd.f32 0.0, %v1837
    %v1839 = vpop.f32.mrf.mxu0
    %v1840 = vadd.f32 0.0, %v1839
    %1841 = vdwg.mxu0
    %v1842 = vlaneseq
    %v1843 = vshrl.u32 %v1842, 7
    %v1844 = vsub.s32 0, %v1843
    %v1845 = vrot.slane %v1764, %v1844
    %v1846 = vlaneseq
    %v1847 = vshrl.u32 %v1846, 7
    %v1848 = vsub.s32 0, %v1847
    %v1849 = vrot.slane %v1766, %v1848
    %v1850 = vmul.f32 %v780, %v1845
    %v1851 = vmul.f32 %v781, %v1849
    %v1852 = vmul.f32 %v782, %v1845
    %v1853 = vmul.f32 %v783, %v1849
    %v1854 = vmul.f32 %v784, %v1845
    %v1855 = vmul.f32 %v785, %v1849
    %v1856 = vmul.f32 %v786, %v1845
    %v1857 = vmul.f32 %v787, %v1849
    %v1858 = vmul.f32 %v1336, %v1845
    %v1859 = vmul.f32 %v1337, %v1849
    %v1860 = vmul.f32 %v1338, %v1845
    %v1861 = vmul.f32 %v1339, %v1849
    %v1862 = vmul.f32 %v1340, %v1845
    %v1863 = vmul.f32 %v1341, %v1849
    %v1864 = vmul.f32 %v1342, %v1845
    %v1865 = vmul.f32 %v1343, %v1849
    %v1866 = vlaneseq
    %v1867 = vshrl.u32 %v1866, 7
    %v1868 = vsub.s32 0, %v1867
    %v1869 = vrot.slane %v1838, %v1868
    %v1870 = vlaneseq
    %v1871 = vshrl.u32 %v1870, 7
    %v1872 = vsub.s32 0, %v1871
    %v1873 = vrot.slane %v1840, %v1872
    %v1874 = vadd.f32 %v1850, %v1869
    %v1875 = vadd.f32 %v1851, %v1873
    %v1876 = vadd.f32 %v1852, %v1869
    %v1877 = vadd.f32 %v1853, %v1873
    %v1878 = vadd.f32 %v1854, %v1869
    %v1879 = vadd.f32 %v1855, %v1873
    %v1880 = vadd.f32 %v1856, %v1869
    %v1881 = vadd.f32 %v1857, %v1873
    %v1882 = vadd.f32 %v1858, %v1869
    %v1883 = vadd.f32 %v1859, %v1873
    %v1884 = vadd.f32 %v1860, %v1869
    %v1885 = vadd.f32 %v1861, %v1873
    %v1886 = vadd.f32 %v1862, %v1869
    %v1887 = vadd.f32 %v1863, %v1873
    %v1888 = vadd.f32 %v1864, %v1869
    %v1889 = vadd.f32 %v1865, %v1873
    %v1890 = vmax.f32 %v1874, 0.0
    %v1891 = vmax.f32 %v1875, 0.0
    %v1892 = vmax.f32 %v1876, 0.0
    %v1893 = vmax.f32 %v1877, 0.0
    %v1894 = vmax.f32 %v1878, 0.0
    %v1895 = vmax.f32 %v1879, 0.0
    %v1896 = vmax.f32 %v1880, 0.0
    %v1897 = vmax.f32 %v1881, 0.0
    %v1898 = vmax.f32 %v1882, 0.0
    %v1899 = vmax.f32 %v1883, 0.0
    %v1900 = vmax.f32 %v1884, 0.0
    %v1901 = vmax.f32 %v1885, 0.0
    %v1902 = vmax.f32 %v1886, 0.0
    %v1903 = vmax.f32 %v1887, 0.0
    %v1904 = vmax.f32 %v1888, 0.0
    %v1905 = vmax.f32 %v1889, 0.0
    %v1906 = vld [vmem:[%s11] sm:$0xff]
    %v1907 = vld [vmem:[%s11 + $0x8] sm:$0xff]
    %v1916 = vrot.slane %v1890, 1
    %v1917 = vrot.slane %v1892, 1
    %v1918 = vsel %vm121, %v1916, %v1917
    %v1919 = vrot.slane %v1891, 1
    %v1920 = vrot.slane %v1893, 1
    %v1921 = vsel %vm121, %v1919, %v1920
    %v1922 = vrot.slane %v1894, 1
    %v1923 = vsel %vm121, %v1917, %v1922
    %v1924 = vrot.slane %v1895, 1
    %v1925 = vsel %vm121, %v1920, %v1924
    %v1926 = vrot.slane %v1896, 1
    %v1927 = vsel %vm121, %v1922, %v1926
    %v1928 = vrot.slane %v1897, 1
    %v1929 = vsel %vm121, %v1924, %v1928
    %v1938 = vsel %vm121, %v1926, 0.0
    %v1939 = vsel %vm121, %v1928, 0.0
    %vm1940 = vcmask 1040384
    %v1941 = vrot.slane %v1890, 7
    %v1942 = vrot.slane %v1891, 7
    %v1943 = vrot.slane %v1892, 7
    %v1944 = vsel %vm1940, %v1941, %v1943
    %v1945 = vrot.slane %v1893, 7
    %v1946 = vsel %vm1940, %v1942, %v1945
    %v1947 = vrot.slane %v1894, 7
    %v1948 = vsel %vm1940, %v1943, %v1947
    %v1949 = vrot.slane %v1895, 7
    %v1950 = vsel %vm1940, %v1945, %v1949
    %v1951 = vrot.slane %v1896, 7
    %v1952 = vsel %vm1940, %v1947, %v1951
    %v1953 = vrot.slane %v1897, 7
    %v1954 = vsel %vm1940, %v1949, %v1953
    %v1963 = vsel %vm1940, 0.0, %v1941
    %v1964 = vsel %vm1940, 0.0, %v1942
    %v1965 = vmax.f32 %v1890, %v1918
    %v1966 = vmax.f32 %v1891, %v1921
    %v1967 = vmax.f32 %v1892, %v1923
    %v1968 = vmax.f32 %v1893, %v1925
    %v1969 = vmax.f32 %v1894, %v1927
    %v1970 = vmax.f32 %v1895, %v1929
    %v1971 = vmax.f32 %v1896, %v1938
    %v1972 = vmax.f32 %v1897, %v1939
    %v1973 = vmax.f32 %v1965, %v1963
    %v1974 = vmax.f32 %v1966, %v1964
    %v1975 = vmax.f32 %v1967, %v1944
    %v1976 = vmax.f32 %v1968, %v1946
    %v1977 = vmax.f32 %v1969, %v1948
    %v1978 = vmax.f32 %v1970, %v1950
    %v1979 = vmax.f32 %v1971, %v1952
    %v1980 = vmax.f32 %v1972, %v1954
    %vm1981 = vcmask 261120
    %v1983 = vsel %vm1981, %v1906, 0
    %v1986 = vsel %vm1981, %v1907, 0
    %1988 = vmatprep.subr.mxu0 0.0
    %1989 = vmatpush1.msra.mxu0 0.0
    %1990 = vmatprep.subr.mxu0 0.0
    %1991 = vmatpush1.msra.mxu0 0.0
    %1992 = vmatprep.subr.mxu0 0.0
    %1993 = vmatpush1.msra.mxu0 0.0
    %1994 = vmatprep.subr.mxu0 0.0
    %1995 = vmatpush1.msra.mxu0 0.0
    %1996 = vmatprep.subr.mxu0 0.0
    %1997 = vmatpush1.msra.mxu0 0.0
    %1998 = vmatprep.subr.mxu0 0.0
    %1999 = vmatpush1.msra.mxu0 0.0
    %2000 = vmatprep.subr.mxu0 0.0
    %2001 = vmatpush1.msra.mxu0 0.0
    %2002 = vmatprep.subr.mxu0 0.0
    %2003 = vmatpush1.msra.mxu0 0.0
    %2004 = vmatprep.subr.mxu0 0.0
    %2005 = vmatpush1.msra.mxu0 0.0
    %2006 = vmatprep.subr.mxu0 0.0
    %2007 = vmatpush1.msra.mxu0 0.0
    %2008 = vmatprep.subr.mxu0 0.0
    %2009 = vmatpush1.msra.mxu0 0.0
    %2010 = vmatprep.subr.mxu0 0.0
    %2011 = vmatpush1.msra.mxu0 0.0
    %2012 = vmatprep.subr.mxu0 %v1980
    %2013 = vmatpush1.msra.mxu0 %v1979
    %2014 = vmatprep.subr.mxu0 %v1978
    %2015 = vmatpush1.msra.mxu0 %v1977
    %2016 = vmatprep.subr.mxu0 %v1976
    %2017 = vmatpush1.msra.mxu0 %v1975
    %2018 = vmatprep.subr.mxu0 %v1974
    %2019 = vmatpush1.msra.mxu0 %v1973
    %2020 = vmatprep.subr.mxu0 0.0
    %2021 = vmatpush2.msra.mxu0 0.0
    %2022 = vmatprep.subr.mxu0 0.0
    %2023 = vmatpush2.msra.mxu0 0.0
    %2024 = vmatprep.subr.mxu0 0.0
    %2025 = vmatpush2.msra.mxu0 0.0
    %2026 = vmatprep.subr.mxu0 0.0
    %2027 = vmatpush2.msra.mxu0 0.0
    %2028 = vmatprep.subr.mxu0 0.0
    %2029 = vmatpush2.msra.mxu0 0.0
    %2030 = vmatprep.subr.mxu0 0.0
    %2031 = vmatpush2.msra.mxu0 0.0
    %2032 = vmatprep.subr.mxu0 0.0
    %2033 = vmatpush2.msra.mxu0 0.0
    %2034 = vmatprep.subr.mxu0 0.0
    %2035 = vmatpush2.msra.mxu0 0.0
    %2036 = vmatprep.subr.mxu0 0.0
    %2037 = vmatpush2.msra.mxu0 0.0
    %2038 = vmatprep.subr.mxu0 0.0
    %2039 = vmatpush2.msra.mxu0 0.0
    %2040 = vmatprep.subr.mxu0 0.0
    %2041 = vmatpush2.msra.mxu0 0.0
    %2042 = vmatprep.subr.mxu0 0.0
    %2043 = vmatpush2.msra.mxu0 0.0
    %2044 = vmatprep.subr.mxu0 0.0
    %2045 = vmatpush2.msra.mxu0 0.0
    %2046 = vmatprep.subr.mxu0 0.0
    %2047 = vmatpush2.msra.mxu0 0.0
    %2048 = vmatprep.subr.mxu0 0.0
    %2049 = vmatpush2.msra.mxu0 0.0
    %2050 = vmatprep.subr.mxu0 0.0
    %2051 = vmatpush2.msra.mxu0 0.0
    %2052 = vmatprep.mubr.f32.mxu0 0.0
    %2053 = vmatmul.mubr.f32.gmra.mxu0 %v1983
    %v2054 = vpop.f32.mrf.mxu0
    %v2055 = vadd.f32 0.0, %v2054
    %v2056 = vpop.f32.mrf.mxu0
    %v2057 = vadd.f32 0.0, %v2056
    %2058 = vmatprep.mubr.f32.mxu0 0.0
    %2059 = vmatmul.mubr.f32.gmra.mxu0 %v1986
    %v2060 = vpop.f32.mrf.mxu0
    %v2061 = vadd.f32 0.0, %v2060
    %v2062 = vpop.f32.mrf.mxu0
    %v2063 = vadd.f32 0.0, %v2062
    %2064 = vdwg.mxu0
    %2069 = vrot.lane.b32.xlu0 %v2055, 120
    %v2070 = vpop.permute.xlu0 %2069
    %2071 = vrot.lane.b32.xlu0 %v2057, 120
    %v2072 = vpop.permute.xlu0 %2071
    %2073 = vrot.lane.b32.xlu0 %v2061, 120
    %v2074 = vpop.permute.xlu0 %2073
    %2075 = vrot.lane.b32.xlu0 %v2063, 120
    %v2076 = vpop.permute.xlu0 %2075
    %vm2077 = vcmask 982016
    %v2078 = vsel %vm2077, %v2070, %v2072
    %v2079 = vsel %vm2077, %v2074, %v2076
    %v2084 = vsel %vm2077, %v2072, 0.0
    %v2085 = vsel %vm2077, %v2076, 0.0
    %2086 = vrot.lane.b32.xlu0 %v2055, 8
    %v2087 = vpop.permute.xlu0 %2086
    %2088 = vrot.lane.b32.xlu0 %v2057, 8
    %v2089 = vpop.permute.xlu0 %2088
    %2090 = vrot.lane.b32.xlu0 %v2061, 8
    %v2091 = vpop.permute.xlu0 %2090
    %2092 = vrot.lane.b32.xlu0 %v2063, 8
    %v2093 = vpop.permute.xlu0 %2092
    %v2094 = vsel %vm1477, %v2087, %v2089
    %v2095 = vsel %vm1477, %v2091, %v2093
    %v2100 = vsel %vm1477, 0.0, %v2087
    %v2101 = vsel %vm1477, 0.0, %v2091
    %v2102 = vmax.f32 %v2055, %v2078
    %v2103 = vmax.f32 %v2057, %v2084
    %v2104 = vmax.f32 %v2061, %v2079
    %v2105 = vmax.f32 %v2063, %v2085
    %v2106 = vmax.f32 %v2102, %v2100
    %v2107 = vmax.f32 %v2103, %v2094
    %v2108 = vmax.f32 %v2104, %v2101
    %v2109 = vmax.f32 %v2105, %v2095
    %vm2114 = vcmask 1041408
    %v2115 = vrot.slane %v2106, 6
    %v2116 = vrot.slane %v2107, 6
    %v2117 = vrot.slane %v2108, 6
    %v2118 = vsel %vm2114, %v2115, %v2117
    %v2119 = vrot.slane %v2109, 6
    %v2120 = vsel %vm2114, %v2116, %v2119
    %v2127 = vsel %vm2114, 0.0, %v2115
    %v2128 = vsel %vm2114, 0.0, %v2116
    %v2129 = vsel %vm2114, %v2117, 0.0
    %v2130 = vsel %vm2114, %v2119, 0.0
    %v2131 = vld [vmem:[%s2] sm:$0xff]
    %v2132 = vld [vmem:[%s2 + $0x8] sm:$0xff]
    %v2133 = vld [vmem:[%s2 + $0x10] sm:$0xff]
    %v2134 = vld [vmem:[%s2 + $0x18] sm:$0xff]
    %v2135 = vld [vmem:[%s2 + $0x20] sm:$0xff]
    %v2136 = vld [vmem:[%s2 + $0x28] sm:$0xff]
    %v2137 = vld [vmem:[%s2 + $0x30] sm:$0xff]
    %v2138 = vld [vmem:[%s2 + $0x38] sm:$0xff]
    %v2139 = vld [vmem:[%s2 + $0x40] sm:$0xff]
    %v2140 = vld [vmem:[%s2 + $0x48] sm:$0xff]
    %v2141 = vld [vmem:[%s2 + $0x50] sm:$0xff]
    %v2142 = vld [vmem:[%s2 + $0x58] sm:$0xff]
    %v2143 = vld [vmem:[%s2 + $0x60] sm:$0xff]
    %v2144 = vld [vmem:[%s2 + $0x68] sm:$0xff]
    %v2145 = vld [vmem:[%s2 + $0x70] sm:$0xff]
    %v2146 = vld [vmem:[%s2 + $0x78] sm:$0xff]
    %v2147 = vld [vmem:[%s2 + $0x80] sm:$0xff]
    %v2148 = vld [vmem:[%s2 + $0x88] sm:$0xff]
    %v2149 = vld [vmem:[%s2 + $0x90] sm:$0xff]
    %v2150 = vld [vmem:[%s2 + $0x98] sm:$0xff]
    %v2151 = vld [vmem:[%s2 + $0xa0] sm:$0xff]
    %v2152 = vld [vmem:[%s2 + $0xa8] sm:$0xff]
    %v2153 = vld [vmem:[%s2 + $0xb0] sm:$0xff]
    %v2154 = vld [vmem:[%s2 + $0xb8] sm:$0xff]
    %v2155 = vld [vmem:[%s2 + $0xc0] sm:$0xff]
    %v2156 = vld [vmem:[%s2 + $0xc8] sm:$0xff]
    %v2157 = vld [vmem:[%s2 + $0xd0] sm:$0xff]
    %v2158 = vld [vmem:[%s2 + $0xd8] sm:$0xff]
    %v2159 = vld [vmem:[%s2 + $0xe0] sm:$0xff]
    %v2160 = vld [vmem:[%s2 + $0xe8] sm:$0xff]
    %v2161 = vld [vmem:[%s2 + $0xf0] sm:$0xff]
    %v2162 = vld [vmem:[%s2 + $0xf8] sm:$0xff]
    %v2163 = vld [vmem:[%s2 + $0x100] sm:$0xff]
    %v2164 = vld [vmem:[%s2 + $0x108] sm:$0xff]
    %v2165 = vld [vmem:[%s2 + $0x110] sm:$0xff]
    %v2166 = vld [vmem:[%s2 + $0x118] sm:$0xff]
    %v2167 = vld [vmem:[%s2 + $0x120] sm:$0xff]
    %v2168 = vld [vmem:[%s2 + $0x128] sm:$0xff]
    %v2169 = vld [vmem:[%s2 + $0x130] sm:$0xff]
    %v2170 = vld [vmem:[%s2 + $0x138] sm:$0xff]
    %v2171 = vld [vmem:[%s2 + $0x140] sm:$0xff]
    %v2172 = vld [vmem:[%s2 + $0x148] sm:$0xff]
    %v2173 = vld [vmem:[%s2 + $0x150] sm:$0xff]
    %v2174 = vld [vmem:[%s2 + $0x158] sm:$0xff]
    %v2175 = vld [vmem:[%s2 + $0x160] sm:$0xff]
    %v2176 = vld [vmem:[%s2 + $0x168] sm:$0xff]
    %v2177 = vld [vmem:[%s2 + $0x170] sm:$0xff]
    %v2178 = vld [vmem:[%s2 + $0x178] sm:$0xff]
    %v2179 = vld [vmem:[%s2 + $0x180] sm:$0xff]
    %v2180 = vld [vmem:[%s2 + $0x188] sm:$0xff]
    %v2181 = vld [vmem:[%s2 + $0x190] sm:$0xff]
    %v2182 = vld [vmem:[%s2 + $0x198] sm:$0xff]
    %v2183 = vld [vmem:[%s2 + $0x1a0] sm:$0xff]
    %v2184 = vld [vmem:[%s2 + $0x1a8] sm:$0xff]
    %v2185 = vld [vmem:[%s2 + $0x1b0] sm:$0xff]
    %v2186 = vld [vmem:[%s2 + $0x1b8] sm:$0xff]
    %v2187 = vld [vmem:[%s2 + $0x1c0] sm:$0xff]
    %v2188 = vld [vmem:[%s2 + $0x1c8] sm:$0xff]
    %v2189 = vld [vmem:[%s2 + $0x1d0] sm:$0xff]
    %v2190 = vld [vmem:[%s2 + $0x1d8] sm:$0xff]
    %v2191 = vld [vmem:[%s2 + $0x1e0] sm:$0xff]
    %v2192 = vld [vmem:[%s2 + $0x1e8] sm:$0xff]
    %v2193 = vld [vmem:[%s2 + $0x1f0] sm:$0xff]
    %v2194 = vld [vmem:[%s2 + $0x1f8] sm:$0xff]
    %s2195 = scalar_lea.vmem %s2, 512
    %v2196 = vld [vmem:[%s2195] sm:$0xff]
    %v2197 = vld [vmem:[%s2195 + $0x8] sm:$0xff]
    %v2198 = vld [vmem:[%s2195 + $0x10] sm:$0xff]
    %v2199 = vld [vmem:[%s2195 + $0x18] sm:$0xff]
    %v2200 = vld [vmem:[%s2195 + $0x20] sm:$0xff]
    %v2201 = vld [vmem:[%s2195 + $0x28] sm:$0xff]
    %v2202 = vld [vmem:[%s2195 + $0x30] sm:$0xff]
    %v2203 = vld [vmem:[%s2195 + $0x38] sm:$0xff]
    %v2204 = vld [vmem:[%s2195 + $0x40] sm:$0xff]
    %v2205 = vld [vmem:[%s2195 + $0x48] sm:$0xff]
    %v2206 = vld [vmem:[%s2195 + $0x50] sm:$0xff]
    %v2207 = vld [vmem:[%s2195 + $0x58] sm:$0xff]
    %v2208 = vld [vmem:[%s2195 + $0x60] sm:$0xff]
    %v2209 = vld [vmem:[%s2195 + $0x68] sm:$0xff]
    %v2210 = vld [vmem:[%s2195 + $0x70] sm:$0xff]
    %v2211 = vld [vmem:[%s2195 + $0x78] sm:$0xff]
    %v2212 = vld [vmem:[%s2195 + $0x80] sm:$0xff]
    %v2213 = vld [vmem:[%s2195 + $0x88] sm:$0xff]
    %v2214 = vld [vmem:[%s2195 + $0x90] sm:$0xff]
    %v2215 = vld [vmem:[%s2195 + $0x98] sm:$0xff]
    %v2216 = vld [vmem:[%s2195 + $0xa0] sm:$0xff]
    %v2217 = vld [vmem:[%s2195 + $0xa8] sm:$0xff]
    %v2218 = vld [vmem:[%s2195 + $0xb0] sm:$0xff]
    %v2219 = vld [vmem:[%s2195 + $0xb8] sm:$0xff]
    %v2220 = vld [vmem:[%s2195 + $0xc0] sm:$0xff]
    %v2221 = vld [vmem:[%s2195 + $0xc8] sm:$0xff]
    %v2222 = vld [vmem:[%s2195 + $0xd0] sm:$0xff]
    %v2223 = vld [vmem:[%s2195 + $0xd8] sm:$0xff]
    %v2224 = vld [vmem:[%s2195 + $0xe0] sm:$0xff]
    %v2225 = vld [vmem:[%s2195 + $0xe8] sm:$0xff]
    %v2226 = vld [vmem:[%s2195 + $0xf0] sm:$0xff]
    %v2227 = vld [vmem:[%s2195 + $0xf8] sm:$0xff]
    %v2228 = vld [vmem:[%s2195 + $0x100] sm:$0xff]
    %v2229 = vld [vmem:[%s2195 + $0x108] sm:$0xff]
    %v2230 = vld [vmem:[%s2195 + $0x110] sm:$0xff]
    %v2231 = vld [vmem:[%s2195 + $0x118] sm:$0xff]
    %v2232 = vld [vmem:[%s2195 + $0x120] sm:$0xff]
    %v2233 = vld [vmem:[%s2195 + $0x128] sm:$0xff]
    %v2234 = vld [vmem:[%s2195 + $0x130] sm:$0xff]
    %v2235 = vld [vmem:[%s2195 + $0x138] sm:$0xff]
    %v2236 = vld [vmem:[%s2195 + $0x140] sm:$0xff]
    %v2237 = vld [vmem:[%s2195 + $0x148] sm:$0xff]
    %v2238 = vld [vmem:[%s2195 + $0x150] sm:$0xff]
    %v2239 = vld [vmem:[%s2195 + $0x158] sm:$0xff]
    %v2240 = vld [vmem:[%s2195 + $0x160] sm:$0xff]
    %v2241 = vld [vmem:[%s2195 + $0x168] sm:$0xff]
    %v2242 = vld [vmem:[%s2195 + $0x170] sm:$0xff]
    %v2243 = vld [vmem:[%s2195 + $0x178] sm:$0xff]
    %v2244 = vld [vmem:[%s2195 + $0x180] sm:$0xff]
    %v2245 = vld [vmem:[%s2195 + $0x188] sm:$0xff]
    %v2246 = vld [vmem:[%s2195 + $0x190] sm:$0xff]
    %v2247 = vld [vmem:[%s2195 + $0x198] sm:$0xff]
    %v2248 = vld [vmem:[%s2195 + $0x1a0] sm:$0xff]
    %v2249 = vld [vmem:[%s2195 + $0x1a8] sm:$0xff]
    %v2250 = vld [vmem:[%s2195 + $0x1b0] sm:$0xff]
    %v2251 = vld [vmem:[%s2195 + $0x1b8] sm:$0xff]
    %v2252 = vld [vmem:[%s2195 + $0x1c0] sm:$0xff]
    %v2253 = vld [vmem:[%s2195 + $0x1c8] sm:$0xff]
    %v2254 = vld [vmem:[%s2195 + $0x1d0] sm:$0xff]
    %v2255 = vld [vmem:[%s2195 + $0x1d8] sm:$0xff]
    %v2256 = vld [vmem:[%s2195 + $0x1e0] sm:$0xff]
    %v2257 = vld [vmem:[%s2195 + $0x1e8] sm:$0xff]
    %v2258 = vld [vmem:[%s2195 + $0x1f0] sm:$0xff]
    %v2259 = vld [vmem:[%s2195 + $0x1f8] sm:$0xff]
    %v2264 = vrot.slane %v2127, 1
    %v2265 = vrot.slane %v2118, 1
    %v2266 = vsel %vm121, %v2264, %v2265
    %v2267 = vrot.slane %v2128, 1
    %v2268 = vrot.slane %v2120, 1
    %v2269 = vsel %vm121, %v2267, %v2268
    %v2270 = vrot.slane %v2129, 1
    %v2271 = vsel %vm121, %v2265, %v2270
    %v2272 = vrot.slane %v2130, 1
    %v2273 = vsel %vm121, %v2268, %v2272
    %2278 = vmatprep.subr.mxu0 %v2227
    %2279 = vmatpush1.msra.mxu0 %v2226
    %2280 = vmatprep.subr.mxu0 %v2225
    %2281 = vmatpush1.msra.mxu0 %v2224
    %2282 = vmatprep.subr.mxu0 %v2223
    %2283 = vmatpush1.msra.mxu0 %v2222
    %2284 = vmatprep.subr.mxu0 %v2221
    %2285 = vmatpush1.msra.mxu0 %v2220
    %2286 = vmatprep.subr.mxu0 %v2219
    %2287 = vmatpush1.msra.mxu0 %v2218
    %2288 = vmatprep.subr.mxu0 %v2217
    %2289 = vmatpush1.msra.mxu0 %v2216
    %2290 = vmatprep.subr.mxu0 %v2215
    %2291 = vmatpush1.msra.mxu0 %v2214
    %2292 = vmatprep.subr.mxu0 %v2213
    %2293 = vmatpush1.msra.mxu0 %v2212
    %2294 = vmatprep.subr.mxu0 %v2211
    %2295 = vmatpush1.msra.mxu0 %v2210
    %2296 = vmatprep.subr.mxu0 %v2209
    %2297 = vmatpush1.msra.mxu0 %v2208
    %2298 = vmatprep.subr.mxu0 %v2207
    %2299 = vmatpush1.msra.mxu0 %v2206
    %2300 = vmatprep.subr.mxu0 %v2205
    %2301 = vmatpush1.msra.mxu0 %v2204
    %2302 = vmatprep.subr.mxu0 %v2203
    %2303 = vmatpush1.msra.mxu0 %v2202
    %2304 = vmatprep.subr.mxu0 %v2201
    %2305 = vmatpush1.msra.mxu0 %v2200
    %2306 = vmatprep.subr.mxu0 %v2199
    %2307 = vmatpush1.msra.mxu0 %v2198
    %2308 = vmatprep.subr.mxu0 %v2197
    %2309 = vmatpush1.msra.mxu0 %v2196
    %2310 = vmatprep.subr.mxu0 %v2259
    %2311 = vmatpush2.msra.mxu0 %v2258
    %2312 = vmatprep.subr.mxu0 %v2257
    %2313 = vmatpush2.msra.mxu0 %v2256
    %2314 = vmatprep.subr.mxu0 %v2255
    %2315 = vmatpush2.msra.mxu0 %v2254
    %2316 = vmatprep.subr.mxu0 %v2253
    %2317 = vmatpush2.msra.mxu0 %v2252
    %2318 = vmatprep.subr.mxu0 %v2251
    %2319 = vmatpush2.msra.mxu0 %v2250
    %2320 = vmatprep.subr.mxu0 %v2249
    %2321 = vmatpush2.msra.mxu0 %v2248
    %2322 = vmatprep.subr.mxu0 %v2247
    %2323 = vmatpush2.msra.mxu0 %v2246
    %2324 = vmatprep.subr.mxu0 %v2245
    %2325 = vmatpush2.msra.mxu0 %v2244
    %2326 = vmatprep.subr.mxu0 %v2243
    %2327 = vmatpush2.msra.mxu0 %v2242
    %2328 = vmatprep.subr.mxu0 %v2241
    %2329 = vmatpush2.msra.mxu0 %v2240
    %2330 = vmatprep.subr.mxu0 %v2239
    %2331 = vmatpush2.msra.mxu0 %v2238
    %2332 = vmatprep.subr.mxu0 %v2237
    %2333 = vmatpush2.msra.mxu0 %v2236
    %2334 = vmatprep.subr.mxu0 %v2235
    %2335 = vmatpush2.msra.mxu0 %v2234
    %2336 = vmatprep.subr.mxu0 %v2233
    %2337 = vmatpush2.msra.mxu0 %v2232
    %2338 = vmatprep.subr.mxu0 %v2231
    %2339 = vmatpush2.msra.mxu0 %v2230
    %2340 = vmatprep.subr.mxu0 %v2229
    %2341 = vmatpush2.msra.mxu0 %v2228
    %2342 = vmatprep.mubr.f32.mxu0 %v2269
    %2343 = vmatmul.mubr.f32.gmra.mxu0 %v2266
    %v2344 = vpop.f32.mrf.mxu0
    %v2345 = vadd.f32 0.0, %v2344
    %v2346 = vpop.f32.mrf.mxu0
    %v2347 = vadd.f32 0.0, %v2346
    %2348 = vmatprep.mubr.f32.mxu0 %v2273
    %2349 = vmatmul.mubr.f32.gmra.mxu0 %v2271
    %v2350 = vpop.f32.mrf.mxu0
    %v2351 = vadd.f32 0.0, %v2350
    %v2352 = vpop.f32.mrf.mxu0
    %v2353 = vadd.f32 0.0, %v2352
    %2354 = vdwg.mxu0
    %2355 = vmatprep.subr.mxu0 %v2162
    %2356 = vmatpush1.msra.mxu0 %v2161
    %2357 = vmatprep.subr.mxu0 %v2160
    %2358 = vmatpush1.msra.mxu0 %v2159
    %2359 = vmatprep.subr.mxu0 %v2158
    %2360 = vmatpush1.msra.mxu0 %v2157
    %2361 = vmatprep.subr.mxu0 %v2156
    %2362 = vmatpush1.msra.mxu0 %v2155
    %2363 = vmatprep.subr.mxu0 %v2154
    %2364 = vmatpush1.msra.mxu0 %v2153
    %2365 = vmatprep.subr.mxu0 %v2152
    %2366 = vmatpush1.msra.mxu0 %v2151
    %2367 = vmatprep.subr.mxu0 %v2150
    %2368 = vmatpush1.msra.mxu0 %v2149
    %2369 = vmatprep.subr.mxu0 %v2148
    %2370 = vmatpush1.msra.mxu0 %v2147
    %2371 = vmatprep.subr.mxu0 %v2146
    %2372 = vmatpush1.msra.mxu0 %v2145
    %2373 = vmatprep.subr.mxu0 %v2144
    %2374 = vmatpush1.msra.mxu0 %v2143
    %2375 = vmatprep.subr.mxu0 %v2142
    %2376 = vmatpush1.msra.mxu0 %v2141
    %2377 = vmatprep.subr.mxu0 %v2140
    %2378 = vmatpush1.msra.mxu0 %v2139
    %2379 = vmatprep.subr.mxu0 %v2138
    %2380 = vmatpush1.msra.mxu0 %v2137
    %2381 = vmatprep.subr.mxu0 %v2136
    %2382 = vmatpush1.msra.mxu0 %v2135
    %2383 = vmatprep.subr.mxu0 %v2134
    %2384 = vmatpush1.msra.mxu0 %v2133
    %2385 = vmatprep.subr.mxu0 %v2132
    %2386 = vmatpush1.msra.mxu0 %v2131
    %2387 = vmatprep.subr.mxu0 %v2194
    %2388 = vmatpush2.msra.mxu0 %v2193
    %2389 = vmatprep.subr.mxu0 %v2192
    %2390 = vmatpush2.msra.mxu0 %v2191
    %2391 = vmatprep.subr.mxu0 %v2190
    %2392 = vmatpush2.msra.mxu0 %v2189
    %2393 = vmatprep.subr.mxu0 %v2188
    %2394 = vmatpush2.msra.mxu0 %v2187
    %2395 = vmatprep.subr.mxu0 %v2186
    %2396 = vmatpush2.msra.mxu0 %v2185
    %2397 = vmatprep.subr.mxu0 %v2184
    %2398 = vmatpush2.msra.mxu0 %v2183
    %2399 = vmatprep.subr.mxu0 %v2182
    %2400 = vmatpush2.msra.mxu0 %v2181
    %2401 = vmatprep.subr.mxu0 %v2180
    %2402 = vmatpush2.msra.mxu0 %v2179
    %2403 = vmatprep.subr.mxu0 %v2178
    %2404 = vmatpush2.msra.mxu0 %v2177
    %2405 = vmatprep.subr.mxu0 %v2176
    %2406 = vmatpush2.msra.mxu0 %v2175
    %2407 = vmatprep.subr.mxu0 %v2174
    %2408 = vmatpush2.msra.mxu0 %v2173
    %2409 = vmatprep.subr.mxu0 %v2172
    %2410 = vmatpush2.msra.mxu0 %v2171
    %2411 = vmatprep.subr.mxu0 %v2170
    %2412 = vmatpush2.msra.mxu0 %v2169
    %2413 = vmatprep.subr.mxu0 %v2168
    %2414 = vmatpush2.msra.mxu0 %v2167
    %2415 = vmatprep.subr.mxu0 %v2166
    %2416 = vmatpush2.msra.mxu0 %v2165
    %2417 = vmatprep.subr.mxu0 %v2164
    %2418 = vmatpush2.msra.mxu0 %v2163
    %2419 = vmatprep.mubr.f32.mxu0 %v2128
    %2420 = vmatmul.mubr.f32.gmra.mxu0 %v2127
    %v2421 = vpop.f32.mrf.mxu0
    %v2422 = vadd.f32 %v2345, %v2421
    %v2423 = vpop.f32.mrf.mxu0
    %v2424 = vadd.f32 %v2347, %v2423
    %2425 = vmatprep.mubr.f32.mxu0 %v2120
    %2426 = vmatmul.mubr.f32.gmra.mxu0 %v2118
    %v2427 = vpop.f32.mrf.mxu0
    %v2428 = vadd.f32 %v2351, %v2427
    %v2429 = vpop.f32.mrf.mxu0
    %v2430 = vadd.f32 %v2353, %v2429
    %2431 = vdwg.mxu0
    %s2432 = scalar_lea.vmem %s2, 1024
    %v2433 = vld [vmem:[%s2432] sm:$0xff]
    %v2434 = vld [vmem:[%s2432 + $0x8] sm:$0xff]
    %v2435 = vld [vmem:[%s2432 + $0x10] sm:$0xff]
    %v2436 = vld [vmem:[%s2432 + $0x18] sm:$0xff]
    %v2437 = vld [vmem:[%s2432 + $0x20] sm:$0xff]
    %v2438 = vld [vmem:[%s2432 + $0x28] sm:$0xff]
    %v2439 = vld [vmem:[%s2432 + $0x30] sm:$0xff]
    %v2440 = vld [vmem:[%s2432 + $0x38] sm:$0xff]
    %v2441 = vld [vmem:[%s2432 + $0x40] sm:$0xff]
    %v2442 = vld [vmem:[%s2432 + $0x48] sm:$0xff]
    %v2443 = vld [vmem:[%s2432 + $0x50] sm:$0xff]
    %v2444 = vld [vmem:[%s2432 + $0x58] sm:$0xff]
    %v2445 = vld [vmem:[%s2432 + $0x60] sm:$0xff]
    %v2446 = vld [vmem:[%s2432 + $0x68] sm:$0xff]
    %v2447 = vld [vmem:[%s2432 + $0x70] sm:$0xff]
    %v2448 = vld [vmem:[%s2432 + $0x78] sm:$0xff]
    %v2449 = vld [vmem:[%s2432 + $0x80] sm:$0xff]
    %v2450 = vld [vmem:[%s2432 + $0x88] sm:$0xff]
    %v2451 = vld [vmem:[%s2432 + $0x90] sm:$0xff]
    %v2452 = vld [vmem:[%s2432 + $0x98] sm:$0xff]
    %v2453 = vld [vmem:[%s2432 + $0xa0] sm:$0xff]
    %v2454 = vld [vmem:[%s2432 + $0xa8] sm:$0xff]
    %v2455 = vld [vmem:[%s2432 + $0xb0] sm:$0xff]
    %v2456 = vld [vmem:[%s2432 + $0xb8] sm:$0xff]
    %v2457 = vld [vmem:[%s2432 + $0xc0] sm:$0xff]
    %v2458 = vld [vmem:[%s2432 + $0xc8] sm:$0xff]
    %v2459 = vld [vmem:[%s2432 + $0xd0] sm:$0xff]
    %v2460 = vld [vmem:[%s2432 + $0xd8] sm:$0xff]
    %v2461 = vld [vmem:[%s2432 + $0xe0] sm:$0xff]
    %v2462 = vld [vmem:[%s2432 + $0xe8] sm:$0xff]
    %v2463 = vld [vmem:[%s2432 + $0xf0] sm:$0xff]
    %v2464 = vld [vmem:[%s2432 + $0xf8] sm:$0xff]
    %v2465 = vld [vmem:[%s2432 + $0x100] sm:$0xff]
    %v2466 = vld [vmem:[%s2432 + $0x108] sm:$0xff]
    %v2467 = vld [vmem:[%s2432 + $0x110] sm:$0xff]
    %v2468 = vld [vmem:[%s2432 + $0x118] sm:$0xff]
    %v2469 = vld [vmem:[%s2432 + $0x120] sm:$0xff]
    %v2470 = vld [vmem:[%s2432 + $0x128] sm:$0xff]
    %v2471 = vld [vmem:[%s2432 + $0x130] sm:$0xff]
    %v2472 = vld [vmem:[%s2432 + $0x138] sm:$0xff]
    %v2473 = vld [vmem:[%s2432 + $0x140] sm:$0xff]
    %v2474 = vld [vmem:[%s2432 + $0x148] sm:$0xff]
    %v2475 = vld [vmem:[%s2432 + $0x150] sm:$0xff]
    %v2476 = vld [vmem:[%s2432 + $0x158] sm:$0xff]
    %v2477 = vld [vmem:[%s2432 + $0x160] sm:$0xff]
    %v2478 = vld [vmem:[%s2432 + $0x168] sm:$0xff]
    %v2479 = vld [vmem:[%s2432 + $0x170] sm:$0xff]
    %v2480 = vld [vmem:[%s2432 + $0x178] sm:$0xff]
    %v2481 = vld [vmem:[%s2432 + $0x180] sm:$0xff]
    %v2482 = vld [vmem:[%s2432 + $0x188] sm:$0xff]
    %v2483 = vld [vmem:[%s2432 + $0x190] sm:$0xff]
    %v2484 = vld [vmem:[%s2432 + $0x198] sm:$0xff]
    %v2485 = vld [vmem:[%s2432 + $0x1a0] sm:$0xff]
    %v2486 = vld [vmem:[%s2432 + $0x1a8] sm:$0xff]
    %v2487 = vld [vmem:[%s2432 + $0x1b0] sm:$0xff]
    %v2488 = vld [vmem:[%s2432 + $0x1b8] sm:$0xff]
    %v2489 = vld [vmem:[%s2432 + $0x1c0] sm:$0xff]
    %v2490 = vld [vmem:[%s2432 + $0x1c8] sm:$0xff]
    %v2491 = vld [vmem:[%s2432 + $0x1d0] sm:$0xff]
    %v2492 = vld [vmem:[%s2432 + $0x1d8] sm:$0xff]
    %v2493 = vld [vmem:[%s2432 + $0x1e0] sm:$0xff]
    %v2494 = vld [vmem:[%s2432 + $0x1e8] sm:$0xff]
    %v2495 = vld [vmem:[%s2432 + $0x1f0] sm:$0xff]
    %v2496 = vld [vmem:[%s2432 + $0x1f8] sm:$0xff]
    %v2497 = vrot.slane %v2127, 2
    %v2498 = vrot.slane %v2118, 2
    %v2499 = vsel %vm368, %v2497, %v2498
    %v2500 = vrot.slane %v2128, 2
    %v2501 = vrot.slane %v2120, 2
    %v2502 = vsel %vm368, %v2500, %v2501
    %v2503 = vrot.slane %v2129, 2
    %v2504 = vsel %vm368, %v2498, %v2503
    %v2505 = vrot.slane %v2130, 2
    %v2506 = vsel %vm368, %v2501, %v2505
    %2511 = vmatprep.subr.mxu0 %v2464
    %2512 = vmatpush1.msra.mxu0 %v2463
    %2513 = vmatprep.subr.mxu0 %v2462
    %2514 = vmatpush1.msra.mxu0 %v2461
    %2515 = vmatprep.subr.mxu0 %v2460
    %2516 = vmatpush1.msra.mxu0 %v2459
    %2517 = vmatprep.subr.mxu0 %v2458
    %2518 = vmatpush1.msra.mxu0 %v2457
    %2519 = vmatprep.subr.mxu0 %v2456
    %2520 = vmatpush1.msra.mxu0 %v2455
    %2521 = vmatprep.subr.mxu0 %v2454
    %2522 = vmatpush1.msra.mxu0 %v2453
    %2523 = vmatprep.subr.mxu0 %v2452
    %2524 = vmatpush1.msra.mxu0 %v2451
    %2525 = vmatprep.subr.mxu0 %v2450
    %2526 = vmatpush1.msra.mxu0 %v2449
    %2527 = vmatprep.subr.mxu0 %v2448
    %2528 = vmatpush1.msra.mxu0 %v2447
    %2529 = vmatprep.subr.mxu0 %v2446
    %2530 = vmatpush1.msra.mxu0 %v2445
    %2531 = vmatprep.subr.mxu0 %v2444
    %2532 = vmatpush1.msra.mxu0 %v2443
    %2533 = vmatprep.subr.mxu0 %v2442
    %2534 = vmatpush1.msra.mxu0 %v2441
    %2535 = vmatprep.subr.mxu0 %v2440
    %2536 = vmatpush1.msra.mxu0 %v2439
    %2537 = vmatprep.subr.mxu0 %v2438
    %2538 = vmatpush1.msra.mxu0 %v2437
    %2539 = vmatprep.subr.mxu0 %v2436
    %2540 = vmatpush1.msra.mxu0 %v2435
    %2541 = vmatprep.subr.mxu0 %v2434
    %2542 = vmatpush1.msra.mxu0 %v2433
    %2543 = vmatprep.subr.mxu0 %v2496
    %2544 = vmatpush2.msra.mxu0 %v2495
    %2545 = vmatprep.subr.mxu0 %v2494
    %2546 = vmatpush2.msra.mxu0 %v2493
    %2547 = vmatprep.subr.mxu0 %v2492
    %2548 = vmatpush2.msra.mxu0 %v2491
    %2549 = vmatprep.subr.mxu0 %v2490
    %2550 = vmatpush2.msra.mxu0 %v2489
    %2551 = vmatprep.subr.mxu0 %v2488
    %2552 = vmatpush2.msra.mxu0 %v2487
    %2553 = vmatprep.subr.mxu0 %v2486
    %2554 = vmatpush2.msra.mxu0 %v2485
    %2555 = vmatprep.subr.mxu0 %v2484
    %2556 = vmatpush2.msra.mxu0 %v2483
    %2557 = vmatprep.subr.mxu0 %v2482
    %2558 = vmatpush2.msra.mxu0 %v2481
    %2559 = vmatprep.subr.mxu0 %v2480
    %2560 = vmatpush2.msra.mxu0 %v2479
    %2561 = vmatprep.subr.mxu0 %v2478
    %2562 = vmatpush2.msra.mxu0 %v2477
    %2563 = vmatprep.subr.mxu0 %v2476
    %2564 = vmatpush2.msra.mxu0 %v2475
    %2565 = vmatprep.subr.mxu0 %v2474
    %2566 = vmatpush2.msra.mxu0 %v2473
    %2567 = vmatprep.subr.mxu0 %v2472
    %2568 = vmatpush2.msra.mxu0 %v2471
    %2569 = vmatprep.subr.mxu0 %v2470
    %2570 = vmatpush2.msra.mxu0 %v2469
    %2571 = vmatprep.subr.mxu0 %v2468
    %2572 = vmatpush2.msra.mxu0 %v2467
    %2573 = vmatprep.subr.mxu0 %v2466
    %2574 = vmatpush2.msra.mxu0 %v2465
    %2575 = vmatprep.mubr.f32.mxu0 %v2502
    %2576 = vmatmul.mubr.f32.gmra.mxu0 %v2499
    %v2577 = vpop.f32.mrf.mxu0
    %v2578 = vadd.f32 0.0, %v2577
    %v2579 = vpop.f32.mrf.mxu0
    %v2580 = vadd.f32 0.0, %v2579
    %2581 = vmatprep.mubr.f32.mxu0 %v2506
    %2582 = vmatmul.mubr.f32.gmra.mxu0 %v2504
    %v2583 = vpop.f32.mrf.mxu0
    %v2584 = vadd.f32 0.0, %v2583
    %v2585 = vpop.f32.mrf.mxu0
    %v2586 = vadd.f32 0.0, %v2585
    %2587 = vdwg.mxu0
    %v2588 = vadd.f32 %v2422, %v2578
    %v2589 = vadd.f32 %v2424, %v2580
    %v2590 = vadd.f32 %v2428, %v2584
    %v2591 = vadd.f32 %v2430, %v2586
    %s2592 = scalar_lea.vmem %s2, 1536
    %v2593 = vld [vmem:[%s2592] sm:$0xff]
    %v2594 = vld [vmem:[%s2592 + $0x8] sm:$0xff]
    %v2595 = vld [vmem:[%s2592 + $0x10] sm:$0xff]
    %v2596 = vld [vmem:[%s2592 + $0x18] sm:$0xff]
    %v2597 = vld [vmem:[%s2592 + $0x20] sm:$0xff]
    %v2598 = vld [vmem:[%s2592 + $0x28] sm:$0xff]
    %v2599 = vld [vmem:[%s2592 + $0x30] sm:$0xff]
    %v2600 = vld [vmem:[%s2592 + $0x38] sm:$0xff]
    %v2601 = vld [vmem:[%s2592 + $0x40] sm:$0xff]
    %v2602 = vld [vmem:[%s2592 + $0x48] sm:$0xff]
    %v2603 = vld [vmem:[%s2592 + $0x50] sm:$0xff]
    %v2604 = vld [vmem:[%s2592 + $0x58] sm:$0xff]
    %v2605 = vld [vmem:[%s2592 + $0x60] sm:$0xff]
    %v2606 = vld [vmem:[%s2592 + $0x68] sm:$0xff]
    %v2607 = vld [vmem:[%s2592 + $0x70] sm:$0xff]
    %v2608 = vld [vmem:[%s2592 + $0x78] sm:$0xff]
    %v2609 = vld [vmem:[%s2592 + $0x80] sm:$0xff]
    %v2610 = vld [vmem:[%s2592 + $0x88] sm:$0xff]
    %v2611 = vld [vmem:[%s2592 + $0x90] sm:$0xff]
    %v2612 = vld [vmem:[%s2592 + $0x98] sm:$0xff]
    %v2613 = vld [vmem:[%s2592 + $0xa0] sm:$0xff]
    %v2614 = vld [vmem:[%s2592 + $0xa8] sm:$0xff]
    %v2615 = vld [vmem:[%s2592 + $0xb0] sm:$0xff]
    %v2616 = vld [vmem:[%s2592 + $0xb8] sm:$0xff]
    %v2617 = vld [vmem:[%s2592 + $0xc0] sm:$0xff]
    %v2618 = vld [vmem:[%s2592 + $0xc8] sm:$0xff]
    %v2619 = vld [vmem:[%s2592 + $0xd0] sm:$0xff]
    %v2620 = vld [vmem:[%s2592 + $0xd8] sm:$0xff]
    %v2621 = vld [vmem:[%s2592 + $0xe0] sm:$0xff]
    %v2622 = vld [vmem:[%s2592 + $0xe8] sm:$0xff]
    %v2623 = vld [vmem:[%s2592 + $0xf0] sm:$0xff]
    %v2624 = vld [vmem:[%s2592 + $0xf8] sm:$0xff]
    %v2625 = vld [vmem:[%s2592 + $0x100] sm:$0xff]
    %v2626 = vld [vmem:[%s2592 + $0x108] sm:$0xff]
    %v2627 = vld [vmem:[%s2592 + $0x110] sm:$0xff]
    %v2628 = vld [vmem:[%s2592 + $0x118] sm:$0xff]
    %v2629 = vld [vmem:[%s2592 + $0x120] sm:$0xff]
    %v2630 = vld [vmem:[%s2592 + $0x128] sm:$0xff]
    %v2631 = vld [vmem:[%s2592 + $0x130] sm:$0xff]
    %v2632 = vld [vmem:[%s2592 + $0x138] sm:$0xff]
    %v2633 = vld [vmem:[%s2592 + $0x140] sm:$0xff]
    %v2634 = vld [vmem:[%s2592 + $0x148] sm:$0xff]
    %v2635 = vld [vmem:[%s2592 + $0x150] sm:$0xff]
    %v2636 = vld [vmem:[%s2592 + $0x158] sm:$0xff]
    %v2637 = vld [vmem:[%s2592 + $0x160] sm:$0xff]
    %v2638 = vld [vmem:[%s2592 + $0x168] sm:$0xff]
    %v2639 = vld [vmem:[%s2592 + $0x170] sm:$0xff]
    %v2640 = vld [vmem:[%s2592 + $0x178] sm:$0xff]
    %v2641 = vld [vmem:[%s2592 + $0x180] sm:$0xff]
    %v2642 = vld [vmem:[%s2592 + $0x188] sm:$0xff]
    %v2643 = vld [vmem:[%s2592 + $0x190] sm:$0xff]
    %v2644 = vld [vmem:[%s2592 + $0x198] sm:$0xff]
    %v2645 = vld [vmem:[%s2592 + $0x1a0] sm:$0xff]
    %v2646 = vld [vmem:[%s2592 + $0x1a8] sm:$0xff]
    %v2647 = vld [vmem:[%s2592 + $0x1b0] sm:$0xff]
    %v2648 = vld [vmem:[%s2592 + $0x1b8] sm:$0xff]
    %v2649 = vld [vmem:[%s2592 + $0x1c0] sm:$0xff]
    %v2650 = vld [vmem:[%s2592 + $0x1c8] sm:$0xff]
    %v2651 = vld [vmem:[%s2592 + $0x1d0] sm:$0xff]
    %v2652 = vld [vmem:[%s2592 + $0x1d8] sm:$0xff]
    %v2653 = vld [vmem:[%s2592 + $0x1e0] sm:$0xff]
    %v2654 = vld [vmem:[%s2592 + $0x1e8] sm:$0xff]
    %v2655 = vld [vmem:[%s2592 + $0x1f0] sm:$0xff]
    %v2656 = vld [vmem:[%s2592 + $0x1f8] sm:$0xff]
    %v2657 = vrot.slane %v2127, 3
    %v2658 = vrot.slane %v2118, 3
    %v2659 = vsel %vm518, %v2657, %v2658
    %v2660 = vrot.slane %v2128, 3
    %v2661 = vrot.slane %v2120, 3
    %v2662 = vsel %vm518, %v2660, %v2661
    %v2663 = vrot.slane %v2129, 3
    %v2664 = vsel %vm518, %v2658, %v2663
    %v2665 = vrot.slane %v2130, 3
    %v2666 = vsel %vm518, %v2661, %v2665
    %2671 = vmatprep.subr.mxu0 %v2624
    %2672 = vmatpush1.msra.mxu0 %v2623
    %2673 = vmatprep.subr.mxu0 %v2622
    %2674 = vmatpush1.msra.mxu0 %v2621
    %2675 = vmatprep.subr.mxu0 %v2620
    %2676 = vmatpush1.msra.mxu0 %v2619
    %2677 = vmatprep.subr.mxu0 %v2618
    %2678 = vmatpush1.msra.mxu0 %v2617
    %2679 = vmatprep.subr.mxu0 %v2616
    %2680 = vmatpush1.msra.mxu0 %v2615
    %2681 = vmatprep.subr.mxu0 %v2614
    %2682 = vmatpush1.msra.mxu0 %v2613
    %2683 = vmatprep.subr.mxu0 %v2612
    %2684 = vmatpush1.msra.mxu0 %v2611
    %2685 = vmatprep.subr.mxu0 %v2610
    %2686 = vmatpush1.msra.mxu0 %v2609
    %2687 = vmatprep.subr.mxu0 %v2608
    %2688 = vmatpush1.msra.mxu0 %v2607
    %2689 = vmatprep.subr.mxu0 %v2606
    %2690 = vmatpush1.msra.mxu0 %v2605
    %2691 = vmatprep.subr.mxu0 %v2604
    %2692 = vmatpush1.msra.mxu0 %v2603
    %2693 = vmatprep.subr.mxu0 %v2602
    %2694 = vmatpush1.msra.mxu0 %v2601
    %2695 = vmatprep.subr.mxu0 %v2600
    %2696 = vmatpush1.msra.mxu0 %v2599
    %2697 = vmatprep.subr.mxu0 %v2598
    %2698 = vmatpush1.msra.mxu0 %v2597
    %2699 = vmatprep.subr.mxu0 %v2596
    %2700 = vmatpush1.msra.mxu0 %v2595
    %2701 = vmatprep.subr.mxu0 %v2594
    %2702 = vmatpush1.msra.mxu0 %v2593
    %2703 = vmatprep.subr.mxu0 %v2656
    %2704 = vmatpush2.msra.mxu0 %v2655
    %2705 = vmatprep.subr.mxu0 %v2654
    %2706 = vmatpush2.msra.mxu0 %v2653
    %2707 = vmatprep.subr.mxu0 %v2652
    %2708 = vmatpush2.msra.mxu0 %v2651
    %2709 = vmatprep.subr.mxu0 %v2650
    %2710 = vmatpush2.msra.mxu0 %v2649
    %2711 = vmatprep.subr.mxu0 %v2648
    %2712 = vmatpush2.msra.mxu0 %v2647
    %2713 = vmatprep.subr.mxu0 %v2646
    %2714 = vmatpush2.msra.mxu0 %v2645
    %2715 = vmatprep.subr.mxu0 %v2644
    %2716 = vmatpush2.msra.mxu0 %v2643
    %2717 = vmatprep.subr.mxu0 %v2642
    %2718 = vmatpush2.msra.mxu0 %v2641
    %2719 = vmatprep.subr.mxu0 %v2640
    %2720 = vmatpush2.msra.mxu0 %v2639
    %2721 = vmatprep.subr.mxu0 %v2638
    %2722 = vmatpush2.msra.mxu0 %v2637
    %2723 = vmatprep.subr.mxu0 %v2636
    %2724 = vmatpush2.msra.mxu0 %v2635
    %2725 = vmatprep.subr.mxu0 %v2634
    %2726 = vmatpush2.msra.mxu0 %v2633
    %2727 = vmatprep.subr.mxu0 %v2632
    %2728 = vmatpush2.msra.mxu0 %v2631
    %2729 = vmatprep.subr.mxu0 %v2630
    %2730 = vmatpush2.msra.mxu0 %v2629
    %2731 = vmatprep.subr.mxu0 %v2628
    %2732 = vmatpush2.msra.mxu0 %v2627
    %2733 = vmatprep.subr.mxu0 %v2626
    %2734 = vmatpush2.msra.mxu0 %v2625
    %2735 = vmatprep.mubr.f32.mxu0 %v2662
    %2736 = vmatmul.mubr.f32.gmra.mxu0 %v2659
    %v2737 = vpop.f32.mrf.mxu0
    %v2738 = vadd.f32 0.0, %v2737
    %v2739 = vpop.f32.mrf.mxu0
    %v2740 = vadd.f32 0.0, %v2739
    %2741 = vmatprep.mubr.f32.mxu0 %v2666
    %2742 = vmatmul.mubr.f32.gmra.mxu0 %v2664
    %v2743 = vpop.f32.mrf.mxu0
    %v2744 = vadd.f32 0.0, %v2743
    %v2745 = vpop.f32.mrf.mxu0
    %v2746 = vadd.f32 0.0, %v2745
    %2747 = vdwg.mxu0
    %v2748 = vadd.f32 %v2588, %v2738
    %v2749 = vadd.f32 %v2589, %v2740
    %v2750 = vadd.f32 %v2590, %v2744
    %v2751 = vadd.f32 %v2591, %v2746
    %s2752 = scalar_lea.vmem %s2, 2048
    %v2753 = vld [vmem:[%s2752] sm:$0xff]
    %v2754 = vld [vmem:[%s2752 + $0x8] sm:$0xff]
    %v2755 = vld [vmem:[%s2752 + $0x10] sm:$0xff]
    %v2756 = vld [vmem:[%s2752 + $0x18] sm:$0xff]
    %v2757 = vld [vmem:[%s2752 + $0x20] sm:$0xff]
    %v2758 = vld [vmem:[%s2752 + $0x28] sm:$0xff]
    %v2759 = vld [vmem:[%s2752 + $0x30] sm:$0xff]
    %v2760 = vld [vmem:[%s2752 + $0x38] sm:$0xff]
    %v2761 = vld [vmem:[%s2752 + $0x40] sm:$0xff]
    %v2762 = vld [vmem:[%s2752 + $0x48] sm:$0xff]
    %v2763 = vld [vmem:[%s2752 + $0x50] sm:$0xff]
    %v2764 = vld [vmem:[%s2752 + $0x58] sm:$0xff]
    %v2765 = vld [vmem:[%s2752 + $0x60] sm:$0xff]
    %v2766 = vld [vmem:[%s2752 + $0x68] sm:$0xff]
    %v2767 = vld [vmem:[%s2752 + $0x70] sm:$0xff]
    %v2768 = vld [vmem:[%s2752 + $0x78] sm:$0xff]
    %v2769 = vld [vmem:[%s2752 + $0x80] sm:$0xff]
    %v2770 = vld [vmem:[%s2752 + $0x88] sm:$0xff]
    %v2771 = vld [vmem:[%s2752 + $0x90] sm:$0xff]
    %v2772 = vld [vmem:[%s2752 + $0x98] sm:$0xff]
    %v2773 = vld [vmem:[%s2752 + $0xa0] sm:$0xff]
    %v2774 = vld [vmem:[%s2752 + $0xa8] sm:$0xff]
    %v2775 = vld [vmem:[%s2752 + $0xb0] sm:$0xff]
    %v2776 = vld [vmem:[%s2752 + $0xb8] sm:$0xff]
    %v2777 = vld [vmem:[%s2752 + $0xc0] sm:$0xff]
    %v2778 = vld [vmem:[%s2752 + $0xc8] sm:$0xff]
    %v2779 = vld [vmem:[%s2752 + $0xd0] sm:$0xff]
    %v2780 = vld [vmem:[%s2752 + $0xd8] sm:$0xff]
    %v2781 = vld [vmem:[%s2752 + $0xe0] sm:$0xff]
    %v2782 = vld [vmem:[%s2752 + $0xe8] sm:$0xff]
    %v2783 = vld [vmem:[%s2752 + $0xf0] sm:$0xff]
    %v2784 = vld [vmem:[%s2752 + $0xf8] sm:$0xff]
    %v2785 = vld [vmem:[%s2752 + $0x100] sm:$0xff]
    %v2786 = vld [vmem:[%s2752 + $0x108] sm:$0xff]
    %v2787 = vld [vmem:[%s2752 + $0x110] sm:$0xff]
    %v2788 = vld [vmem:[%s2752 + $0x118] sm:$0xff]
    %v2789 = vld [vmem:[%s2752 + $0x120] sm:$0xff]
    %v2790 = vld [vmem:[%s2752 + $0x128] sm:$0xff]
    %v2791 = vld [vmem:[%s2752 + $0x130] sm:$0xff]
    %v2792 = vld [vmem:[%s2752 + $0x138] sm:$0xff]
    %v2793 = vld [vmem:[%s2752 + $0x140] sm:$0xff]
    %v2794 = vld [vmem:[%s2752 + $0x148] sm:$0xff]
    %v2795 = vld [vmem:[%s2752 + $0x150] sm:$0xff]
    %v2796 = vld [vmem:[%s2752 + $0x158] sm:$0xff]
    %v2797 = vld [vmem:[%s2752 + $0x160] sm:$0xff]
    %v2798 = vld [vmem:[%s2752 + $0x168] sm:$0xff]
    %v2799 = vld [vmem:[%s2752 + $0x170] sm:$0xff]
    %v2800 = vld [vmem:[%s2752 + $0x178] sm:$0xff]
    %v2801 = vld [vmem:[%s2752 + $0x180] sm:$0xff]
    %v2802 = vld [vmem:[%s2752 + $0x188] sm:$0xff]
    %v2803 = vld [vmem:[%s2752 + $0x190] sm:$0xff]
    %v2804 = vld [vmem:[%s2752 + $0x198] sm:$0xff]
    %v2805 = vld [vmem:[%s2752 + $0x1a0] sm:$0xff]
    %v2806 = vld [vmem:[%s2752 + $0x1a8] sm:$0xff]
    %v2807 = vld [vmem:[%s2752 + $0x1b0] sm:$0xff]
    %v2808 = vld [vmem:[%s2752 + $0x1b8] sm:$0xff]
    %v2809 = vld [vmem:[%s2752 + $0x1c0] sm:$0xff]
    %v2810 = vld [vmem:[%s2752 + $0x1c8] sm:$0xff]
    %v2811 = vld [vmem:[%s2752 + $0x1d0] sm:$0xff]
    %v2812 = vld [vmem:[%s2752 + $0x1d8] sm:$0xff]
    %v2813 = vld [vmem:[%s2752 + $0x1e0] sm:$0xff]
    %v2814 = vld [vmem:[%s2752 + $0x1e8] sm:$0xff]
    %v2815 = vld [vmem:[%s2752 + $0x1f0] sm:$0xff]
    %v2816 = vld [vmem:[%s2752 + $0x1f8] sm:$0xff]
    %v2817 = vrot.slane %v2127, 4
    %v2818 = vrot.slane %v2118, 4
    %v2819 = vsel %vm140, %v2817, %v2818
    %v2820 = vrot.slane %v2128, 4
    %v2821 = vrot.slane %v2120, 4
    %v2822 = vsel %vm140, %v2820, %v2821
    %v2823 = vrot.slane %v2129, 4
    %v2824 = vsel %vm140, %v2818, %v2823
    %v2825 = vrot.slane %v2130, 4
    %v2826 = vsel %vm140, %v2821, %v2825
    %2831 = vmatprep.subr.mxu0 %v2784
    %2832 = vmatpush1.msra.mxu0 %v2783
    %2833 = vmatprep.subr.mxu0 %v2782
    %2834 = vmatpush1.msra.mxu0 %v2781
    %2835 = vmatprep.subr.mxu0 %v2780
    %2836 = vmatpush1.msra.mxu0 %v2779
    %2837 = vmatprep.subr.mxu0 %v2778
    %2838 = vmatpush1.msra.mxu0 %v2777
    %2839 = vmatprep.subr.mxu0 %v2776
    %2840 = vmatpush1.msra.mxu0 %v2775
    %2841 = vmatprep.subr.mxu0 %v2774
    %2842 = vmatpush1.msra.mxu0 %v2773
    %2843 = vmatprep.subr.mxu0 %v2772
    %2844 = vmatpush1.msra.mxu0 %v2771
    %2845 = vmatprep.subr.mxu0 %v2770
    %2846 = vmatpush1.msra.mxu0 %v2769
    %2847 = vmatprep.subr.mxu0 %v2768
    %2848 = vmatpush1.msra.mxu0 %v2767
    %2849 = vmatprep.subr.mxu0 %v2766
    %2850 = vmatpush1.msra.mxu0 %v2765
    %2851 = vmatprep.subr.mxu0 %v2764
    %2852 = vmatpush1.msra.mxu0 %v2763
    %2853 = vmatprep.subr.mxu0 %v2762
    %2854 = vmatpush1.msra.mxu0 %v2761
    %2855 = vmatprep.subr.mxu0 %v2760
    %2856 = vmatpush1.msra.mxu0 %v2759
    %2857 = vmatprep.subr.mxu0 %v2758
    %2858 = vmatpush1.msra.mxu0 %v2757
    %2859 = vmatprep.subr.mxu0 %v2756
    %2860 = vmatpush1.msra.mxu0 %v2755
    %2861 = vmatprep.subr.mxu0 %v2754
    %2862 = vmatpush1.msra.mxu0 %v2753
    %2863 = vmatprep.subr.mxu0 %v2816
    %2864 = vmatpush2.msra.mxu0 %v2815
    %2865 = vmatprep.subr.mxu0 %v2814
    %2866 = vmatpush2.msra.mxu0 %v2813
    %2867 = vmatprep.subr.mxu0 %v2812
    %2868 = vmatpush2.msra.mxu0 %v2811
    %2869 = vmatprep.subr.mxu0 %v2810
    %2870 = vmatpush2.msra.mxu0 %v2809
    %2871 = vmatprep.subr.mxu0 %v2808
    %2872 = vmatpush2.msra.mxu0 %v2807
    %2873 = vmatprep.subr.mxu0 %v2806
    %2874 = vmatpush2.msra.mxu0 %v2805
    %2875 = vmatprep.subr.mxu0 %v2804
    %2876 = vmatpush2.msra.mxu0 %v2803
    %2877 = vmatprep.subr.mxu0 %v2802
    %2878 = vmatpush2.msra.mxu0 %v2801
    %2879 = vmatprep.subr.mxu0 %v2800
    %2880 = vmatpush2.msra.mxu0 %v2799
    %2881 = vmatprep.subr.mxu0 %v2798
    %2882 = vmatpush2.msra.mxu0 %v2797
    %2883 = vmatprep.subr.mxu0 %v2796
    %2884 = vmatpush2.msra.mxu0 %v2795
    %2885 = vmatprep.subr.mxu0 %v2794
    %2886 = vmatpush2.msra.mxu0 %v2793
    %2887 = vmatprep.subr.mxu0 %v2792
    %2888 = vmatpush2.msra.mxu0 %v2791
    %2889 = vmatprep.subr.mxu0 %v2790
    %2890 = vmatpush2.msra.mxu0 %v2789
    %2891 = vmatprep.subr.mxu0 %v2788
    %2892 = vmatpush2.msra.mxu0 %v2787
    %2893 = vmatprep.subr.mxu0 %v2786
    %2894 = vmatpush2.msra.mxu0 %v2785
    %2895 = vmatprep.mubr.f32.mxu0 %v2822
    %2896 = vmatmul.mubr.f32.gmra.mxu0 %v2819
    %v2897 = vpop.f32.mrf.mxu0
    %v2898 = vadd.f32 0.0, %v2897
    %v2899 = vpop.f32.mrf.mxu0
    %v2900 = vadd.f32 0.0, %v2899
    %2901 = vmatprep.mubr.f32.mxu0 %v2826
    %2902 = vmatmul.mubr.f32.gmra.mxu0 %v2824
    %v2903 = vpop.f32.mrf.mxu0
    %v2904 = vadd.f32 0.0, %v2903
    %v2905 = vpop.f32.mrf.mxu0
    %v2906 = vadd.f32 0.0, %v2905
    %2907 = vdwg.mxu0
    %v2908 = vadd.f32 %v2748, %v2898
    %v2909 = vadd.f32 %v2749, %v2900
    %v2910 = vadd.f32 %v2750, %v2904
    %v2911 = vadd.f32 %v2751, %v2906
    %v2920 = vrot.slane %v1898, 1
    %v2921 = vrot.slane %v1900, 1
    %v2922 = vsel %vm121, %v2920, %v2921
    %v2923 = vrot.slane %v1899, 1
    %v2924 = vrot.slane %v1901, 1
    %v2925 = vsel %vm121, %v2923, %v2924
    %v2926 = vrot.slane %v1902, 1
    %v2927 = vsel %vm121, %v2921, %v2926
    %v2928 = vrot.slane %v1903, 1
    %v2929 = vsel %vm121, %v2924, %v2928
    %v2930 = vrot.slane %v1904, 1
    %v2931 = vsel %vm121, %v2926, %v2930
    %v2932 = vrot.slane %v1905, 1
    %v2933 = vsel %vm121, %v2928, %v2932
    %v2942 = vsel %vm121, %v2930, 0.0
    %v2943 = vsel %vm121, %v2932, 0.0
    %v2944 = vrot.slane %v1898, 7
    %v2945 = vrot.slane %v1899, 7
    %v2946 = vrot.slane %v1900, 7
    %v2947 = vsel %vm1940, %v2944, %v2946
    %v2948 = vrot.slane %v1901, 7
    %v2949 = vsel %vm1940, %v2945, %v2948
    %v2950 = vrot.slane %v1902, 7
    %v2951 = vsel %vm1940, %v2946, %v2950
    %v2952 = vrot.slane %v1903, 7
    %v2953 = vsel %vm1940, %v2948, %v2952
    %v2954 = vrot.slane %v1904, 7
    %v2955 = vsel %vm1940, %v2950, %v2954
    %v2956 = vrot.slane %v1905, 7
    %v2957 = vsel %vm1940, %v2952, %v2956
    %v2966 = vsel %vm1940, 0.0, %v2944
    %v2967 = vsel %vm1940, 0.0, %v2945
    %v2968 = vmax.f32 %v1898, %v2922
    %v2969 = vmax.f32 %v1899, %v2925
    %v2970 = vmax.f32 %v1900, %v2927
    %v2971 = vmax.f32 %v1901, %v2929
    %v2972 = vmax.f32 %v1902, %v2931
    %v2973 = vmax.f32 %v1903, %v2933
    %v2974 = vmax.f32 %v1904, %v2942
    %v2975 = vmax.f32 %v1905, %v2943
    %v2976 = vmax.f32 %v2968, %v2966
    %v2977 = vmax.f32 %v2969, %v2967
    %v2978 = vmax.f32 %v2970, %v2947
    %v2979 = vmax.f32 %v2971, %v2949
    %v2980 = vmax.f32 %v2972, %v2951
    %v2981 = vmax.f32 %v2973, %v2953
    %v2982 = vmax.f32 %v2974, %v2955
    %v2983 = vmax.f32 %v2975, %v2957
    %2984 = vmatprep.subr.mxu0 0.0
    %2985 = vmatpush1.msra.mxu0 0.0
    %2986 = vmatprep.subr.mxu0 0.0
    %2987 = vmatpush1.msra.mxu0 0.0
    %2988 = vmatprep.subr.mxu0 0.0
    %2989 = vmatpush1.msra.mxu0 0.0
    %2990 = vmatprep.subr.mxu0 0.0
    %2991 = vmatpush1.msra.mxu0 0.0
    %2992 = vmatprep.subr.mxu0 0.0
    %2993 = vmatpush1.msra.mxu0 0.0
    %2994 = vmatprep.subr.mxu0 0.0
    %2995 = vmatpush1.msra.mxu0 0.0
    %2996 = vmatprep.subr.mxu0 0.0
    %2997 = vmatpush1.msra.mxu0 0.0
    %2998 = vmatprep.subr.mxu0 0.0
    %2999 = vmatpush1.msra.mxu0 0.0
    %3000 = vmatprep.subr.mxu0 0.0
    %3001 = vmatpush1.msra.mxu0 0.0
    %3002 = vmatprep.subr.mxu0 0.0
    %3003 = vmatpush1.msra.mxu0 0.0
    %3004 = vmatprep.subr.mxu0 0.0
    %3005 = vmatpush1.msra.mxu0 0.0
    %3006 = vmatprep.subr.mxu0 0.0
    %3007 = vmatpush1.msra.mxu0 0.0
    %3008 = vmatprep.subr.mxu0 %v2983
    %3009 = vmatpush1.msra.mxu0 %v2982
    %3010 = vmatprep.subr.mxu0 %v2981
    %3011 = vmatpush1.msra.mxu0 %v2980
    %3012 = vmatprep.subr.mxu0 %v2979
    %3013 = vmatpush1.msra.mxu0 %v2978
    %3014 = vmatprep.subr.mxu0 %v2977
    %3015 = vmatpush1.msra.mxu0 %v2976
    %3016 = vmatprep.subr.mxu0 0.0
    %3017 = vmatpush2.msra.mxu0 0.0
    %3018 = vmatprep.subr.mxu0 0.0
    %3019 = vmatpush2.msra.mxu0 0.0
    %3020 = vmatprep.subr.mxu0 0.0
    %3021 = vmatpush2.msra.mxu0 0.0
    %3022 = vmatprep.subr.mxu0 0.0
    %3023 = vmatpush2.msra.mxu0 0.0
    %3024 = vmatprep.subr.mxu0 0.0
    %3025 = vmatpush2.msra.mxu0 0.0
    %3026 = vmatprep.subr.mxu0 0.0
    %3027 = vmatpush2.msra.mxu0 0.0
    %3028 = vmatprep.subr.mxu0 0.0
    %3029 = vmatpush2.msra.mxu0 0.0
    %3030 = vmatprep.subr.mxu0 0.0
    %3031 = vmatpush2.msra.mxu0 0.0
    %3032 = vmatprep.subr.mxu0 0.0
    %3033 = vmatpush2.msra.mxu0 0.0
    %3034 = vmatprep.subr.mxu0 0.0
    %3035 = vmatpush2.msra.mxu0 0.0
    %3036 = vmatprep.subr.mxu0 0.0
    %3037 = vmatpush2.msra.mxu0 0.0
    %3038 = vmatprep.subr.mxu0 0.0
    %3039 = vmatpush2.msra.mxu0 0.0
    %3040 = vmatprep.subr.mxu0 0.0
    %3041 = vmatpush2.msra.mxu0 0.0
    %3042 = vmatprep.subr.mxu0 0.0
    %3043 = vmatpush2.msra.mxu0 0.0
    %3044 = vmatprep.subr.mxu0 0.0
    %3045 = vmatpush2.msra.mxu0 0.0
    %3046 = vmatprep.subr.mxu0 0.0
    %3047 = vmatpush2.msra.mxu0 0.0
    %3048 = vmatprep.mubr.f32.mxu0 0.0
    %3049 = vmatmul.mubr.f32.gmra.mxu0 %v1983
    %v3050 = vpop.f32.mrf.mxu0
    %v3051 = vadd.f32 0.0, %v3050
    %v3052 = vpop.f32.mrf.mxu0
    %v3053 = vadd.f32 0.0, %v3052
    %3054 = vmatprep.mubr.f32.mxu0 0.0
    %3055 = vmatmul.mubr.f32.gmra.mxu0 %v1986
    %v3056 = vpop.f32.mrf.mxu0
    %v3057 = vadd.f32 0.0, %v3056
    %v3058 = vpop.f32.mrf.mxu0
    %v3059 = vadd.f32 0.0, %v3058
    %3060 = vdwg.mxu0
    %3065 = vrot.lane.b32.xlu0 %v3051, 120
    %v3066 = vpop.permute.xlu0 %3065
    %3067 = vrot.lane.b32.xlu0 %v3053, 120
    %v3068 = vpop.permute.xlu0 %3067
    %3069 = vrot.lane.b32.xlu0 %v3057, 120
    %v3070 = vpop.permute.xlu0 %3069
    %3071 = vrot.lane.b32.xlu0 %v3059, 120
    %v3072 = vpop.permute.xlu0 %3071
    %v3073 = vsel %vm2077, %v3066, %v3068
    %v3074 = vsel %vm2077, %v3070, %v3072
    %v3079 = vsel %vm2077, %v3068, 0.0
    %v3080 = vsel %vm2077, %v3072, 0.0
    %3081 = vrot.lane.b32.xlu0 %v3051, 8
    %v3082 = vpop.permute.xlu0 %3081
    %3083 = vrot.lane.b32.xlu0 %v3053, 8
    %v3084 = vpop.permute.xlu0 %3083
    %3085 = vrot.lane.b32.xlu0 %v3057, 8
    %v3086 = vpop.permute.xlu0 %3085
    %3087 = vrot.lane.b32.xlu0 %v3059, 8
    %v3088 = vpop.permute.xlu0 %3087
    %v3089 = vsel %vm1477, %v3082, %v3084
    %v3090 = vsel %vm1477, %v3086, %v3088
    %v3095 = vsel %vm1477, 0.0, %v3082
    %v3096 = vsel %vm1477, 0.0, %v3086
    %v3097 = vmax.f32 %v3051, %v3073
    %v3098 = vmax.f32 %v3053, %v3079
    %v3099 = vmax.f32 %v3057, %v3074
    %v3100 = vmax.f32 %v3059, %v3080
    %v3101 = vmax.f32 %v3097, %v3095
    %v3102 = vmax.f32 %v3098, %v3089
    %v3103 = vmax.f32 %v3099, %v3096
    %v3104 = vmax.f32 %v3100, %v3090
    %v3109 = vrot.slane %v3101, 6
    %v3110 = vrot.slane %v3102, 6
    %v3111 = vrot.slane %v3103, 6
    %v3112 = vsel %vm2114, %v3109, %v3111
    %v3113 = vrot.slane %v3104, 6
    %v3114 = vsel %vm2114, %v3110, %v3113
    %v3121 = vsel %vm2114, 0.0, %v3109
    %v3122 = vsel %vm2114, 0.0, %v3110
    %v3123 = vsel %vm2114, %v3111, 0.0
    %v3124 = vsel %vm2114, %v3113, 0.0
    %v3129 = vrot.slane %v3121, 1
    %v3130 = vrot.slane %v3112, 1
    %v3131 = vsel %vm121, %v3129, %v3130
    %v3132 = vrot.slane %v3122, 1
    %v3133 = vrot.slane %v3114, 1
    %v3134 = vsel %vm121, %v3132, %v3133
    %v3135 = vrot.slane %v3123, 1
    %v3136 = vsel %vm121, %v3130, %v3135
    %v3137 = vrot.slane %v3124, 1
    %v3138 = vsel %vm121, %v3133, %v3137
    %3143 = vmatprep.subr.mxu0 %v2227
    %3144 = vmatpush1.msra.mxu0 %v2226
    %3145 = vmatprep.subr.mxu0 %v2225
    %3146 = vmatpush1.msra.mxu0 %v2224
    %3147 = vmatprep.subr.mxu0 %v2223
    %3148 = vmatpush1.msra.mxu0 %v2222
    %3149 = vmatprep.subr.mxu0 %v2221
    %3150 = vmatpush1.msra.mxu0 %v2220
    %3151 = vmatprep.subr.mxu0 %v2219
    %3152 = vmatpush1.msra.mxu0 %v2218
    %3153 = vmatprep.subr.mxu0 %v2217
    %3154 = vmatpush1.msra.mxu0 %v2216
    %3155 = vmatprep.subr.mxu0 %v2215
    %3156 = vmatpush1.msra.mxu0 %v2214
    %3157 = vmatprep.subr.mxu0 %v2213
    %3158 = vmatpush1.msra.mxu0 %v2212
    %3159 = vmatprep.subr.mxu0 %v2211
    %3160 = vmatpush1.msra.mxu0 %v2210
    %3161 = vmatprep.subr.mxu0 %v2209
    %3162 = vmatpush1.msra.mxu0 %v2208
    %3163 = vmatprep.subr.mxu0 %v2207
    %3164 = vmatpush1.msra.mxu0 %v2206
    %3165 = vmatprep.subr.mxu0 %v2205
    %3166 = vmatpush1.msra.mxu0 %v2204
    %3167 = vmatprep.subr.mxu0 %v2203
    %3168 = vmatpush1.msra.mxu0 %v2202
    %3169 = vmatprep.subr.mxu0 %v2201
    %3170 = vmatpush1.msra.mxu0 %v2200
    %3171 = vmatprep.subr.mxu0 %v2199
    %3172 = vmatpush1.msra.mxu0 %v2198
    %3173 = vmatprep.subr.mxu0 %v2197
    %3174 = vmatpush1.msra.mxu0 %v2196
    %3175 = vmatprep.subr.mxu0 %v2259
    %3176 = vmatpush2.msra.mxu0 %v2258
    %3177 = vmatprep.subr.mxu0 %v2257
    %3178 = vmatpush2.msra.mxu0 %v2256
    %3179 = vmatprep.subr.mxu0 %v2255
    %3180 = vmatpush2.msra.mxu0 %v2254
    %3181 = vmatprep.subr.mxu0 %v2253
    %3182 = vmatpush2.msra.mxu0 %v2252
    %3183 = vmatprep.subr.mxu0 %v2251
    %3184 = vmatpush2.msra.mxu0 %v2250
    %3185 = vmatprep.subr.mxu0 %v2249
    %3186 = vmatpush2.msra.mxu0 %v2248
    %3187 = vmatprep.subr.mxu0 %v2247
    %3188 = vmatpush2.msra.mxu0 %v2246
    %3189 = vmatprep.subr.mxu0 %v2245
    %3190 = vmatpush2.msra.mxu0 %v2244
    %3191 = vmatprep.subr.mxu0 %v2243
    %3192 = vmatpush2.msra.mxu0 %v2242
    %3193 = vmatprep.subr.mxu0 %v2241
    %3194 = vmatpush2.msra.mxu0 %v2240
    %3195 = vmatprep.subr.mxu0 %v2239
    %3196 = vmatpush2.msra.mxu0 %v2238
    %3197 = vmatprep.subr.mxu0 %v2237
    %3198 = vmatpush2.msra.mxu0 %v2236
    %3199 = vmatprep.subr.mxu0 %v2235
    %3200 = vmatpush2.msra.mxu0 %v2234
    %3201 = vmatprep.subr.mxu0 %v2233
    %3202 = vmatpush2.msra.mxu0 %v2232
    %3203 = vmatprep.subr.mxu0 %v2231
    %3204 = vmatpush2.msra.mxu0 %v2230
    %3205 = vmatprep.subr.mxu0 %v2229
    %3206 = vmatpush2.msra.mxu0 %v2228
    %3207 = vmatprep.mubr.f32.mxu0 %v3134
    %3208 = vmatmul.mubr.f32.gmra.mxu0 %v3131
    %v3209 = vpop.f32.mrf.mxu0
    %v3210 = vadd.f32 0.0, %v3209
    %v3211 = vpop.f32.mrf.mxu0
    %v3212 = vadd.f32 0.0, %v3211
    %3213 = vmatprep.mubr.f32.mxu0 %v3138
    %3214 = vmatmul.mubr.f32.gmra.mxu0 %v3136
    %v3215 = vpop.f32.mrf.mxu0
    %v3216 = vadd.f32 0.0, %v3215
    %v3217 = vpop.f32.mrf.mxu0
    %v3218 = vadd.f32 0.0, %v3217
    %3219 = vdwg.mxu0
    %3220 = vmatprep.subr.mxu0 %v2162
    %3221 = vmatpush1.msra.mxu0 %v2161
    %3222 = vmatprep.subr.mxu0 %v2160
    %3223 = vmatpush1.msra.mxu0 %v2159
    %3224 = vmatprep.subr.mxu0 %v2158
    %3225 = vmatpush1.msra.mxu0 %v2157
    %3226 = vmatprep.subr.mxu0 %v2156
    %3227 = vmatpush1.msra.mxu0 %v2155
    %3228 = vmatprep.subr.mxu0 %v2154
    %3229 = vmatpush1.msra.mxu0 %v2153
    %3230 = vmatprep.subr.mxu0 %v2152
    %3231 = vmatpush1.msra.mxu0 %v2151
    %3232 = vmatprep.subr.mxu0 %v2150
    %3233 = vmatpush1.msra.mxu0 %v2149
    %3234 = vmatprep.subr.mxu0 %v2148
    %3235 = vmatpush1.msra.mxu0 %v2147
    %3236 = vmatprep.subr.mxu0 %v2146
    %3237 = vmatpush1.msra.mxu0 %v2145
    %3238 = vmatprep.subr.mxu0 %v2144
    %3239 = vmatpush1.msra.mxu0 %v2143
    %3240 = vmatprep.subr.mxu0 %v2142
    %3241 = vmatpush1.msra.mxu0 %v2141
    %3242 = vmatprep.subr.mxu0 %v2140
    %3243 = vmatpush1.msra.mxu0 %v2139
    %3244 = vmatprep.subr.mxu0 %v2138
    %3245 = vmatpush1.msra.mxu0 %v2137
    %3246 = vmatprep.subr.mxu0 %v2136
    %3247 = vmatpush1.msra.mxu0 %v2135
    %3248 = vmatprep.subr.mxu0 %v2134
    %3249 = vmatpush1.msra.mxu0 %v2133
    %3250 = vmatprep.subr.mxu0 %v2132
    %3251 = vmatpush1.msra.mxu0 %v2131
    %3252 = vmatprep.subr.mxu0 %v2194
    %3253 = vmatpush2.msra.mxu0 %v2193
    %3254 = vmatprep.subr.mxu0 %v2192
    %3255 = vmatpush2.msra.mxu0 %v2191
    %3256 = vmatprep.subr.mxu0 %v2190
    %3257 = vmatpush2.msra.mxu0 %v2189
    %3258 = vmatprep.subr.mxu0 %v2188
    %3259 = vmatpush2.msra.mxu0 %v2187
    %3260 = vmatprep.subr.mxu0 %v2186
    %3261 = vmatpush2.msra.mxu0 %v2185
    %3262 = vmatprep.subr.mxu0 %v2184
    %3263 = vmatpush2.msra.mxu0 %v2183
    %3264 = vmatprep.subr.mxu0 %v2182
    %3265 = vmatpush2.msra.mxu0 %v2181
    %3266 = vmatprep.subr.mxu0 %v2180
    %3267 = vmatpush2.msra.mxu0 %v2179
    %3268 = vmatprep.subr.mxu0 %v2178
    %3269 = vmatpush2.msra.mxu0 %v2177
    %3270 = vmatprep.subr.mxu0 %v2176
    %3271 = vmatpush2.msra.mxu0 %v2175
    %3272 = vmatprep.subr.mxu0 %v2174
    %3273 = vmatpush2.msra.mxu0 %v2173
    %3274 = vmatprep.subr.mxu0 %v2172
    %3275 = vmatpush2.msra.mxu0 %v2171
    %3276 = vmatprep.subr.mxu0 %v2170
    %3277 = vmatpush2.msra.mxu0 %v2169
    %3278 = vmatprep.subr.mxu0 %v2168
    %3279 = vmatpush2.msra.mxu0 %v2167
    %3280 = vmatprep.subr.mxu0 %v2166
    %3281 = vmatpush2.msra.mxu0 %v2165
    %3282 = vmatprep.subr.mxu0 %v2164
    %3283 = vmatpush2.msra.mxu0 %v2163
    %3284 = vmatprep.mubr.f32.mxu0 %v3122
    %3285 = vmatmul.mubr.f32.gmra.mxu0 %v3121
    %v3286 = vpop.f32.mrf.mxu0
    %v3287 = vadd.f32 %v3210, %v3286
    %v3288 = vpop.f32.mrf.mxu0
    %v3289 = vadd.f32 %v3212, %v3288
    %3290 = vmatprep.mubr.f32.mxu0 %v3114
    %3291 = vmatmul.mubr.f32.gmra.mxu0 %v3112
    %v3292 = vpop.f32.mrf.mxu0
    %v3293 = vadd.f32 %v3216, %v3292
    %v3294 = vpop.f32.mrf.mxu0
    %v3295 = vadd.f32 %v3218, %v3294
    %3296 = vdwg.mxu0
    %v3297 = vrot.slane %v3121, 2
    %v3298 = vrot.slane %v3112, 2
    %v3299 = vsel %vm368, %v3297, %v3298
    %v3300 = vrot.slane %v3122, 2
    %v3301 = vrot.slane %v3114, 2
    %v3302 = vsel %vm368, %v3300, %v3301
    %v3303 = vrot.slane %v3123, 2
    %v3304 = vsel %vm368, %v3298, %v3303
    %v3305 = vrot.slane %v3124, 2
    %v3306 = vsel %vm368, %v3301, %v3305
    %3311 = vmatprep.subr.mxu0 %v2464
    %3312 = vmatpush1.msra.mxu0 %v2463
    %3313 = vmatprep.subr.mxu0 %v2462
    %3314 = vmatpush1.msra.mxu0 %v2461
    %3315 = vmatprep.subr.mxu0 %v2460
    %3316 = vmatpush1.msra.mxu0 %v2459
    %3317 = vmatprep.subr.mxu0 %v2458
    %3318 = vmatpush1.msra.mxu0 %v2457
    %3319 = vmatprep.subr.mxu0 %v2456
    %3320 = vmatpush1.msra.mxu0 %v2455
    %3321 = vmatprep.subr.mxu0 %v2454
    %3322 = vmatpush1.msra.mxu0 %v2453
    %3323 = vmatprep.subr.mxu0 %v2452
    %3324 = vmatpush1.msra.mxu0 %v2451
    %3325 = vmatprep.subr.mxu0 %v2450
    %3326 = vmatpush1.msra.mxu0 %v2449
    %3327 = vmatprep.subr.mxu0 %v2448
    %3328 = vmatpush1.msra.mxu0 %v2447
    %3329 = vmatprep.subr.mxu0 %v2446
    %3330 = vmatpush1.msra.mxu0 %v2445
    %3331 = vmatprep.subr.mxu0 %v2444
    %3332 = vmatpush1.msra.mxu0 %v2443
    %3333 = vmatprep.subr.mxu0 %v2442
    %3334 = vmatpush1.msra.mxu0 %v2441
    %3335 = vmatprep.subr.mxu0 %v2440
    %3336 = vmatpush1.msra.mxu0 %v2439
    %3337 = vmatprep.subr.mxu0 %v2438
    %3338 = vmatpush1.msra.mxu0 %v2437
    %3339 = vmatprep.subr.mxu0 %v2436
    %3340 = vmatpush1.msra.mxu0 %v2435
    %3341 = vmatprep.subr.mxu0 %v2434
    %3342 = vmatpush1.msra.mxu0 %v2433
    %3343 = vmatprep.subr.mxu0 %v2496
    %3344 = vmatpush2.msra.mxu0 %v2495
    %3345 = vmatprep.subr.mxu0 %v2494
    %3346 = vmatpush2.msra.mxu0 %v2493
    %3347 = vmatprep.subr.mxu0 %v2492
    %3348 = vmatpush2.msra.mxu0 %v2491
    %3349 = vmatprep.subr.mxu0 %v2490
    %3350 = vmatpush2.msra.mxu0 %v2489
    %3351 = vmatprep.subr.mxu0 %v2488
    %3352 = vmatpush2.msra.mxu0 %v2487
    %3353 = vmatprep.subr.mxu0 %v2486
    %3354 = vmatpush2.msra.mxu0 %v2485
    %3355 = vmatprep.subr.mxu0 %v2484
    %3356 = vmatpush2.msra.mxu0 %v2483
    %3357 = vmatprep.subr.mxu0 %v2482
    %3358 = vmatpush2.msra.mxu0 %v2481
    %3359 = vmatprep.subr.mxu0 %v2480
    %3360 = vmatpush2.msra.mxu0 %v2479
    %3361 = vmatprep.subr.mxu0 %v2478
    %3362 = vmatpush2.msra.mxu0 %v2477
    %3363 = vmatprep.subr.mxu0 %v2476
    %3364 = vmatpush2.msra.mxu0 %v2475
    %3365 = vmatprep.subr.mxu0 %v2474
    %3366 = vmatpush2.msra.mxu0 %v2473
    %3367 = vmatprep.subr.mxu0 %v2472
    %3368 = vmatpush2.msra.mxu0 %v2471
    %3369 = vmatprep.subr.mxu0 %v2470
    %3370 = vmatpush2.msra.mxu0 %v2469
    %3371 = vmatprep.subr.mxu0 %v2468
    %3372 = vmatpush2.msra.mxu0 %v2467
    %3373 = vmatprep.subr.mxu0 %v2466
    %3374 = vmatpush2.msra.mxu0 %v2465
    %3375 = vmatprep.mubr.f32.mxu0 %v3302
    %3376 = vmatmul.mubr.f32.gmra.mxu0 %v3299
    %v3377 = vpop.f32.mrf.mxu0
    %v3378 = vadd.f32 0.0, %v3377
    %v3379 = vpop.f32.mrf.mxu0
    %v3380 = vadd.f32 0.0, %v3379
    %3381 = vmatprep.mubr.f32.mxu0 %v3306
    %3382 = vmatmul.mubr.f32.gmra.mxu0 %v3304
    %v3383 = vpop.f32.mrf.mxu0
    %v3384 = vadd.f32 0.0, %v3383
    %v3385 = vpop.f32.mrf.mxu0
    %v3386 = vadd.f32 0.0, %v3385
    %3387 = vdwg.mxu0
    %v3388 = vadd.f32 %v3287, %v3378
    %v3389 = vadd.f32 %v3289, %v3380
    %v3390 = vadd.f32 %v3293, %v3384
    %v3391 = vadd.f32 %v3295, %v3386
    %v3392 = vrot.slane %v3121, 3
    %v3393 = vrot.slane %v3112, 3
    %v3394 = vsel %vm518, %v3392, %v3393
    %v3395 = vrot.slane %v3122, 3
    %v3396 = vrot.slane %v3114, 3
    %v3397 = vsel %vm518, %v3395, %v3396
    %v3398 = vrot.slane %v3123, 3
    %v3399 = vsel %vm518, %v3393, %v3398
    %v3400 = vrot.slane %v3124, 3
    %v3401 = vsel %vm518, %v3396, %v3400
    %3406 = vmatprep.subr.mxu0 %v2624
    %3407 = vmatpush1.msra.mxu0 %v2623
    %3408 = vmatprep.subr.mxu0 %v2622
    %3409 = vmatpush1.msra.mxu0 %v2621
    %3410 = vmatprep.subr.mxu0 %v2620
    %3411 = vmatpush1.msra.mxu0 %v2619
    %3412 = vmatprep.subr.mxu0 %v2618
    %3413 = vmatpush1.msra.mxu0 %v2617
    %3414 = vmatprep.subr.mxu0 %v2616
    %3415 = vmatpush1.msra.mxu0 %v2615
    %3416 = vmatprep.subr.mxu0 %v2614
    %3417 = vmatpush1.msra.mxu0 %v2613
    %3418 = vmatprep.subr.mxu0 %v2612
    %3419 = vmatpush1.msra.mxu0 %v2611
    %3420 = vmatprep.subr.mxu0 %v2610
    %3421 = vmatpush1.msra.mxu0 %v2609
    %3422 = vmatprep.subr.mxu0 %v2608
    %3423 = vmatpush1.msra.mxu0 %v2607
    %3424 = vmatprep.subr.mxu0 %v2606
    %3425 = vmatpush1.msra.mxu0 %v2605
    %3426 = vmatprep.subr.mxu0 %v2604
    %3427 = vmatpush1.msra.mxu0 %v2603
    %3428 = vmatprep.subr.mxu0 %v2602
    %3429 = vmatpush1.msra.mxu0 %v2601
    %3430 = vmatprep.subr.mxu0 %v2600
    %3431 = vmatpush1.msra.mxu0 %v2599
    %3432 = vmatprep.subr.mxu0 %v2598
    %3433 = vmatpush1.msra.mxu0 %v2597
    %3434 = vmatprep.subr.mxu0 %v2596
    %3435 = vmatpush1.msra.mxu0 %v2595
    %3436 = vmatprep.subr.mxu0 %v2594
    %3437 = vmatpush1.msra.mxu0 %v2593
    %3438 = vmatprep.subr.mxu0 %v2656
    %3439 = vmatpush2.msra.mxu0 %v2655
    %3440 = vmatprep.subr.mxu0 %v2654
    %3441 = vmatpush2.msra.mxu0 %v2653
    %3442 = vmatprep.subr.mxu0 %v2652
    %3443 = vmatpush2.msra.mxu0 %v2651
    %3444 = vmatprep.subr.mxu0 %v2650
    %3445 = vmatpush2.msra.mxu0 %v2649
    %3446 = vmatprep.subr.mxu0 %v2648
    %3447 = vmatpush2.msra.mxu0 %v2647
    %3448 = vmatprep.subr.mxu0 %v2646
    %3449 = vmatpush2.msra.mxu0 %v2645
    %3450 = vmatprep.subr.mxu0 %v2644
    %3451 = vmatpush2.msra.mxu0 %v2643
    %3452 = vmatprep.subr.mxu0 %v2642
    %3453 = vmatpush2.msra.mxu0 %v2641
    %3454 = vmatprep.subr.mxu0 %v2640
    %3455 = vmatpush2.msra.mxu0 %v2639
    %3456 = vmatprep.subr.mxu0 %v2638
    %3457 = vmatpush2.msra.mxu0 %v2637
    %3458 = vmatprep.subr.mxu0 %v2636
    %3459 = vmatpush2.msra.mxu0 %v2635
    %3460 = vmatprep.subr.mxu0 %v2634
    %3461 = vmatpush2.msra.mxu0 %v2633
    %3462 = vmatprep.subr.mxu0 %v2632
    %3463 = vmatpush2.msra.mxu0 %v2631
    %3464 = vmatprep.subr.mxu0 %v2630
    %3465 = vmatpush2.msra.mxu0 %v2629
    %3466 = vmatprep.subr.mxu0 %v2628
    %3467 = vmatpush2.msra.mxu0 %v2627
    %3468 = vmatprep.subr.mxu0 %v2626
    %3469 = vmatpush2.msra.mxu0 %v2625
    %3470 = vmatprep.mubr.f32.mxu0 %v3397
    %3471 = vmatmul.mubr.f32.gmra.mxu0 %v3394
    %v3472 = vpop.f32.mrf.mxu0
    %v3473 = vadd.f32 0.0, %v3472
    %v3474 = vpop.f32.mrf.mxu0
    %v3475 = vadd.f32 0.0, %v3474
    %3476 = vmatprep.mubr.f32.mxu0 %v3401
    %3477 = vmatmul.mubr.f32.gmra.mxu0 %v3399
    %v3478 = vpop.f32.mrf.mxu0
    %v3479 = vadd.f32 0.0, %v3478
    %v3480 = vpop.f32.mrf.mxu0
    %v3481 = vadd.f32 0.0, %v3480
    %3482 = vdwg.mxu0
    %v3483 = vadd.f32 %v3388, %v3473
    %v3484 = vadd.f32 %v3389, %v3475
    %v3485 = vadd.f32 %v3390, %v3479
    %v3486 = vadd.f32 %v3391, %v3481
    %v3487 = vrot.slane %v3121, 4
    %v3488 = vrot.slane %v3112, 4
    %v3489 = vsel %vm140, %v3487, %v3488
    %v3490 = vrot.slane %v3122, 4
    %v3491 = vrot.slane %v3114, 4
    %v3492 = vsel %vm140, %v3490, %v3491
    %v3493 = vrot.slane %v3123, 4
    %v3494 = vsel %vm140, %v3488, %v3493
    %v3495 = vrot.slane %v3124, 4
    %v3496 = vsel %vm140, %v3491, %v3495
    %3501 = vmatprep.subr.mxu0 %v2784
    %3502 = vmatpush1.msra.mxu0 %v2783
    %3503 = vmatprep.subr.mxu0 %v2782
    %3504 = vmatpush1.msra.mxu0 %v2781
    %3505 = vmatprep.subr.mxu0 %v2780
    %3506 = vmatpush1.msra.mxu0 %v2779
    %3507 = vmatprep.subr.mxu0 %v2778
    %3508 = vmatpush1.msra.mxu0 %v2777
    %3509 = vmatprep.subr.mxu0 %v2776
    %3510 = vmatpush1.msra.mxu0 %v2775
    %3511 = vmatprep.subr.mxu0 %v2774
    %3512 = vmatpush1.msra.mxu0 %v2773
    %3513 = vmatprep.subr.mxu0 %v2772
    %3514 = vmatpush1.msra.mxu0 %v2771
    %3515 = vmatprep.subr.mxu0 %v2770
    %3516 = vmatpush1.msra.mxu0 %v2769
    %3517 = vmatprep.subr.mxu0 %v2768
    %3518 = vmatpush1.msra.mxu0 %v2767
    %3519 = vmatprep.subr.mxu0 %v2766
    %3520 = vmatpush1.msra.mxu0 %v2765
    %3521 = vmatprep.subr.mxu0 %v2764
    %3522 = vmatpush1.msra.mxu0 %v2763
    %3523 = vmatprep.subr.mxu0 %v2762
    %3524 = vmatpush1.msra.mxu0 %v2761
    %3525 = vmatprep.subr.mxu0 %v2760
    %3526 = vmatpush1.msra.mxu0 %v2759
    %3527 = vmatprep.subr.mxu0 %v2758
    %3528 = vmatpush1.msra.mxu0 %v2757
    %3529 = vmatprep.subr.mxu0 %v2756
    %3530 = vmatpush1.msra.mxu0 %v2755
    %3531 = vmatprep.subr.mxu0 %v2754
    %3532 = vmatpush1.msra.mxu0 %v2753
    %3533 = vmatprep.subr.mxu0 %v2816
    %3534 = vmatpush2.msra.mxu0 %v2815
    %3535 = vmatprep.subr.mxu0 %v2814
    %3536 = vmatpush2.msra.mxu0 %v2813
    %3537 = vmatprep.subr.mxu0 %v2812
    %3538 = vmatpush2.msra.mxu0 %v2811
    %3539 = vmatprep.subr.mxu0 %v2810
    %3540 = vmatpush2.msra.mxu0 %v2809
    %3541 = vmatprep.subr.mxu0 %v2808
    %3542 = vmatpush2.msra.mxu0 %v2807
    %3543 = vmatprep.subr.mxu0 %v2806
    %3544 = vmatpush2.msra.mxu0 %v2805
    %3545 = vmatprep.subr.mxu0 %v2804
    %3546 = vmatpush2.msra.mxu0 %v2803
    %3547 = vmatprep.subr.mxu0 %v2802
    %3548 = vmatpush2.msra.mxu0 %v2801
    %3549 = vmatprep.subr.mxu0 %v2800
    %3550 = vmatpush2.msra.mxu0 %v2799
    %3551 = vmatprep.subr.mxu0 %v2798
    %3552 = vmatpush2.msra.mxu0 %v2797
    %3553 = vmatprep.subr.mxu0 %v2796
    %3554 = vmatpush2.msra.mxu0 %v2795
    %3555 = vmatprep.subr.mxu0 %v2794
    %3556 = vmatpush2.msra.mxu0 %v2793
    %3557 = vmatprep.subr.mxu0 %v2792
    %3558 = vmatpush2.msra.mxu0 %v2791
    %3559 = vmatprep.subr.mxu0 %v2790
    %3560 = vmatpush2.msra.mxu0 %v2789
    %3561 = vmatprep.subr.mxu0 %v2788
    %3562 = vmatpush2.msra.mxu0 %v2787
    %3563 = vmatprep.subr.mxu0 %v2786
    %3564 = vmatpush2.msra.mxu0 %v2785
    %3565 = vmatprep.mubr.f32.mxu0 %v3492
    %3566 = vmatmul.mubr.f32.gmra.mxu0 %v3489
    %v3567 = vpop.f32.mrf.mxu0
    %v3568 = vadd.f32 0.0, %v3567
    %v3569 = vpop.f32.mrf.mxu0
    %v3570 = vadd.f32 0.0, %v3569
    %3571 = vmatprep.mubr.f32.mxu0 %v3496
    %3572 = vmatmul.mubr.f32.gmra.mxu0 %v3494
    %v3573 = vpop.f32.mrf.mxu0
    %v3574 = vadd.f32 0.0, %v3573
    %v3575 = vpop.f32.mrf.mxu0
    %v3576 = vadd.f32 0.0, %v3575
    %3577 = vdwg.mxu0
    %v3578 = vadd.f32 %v3483, %v3568
    %v3579 = vadd.f32 %v3484, %v3570
    %v3580 = vadd.f32 %v3485, %v3574
    %v3581 = vadd.f32 %v3486, %v3576
    %v3582 = vld [vmem:[%s5] sm:$0x1]
    %v3583 = vld [vmem:[%s6] sm:$0x1]
    %v3584 = vld [vmem:[%s9] sm:$0xff]
    %v3585 = vld [vmem:[%s9 + $0x8] sm:$0xff]
    %v3586 = vld [vmem:[%s9 + $0x10] sm:$0xff]
    %v3587 = vld [vmem:[%s9 + $0x18] sm:$0xff]
    %v3588 = vld [vmem:[%s9 + $0x20] sm:$0xff]
    %v3589 = vld [vmem:[%s9 + $0x28] sm:$0xff]
    %v3590 = vld [vmem:[%s9 + $0x30] sm:$0xff]
    %v3591 = vld [vmem:[%s9 + $0x38] sm:$0xff]
    %v3592 = vld [vmem:[%s9 + $0x40] sm:$0xff]
    %v3593 = vld [vmem:[%s9 + $0x48] sm:$0xff]
    %v3594 = vld [vmem:[%s9 + $0x50] sm:$0xff]
    %v3595 = vld [vmem:[%s9 + $0x58] sm:$0xff]
    %v3596 = vld [vmem:[%s9 + $0x60] sm:$0xff]
    %v3597 = vld [vmem:[%s9 + $0x68] sm:$0xff]
    %v3598 = vld [vmem:[%s9 + $0x70] sm:$0xff]
    %v3599 = vld [vmem:[%s9 + $0x78] sm:$0xff]
    %v3600 = vld [vmem:[%s9 + $0x80] sm:$0xff]
    %v3601 = vld [vmem:[%s9 + $0x88] sm:$0xff]
    %v3602 = vld [vmem:[%s9 + $0x90] sm:$0xff]
    %v3603 = vld [vmem:[%s9 + $0x98] sm:$0xff]
    %v3604 = vld [vmem:[%s9 + $0xa0] sm:$0xff]
    %v3605 = vld [vmem:[%s9 + $0xa8] sm:$0xff]
    %v3606 = vld [vmem:[%s9 + $0xb0] sm:$0xff]
    %v3607 = vld [vmem:[%s9 + $0xb8] sm:$0xff]
    %v3608 = vld [vmem:[%s9 + $0xc0] sm:$0xff]
    %v3609 = vld [vmem:[%s9 + $0xc8] sm:$0xff]
    %v3610 = vld [vmem:[%s9 + $0xd0] sm:$0xff]
    %v3611 = vld [vmem:[%s9 + $0xd8] sm:$0xff]
    %v3612 = vld [vmem:[%s9 + $0xe0] sm:$0xff]
    %v3613 = vld [vmem:[%s9 + $0xe8] sm:$0xff]
    %v3614 = vld [vmem:[%s9 + $0xf0] sm:$0xff]
    %v3615 = vld [vmem:[%s9 + $0xf8] sm:$0xff]
    %v3616 = vld [vmem:[%s10] sm:$0xff]
    %v3617 = vld [vmem:[%s10 + $0x8] sm:$0xff]
    %v3618 = vld [vmem:[%s10 + $0x10] sm:$0xff]
    %v3619 = vld [vmem:[%s10 + $0x18] sm:$0xff]
    %v3620 = vadd.f32 %v2908, %v2910
    %v3621 = vadd.f32 %v3620, %v3578
    %v3622 = vadd.f32 %v3621, %v3580
    %v3623 = vrot.slane %v3622, 4
    %v3624 = vadd.f32 %v3622, %v3623
    %v3625 = vrot.slane %v3624, 2
    %v3626 = vadd.f32 %v3624, %v3625
    %v3627 = vrot.slane %v3626, 1
    %v3628 = vadd.f32 %v3626, %v3627
    %v3629 = vadd.f32 %v2909, %v2911
    %v3630 = vadd.f32 %v3629, %v3579
    %v3631 = vadd.f32 %v3630, %v3581
    %v3632 = vrot.slane %v3631, 4
    %v3633 = vadd.f32 %v3631, %v3632
    %v3634 = vrot.slane %v3633, 2
    %v3635 = vadd.f32 %v3633, %v3634
    %v3636 = vrot.slane %v3635, 1
    %v3637 = vadd.f32 %v3635, %v3636
    %3638 = vmatprep.subr.mxu0 0.0
    %3639 = vmatpush1.msra.mxu0 %v3599
    %3640 = vmatprep.subr.mxu0 0.0
    %3641 = vmatpush1.msra.mxu0 %v3598
    %3642 = vmatprep.subr.mxu0 0.0
    %3643 = vmatpush1.msra.mxu0 %v3597
    %3644 = vmatprep.subr.mxu0 0.0
    %3645 = vmatpush1.msra.mxu0 %v3596
    %3646 = vmatprep.subr.mxu0 0.0
    %3647 = vmatpush1.msra.mxu0 %v3595
    %3648 = vmatprep.subr.mxu0 0.0
    %3649 = vmatpush1.msra.mxu0 %v3594
    %3650 = vmatprep.subr.mxu0 0.0
    %3651 = vmatpush1.msra.mxu0 %v3593
    %3652 = vmatprep.subr.mxu0 0.0
    %3653 = vmatpush1.msra.mxu0 %v3592
    %3654 = vmatprep.subr.mxu0 0.0
    %3655 = vmatpush1.msra.mxu0 %v3591
    %3656 = vmatprep.subr.mxu0 0.0
    %3657 = vmatpush1.msra.mxu0 %v3590
    %3658 = vmatprep.subr.mxu0 0.0
    %3659 = vmatpush1.msra.mxu0 %v3589
    %3660 = vmatprep.subr.mxu0 0.0
    %3661 = vmatpush1.msra.mxu0 %v3588
    %3662 = vmatprep.subr.mxu0 0.0
    %3663 = vmatpush1.msra.mxu0 %v3587
    %3664 = vmatprep.subr.mxu0 0.0
    %3665 = vmatpush1.msra.mxu0 %v3586
    %3666 = vmatprep.subr.mxu0 0.0
    %3667 = vmatpush1.msra.mxu0 %v3585
    %3668 = vmatprep.subr.mxu0 0.0
    %3669 = vmatpush1.msra.mxu0 %v3584
    %3670 = vmatprep.subr.mxu0 0.0
    %3671 = vmatpush2.msra.mxu0 %v3615
    %3672 = vmatprep.subr.mxu0 0.0
    %3673 = vmatpush2.msra.mxu0 %v3614
    %3674 = vmatprep.subr.mxu0 0.0
    %3675 = vmatpush2.msra.mxu0 %v3613
    %3676 = vmatprep.subr.mxu0 0.0
    %3677 = vmatpush2.msra.mxu0 %v3612
    %3678 = vmatprep.subr.mxu0 0.0
    %3679 = vmatpush2.msra.mxu0 %v3611
    %3680 = vmatprep.subr.mxu0 0.0
    %3681 = vmatpush2.msra.mxu0 %v3610
    %3682 = vmatprep.subr.mxu0 0.0
    %3683 = vmatpush2.msra.mxu0 %v3609
    %3684 = vmatprep.subr.mxu0 0.0
    %3685 = vmatpush2.msra.mxu0 %v3608
    %3686 = vmatprep.subr.mxu0 0.0
    %3687 = vmatpush2.msra.mxu0 %v3607
    %3688 = vmatprep.subr.mxu0 0.0
    %3689 = vmatpush2.msra.mxu0 %v3606
    %3690 = vmatprep.subr.mxu0 0.0
    %3691 = vmatpush2.msra.mxu0 %v3605
    %3692 = vmatprep.subr.mxu0 0.0
    %3693 = vmatpush2.msra.mxu0 %v3604
    %3694 = vmatprep.subr.mxu0 0.0
    %3695 = vmatpush2.msra.mxu0 %v3603
    %3696 = vmatprep.subr.mxu0 0.0
    %3697 = vmatpush2.msra.mxu0 %v3602
    %3698 = vmatprep.subr.mxu0 0.0
    %3699 = vmatpush2.msra.mxu0 %v3601
    %3700 = vmatprep.subr.mxu0 0.0
    %3701 = vmatpush2.msra.mxu0 %v3600
    %3702 = vmatprep.mubr.f32.mxu0 %v3637
    %3703 = vmatmul.mubr.f32.gmra.mxu0 %v3628
    %v3704 = vpop.f32.mrf.mxu0
    %v3705 = vadd.f32 0.0, %v3704
    %v3706 = vpop.f32.mrf.mxu0
    %3707 = vdwg.mxu0
    %v3708 = vmul.f32 %v3705, 0.001953125
    %vm3709 = vcmask 130048
    %v3711 = vsel %vm3709, %v3708, 0
    %3713 = vmatprep.subr.mxu0 0.0
    %3714 = vmatpush1.msra.mxu0 0.0
    %3715 = vmatprep.subr.mxu0 0.0
    %3716 = vmatpush1.msra.mxu0 0.0
    %3717 = vmatprep.subr.mxu0 0.0
    %3718 = vmatpush1.msra.mxu0 0.0
    %3719 = vmatprep.subr.mxu0 0.0
    %3720 = vmatpush1.msra.mxu0 0.0
    %3721 = vmatprep.subr.mxu0 0.0
    %3722 = vmatpush1.msra.mxu0 0.0
    %3723 = vmatprep.subr.mxu0 0.0
    %3724 = vmatpush1.msra.mxu0 0.0
    %3725 = vmatprep.subr.mxu0 0.0
    %3726 = vmatpush1.msra.mxu0 0.0
    %3727 = vmatprep.subr.mxu0 0.0
    %3728 = vmatpush1.msra.mxu0 0.0
    %3729 = vmatprep.subr.mxu0 0.0
    %3730 = vmatpush1.msra.mxu0 0.0
    %3731 = vmatprep.subr.mxu0 0.0
    %3732 = vmatpush1.msra.mxu0 0.0
    %3733 = vmatprep.subr.mxu0 0.0
    %3734 = vmatpush1.msra.mxu0 0.0
    %3735 = vmatprep.subr.mxu0 0.0
    %3736 = vmatpush1.msra.mxu0 0.0
    %3737 = vmatprep.subr.mxu0 0.0
    %3738 = vmatpush1.msra.mxu0 0.0
    %3739 = vmatprep.subr.mxu0 0.0
    %3740 = vmatpush1.msra.mxu0 0.0
    %3741 = vmatprep.subr.mxu0 %v3619
    %3742 = vmatpush1.msra.mxu0 %v3618
    %3743 = vmatprep.subr.mxu0 %v3617
    %3744 = vmatpush1.msra.mxu0 %v3616
    %3745 = vmatprep.subr.mxu0 0.0
    %3746 = vmatpush2.msra.mxu0 0.0
    %3747 = vmatprep.subr.mxu0 0.0
    %3748 = vmatpush2.msra.mxu0 0.0
    %3749 = vmatprep.subr.mxu0 0.0
    %3750 = vmatpush2.msra.mxu0 0.0
    %3751 = vmatprep.subr.mxu0 0.0
    %3752 = vmatpush2.msra.mxu0 0.0
    %3753 = vmatprep.subr.mxu0 0.0
    %3754 = vmatpush2.msra.mxu0 0.0
    %3755 = vmatprep.subr.mxu0 0.0
    %3756 = vmatpush2.msra.mxu0 0.0
    %3757 = vmatprep.subr.mxu0 0.0
    %3758 = vmatpush2.msra.mxu0 0.0
    %3759 = vmatprep.subr.mxu0 0.0
    %3760 = vmatpush2.msra.mxu0 0.0
    %3761 = vmatprep.subr.mxu0 0.0
    %3762 = vmatpush2.msra.mxu0 0.0
    %3763 = vmatprep.subr.mxu0 0.0
    %3764 = vmatpush2.msra.mxu0 0.0
    %3765 = vmatprep.subr.mxu0 0.0
    %3766 = vmatpush2.msra.mxu0 0.0
    %3767 = vmatprep.subr.mxu0 0.0
    %3768 = vmatpush2.msra.mxu0 0.0
    %3769 = vmatprep.subr.mxu0 0.0
    %3770 = vmatpush2.msra.mxu0 0.0
    %3771 = vmatprep.subr.mxu0 0.0
    %3772 = vmatpush2.msra.mxu0 0.0
    %3773 = vmatprep.subr.mxu0 0.0
    %3774 = vmatpush2.msra.mxu0 0.0
    %3775 = vmatprep.subr.mxu0 0.0
    %3776 = vmatpush2.msra.mxu0 0.0
    %3777 = vmatprep.mubr.f32.mxu0 0.0
    %3778 = vmatmul.mubr.f32.gmra.mxu0 %v3711
    %v3779 = vpop.f32.mrf.mxu0
    %v3780 = vadd.f32 0.0, %v3779
    %v3781 = vpop.f32.mrf.mxu0
    %v3782 = vadd.f32 0.0, %v3781
    %3783 = vdwg.mxu0
    %v3784 = vlaneseq
    %v3785 = vshrl.u32 %v3784, 7
    %v3786 = vsub.s32 0, %v3785
    %v3787 = vrot.slane %v3780, %v3786
    %v3788 = vlaneseq
    %v3789 = vshrl.u32 %v3788, 7
    %v3790 = vsub.s32 0, %v3789
    %v3791 = vrot.slane %v3782, %v3790
    %v3792 = vsub.f32 %v2908, %v3787
    %v3793 = vsub.f32 %v2909, %v3791
    %v3794 = vsub.f32 %v2910, %v3787
    %v3795 = vsub.f32 %v2911, %v3791
    %v3796 = vsub.f32 %v3578, %v3787
    %v3797 = vsub.f32 %v3579, %v3791
    %v3798 = vsub.f32 %v3580, %v3787
    %v3799 = vsub.f32 %v3581, %v3791
    %v3800 = vmul.f32 %v3792, %v3792
    %v3801 = vmul.f32 %v3793, %v3793
    %v3802 = vmul.f32 %v3794, %v3794
    %v3803 = vmul.f32 %v3795, %v3795
    %v3804 = vmul.f32 %v3796, %v3796
    %v3805 = vmul.f32 %v3797, %v3797
    %v3806 = vmul.f32 %v3798, %v3798
    %v3807 = vmul.f32 %v3799, %v3799
    %v3808 = vadd.f32 %v3800, %v3802
    %v3809 = vadd.f32 %v3808, %v3804
    %v3810 = vadd.f32 %v3809, %v3806
    %v3811 = vrot.slane %v3810, 4
    %v3812 = vadd.f32 %v3810, %v3811
    %v3813 = vrot.slane %v3812, 2
    %v3814 = vadd.f32 %v3812, %v3813
    %v3815 = vrot.slane %v3814, 1
    %v3816 = vadd.f32 %v3814, %v3815
    %v3817 = vadd.f32 %v3801, %v3803
    %v3818 = vadd.f32 %v3817, %v3805
    %v3819 = vadd.f32 %v3818, %v3807
    %v3820 = vrot.slane %v3819, 4
    %v3821 = vadd.f32 %v3819, %v3820
    %v3822 = vrot.slane %v3821, 2
    %v3823 = vadd.f32 %v3821, %v3822
    %v3824 = vrot.slane %v3823, 1
    %v3825 = vadd.f32 %v3823, %v3824
    %3826 = vmatprep.subr.mxu0 0.0
    %3827 = vmatpush1.msra.mxu0 %v3599
    %3828 = vmatprep.subr.mxu0 0.0
    %3829 = vmatpush1.msra.mxu0 %v3598
    %3830 = vmatprep.subr.mxu0 0.0
    %3831 = vmatpush1.msra.mxu0 %v3597
    %3832 = vmatprep.subr.mxu0 0.0
    %3833 = vmatpush1.msra.mxu0 %v3596
    %3834 = vmatprep.subr.mxu0 0.0
    %3835 = vmatpush1.msra.mxu0 %v3595
    %3836 = vmatprep.subr.mxu0 0.0
    %3837 = vmatpush1.msra.mxu0 %v3594
    %3838 = vmatprep.subr.mxu0 0.0
    %3839 = vmatpush1.msra.mxu0 %v3593
    %3840 = vmatprep.subr.mxu0 0.0
    %3841 = vmatpush1.msra.mxu0 %v3592
    %3842 = vmatprep.subr.mxu0 0.0
    %3843 = vmatpush1.msra.mxu0 %v3591
    %3844 = vmatprep.subr.mxu0 0.0
    %3845 = vmatpush1.msra.mxu0 %v3590
    %3846 = vmatprep.subr.mxu0 0.0
    %3847 = vmatpush1.msra.mxu0 %v3589
    %3848 = vmatprep.subr.mxu0 0.0
    %3849 = vmatpush1.msra.mxu0 %v3588
    %3850 = vmatprep.subr.mxu0 0.0
    %3851 = vmatpush1.msra.mxu0 %v3587
    %3852 = vmatprep.subr.mxu0 0.0
    %3853 = vmatpush1.msra.mxu0 %v3586
    %3854 = vmatprep.subr.mxu0 0.0
    %3855 = vmatpush1.msra.mxu0 %v3585
    %3856 = vmatprep.subr.mxu0 0.0
    %3857 = vmatpush1.msra.mxu0 %v3584
    %3858 = vmatprep.subr.mxu0 0.0
    %3859 = vmatpush2.msra.mxu0 %v3615
    %3860 = vmatprep.subr.mxu0 0.0
    %3861 = vmatpush2.msra.mxu0 %v3614
    %3862 = vmatprep.subr.mxu0 0.0
    %3863 = vmatpush2.msra.mxu0 %v3613
    %3864 = vmatprep.subr.mxu0 0.0
    %3865 = vmatpush2.msra.mxu0 %v3612
    %3866 = vmatprep.subr.mxu0 0.0
    %3867 = vmatpush2.msra.mxu0 %v3611
    %3868 = vmatprep.subr.mxu0 0.0
    %3869 = vmatpush2.msra.mxu0 %v3610
    %3870 = vmatprep.subr.mxu0 0.0
    %3871 = vmatpush2.msra.mxu0 %v3609
    %3872 = vmatprep.subr.mxu0 0.0
    %3873 = vmatpush2.msra.mxu0 %v3608
    %3874 = vmatprep.subr.mxu0 0.0
    %3875 = vmatpush2.msra.mxu0 %v3607
    %3876 = vmatprep.subr.mxu0 0.0
    %3877 = vmatpush2.msra.mxu0 %v3606
    %3878 = vmatprep.subr.mxu0 0.0
    %3879 = vmatpush2.msra.mxu0 %v3605
    %3880 = vmatprep.subr.mxu0 0.0
    %3881 = vmatpush2.msra.mxu0 %v3604
    %3882 = vmatprep.subr.mxu0 0.0
    %3883 = vmatpush2.msra.mxu0 %v3603
    %3884 = vmatprep.subr.mxu0 0.0
    %3885 = vmatpush2.msra.mxu0 %v3602
    %3886 = vmatprep.subr.mxu0 0.0
    %3887 = vmatpush2.msra.mxu0 %v3601
    %3888 = vmatprep.subr.mxu0 0.0
    %3889 = vmatpush2.msra.mxu0 %v3600
    %3890 = vmatprep.mubr.f32.mxu0 %v3825
    %3891 = vmatmul.mubr.f32.gmra.mxu0 %v3816
    %v3892 = vpop.f32.mrf.mxu0
    %v3893 = vadd.f32 0.0, %v3892
    %v3894 = vpop.f32.mrf.mxu0
    %3895 = vdwg.mxu0
    %v3896 = vmul.f32 %v3893, 0.001953125
    %v3897 = vadd.f32 %v3896, 1e-05
    %v3898 = vrsqrt.pop %v3897
    %v3899 = vmul.f32 %v3582, %v3898
    %v3900 = vmul.f32 %v3708, %v3899
    %v3901 = vsub.f32 %v3583, %v3900
    %v3903 = vsel %vm3709, %v3899, 0
    %3905 = vmatprep.subr.mxu0 0.0
    %3906 = vmatpush1.msra.mxu0 0.0
    %3907 = vmatprep.subr.mxu0 0.0
    %3908 = vmatpush1.msra.mxu0 0.0
    %3909 = vmatprep.subr.mxu0 0.0
    %3910 = vmatpush1.msra.mxu0 0.0
    %3911 = vmatprep.subr.mxu0 0.0
    %3912 = vmatpush1.msra.mxu0 0.0
    %3913 = vmatprep.subr.mxu0 0.0
    %3914 = vmatpush1.msra.mxu0 0.0
    %3915 = vmatprep.subr.mxu0 0.0
    %3916 = vmatpush1.msra.mxu0 0.0
    %3917 = vmatprep.subr.mxu0 0.0
    %3918 = vmatpush1.msra.mxu0 0.0
    %3919 = vmatprep.subr.mxu0 0.0
    %3920 = vmatpush1.msra.mxu0 0.0
    %3921 = vmatprep.subr.mxu0 0.0
    %3922 = vmatpush1.msra.mxu0 0.0
    %3923 = vmatprep.subr.mxu0 0.0
    %3924 = vmatpush1.msra.mxu0 0.0
    %3925 = vmatprep.subr.mxu0 0.0
    %3926 = vmatpush1.msra.mxu0 0.0
    %3927 = vmatprep.subr.mxu0 0.0
    %3928 = vmatpush1.msra.mxu0 0.0
    %3929 = vmatprep.subr.mxu0 0.0
    %3930 = vmatpush1.msra.mxu0 0.0
    %3931 = vmatprep.subr.mxu0 0.0
    %3932 = vmatpush1.msra.mxu0 0.0
    %3933 = vmatprep.subr.mxu0 %v3619
    %3934 = vmatpush1.msra.mxu0 %v3618
    %3935 = vmatprep.subr.mxu0 %v3617
    %3936 = vmatpush1.msra.mxu0 %v3616
    %3937 = vmatprep.subr.mxu0 0.0
    %3938 = vmatpush2.msra.mxu0 0.0
    %3939 = vmatprep.subr.mxu0 0.0
    %3940 = vmatpush2.msra.mxu0 0.0
    %3941 = vmatprep.subr.mxu0 0.0
    %3942 = vmatpush2.msra.mxu0 0.0
    %3943 = vmatprep.subr.mxu0 0.0
    %3944 = vmatpush2.msra.mxu0 0.0
    %3945 = vmatprep.subr.mxu0 0.0
    %3946 = vmatpush2.msra.mxu0 0.0
    %3947 = vmatprep.subr.mxu0 0.0
    %3948 = vmatpush2.msra.mxu0 0.0
    %3949 = vmatprep.subr.mxu0 0.0
    %3950 = vmatpush2.msra.mxu0 0.0
    %3951 = vmatprep.subr.mxu0 0.0
    %3952 = vmatpush2.msra.mxu0 0.0
    %3953 = vmatprep.subr.mxu0 0.0
    %3954 = vmatpush2.msra.mxu0 0.0
    %3955 = vmatprep.subr.mxu0 0.0
    %3956 = vmatpush2.msra.mxu0 0.0
    %3957 = vmatprep.subr.mxu0 0.0
    %3958 = vmatpush2.msra.mxu0 0.0
    %3959 = vmatprep.subr.mxu0 0.0
    %3960 = vmatpush2.msra.mxu0 0.0
    %3961 = vmatprep.subr.mxu0 0.0
    %3962 = vmatpush2.msra.mxu0 0.0
    %3963 = vmatprep.subr.mxu0 0.0
    %3964 = vmatpush2.msra.mxu0 0.0
    %3965 = vmatprep.subr.mxu0 0.0
    %3966 = vmatpush2.msra.mxu0 0.0
    %3967 = vmatprep.subr.mxu0 0.0
    %3968 = vmatpush2.msra.mxu0 0.0
    %3969 = vmatprep.mubr.f32.mxu0 0.0
    %3970 = vmatmul.mubr.f32.gmra.mxu0 %v3903
    %v3971 = vpop.f32.mrf.mxu0
    %v3972 = vadd.f32 0.0, %v3971
    %v3973 = vpop.f32.mrf.mxu0
    %v3974 = vadd.f32 0.0, %v3973
    %3975 = vdwg.mxu0
    %v3977 = vsel %vm3709, %v3901, 0
    %3979 = vmatprep.subr.mxu0 0.0
    %3980 = vmatpush1.msra.mxu0 0.0
    %3981 = vmatprep.subr.mxu0 0.0
    %3982 = vmatpush1.msra.mxu0 0.0
    %3983 = vmatprep.subr.mxu0 0.0
    %3984 = vmatpush1.msra.mxu0 0.0
    %3985 = vmatprep.subr.mxu0 0.0
    %3986 = vmatpush1.msra.mxu0 0.0
    %3987 = vmatprep.subr.mxu0 0.0
    %3988 = vmatpush1.msra.mxu0 0.0
    %3989 = vmatprep.subr.mxu0 0.0
    %3990 = vmatpush1.msra.mxu0 0.0
    %3991 = vmatprep.subr.mxu0 0.0
    %3992 = vmatpush1.msra.mxu0 0.0
    %3993 = vmatprep.subr.mxu0 0.0
    %3994 = vmatpush1.msra.mxu0 0.0
    %3995 = vmatprep.subr.mxu0 0.0
    %3996 = vmatpush1.msra.mxu0 0.0
    %3997 = vmatprep.subr.mxu0 0.0
    %3998 = vmatpush1.msra.mxu0 0.0
    %3999 = vmatprep.subr.mxu0 0.0
    %4000 = vmatpush1.msra.mxu0 0.0
    %4001 = vmatprep.subr.mxu0 0.0
    %4002 = vmatpush1.msra.mxu0 0.0
    %4003 = vmatprep.subr.mxu0 0.0
    %4004 = vmatpush1.msra.mxu0 0.0
    %4005 = vmatprep.subr.mxu0 0.0
    %4006 = vmatpush1.msra.mxu0 0.0
    %4007 = vmatprep.subr.mxu0 %v3619
    %4008 = vmatpush1.msra.mxu0 %v3618
    %4009 = vmatprep.subr.mxu0 %v3617
    %4010 = vmatpush1.msra.mxu0 %v3616
    %4011 = vmatprep.subr.mxu0 0.0
    %4012 = vmatpush2.msra.mxu0 0.0
    %4013 = vmatprep.subr.mxu0 0.0
    %4014 = vmatpush2.msra.mxu0 0.0
    %4015 = vmatprep.subr.mxu0 0.0
    %4016 = vmatpush2.msra.mxu0 0.0
    %4017 = vmatprep.subr.mxu0 0.0
    %4018 = vmatpush2.msra.mxu0 0.0
    %4019 = vmatprep.subr.mxu0 0.0
    %4020 = vmatpush2.msra.mxu0 0.0
    %4021 = vmatprep.subr.mxu0 0.0
    %4022 = vmatpush2.msra.mxu0 0.0
    %4023 = vmatprep.subr.mxu0 0.0
    %4024 = vmatpush2.msra.mxu0 0.0
    %4025 = vmatprep.subr.mxu0 0.0
    %4026 = vmatpush2.msra.mxu0 0.0
    %4027 = vmatprep.subr.mxu0 0.0
    %4028 = vmatpush2.msra.mxu0 0.0
    %4029 = vmatprep.subr.mxu0 0.0
    %4030 = vmatpush2.msra.mxu0 0.0
    %4031 = vmatprep.subr.mxu0 0.0
    %4032 = vmatpush2.msra.mxu0 0.0
    %4033 = vmatprep.subr.mxu0 0.0
    %4034 = vmatpush2.msra.mxu0 0.0
    %4035 = vmatprep.subr.mxu0 0.0
    %4036 = vmatpush2.msra.mxu0 0.0
    %4037 = vmatprep.subr.mxu0 0.0
    %4038 = vmatpush2.msra.mxu0 0.0
    %4039 = vmatprep.subr.mxu0 0.0
    %4040 = vmatpush2.msra.mxu0 0.0
    %4041 = vmatprep.subr.mxu0 0.0
    %4042 = vmatpush2.msra.mxu0 0.0
    %4043 = vmatprep.mubr.f32.mxu0 0.0
    %4044 = vmatmul.mubr.f32.gmra.mxu0 %v3977
    %v4045 = vpop.f32.mrf.mxu0
    %v4046 = vadd.f32 0.0, %v4045
    %v4047 = vpop.f32.mrf.mxu0
    %v4048 = vadd.f32 0.0, %v4047
    %4049 = vdwg.mxu0
    %v4050 = vlaneseq
    %v4051 = vshrl.u32 %v4050, 7
    %v4052 = vsub.s32 0, %v4051
    %v4053 = vrot.slane %v3972, %v4052
    %v4054 = vlaneseq
    %v4055 = vshrl.u32 %v4054, 7
    %v4056 = vsub.s32 0, %v4055
    %v4057 = vrot.slane %v3974, %v4056
    %v4058 = vmul.f32 %v2908, %v4053
    %v4059 = vmul.f32 %v2909, %v4057
    %v4060 = vmul.f32 %v2910, %v4053
    %v4061 = vmul.f32 %v2911, %v4057
    %v4062 = vmul.f32 %v3578, %v4053
    %v4063 = vmul.f32 %v3579, %v4057
    %v4064 = vmul.f32 %v3580, %v4053
    %v4065 = vmul.f32 %v3581, %v4057
    %v4066 = vlaneseq
    %v4067 = vshrl.u32 %v4066, 7
    %v4068 = vsub.s32 0, %v4067
    %v4069 = vrot.slane %v4046, %v4068
    %v4070 = vlaneseq
    %v4071 = vshrl.u32 %v4070, 7
    %v4072 = vsub.s32 0, %v4071
    %v4073 = vrot.slane %v4048, %v4072
    %v4074 = vadd.f32 %v4058, %v4069
    %v4075 = vadd.f32 %v4059, %v4073
    %v4076 = vadd.f32 %v4060, %v4069
    %v4077 = vadd.f32 %v4061, %v4073
    %v4078 = vadd.f32 %v4062, %v4069
    %v4079 = vadd.f32 %v4063, %v4073
    %v4080 = vadd.f32 %v4064, %v4069
    %v4081 = vadd.f32 %v4065, %v4073
    %v4082 = vmax.f32 %v4074, 0.0
    %v4083 = vmax.f32 %v4075, 0.0
    %v4084 = vmax.f32 %v4076, 0.0
    %v4085 = vmax.f32 %v4077, 0.0
    %v4086 = vmax.f32 %v4078, 0.0
    %v4087 = vmax.f32 %v4079, 0.0
    %v4088 = vmax.f32 %v4080, 0.0
    %v4089 = vmax.f32 %v4081, 0.0
    %v4090 = vld [vmem:[%s12] sm:$0xff]
    %v4095 = vrot.slane %v4082, 1
    %v4096 = vrot.slane %v4084, 1
    %v4097 = vsel %vm121, %v4095, %v4096
    %v4098 = vrot.slane %v4083, 1
    %v4099 = vrot.slane %v4085, 1
    %v4100 = vsel %vm121, %v4098, %v4099
    %v4105 = vsel %vm121, %v4096, 0.0
    %v4106 = vsel %vm121, %v4099, 0.0
    %v4107 = vrot.slane %v4082, 7
    %v4108 = vrot.slane %v4083, 7
    %v4109 = vrot.slane %v4084, 7
    %v4110 = vsel %vm1940, %v4107, %v4109
    %v4111 = vrot.slane %v4085, 7
    %v4112 = vsel %vm1940, %v4108, %v4111
    %v4117 = vsel %vm1940, 0.0, %v4107
    %v4118 = vsel %vm1940, 0.0, %v4108
    %v4119 = vmax.f32 %v4082, %v4097
    %v4120 = vmax.f32 %v4083, %v4100
    %v4121 = vmax.f32 %v4084, %v4105
    %v4122 = vmax.f32 %v4085, %v4106
    %v4123 = vmax.f32 %v4119, %v4117
    %v4124 = vmax.f32 %v4120, %v4118
    %v4125 = vmax.f32 %v4121, %v4110
    %v4126 = vmax.f32 %v4122, %v4112
    %v4128 = vsel %vm3709, %v4090, 0
    %4130 = vmatprep.subr.mxu0 0.0
    %4131 = vmatpush1.msra.mxu0 0.0
    %4132 = vmatprep.subr.mxu0 0.0
    %4133 = vmatpush1.msra.mxu0 0.0
    %4134 = vmatprep.subr.mxu0 0.0
    %4135 = vmatpush1.msra.mxu0 0.0
    %4136 = vmatprep.subr.mxu0 0.0
    %4137 = vmatpush1.msra.mxu0 0.0
    %4138 = vmatprep.subr.mxu0 0.0
    %4139 = vmatpush1.msra.mxu0 0.0
    %4140 = vmatprep.subr.mxu0 0.0
    %4141 = vmatpush1.msra.mxu0 0.0
    %4142 = vmatprep.subr.mxu0 0.0
    %4143 = vmatpush1.msra.mxu0 0.0
    %4144 = vmatprep.subr.mxu0 0.0
    %4145 = vmatpush1.msra.mxu0 0.0
    %4146 = vmatprep.subr.mxu0 0.0
    %4147 = vmatpush1.msra.mxu0 0.0
    %4148 = vmatprep.subr.mxu0 0.0
    %4149 = vmatpush1.msra.mxu0 0.0
    %4150 = vmatprep.subr.mxu0 0.0
    %4151 = vmatpush1.msra.mxu0 0.0
    %4152 = vmatprep.subr.mxu0 0.0
    %4153 = vmatpush1.msra.mxu0 0.0
    %4154 = vmatprep.subr.mxu0 0.0
    %4155 = vmatpush1.msra.mxu0 0.0
    %4156 = vmatprep.subr.mxu0 0.0
    %4157 = vmatpush1.msra.mxu0 0.0
    %4158 = vmatprep.subr.mxu0 %v4126
    %4159 = vmatpush1.msra.mxu0 %v4125
    %4160 = vmatprep.subr.mxu0 %v4124
    %4161 = vmatpush1.msra.mxu0 %v4123
    %4162 = vmatprep.subr.mxu0 0.0
    %4163 = vmatpush2.msra.mxu0 0.0
    %4164 = vmatprep.subr.mxu0 0.0
    %4165 = vmatpush2.msra.mxu0 0.0
    %4166 = vmatprep.subr.mxu0 0.0
    %4167 = vmatpush2.msra.mxu0 0.0
    %4168 = vmatprep.subr.mxu0 0.0
    %4169 = vmatpush2.msra.mxu0 0.0
    %4170 = vmatprep.subr.mxu0 0.0
    %4171 = vmatpush2.msra.mxu0 0.0
    %4172 = vmatprep.subr.mxu0 0.0
    %4173 = vmatpush2.msra.mxu0 0.0
    %4174 = vmatprep.subr.mxu0 0.0
    %4175 = vmatpush2.msra.mxu0 0.0
    %4176 = vmatprep.subr.mxu0 0.0
    %4177 = vmatpush2.msra.mxu0 0.0
    %4178 = vmatprep.subr.mxu0 0.0
    %4179 = vmatpush2.msra.mxu0 0.0
    %4180 = vmatprep.subr.mxu0 0.0
    %4181 = vmatpush2.msra.mxu0 0.0
    %4182 = vmatprep.subr.mxu0 0.0
    %4183 = vmatpush2.msra.mxu0 0.0
    %4184 = vmatprep.subr.mxu0 0.0
    %4185 = vmatpush2.msra.mxu0 0.0
    %4186 = vmatprep.subr.mxu0 0.0
    %4187 = vmatpush2.msra.mxu0 0.0
    %4188 = vmatprep.subr.mxu0 0.0
    %4189 = vmatpush2.msra.mxu0 0.0
    %4190 = vmatprep.subr.mxu0 0.0
    %4191 = vmatpush2.msra.mxu0 0.0
    %4192 = vmatprep.subr.mxu0 0.0
    %4193 = vmatpush2.msra.mxu0 0.0
    %4194 = vmatprep.mubr.f32.mxu0 0.0
    %4195 = vmatmul.mubr.f32.gmra.mxu0 %v4128
    %v4196 = vpop.f32.mrf.mxu0
    %v4197 = vadd.f32 0.0, %v4196
    %v4198 = vpop.f32.mrf.mxu0
    %v4199 = vadd.f32 0.0, %v4198
    %4200 = vdwg.mxu0
    %4203 = vrot.lane.b32.xlu0 %v4197, 112
    %v4204 = vpop.permute.xlu0 %4203
    %4205 = vrot.lane.b32.xlu0 %v4199, 112
    %v4206 = vpop.permute.xlu0 %4205
    %vm4207 = vcmask 916480
    %v4208 = vsel %vm4207, %v4204, %v4206
    %v4211 = vsel %vm4207, %v4206, 0.0
    %4212 = vrot.lane.b32.xlu0 %v4197, 16
    %v4213 = vpop.permute.xlu0 %4212
    %4214 = vrot.lane.b32.xlu0 %v4199, 16
    %v4215 = vpop.permute.xlu0 %4214
    %v4216 = vsel %vm3709, %v4213, %v4215
    %v4219 = vsel %vm3709, 0.0, %v4213
    %v4220 = vmax.f32 %v4197, %v4208
    %v4221 = vmax.f32 %v4199, %v4211
    %v4222 = vmax.f32 %v4220, %v4219
    %v4223 = vmax.f32 %v4221, %v4216
    %v4224 = vld [vmem:[%s13] sm:$0xff]
    %v4225 = vld [vmem:[%s13 + $0x8] sm:$0xff]
    %v4226 = vld [vmem:[%s13 + $0x10] sm:$0xff]
    %v4227 = vld [vmem:[%s13 + $0x18] sm:$0xff]
    %v4228 = vld [vmem:[%s13 + $0x20] sm:$0xff]
    %v4229 = vld [vmem:[%s13 + $0x28] sm:$0xff]
    %v4230 = vld [vmem:[%s13 + $0x30] sm:$0xff]
    %v4231 = vld [vmem:[%s13 + $0x38] sm:$0xff]
    %v4232 = vld [vmem:[%s13 + $0x40] sm:$0xff]
    %v4233 = vld [vmem:[%s13 + $0x48] sm:$0xff]
    %v4234 = vld [vmem:[%s13 + $0x50] sm:$0xff]
    %v4235 = vld [vmem:[%s13 + $0x58] sm:$0xff]
    %v4236 = vld [vmem:[%s13 + $0x60] sm:$0xff]
    %v4237 = vld [vmem:[%s13 + $0x68] sm:$0xff]
    %v4238 = vld [vmem:[%s13 + $0x70] sm:$0xff]
    %v4239 = vld [vmem:[%s13 + $0x78] sm:$0xff]
    %v4240 = vld [vmem:[%s13 + $0x80] sm:$0xff]
    %v4241 = vld [vmem:[%s13 + $0x88] sm:$0xff]
    %v4242 = vld [vmem:[%s13 + $0x90] sm:$0xff]
    %v4243 = vld [vmem:[%s13 + $0x98] sm:$0xff]
    %v4244 = vld [vmem:[%s13 + $0xa0] sm:$0xff]
    %v4245 = vld [vmem:[%s13 + $0xa8] sm:$0xff]
    %v4246 = vld [vmem:[%s13 + $0xb0] sm:$0xff]
    %v4247 = vld [vmem:[%s13 + $0xb8] sm:$0xff]
    %v4248 = vld [vmem:[%s13 + $0xc0] sm:$0xff]
    %v4249 = vld [vmem:[%s13 + $0xc8] sm:$0xff]
    %v4250 = vld [vmem:[%s13 + $0xd0] sm:$0xff]
    %v4251 = vld [vmem:[%s13 + $0xd8] sm:$0xff]
    %v4252 = vld [vmem:[%s13 + $0xe0] sm:$0xff]
    %v4253 = vld [vmem:[%s13 + $0xe8] sm:$0xff]
    %v4254 = vld [vmem:[%s13 + $0xf0] sm:$0xff]
    %v4255 = vld [vmem:[%s13 + $0xf8] sm:$0xff]
    %s4256 = scalar_lea.vmem %s13, 256
    %v4257 = vld [vmem:[%s4256] sm:$0xff]
    %v4258 = vld [vmem:[%s4256 + $0x8] sm:$0xff]
    %v4259 = vld [vmem:[%s4256 + $0x10] sm:$0xff]
    %v4260 = vld [vmem:[%s4256 + $0x18] sm:$0xff]
    %v4261 = vld [vmem:[%s4256 + $0x20] sm:$0xff]
    %v4262 = vld [vmem:[%s4256 + $0x28] sm:$0xff]
    %v4263 = vld [vmem:[%s4256 + $0x30] sm:$0xff]
    %v4264 = vld [vmem:[%s4256 + $0x38] sm:$0xff]
    %v4265 = vld [vmem:[%s4256 + $0x40] sm:$0xff]
    %v4266 = vld [vmem:[%s4256 + $0x48] sm:$0xff]
    %v4267 = vld [vmem:[%s4256 + $0x50] sm:$0xff]
    %v4268 = vld [vmem:[%s4256 + $0x58] sm:$0xff]
    %v4269 = vld [vmem:[%s4256 + $0x60] sm:$0xff]
    %v4270 = vld [vmem:[%s4256 + $0x68] sm:$0xff]
    %v4271 = vld [vmem:[%s4256 + $0x70] sm:$0xff]
    %v4272 = vld [vmem:[%s4256 + $0x78] sm:$0xff]
    %v4273 = vld [vmem:[%s4256 + $0x80] sm:$0xff]
    %v4274 = vld [vmem:[%s4256 + $0x88] sm:$0xff]
    %v4275 = vld [vmem:[%s4256 + $0x90] sm:$0xff]
    %v4276 = vld [vmem:[%s4256 + $0x98] sm:$0xff]
    %v4277 = vld [vmem:[%s4256 + $0xa0] sm:$0xff]
    %v4278 = vld [vmem:[%s4256 + $0xa8] sm:$0xff]
    %v4279 = vld [vmem:[%s4256 + $0xb0] sm:$0xff]
    %v4280 = vld [vmem:[%s4256 + $0xb8] sm:$0xff]
    %v4281 = vld [vmem:[%s4256 + $0xc0] sm:$0xff]
    %v4282 = vld [vmem:[%s4256 + $0xc8] sm:$0xff]
    %v4283 = vld [vmem:[%s4256 + $0xd0] sm:$0xff]
    %v4284 = vld [vmem:[%s4256 + $0xd8] sm:$0xff]
    %v4285 = vld [vmem:[%s4256 + $0xe0] sm:$0xff]
    %v4286 = vld [vmem:[%s4256 + $0xe8] sm:$0xff]
    %v4287 = vld [vmem:[%s4256 + $0xf0] sm:$0xff]
    %v4288 = vld [vmem:[%s4256 + $0xf8] sm:$0xff]
    %v4291 = vrot.slane %v4222, 1
    %v4292 = vrot.slane %v4223, 1
    %4295 = vmatprep.subr.mxu0 0.0
    %4296 = vmatpush1.msra.mxu0 %v4272
    %4297 = vmatprep.subr.mxu0 0.0
    %4298 = vmatpush1.msra.mxu0 %v4271
    %4299 = vmatprep.subr.mxu0 0.0
    %4300 = vmatpush1.msra.mxu0 %v4270
    %4301 = vmatprep.subr.mxu0 0.0
    %4302 = vmatpush1.msra.mxu0 %v4269
    %4303 = vmatprep.subr.mxu0 0.0
    %4304 = vmatpush1.msra.mxu0 %v4268
    %4305 = vmatprep.subr.mxu0 0.0
    %4306 = vmatpush1.msra.mxu0 %v4267
    %4307 = vmatprep.subr.mxu0 0.0
    %4308 = vmatpush1.msra.mxu0 %v4266
    %4309 = vmatprep.subr.mxu0 0.0
    %4310 = vmatpush1.msra.mxu0 %v4265
    %4311 = vmatprep.subr.mxu0 0.0
    %4312 = vmatpush1.msra.mxu0 %v4264
    %4313 = vmatprep.subr.mxu0 0.0
    %4314 = vmatpush1.msra.mxu0 %v4263
    %4315 = vmatprep.subr.mxu0 0.0
    %4316 = vmatpush1.msra.mxu0 %v4262
    %4317 = vmatprep.subr.mxu0 0.0
    %4318 = vmatpush1.msra.mxu0 %v4261
    %4319 = vmatprep.subr.mxu0 0.0
    %4320 = vmatpush1.msra.mxu0 %v4260
    %4321 = vmatprep.subr.mxu0 0.0
    %4322 = vmatpush1.msra.mxu0 %v4259
    %4323 = vmatprep.subr.mxu0 0.0
    %4324 = vmatpush1.msra.mxu0 %v4258
    %4325 = vmatprep.subr.mxu0 0.0
    %4326 = vmatpush1.msra.mxu0 %v4257
    %4327 = vmatprep.subr.mxu0 0.0
    %4328 = vmatpush2.msra.mxu0 %v4288
    %4329 = vmatprep.subr.mxu0 0.0
    %4330 = vmatpush2.msra.mxu0 %v4287
    %4331 = vmatprep.subr.mxu0 0.0
    %4332 = vmatpush2.msra.mxu0 %v4286
    %4333 = vmatprep.subr.mxu0 0.0
    %4334 = vmatpush2.msra.mxu0 %v4285
    %4335 = vmatprep.subr.mxu0 0.0
    %4336 = vmatpush2.msra.mxu0 %v4284
    %4337 = vmatprep.subr.mxu0 0.0
    %4338 = vmatpush2.msra.mxu0 %v4283
    %4339 = vmatprep.subr.mxu0 0.0
    %4340 = vmatpush2.msra.mxu0 %v4282
    %4341 = vmatprep.subr.mxu0 0.0
    %4342 = vmatpush2.msra.mxu0 %v4281
    %4343 = vmatprep.subr.mxu0 0.0
    %4344 = vmatpush2.msra.mxu0 %v4280
    %4345 = vmatprep.subr.mxu0 0.0
    %4346 = vmatpush2.msra.mxu0 %v4279
    %4347 = vmatprep.subr.mxu0 0.0
    %4348 = vmatpush2.msra.mxu0 %v4278
    %4349 = vmatprep.subr.mxu0 0.0
    %4350 = vmatpush2.msra.mxu0 %v4277
    %4351 = vmatprep.subr.mxu0 0.0
    %4352 = vmatpush2.msra.mxu0 %v4276
    %4353 = vmatprep.subr.mxu0 0.0
    %4354 = vmatpush2.msra.mxu0 %v4275
    %4355 = vmatprep.subr.mxu0 0.0
    %4356 = vmatpush2.msra.mxu0 %v4274
    %4357 = vmatprep.subr.mxu0 0.0
    %4358 = vmatpush2.msra.mxu0 %v4273
    %4359 = vmatprep.mubr.f32.mxu0 %v4292
    %4360 = vmatmul.mubr.f32.gmra.mxu0 %v4291
    %v4361 = vpop.f32.mrf.mxu0
    %v4362 = vadd.f32 0.0, %v4361
    %v4363 = vpop.f32.mrf.mxu0
    %4364 = vdwg.mxu0
    %4365 = vmatprep.subr.mxu0 0.0
    %4366 = vmatpush1.msra.mxu0 %v4239
    %4367 = vmatprep.subr.mxu0 0.0
    %4368 = vmatpush1.msra.mxu0 %v4238
    %4369 = vmatprep.subr.mxu0 0.0
    %4370 = vmatpush1.msra.mxu0 %v4237
    %4371 = vmatprep.subr.mxu0 0.0
    %4372 = vmatpush1.msra.mxu0 %v4236
    %4373 = vmatprep.subr.mxu0 0.0
    %4374 = vmatpush1.msra.mxu0 %v4235
    %4375 = vmatprep.subr.mxu0 0.0
    %4376 = vmatpush1.msra.mxu0 %v4234
    %4377 = vmatprep.subr.mxu0 0.0
    %4378 = vmatpush1.msra.mxu0 %v4233
    %4379 = vmatprep.subr.mxu0 0.0
    %4380 = vmatpush1.msra.mxu0 %v4232
    %4381 = vmatprep.subr.mxu0 0.0
    %4382 = vmatpush1.msra.mxu0 %v4231
    %4383 = vmatprep.subr.mxu0 0.0
    %4384 = vmatpush1.msra.mxu0 %v4230
    %4385 = vmatprep.subr.mxu0 0.0
    %4386 = vmatpush1.msra.mxu0 %v4229
    %4387 = vmatprep.subr.mxu0 0.0
    %4388 = vmatpush1.msra.mxu0 %v4228
    %4389 = vmatprep.subr.mxu0 0.0
    %4390 = vmatpush1.msra.mxu0 %v4227
    %4391 = vmatprep.subr.mxu0 0.0
    %4392 = vmatpush1.msra.mxu0 %v4226
    %4393 = vmatprep.subr.mxu0 0.0
    %4394 = vmatpush1.msra.mxu0 %v4225
    %4395 = vmatprep.subr.mxu0 0.0
    %4396 = vmatpush1.msra.mxu0 %v4224
    %4397 = vmatprep.subr.mxu0 0.0
    %4398 = vmatpush2.msra.mxu0 %v4255
    %4399 = vmatprep.subr.mxu0 0.0
    %4400 = vmatpush2.msra.mxu0 %v4254
    %4401 = vmatprep.subr.mxu0 0.0
    %4402 = vmatpush2.msra.mxu0 %v4253
    %4403 = vmatprep.subr.mxu0 0.0
    %4404 = vmatpush2.msra.mxu0 %v4252
    %4405 = vmatprep.subr.mxu0 0.0
    %4406 = vmatpush2.msra.mxu0 %v4251
    %4407 = vmatprep.subr.mxu0 0.0
    %4408 = vmatpush2.msra.mxu0 %v4250
    %4409 = vmatprep.subr.mxu0 0.0
    %4410 = vmatpush2.msra.mxu0 %v4249
    %4411 = vmatprep.subr.mxu0 0.0
    %4412 = vmatpush2.msra.mxu0 %v4248
    %4413 = vmatprep.subr.mxu0 0.0
    %4414 = vmatpush2.msra.mxu0 %v4247
    %4415 = vmatprep.subr.mxu0 0.0
    %4416 = vmatpush2.msra.mxu0 %v4246
    %4417 = vmatprep.subr.mxu0 0.0
    %4418 = vmatpush2.msra.mxu0 %v4245
    %4419 = vmatprep.subr.mxu0 0.0
    %4420 = vmatpush2.msra.mxu0 %v4244
    %4421 = vmatprep.subr.mxu0 0.0
    %4422 = vmatpush2.msra.mxu0 %v4243
    %4423 = vmatprep.subr.mxu0 0.0
    %4424 = vmatpush2.msra.mxu0 %v4242
    %4425 = vmatprep.subr.mxu0 0.0
    %4426 = vmatpush2.msra.mxu0 %v4241
    %4427 = vmatprep.subr.mxu0 0.0
    %4428 = vmatpush2.msra.mxu0 %v4240
    %4429 = vmatprep.mubr.f32.mxu0 %v4223
    %4430 = vmatmul.mubr.f32.gmra.mxu0 %v4222
    %v4431 = vpop.f32.mrf.mxu0
    %v4432 = vadd.f32 %v4362, %v4431
    %v4433 = vpop.f32.mrf.mxu0
    %4434 = vdwg.mxu0
    %s4435 = scalar_lea.vmem %s13, 512
    %v4436 = vld [vmem:[%s4435] sm:$0xff]
    %v4437 = vld [vmem:[%s4435 + $0x8] sm:$0xff]
    %v4438 = vld [vmem:[%s4435 + $0x10] sm:$0xff]
    %v4439 = vld [vmem:[%s4435 + $0x18] sm:$0xff]
    %v4440 = vld [vmem:[%s4435 + $0x20] sm:$0xff]
    %v4441 = vld [vmem:[%s4435 + $0x28] sm:$0xff]
    %v4442 = vld [vmem:[%s4435 + $0x30] sm:$0xff]
    %v4443 = vld [vmem:[%s4435 + $0x38] sm:$0xff]
    %v4444 = vld [vmem:[%s4435 + $0x40] sm:$0xff]
    %v4445 = vld [vmem:[%s4435 + $0x48] sm:$0xff]
    %v4446 = vld [vmem:[%s4435 + $0x50] sm:$0xff]
    %v4447 = vld [vmem:[%s4435 + $0x58] sm:$0xff]
    %v4448 = vld [vmem:[%s4435 + $0x60] sm:$0xff]
    %v4449 = vld [vmem:[%s4435 + $0x68] sm:$0xff]
    %v4450 = vld [vmem:[%s4435 + $0x70] sm:$0xff]
    %v4451 = vld [vmem:[%s4435 + $0x78] sm:$0xff]
    %v4452 = vld [vmem:[%s4435 + $0x80] sm:$0xff]
    %v4453 = vld [vmem:[%s4435 + $0x88] sm:$0xff]
    %v4454 = vld [vmem:[%s4435 + $0x90] sm:$0xff]
    %v4455 = vld [vmem:[%s4435 + $0x98] sm:$0xff]
    %v4456 = vld [vmem:[%s4435 + $0xa0] sm:$0xff]
    %v4457 = vld [vmem:[%s4435 + $0xa8] sm:$0xff]
    %v4458 = vld [vmem:[%s4435 + $0xb0] sm:$0xff]
    %v4459 = vld [vmem:[%s4435 + $0xb8] sm:$0xff]
    %v4460 = vld [vmem:[%s4435 + $0xc0] sm:$0xff]
    %v4461 = vld [vmem:[%s4435 + $0xc8] sm:$0xff]
    %v4462 = vld [vmem:[%s4435 + $0xd0] sm:$0xff]
    %v4463 = vld [vmem:[%s4435 + $0xd8] sm:$0xff]
    %v4464 = vld [vmem:[%s4435 + $0xe0] sm:$0xff]
    %v4465 = vld [vmem:[%s4435 + $0xe8] sm:$0xff]
    %v4466 = vld [vmem:[%s4435 + $0xf0] sm:$0xff]
    %v4467 = vld [vmem:[%s4435 + $0xf8] sm:$0xff]
    %v4468 = vrot.slane %v4222, 2
    %v4469 = vrot.slane %v4223, 2
    %4472 = vmatprep.subr.mxu0 0.0
    %4473 = vmatpush1.msra.mxu0 %v4451
    %4474 = vmatprep.subr.mxu0 0.0
    %4475 = vmatpush1.msra.mxu0 %v4450
    %4476 = vmatprep.subr.mxu0 0.0
    %4477 = vmatpush1.msra.mxu0 %v4449
    %4478 = vmatprep.subr.mxu0 0.0
    %4479 = vmatpush1.msra.mxu0 %v4448
    %4480 = vmatprep.subr.mxu0 0.0
    %4481 = vmatpush1.msra.mxu0 %v4447
    %4482 = vmatprep.subr.mxu0 0.0
    %4483 = vmatpush1.msra.mxu0 %v4446
    %4484 = vmatprep.subr.mxu0 0.0
    %4485 = vmatpush1.msra.mxu0 %v4445
    %4486 = vmatprep.subr.mxu0 0.0
    %4487 = vmatpush1.msra.mxu0 %v4444
    %4488 = vmatprep.subr.mxu0 0.0
    %4489 = vmatpush1.msra.mxu0 %v4443
    %4490 = vmatprep.subr.mxu0 0.0
    %4491 = vmatpush1.msra.mxu0 %v4442
    %4492 = vmatprep.subr.mxu0 0.0
    %4493 = vmatpush1.msra.mxu0 %v4441
    %4494 = vmatprep.subr.mxu0 0.0
    %4495 = vmatpush1.msra.mxu0 %v4440
    %4496 = vmatprep.subr.mxu0 0.0
    %4497 = vmatpush1.msra.mxu0 %v4439
    %4498 = vmatprep.subr.mxu0 0.0
    %4499 = vmatpush1.msra.mxu0 %v4438
    %4500 = vmatprep.subr.mxu0 0.0
    %4501 = vmatpush1.msra.mxu0 %v4437
    %4502 = vmatprep.subr.mxu0 0.0
    %4503 = vmatpush1.msra.mxu0 %v4436
    %4504 = vmatprep.subr.mxu0 0.0
    %4505 = vmatpush2.msra.mxu0 %v4467
    %4506 = vmatprep.subr.mxu0 0.0
    %4507 = vmatpush2.msra.mxu0 %v4466
    %4508 = vmatprep.subr.mxu0 0.0
    %4509 = vmatpush2.msra.mxu0 %v4465
    %4510 = vmatprep.subr.mxu0 0.0
    %4511 = vmatpush2.msra.mxu0 %v4464
    %4512 = vmatprep.subr.mxu0 0.0
    %4513 = vmatpush2.msra.mxu0 %v4463
    %4514 = vmatprep.subr.mxu0 0.0
    %4515 = vmatpush2.msra.mxu0 %v4462
    %4516 = vmatprep.subr.mxu0 0.0
    %4517 = vmatpush2.msra.mxu0 %v4461
    %4518 = vmatprep.subr.mxu0 0.0
    %4519 = vmatpush2.msra.mxu0 %v4460
    %4520 = vmatprep.subr.mxu0 0.0
    %4521 = vmatpush2.msra.mxu0 %v4459
    %4522 = vmatprep.subr.mxu0 0.0
    %4523 = vmatpush2.msra.mxu0 %v4458
    %4524 = vmatprep.subr.mxu0 0.0
    %4525 = vmatpush2.msra.mxu0 %v4457
    %4526 = vmatprep.subr.mxu0 0.0
    %4527 = vmatpush2.msra.mxu0 %v4456
    %4528 = vmatprep.subr.mxu0 0.0
    %4529 = vmatpush2.msra.mxu0 %v4455
    %4530 = vmatprep.subr.mxu0 0.0
    %4531 = vmatpush2.msra.mxu0 %v4454
    %4532 = vmatprep.subr.mxu0 0.0
    %4533 = vmatpush2.msra.mxu0 %v4453
    %4534 = vmatprep.subr.mxu0 0.0
    %4535 = vmatpush2.msra.mxu0 %v4452
    %4536 = vmatprep.mubr.f32.mxu0 %v4469
    %4537 = vmatmul.mubr.f32.gmra.mxu0 %v4468
    %v4538 = vpop.f32.mrf.mxu0
    %v4539 = vadd.f32 0.0, %v4538
    %v4540 = vpop.f32.mrf.mxu0
    %4541 = vdwg.mxu0
    %v4542 = vadd.f32 %v4432, %v4539
    %s4543 = scalar_lea.vmem %s13, 768
    %v4544 = vld [vmem:[%s4543] sm:$0xff]
    %v4545 = vld [vmem:[%s4543 + $0x8] sm:$0xff]
    %v4546 = vld [vmem:[%s4543 + $0x10] sm:$0xff]
    %v4547 = vld [vmem:[%s4543 + $0x18] sm:$0xff]
    %v4548 = vld [vmem:[%s4543 + $0x20] sm:$0xff]
    %v4549 = vld [vmem:[%s4543 + $0x28] sm:$0xff]
    %v4550 = vld [vmem:[%s4543 + $0x30] sm:$0xff]
    %v4551 = vld [vmem:[%s4543 + $0x38] sm:$0xff]
    %v4552 = vld [vmem:[%s4543 + $0x40] sm:$0xff]
    %v4553 = vld [vmem:[%s4543 + $0x48] sm:$0xff]
    %v4554 = vld [vmem:[%s4543 + $0x50] sm:$0xff]
    %v4555 = vld [vmem:[%s4543 + $0x58] sm:$0xff]
    %v4556 = vld [vmem:[%s4543 + $0x60] sm:$0xff]
    %v4557 = vld [vmem:[%s4543 + $0x68] sm:$0xff]
    %v4558 = vld [vmem:[%s4543 + $0x70] sm:$0xff]
    %v4559 = vld [vmem:[%s4543 + $0x78] sm:$0xff]
    %v4560 = vld [vmem:[%s4543 + $0x80] sm:$0xff]
    %v4561 = vld [vmem:[%s4543 + $0x88] sm:$0xff]
    %v4562 = vld [vmem:[%s4543 + $0x90] sm:$0xff]
    %v4563 = vld [vmem:[%s4543 + $0x98] sm:$0xff]
    %v4564 = vld [vmem:[%s4543 + $0xa0] sm:$0xff]
    %v4565 = vld [vmem:[%s4543 + $0xa8] sm:$0xff]
    %v4566 = vld [vmem:[%s4543 + $0xb0] sm:$0xff]
    %v4567 = vld [vmem:[%s4543 + $0xb8] sm:$0xff]
    %v4568 = vld [vmem:[%s4543 + $0xc0] sm:$0xff]
    %v4569 = vld [vmem:[%s4543 + $0xc8] sm:$0xff]
    %v4570 = vld [vmem:[%s4543 + $0xd0] sm:$0xff]
    %v4571 = vld [vmem:[%s4543 + $0xd8] sm:$0xff]
    %v4572 = vld [vmem:[%s4543 + $0xe0] sm:$0xff]
    %v4573 = vld [vmem:[%s4543 + $0xe8] sm:$0xff]
    %v4574 = vld [vmem:[%s4543 + $0xf0] sm:$0xff]
    %v4575 = vld [vmem:[%s4543 + $0xf8] sm:$0xff]
    %v4576 = vrot.slane %v4222, 3
    %v4577 = vrot.slane %v4223, 3
    %4580 = vmatprep.subr.mxu0 0.0
    %4581 = vmatpush1.msra.mxu0 %v4559
    %4582 = vmatprep.subr.mxu0 0.0
    %4583 = vmatpush1.msra.mxu0 %v4558
    %4584 = vmatprep.subr.mxu0 0.0
    %4585 = vmatpush1.msra.mxu0 %v4557
    %4586 = vmatprep.subr.mxu0 0.0
    %4587 = vmatpush1.msra.mxu0 %v4556
    %4588 = vmatprep.subr.mxu0 0.0
    %4589 = vmatpush1.msra.mxu0 %v4555
    %4590 = vmatprep.subr.mxu0 0.0
    %4591 = vmatpush1.msra.mxu0 %v4554
    %4592 = vmatprep.subr.mxu0 0.0
    %4593 = vmatpush1.msra.mxu0 %v4553
    %4594 = vmatprep.subr.mxu0 0.0
    %4595 = vmatpush1.msra.mxu0 %v4552
    %4596 = vmatprep.subr.mxu0 0.0
    %4597 = vmatpush1.msra.mxu0 %v4551
    %4598 = vmatprep.subr.mxu0 0.0
    %4599 = vmatpush1.msra.mxu0 %v4550
    %4600 = vmatprep.subr.mxu0 0.0
    %4601 = vmatpush1.msra.mxu0 %v4549
    %4602 = vmatprep.subr.mxu0 0.0
    %4603 = vmatpush1.msra.mxu0 %v4548
    %4604 = vmatprep.subr.mxu0 0.0
    %4605 = vmatpush1.msra.mxu0 %v4547
    %4606 = vmatprep.subr.mxu0 0.0
    %4607 = vmatpush1.msra.mxu0 %v4546
    %4608 = vmatprep.subr.mxu0 0.0
    %4609 = vmatpush1.msra.mxu0 %v4545
    %4610 = vmatprep.subr.mxu0 0.0
    %4611 = vmatpush1.msra.mxu0 %v4544
    %4612 = vmatprep.subr.mxu0 0.0
    %4613 = vmatpush2.msra.mxu0 %v4575
    %4614 = vmatprep.subr.mxu0 0.0
    %4615 = vmatpush2.msra.mxu0 %v4574
    %4616 = vmatprep.subr.mxu0 0.0
    %4617 = vmatpush2.msra.mxu0 %v4573
    %4618 = vmatprep.subr.mxu0 0.0
    %4619 = vmatpush2.msra.mxu0 %v4572
    %4620 = vmatprep.subr.mxu0 0.0
    %4621 = vmatpush2.msra.mxu0 %v4571
    %4622 = vmatprep.subr.mxu0 0.0
    %4623 = vmatpush2.msra.mxu0 %v4570
    %4624 = vmatprep.subr.mxu0 0.0
    %4625 = vmatpush2.msra.mxu0 %v4569
    %4626 = vmatprep.subr.mxu0 0.0
    %4627 = vmatpush2.msra.mxu0 %v4568
    %4628 = vmatprep.subr.mxu0 0.0
    %4629 = vmatpush2.msra.mxu0 %v4567
    %4630 = vmatprep.subr.mxu0 0.0
    %4631 = vmatpush2.msra.mxu0 %v4566
    %4632 = vmatprep.subr.mxu0 0.0
    %4633 = vmatpush2.msra.mxu0 %v4565
    %4634 = vmatprep.subr.mxu0 0.0
    %4635 = vmatpush2.msra.mxu0 %v4564
    %4636 = vmatprep.subr.mxu0 0.0
    %4637 = vmatpush2.msra.mxu0 %v4563
    %4638 = vmatprep.subr.mxu0 0.0
    %4639 = vmatpush2.msra.mxu0 %v4562
    %4640 = vmatprep.subr.mxu0 0.0
    %4641 = vmatpush2.msra.mxu0 %v4561
    %4642 = vmatprep.subr.mxu0 0.0
    %4643 = vmatpush2.msra.mxu0 %v4560
    %4644 = vmatprep.mubr.f32.mxu0 %v4577
    %4645 = vmatmul.mubr.f32.gmra.mxu0 %v4576
    %v4646 = vpop.f32.mrf.mxu0
    %v4647 = vadd.f32 0.0, %v4646
    %v4648 = vpop.f32.mrf.mxu0
    %4649 = vdwg.mxu0
    %v4650 = vadd.f32 %v4542, %v4647
    %s4651 = scalar_lea.vmem %s13, 1024
    %v4652 = vld [vmem:[%s4651] sm:$0xff]
    %v4653 = vld [vmem:[%s4651 + $0x8] sm:$0xff]
    %v4654 = vld [vmem:[%s4651 + $0x10] sm:$0xff]
    %v4655 = vld [vmem:[%s4651 + $0x18] sm:$0xff]
    %v4656 = vld [vmem:[%s4651 + $0x20] sm:$0xff]
    %v4657 = vld [vmem:[%s4651 + $0x28] sm:$0xff]
    %v4658 = vld [vmem:[%s4651 + $0x30] sm:$0xff]
    %v4659 = vld [vmem:[%s4651 + $0x38] sm:$0xff]
    %v4660 = vld [vmem:[%s4651 + $0x40] sm:$0xff]
    %v4661 = vld [vmem:[%s4651 + $0x48] sm:$0xff]
    %v4662 = vld [vmem:[%s4651 + $0x50] sm:$0xff]
    %v4663 = vld [vmem:[%s4651 + $0x58] sm:$0xff]
    %v4664 = vld [vmem:[%s4651 + $0x60] sm:$0xff]
    %v4665 = vld [vmem:[%s4651 + $0x68] sm:$0xff]
    %v4666 = vld [vmem:[%s4651 + $0x70] sm:$0xff]
    %v4667 = vld [vmem:[%s4651 + $0x78] sm:$0xff]
    %v4668 = vld [vmem:[%s4651 + $0x80] sm:$0xff]
    %v4669 = vld [vmem:[%s4651 + $0x88] sm:$0xff]
    %v4670 = vld [vmem:[%s4651 + $0x90] sm:$0xff]
    %v4671 = vld [vmem:[%s4651 + $0x98] sm:$0xff]
    %v4672 = vld [vmem:[%s4651 + $0xa0] sm:$0xff]
    %v4673 = vld [vmem:[%s4651 + $0xa8] sm:$0xff]
    %v4674 = vld [vmem:[%s4651 + $0xb0] sm:$0xff]
    %v4675 = vld [vmem:[%s4651 + $0xb8] sm:$0xff]
    %v4676 = vld [vmem:[%s4651 + $0xc0] sm:$0xff]
    %v4677 = vld [vmem:[%s4651 + $0xc8] sm:$0xff]
    %v4678 = vld [vmem:[%s4651 + $0xd0] sm:$0xff]
    %v4679 = vld [vmem:[%s4651 + $0xd8] sm:$0xff]
    %v4680 = vld [vmem:[%s4651 + $0xe0] sm:$0xff]
    %v4681 = vld [vmem:[%s4651 + $0xe8] sm:$0xff]
    %v4682 = vld [vmem:[%s4651 + $0xf0] sm:$0xff]
    %v4683 = vld [vmem:[%s4651 + $0xf8] sm:$0xff]
    %v4684 = vrot.slane %v4222, 4
    %v4685 = vrot.slane %v4223, 4
    %4688 = vmatprep.subr.mxu0 0.0
    %4689 = vmatpush1.msra.mxu0 %v4667
    %4690 = vmatprep.subr.mxu0 0.0
    %4691 = vmatpush1.msra.mxu0 %v4666
    %4692 = vmatprep.subr.mxu0 0.0
    %4693 = vmatpush1.msra.mxu0 %v4665
    %4694 = vmatprep.subr.mxu0 0.0
    %4695 = vmatpush1.msra.mxu0 %v4664
    %4696 = vmatprep.subr.mxu0 0.0
    %4697 = vmatpush1.msra.mxu0 %v4663
    %4698 = vmatprep.subr.mxu0 0.0
    %4699 = vmatpush1.msra.mxu0 %v4662
    %4700 = vmatprep.subr.mxu0 0.0
    %4701 = vmatpush1.msra.mxu0 %v4661
    %4702 = vmatprep.subr.mxu0 0.0
    %4703 = vmatpush1.msra.mxu0 %v4660
    %4704 = vmatprep.subr.mxu0 0.0
    %4705 = vmatpush1.msra.mxu0 %v4659
    %4706 = vmatprep.subr.mxu0 0.0
    %4707 = vmatpush1.msra.mxu0 %v4658
    %4708 = vmatprep.subr.mxu0 0.0
    %4709 = vmatpush1.msra.mxu0 %v4657
    %4710 = vmatprep.subr.mxu0 0.0
    %4711 = vmatpush1.msra.mxu0 %v4656
    %4712 = vmatprep.subr.mxu0 0.0
    %4713 = vmatpush1.msra.mxu0 %v4655
    %4714 = vmatprep.subr.mxu0 0.0
    %4715 = vmatpush1.msra.mxu0 %v4654
    %4716 = vmatprep.subr.mxu0 0.0
    %4717 = vmatpush1.msra.mxu0 %v4653
    %4718 = vmatprep.subr.mxu0 0.0
    %4719 = vmatpush1.msra.mxu0 %v4652
    %4720 = vmatprep.subr.mxu0 0.0
    %4721 = vmatpush2.msra.mxu0 %v4683
    %4722 = vmatprep.subr.mxu0 0.0
    %4723 = vmatpush2.msra.mxu0 %v4682
    %4724 = vmatprep.subr.mxu0 0.0
    %4725 = vmatpush2.msra.mxu0 %v4681
    %4726 = vmatprep.subr.mxu0 0.0
    %4727 = vmatpush2.msra.mxu0 %v4680
    %4728 = vmatprep.subr.mxu0 0.0
    %4729 = vmatpush2.msra.mxu0 %v4679
    %4730 = vmatprep.subr.mxu0 0.0
    %4731 = vmatpush2.msra.mxu0 %v4678
    %4732 = vmatprep.subr.mxu0 0.0
    %4733 = vmatpush2.msra.mxu0 %v4677
    %4734 = vmatprep.subr.mxu0 0.0
    %4735 = vmatpush2.msra.mxu0 %v4676
    %4736 = vmatprep.subr.mxu0 0.0
    %4737 = vmatpush2.msra.mxu0 %v4675
    %4738 = vmatprep.subr.mxu0 0.0
    %4739 = vmatpush2.msra.mxu0 %v4674
    %4740 = vmatprep.subr.mxu0 0.0
    %4741 = vmatpush2.msra.mxu0 %v4673
    %4742 = vmatprep.subr.mxu0 0.0
    %4743 = vmatpush2.msra.mxu0 %v4672
    %4744 = vmatprep.subr.mxu0 0.0
    %4745 = vmatpush2.msra.mxu0 %v4671
    %4746 = vmatprep.subr.mxu0 0.0
    %4747 = vmatpush2.msra.mxu0 %v4670
    %4748 = vmatprep.subr.mxu0 0.0
    %4749 = vmatpush2.msra.mxu0 %v4669
    %4750 = vmatprep.subr.mxu0 0.0
    %4751 = vmatpush2.msra.mxu0 %v4668
    %4752 = vmatprep.mubr.f32.mxu0 %v4685
    %4753 = vmatmul.mubr.f32.gmra.mxu0 %v4684
    %v4754 = vpop.f32.mrf.mxu0
    %v4755 = vadd.f32 0.0, %v4754
    %v4756 = vpop.f32.mrf.mxu0
    %4757 = vdwg.mxu0
    %v4758 = vadd.f32 %v4650, %v4755
    %s4759 = scalar_lea.vmem %s13, 1280
    %v4760 = vld [vmem:[%s4759] sm:$0xff]
    %v4761 = vld [vmem:[%s4759 + $0x8] sm:$0xff]
    %v4762 = vld [vmem:[%s4759 + $0x10] sm:$0xff]
    %v4763 = vld [vmem:[%s4759 + $0x18] sm:$0xff]
    %v4764 = vld [vmem:[%s4759 + $0x20] sm:$0xff]
    %v4765 = vld [vmem:[%s4759 + $0x28] sm:$0xff]
    %v4766 = vld [vmem:[%s4759 + $0x30] sm:$0xff]
    %v4767 = vld [vmem:[%s4759 + $0x38] sm:$0xff]
    %v4768 = vld [vmem:[%s4759 + $0x40] sm:$0xff]
    %v4769 = vld [vmem:[%s4759 + $0x48] sm:$0xff]
    %v4770 = vld [vmem:[%s4759 + $0x50] sm:$0xff]
    %v4771 = vld [vmem:[%s4759 + $0x58] sm:$0xff]
    %v4772 = vld [vmem:[%s4759 + $0x60] sm:$0xff]
    %v4773 = vld [vmem:[%s4759 + $0x68] sm:$0xff]
    %v4774 = vld [vmem:[%s4759 + $0x70] sm:$0xff]
    %v4775 = vld [vmem:[%s4759 + $0x78] sm:$0xff]
    %v4776 = vld [vmem:[%s4759 + $0x80] sm:$0xff]
    %v4777 = vld [vmem:[%s4759 + $0x88] sm:$0xff]
    %v4778 = vld [vmem:[%s4759 + $0x90] sm:$0xff]
    %v4779 = vld [vmem:[%s4759 + $0x98] sm:$0xff]
    %v4780 = vld [vmem:[%s4759 + $0xa0] sm:$0xff]
    %v4781 = vld [vmem:[%s4759 + $0xa8] sm:$0xff]
    %v4782 = vld [vmem:[%s4759 + $0xb0] sm:$0xff]
    %v4783 = vld [vmem:[%s4759 + $0xb8] sm:$0xff]
    %v4784 = vld [vmem:[%s4759 + $0xc0] sm:$0xff]
    %v4785 = vld [vmem:[%s4759 + $0xc8] sm:$0xff]
    %v4786 = vld [vmem:[%s4759 + $0xd0] sm:$0xff]
    %v4787 = vld [vmem:[%s4759 + $0xd8] sm:$0xff]
    %v4788 = vld [vmem:[%s4759 + $0xe0] sm:$0xff]
    %v4789 = vld [vmem:[%s4759 + $0xe8] sm:$0xff]
    %v4790 = vld [vmem:[%s4759 + $0xf0] sm:$0xff]
    %v4791 = vld [vmem:[%s4759 + $0xf8] sm:$0xff]
    %v4792 = vrot.slane %v4222, 5
    %v4793 = vrot.slane %v4223, 5
    %4796 = vmatprep.subr.mxu0 0.0
    %4797 = vmatpush1.msra.mxu0 %v4775
    %4798 = vmatprep.subr.mxu0 0.0
    %4799 = vmatpush1.msra.mxu0 %v4774
    %4800 = vmatprep.subr.mxu0 0.0
    %4801 = vmatpush1.msra.mxu0 %v4773
    %4802 = vmatprep.subr.mxu0 0.0
    %4803 = vmatpush1.msra.mxu0 %v4772
    %4804 = vmatprep.subr.mxu0 0.0
    %4805 = vmatpush1.msra.mxu0 %v4771
    %4806 = vmatprep.subr.mxu0 0.0
    %4807 = vmatpush1.msra.mxu0 %v4770
    %4808 = vmatprep.subr.mxu0 0.0
    %4809 = vmatpush1.msra.mxu0 %v4769
    %4810 = vmatprep.subr.mxu0 0.0
    %4811 = vmatpush1.msra.mxu0 %v4768
    %4812 = vmatprep.subr.mxu0 0.0
    %4813 = vmatpush1.msra.mxu0 %v4767
    %4814 = vmatprep.subr.mxu0 0.0
    %4815 = vmatpush1.msra.mxu0 %v4766
    %4816 = vmatprep.subr.mxu0 0.0
    %4817 = vmatpush1.msra.mxu0 %v4765
    %4818 = vmatprep.subr.mxu0 0.0
    %4819 = vmatpush1.msra.mxu0 %v4764
    %4820 = vmatprep.subr.mxu0 0.0
    %4821 = vmatpush1.msra.mxu0 %v4763
    %4822 = vmatprep.subr.mxu0 0.0
    %4823 = vmatpush1.msra.mxu0 %v4762
    %4824 = vmatprep.subr.mxu0 0.0
    %4825 = vmatpush1.msra.mxu0 %v4761
    %4826 = vmatprep.subr.mxu0 0.0
    %4827 = vmatpush1.msra.mxu0 %v4760
    %4828 = vmatprep.subr.mxu0 0.0
    %4829 = vmatpush2.msra.mxu0 %v4791
    %4830 = vmatprep.subr.mxu0 0.0
    %4831 = vmatpush2.msra.mxu0 %v4790
    %4832 = vmatprep.subr.mxu0 0.0
    %4833 = vmatpush2.msra.mxu0 %v4789
    %4834 = vmatprep.subr.mxu0 0.0
    %4835 = vmatpush2.msra.mxu0 %v4788
    %4836 = vmatprep.subr.mxu0 0.0
    %4837 = vmatpush2.msra.mxu0 %v4787
    %4838 = vmatprep.subr.mxu0 0.0
    %4839 = vmatpush2.msra.mxu0 %v4786
    %4840 = vmatprep.subr.mxu0 0.0
    %4841 = vmatpush2.msra.mxu0 %v4785
    %4842 = vmatprep.subr.mxu0 0.0
    %4843 = vmatpush2.msra.mxu0 %v4784
    %4844 = vmatprep.subr.mxu0 0.0
    %4845 = vmatpush2.msra.mxu0 %v4783
    %4846 = vmatprep.subr.mxu0 0.0
    %4847 = vmatpush2.msra.mxu0 %v4782
    %4848 = vmatprep.subr.mxu0 0.0
    %4849 = vmatpush2.msra.mxu0 %v4781
    %4850 = vmatprep.subr.mxu0 0.0
    %4851 = vmatpush2.msra.mxu0 %v4780
    %4852 = vmatprep.subr.mxu0 0.0
    %4853 = vmatpush2.msra.mxu0 %v4779
    %4854 = vmatprep.subr.mxu0 0.0
    %4855 = vmatpush2.msra.mxu0 %v4778
    %4856 = vmatprep.subr.mxu0 0.0
    %4857 = vmatpush2.msra.mxu0 %v4777
    %4858 = vmatprep.subr.mxu0 0.0
    %4859 = vmatpush2.msra.mxu0 %v4776
    %4860 = vmatprep.mubr.f32.mxu0 %v4793
    %4861 = vmatmul.mubr.f32.gmra.mxu0 %v4792
    %v4862 = vpop.f32.mrf.mxu0
    %v4863 = vadd.f32 0.0, %v4862
    %v4864 = vpop.f32.mrf.mxu0
    %4865 = vdwg.mxu0
    %v4866 = vadd.f32 %v4758, %v4863
    %s4867 = scalar_lea.vmem %s13, 1536
    %v4868 = vld [vmem:[%s4867] sm:$0xff]
    %v4869 = vld [vmem:[%s4867 + $0x8] sm:$0xff]
    %v4870 = vld [vmem:[%s4867 + $0x10] sm:$0xff]
    %v4871 = vld [vmem:[%s4867 + $0x18] sm:$0xff]
    %v4872 = vld [vmem:[%s4867 + $0x20] sm:$0xff]
    %v4873 = vld [vmem:[%s4867 + $0x28] sm:$0xff]
    %v4874 = vld [vmem:[%s4867 + $0x30] sm:$0xff]
    %v4875 = vld [vmem:[%s4867 + $0x38] sm:$0xff]
    %v4876 = vld [vmem:[%s4867 + $0x40] sm:$0xff]
    %v4877 = vld [vmem:[%s4867 + $0x48] sm:$0xff]
    %v4878 = vld [vmem:[%s4867 + $0x50] sm:$0xff]
    %v4879 = vld [vmem:[%s4867 + $0x58] sm:$0xff]
    %v4880 = vld [vmem:[%s4867 + $0x60] sm:$0xff]
    %v4881 = vld [vmem:[%s4867 + $0x68] sm:$0xff]
    %v4882 = vld [vmem:[%s4867 + $0x70] sm:$0xff]
    %v4883 = vld [vmem:[%s4867 + $0x78] sm:$0xff]
    %v4884 = vld [vmem:[%s4867 + $0x80] sm:$0xff]
    %v4885 = vld [vmem:[%s4867 + $0x88] sm:$0xff]
    %v4886 = vld [vmem:[%s4867 + $0x90] sm:$0xff]
    %v4887 = vld [vmem:[%s4867 + $0x98] sm:$0xff]
    %v4888 = vld [vmem:[%s4867 + $0xa0] sm:$0xff]
    %v4889 = vld [vmem:[%s4867 + $0xa8] sm:$0xff]
    %v4890 = vld [vmem:[%s4867 + $0xb0] sm:$0xff]
    %v4891 = vld [vmem:[%s4867 + $0xb8] sm:$0xff]
    %v4892 = vld [vmem:[%s4867 + $0xc0] sm:$0xff]
    %v4893 = vld [vmem:[%s4867 + $0xc8] sm:$0xff]
    %v4894 = vld [vmem:[%s4867 + $0xd0] sm:$0xff]
    %v4895 = vld [vmem:[%s4867 + $0xd8] sm:$0xff]
    %v4896 = vld [vmem:[%s4867 + $0xe0] sm:$0xff]
    %v4897 = vld [vmem:[%s4867 + $0xe8] sm:$0xff]
    %v4898 = vld [vmem:[%s4867 + $0xf0] sm:$0xff]
    %v4899 = vld [vmem:[%s4867 + $0xf8] sm:$0xff]
    %v4900 = vrot.slane %v4222, 6
    %v4901 = vrot.slane %v4223, 6
    %4904 = vmatprep.subr.mxu0 0.0
    %4905 = vmatpush1.msra.mxu0 %v4883
    %4906 = vmatprep.subr.mxu0 0.0
    %4907 = vmatpush1.msra.mxu0 %v4882
    %4908 = vmatprep.subr.mxu0 0.0
    %4909 = vmatpush1.msra.mxu0 %v4881
    %4910 = vmatprep.subr.mxu0 0.0
    %4911 = vmatpush1.msra.mxu0 %v4880
    %4912 = vmatprep.subr.mxu0 0.0
    %4913 = vmatpush1.msra.mxu0 %v4879
    %4914 = vmatprep.subr.mxu0 0.0
    %4915 = vmatpush1.msra.mxu0 %v4878
    %4916 = vmatprep.subr.mxu0 0.0
    %4917 = vmatpush1.msra.mxu0 %v4877
    %4918 = vmatprep.subr.mxu0 0.0
    %4919 = vmatpush1.msra.mxu0 %v4876
    %4920 = vmatprep.subr.mxu0 0.0
    %4921 = vmatpush1.msra.mxu0 %v4875
    %4922 = vmatprep.subr.mxu0 0.0
    %4923 = vmatpush1.msra.mxu0 %v4874
    %4924 = vmatprep.subr.mxu0 0.0
    %4925 = vmatpush1.msra.mxu0 %v4873
    %4926 = vmatprep.subr.mxu0 0.0
    %4927 = vmatpush1.msra.mxu0 %v4872
    %4928 = vmatprep.subr.mxu0 0.0
    %4929 = vmatpush1.msra.mxu0 %v4871
    %4930 = vmatprep.subr.mxu0 0.0
    %4931 = vmatpush1.msra.mxu0 %v4870
    %4932 = vmatprep.subr.mxu0 0.0
    %4933 = vmatpush1.msra.mxu0 %v4869
    %4934 = vmatprep.subr.mxu0 0.0
    %4935 = vmatpush1.msra.mxu0 %v4868
    %4936 = vmatprep.subr.mxu0 0.0
    %4937 = vmatpush2.msra.mxu0 %v4899
    %4938 = vmatprep.subr.mxu0 0.0
    %4939 = vmatpush2.msra.mxu0 %v4898
    %4940 = vmatprep.subr.mxu0 0.0
    %4941 = vmatpush2.msra.mxu0 %v4897
    %4942 = vmatprep.subr.mxu0 0.0
    %4943 = vmatpush2.msra.mxu0 %v4896
    %4944 = vmatprep.subr.mxu0 0.0
    %4945 = vmatpush2.msra.mxu0 %v4895
    %4946 = vmatprep.subr.mxu0 0.0
    %4947 = vmatpush2.msra.mxu0 %v4894
    %4948 = vmatprep.subr.mxu0 0.0
    %4949 = vmatpush2.msra.mxu0 %v4893
    %4950 = vmatprep.subr.mxu0 0.0
    %4951 = vmatpush2.msra.mxu0 %v4892
    %4952 = vmatprep.subr.mxu0 0.0
    %4953 = vmatpush2.msra.mxu0 %v4891
    %4954 = vmatprep.subr.mxu0 0.0
    %4955 = vmatpush2.msra.mxu0 %v4890
    %4956 = vmatprep.subr.mxu0 0.0
    %4957 = vmatpush2.msra.mxu0 %v4889
    %4958 = vmatprep.subr.mxu0 0.0
    %4959 = vmatpush2.msra.mxu0 %v4888
    %4960 = vmatprep.subr.mxu0 0.0
    %4961 = vmatpush2.msra.mxu0 %v4887
    %4962 = vmatprep.subr.mxu0 0.0
    %4963 = vmatpush2.msra.mxu0 %v4886
    %4964 = vmatprep.subr.mxu0 0.0
    %4965 = vmatpush2.msra.mxu0 %v4885
    %4966 = vmatprep.subr.mxu0 0.0
    %4967 = vmatpush2.msra.mxu0 %v4884
    %4968 = vmatprep.mubr.f32.mxu0 %v4901
    %4969 = vmatmul.mubr.f32.gmra.mxu0 %v4900
    %v4970 = vpop.f32.mrf.mxu0
    %v4971 = vadd.f32 0.0, %v4970
    %v4972 = vpop.f32.mrf.mxu0
    %4973 = vdwg.mxu0
    %v4974 = vadd.f32 %v4866, %v4971
    %s4975 = scalar_lea.vmem %s13, 1792
    %v4976 = vld [vmem:[%s4975] sm:$0xff]
    %v4977 = vld [vmem:[%s4975 + $0x8] sm:$0xff]
    %v4978 = vld [vmem:[%s4975 + $0x10] sm:$0xff]
    %v4979 = vld [vmem:[%s4975 + $0x18] sm:$0xff]
    %v4980 = vld [vmem:[%s4975 + $0x20] sm:$0xff]
    %v4981 = vld [vmem:[%s4975 + $0x28] sm:$0xff]
    %v4982 = vld [vmem:[%s4975 + $0x30] sm:$0xff]
    %v4983 = vld [vmem:[%s4975 + $0x38] sm:$0xff]
    %v4984 = vld [vmem:[%s4975 + $0x40] sm:$0xff]
    %v4985 = vld [vmem:[%s4975 + $0x48] sm:$0xff]
    %v4986 = vld [vmem:[%s4975 + $0x50] sm:$0xff]
    %v4987 = vld [vmem:[%s4975 + $0x58] sm:$0xff]
    %v4988 = vld [vmem:[%s4975 + $0x60] sm:$0xff]
    %v4989 = vld [vmem:[%s4975 + $0x68] sm:$0xff]
    %v4990 = vld [vmem:[%s4975 + $0x70] sm:$0xff]
    %v4991 = vld [vmem:[%s4975 + $0x78] sm:$0xff]
    %v4992 = vld [vmem:[%s4975 + $0x80] sm:$0xff]
    %v4993 = vld [vmem:[%s4975 + $0x88] sm:$0xff]
    %v4994 = vld [vmem:[%s4975 + $0x90] sm:$0xff]
    %v4995 = vld [vmem:[%s4975 + $0x98] sm:$0xff]
    %v4996 = vld [vmem:[%s4975 + $0xa0] sm:$0xff]
    %v4997 = vld [vmem:[%s4975 + $0xa8] sm:$0xff]
    %v4998 = vld [vmem:[%s4975 + $0xb0] sm:$0xff]
    %v4999 = vld [vmem:[%s4975 + $0xb8] sm:$0xff]
    %v5000 = vld [vmem:[%s4975 + $0xc0] sm:$0xff]
    %v5001 = vld [vmem:[%s4975 + $0xc8] sm:$0xff]
    %v5002 = vld [vmem:[%s4975 + $0xd0] sm:$0xff]
    %v5003 = vld [vmem:[%s4975 + $0xd8] sm:$0xff]
    %v5004 = vld [vmem:[%s4975 + $0xe0] sm:$0xff]
    %v5005 = vld [vmem:[%s4975 + $0xe8] sm:$0xff]
    %v5006 = vld [vmem:[%s4975 + $0xf0] sm:$0xff]
    %v5007 = vld [vmem:[%s4975 + $0xf8] sm:$0xff]
    %v5008 = vrot.slane %v4222, 7
    %v5009 = vrot.slane %v4223, 7
    %5012 = vmatprep.subr.mxu0 0.0
    %5013 = vmatpush1.msra.mxu0 %v4991
    %5014 = vmatprep.subr.mxu0 0.0
    %5015 = vmatpush1.msra.mxu0 %v4990
    %5016 = vmatprep.subr.mxu0 0.0
    %5017 = vmatpush1.msra.mxu0 %v4989
    %5018 = vmatprep.subr.mxu0 0.0
    %5019 = vmatpush1.msra.mxu0 %v4988
    %5020 = vmatprep.subr.mxu0 0.0
    %5021 = vmatpush1.msra.mxu0 %v4987
    %5022 = vmatprep.subr.mxu0 0.0
    %5023 = vmatpush1.msra.mxu0 %v4986
    %5024 = vmatprep.subr.mxu0 0.0
    %5025 = vmatpush1.msra.mxu0 %v4985
    %5026 = vmatprep.subr.mxu0 0.0
    %5027 = vmatpush1.msra.mxu0 %v4984
    %5028 = vmatprep.subr.mxu0 0.0
    %5029 = vmatpush1.msra.mxu0 %v4983
    %5030 = vmatprep.subr.mxu0 0.0
    %5031 = vmatpush1.msra.mxu0 %v4982
    %5032 = vmatprep.subr.mxu0 0.0
    %5033 = vmatpush1.msra.mxu0 %v4981
    %5034 = vmatprep.subr.mxu0 0.0
    %5035 = vmatpush1.msra.mxu0 %v4980
    %5036 = vmatprep.subr.mxu0 0.0
    %5037 = vmatpush1.msra.mxu0 %v4979
    %5038 = vmatprep.subr.mxu0 0.0
    %5039 = vmatpush1.msra.mxu0 %v4978
    %5040 = vmatprep.subr.mxu0 0.0
    %5041 = vmatpush1.msra.mxu0 %v4977
    %5042 = vmatprep.subr.mxu0 0.0
    %5043 = vmatpush1.msra.mxu0 %v4976
    %5044 = vmatprep.subr.mxu0 0.0
    %5045 = vmatpush2.msra.mxu0 %v5007
    %5046 = vmatprep.subr.mxu0 0.0
    %5047 = vmatpush2.msra.mxu0 %v5006
    %5048 = vmatprep.subr.mxu0 0.0
    %5049 = vmatpush2.msra.mxu0 %v5005
    %5050 = vmatprep.subr.mxu0 0.0
    %5051 = vmatpush2.msra.mxu0 %v5004
    %5052 = vmatprep.subr.mxu0 0.0
    %5053 = vmatpush2.msra.mxu0 %v5003
    %5054 = vmatprep.subr.mxu0 0.0
    %5055 = vmatpush2.msra.mxu0 %v5002
    %5056 = vmatprep.subr.mxu0 0.0
    %5057 = vmatpush2.msra.mxu0 %v5001
    %5058 = vmatprep.subr.mxu0 0.0
    %5059 = vmatpush2.msra.mxu0 %v5000
    %5060 = vmatprep.subr.mxu0 0.0
    %5061 = vmatpush2.msra.mxu0 %v4999
    %5062 = vmatprep.subr.mxu0 0.0
    %5063 = vmatpush2.msra.mxu0 %v4998
    %5064 = vmatprep.subr.mxu0 0.0
    %5065 = vmatpush2.msra.mxu0 %v4997
    %5066 = vmatprep.subr.mxu0 0.0
    %5067 = vmatpush2.msra.mxu0 %v4996
    %5068 = vmatprep.subr.mxu0 0.0
    %5069 = vmatpush2.msra.mxu0 %v4995
    %5070 = vmatprep.subr.mxu0 0.0
    %5071 = vmatpush2.msra.mxu0 %v4994
    %5072 = vmatprep.subr.mxu0 0.0
    %5073 = vmatpush2.msra.mxu0 %v4993
    %5074 = vmatprep.subr.mxu0 0.0
    %5075 = vmatpush2.msra.mxu0 %v4992
    %5076 = vmatprep.mubr.f32.mxu0 %v5009
    %5077 = vmatmul.mubr.f32.gmra.mxu0 %v5008
    %v5078 = vpop.f32.mrf.mxu0
    %v5079 = vadd.f32 0.0, %v5078
    %v5080 = vpop.f32.mrf.mxu0
    %5081 = vdwg.mxu0
    %v5082 = vadd.f32 %v4974, %v5079
    %v5087 = vrot.slane %v4086, 1
    %v5088 = vrot.slane %v4088, 1
    %v5089 = vsel %vm121, %v5087, %v5088
    %v5090 = vrot.slane %v4087, 1
    %v5091 = vrot.slane %v4089, 1
    %v5092 = vsel %vm121, %v5090, %v5091
    %v5097 = vsel %vm121, %v5088, 0.0
    %v5098 = vsel %vm121, %v5091, 0.0
    %v5099 = vrot.slane %v4086, 7
    %v5100 = vrot.slane %v4087, 7
    %v5101 = vrot.slane %v4088, 7
    %v5102 = vsel %vm1940, %v5099, %v5101
    %v5103 = vrot.slane %v4089, 7
    %v5104 = vsel %vm1940, %v5100, %v5103
    %v5109 = vsel %vm1940, 0.0, %v5099
    %v5110 = vsel %vm1940, 0.0, %v5100
    %v5111 = vmax.f32 %v4086, %v5089
    %v5112 = vmax.f32 %v4087, %v5092
    %v5113 = vmax.f32 %v4088, %v5097
    %v5114 = vmax.f32 %v4089, %v5098
    %v5115 = vmax.f32 %v5111, %v5109
    %v5116 = vmax.f32 %v5112, %v5110
    %v5117 = vmax.f32 %v5113, %v5102
    %v5118 = vmax.f32 %v5114, %v5104
    %5119 = vmatprep.subr.mxu0 0.0
    %5120 = vmatpush1.msra.mxu0 0.0
    %5121 = vmatprep.subr.mxu0 0.0
    %5122 = vmatpush1.msra.mxu0 0.0
    %5123 = vmatprep.subr.mxu0 0.0
    %5124 = vmatpush1.msra.mxu0 0.0
    %5125 = vmatprep.subr.mxu0 0.0
    %5126 = vmatpush1.msra.mxu0 0.0
    %5127 = vmatprep.subr.mxu0 0.0
    %5128 = vmatpush1.msra.mxu0 0.0
    %5129 = vmatprep.subr.mxu0 0.0
    %5130 = vmatpush1.msra.mxu0 0.0
    %5131 = vmatprep.subr.mxu0 0.0
    %5132 = vmatpush1.msra.mxu0 0.0
    %5133 = vmatprep.subr.mxu0 0.0
    %5134 = vmatpush1.msra.mxu0 0.0
    %5135 = vmatprep.subr.mxu0 0.0
    %5136 = vmatpush1.msra.mxu0 0.0
    %5137 = vmatprep.subr.mxu0 0.0
    %5138 = vmatpush1.msra.mxu0 0.0
    %5139 = vmatprep.subr.mxu0 0.0
    %5140 = vmatpush1.msra.mxu0 0.0
    %5141 = vmatprep.subr.mxu0 0.0
    %5142 = vmatpush1.msra.mxu0 0.0
    %5143 = vmatprep.subr.mxu0 0.0
    %5144 = vmatpush1.msra.mxu0 0.0
    %5145 = vmatprep.subr.mxu0 0.0
    %5146 = vmatpush1.msra.mxu0 0.0
    %5147 = vmatprep.subr.mxu0 %v5118
    %5148 = vmatpush1.msra.mxu0 %v5117
    %5149 = vmatprep.subr.mxu0 %v5116
    %5150 = vmatpush1.msra.mxu0 %v5115
    %5151 = vmatprep.subr.mxu0 0.0
    %5152 = vmatpush2.msra.mxu0 0.0
    %5153 = vmatprep.subr.mxu0 0.0
    %5154 = vmatpush2.msra.mxu0 0.0
    %5155 = vmatprep.subr.mxu0 0.0
    %5156 = vmatpush2.msra.mxu0 0.0
    %5157 = vmatprep.subr.mxu0 0.0
    %5158 = vmatpush2.msra.mxu0 0.0
    %5159 = vmatprep.subr.mxu0 0.0
    %5160 = vmatpush2.msra.mxu0 0.0
    %5161 = vmatprep.subr.mxu0 0.0
    %5162 = vmatpush2.msra.mxu0 0.0
    %5163 = vmatprep.subr.mxu0 0.0
    %5164 = vmatpush2.msra.mxu0 0.0
    %5165 = vmatprep.subr.mxu0 0.0
    %5166 = vmatpush2.msra.mxu0 0.0
    %5167 = vmatprep.subr.mxu0 0.0
    %5168 = vmatpush2.msra.mxu0 0.0
    %5169 = vmatprep.subr.mxu0 0.0
    %5170 = vmatpush2.msra.mxu0 0.0
    %5171 = vmatprep.subr.mxu0 0.0
    %5172 = vmatpush2.msra.mxu0 0.0
    %5173 = vmatprep.subr.mxu0 0.0
    %5174 = vmatpush2.msra.mxu0 0.0
    %5175 = vmatprep.subr.mxu0 0.0
    %5176 = vmatpush2.msra.mxu0 0.0
    %5177 = vmatprep.subr.mxu0 0.0
    %5178 = vmatpush2.msra.mxu0 0.0
    %5179 = vmatprep.subr.mxu0 0.0
    %5180 = vmatpush2.msra.mxu0 0.0
    %5181 = vmatprep.subr.mxu0 0.0
    %5182 = vmatpush2.msra.mxu0 0.0
    %5183 = vmatprep.mubr.f32.mxu0 0.0
    %5184 = vmatmul.mubr.f32.gmra.mxu0 %v4128
    %v5185 = vpop.f32.mrf.mxu0
    %v5186 = vadd.f32 0.0, %v5185
    %v5187 = vpop.f32.mrf.mxu0
    %v5188 = vadd.f32 0.0, %v5187
    %5189 = vdwg.mxu0
    %5192 = vrot.lane.b32.xlu0 %v5186, 112
    %v5193 = vpop.permute.xlu0 %5192
    %5194 = vrot.lane.b32.xlu0 %v5188, 112
    %v5195 = vpop.permute.xlu0 %5194
    %v5196 = vsel %vm4207, %v5193, %v5195
    %v5199 = vsel %vm4207, %v5195, 0.0
    %5200 = vrot.lane.b32.xlu0 %v5186, 16
    %v5201 = vpop.permute.xlu0 %5200
    %5202 = vrot.lane.b32.xlu0 %v5188, 16
    %v5203 = vpop.permute.xlu0 %5202
    %v5204 = vsel %vm3709, %v5201, %v5203
    %v5207 = vsel %vm3709, 0.0, %v5201
    %v5208 = vmax.f32 %v5186, %v5196
    %v5209 = vmax.f32 %v5188, %v5199
    %v5210 = vmax.f32 %v5208, %v5207
    %v5211 = vmax.f32 %v5209, %v5204
    %v5214 = vrot.slane %v5210, 1
    %v5215 = vrot.slane %v5211, 1
    %5218 = vmatprep.subr.mxu0 0.0
    %5219 = vmatpush1.msra.mxu0 %v4272
    %5220 = vmatprep.subr.mxu0 0.0
    %5221 = vmatpush1.msra.mxu0 %v4271
    %5222 = vmatprep.subr.mxu0 0.0
    %5223 = vmatpush1.msra.mxu0 %v4270
    %5224 = vmatprep.subr.mxu0 0.0
    %5225 = vmatpush1.msra.mxu0 %v4269
    %5226 = vmatprep.subr.mxu0 0.0
    %5227 = vmatpush1.msra.mxu0 %v4268
    %5228 = vmatprep.subr.mxu0 0.0
    %5229 = vmatpush1.msra.mxu0 %v4267
    %5230 = vmatprep.subr.mxu0 0.0
    %5231 = vmatpush1.msra.mxu0 %v4266
    %5232 = vmatprep.subr.mxu0 0.0
    %5233 = vmatpush1.msra.mxu0 %v4265
    %5234 = vmatprep.subr.mxu0 0.0
    %5235 = vmatpush1.msra.mxu0 %v4264
    %5236 = vmatprep.subr.mxu0 0.0
    %5237 = vmatpush1.msra.mxu0 %v4263
    %5238 = vmatprep.subr.mxu0 0.0
    %5239 = vmatpush1.msra.mxu0 %v4262
    %5240 = vmatprep.subr.mxu0 0.0
    %5241 = vmatpush1.msra.mxu0 %v4261
    %5242 = vmatprep.subr.mxu0 0.0
    %5243 = vmatpush1.msra.mxu0 %v4260
    %5244 = vmatprep.subr.mxu0 0.0
    %5245 = vmatpush1.msra.mxu0 %v4259
    %5246 = vmatprep.subr.mxu0 0.0
    %5247 = vmatpush1.msra.mxu0 %v4258
    %5248 = vmatprep.subr.mxu0 0.0
    %5249 = vmatpush1.msra.mxu0 %v4257
    %5250 = vmatprep.subr.mxu0 0.0
    %5251 = vmatpush2.msra.mxu0 %v4288
    %5252 = vmatprep.subr.mxu0 0.0
    %5253 = vmatpush2.msra.mxu0 %v4287
    %5254 = vmatprep.subr.mxu0 0.0
    %5255 = vmatpush2.msra.mxu0 %v4286
    %5256 = vmatprep.subr.mxu0 0.0
    %5257 = vmatpush2.msra.mxu0 %v4285
    %5258 = vmatprep.subr.mxu0 0.0
    %5259 = vmatpush2.msra.mxu0 %v4284
    %5260 = vmatprep.subr.mxu0 0.0
    %5261 = vmatpush2.msra.mxu0 %v4283
    %5262 = vmatprep.subr.mxu0 0.0
    %5263 = vmatpush2.msra.mxu0 %v4282
    %5264 = vmatprep.subr.mxu0 0.0
    %5265 = vmatpush2.msra.mxu0 %v4281
    %5266 = vmatprep.subr.mxu0 0.0
    %5267 = vmatpush2.msra.mxu0 %v4280
    %5268 = vmatprep.subr.mxu0 0.0
    %5269 = vmatpush2.msra.mxu0 %v4279
    %5270 = vmatprep.subr.mxu0 0.0
    %5271 = vmatpush2.msra.mxu0 %v4278
    %5272 = vmatprep.subr.mxu0 0.0
    %5273 = vmatpush2.msra.mxu0 %v4277
    %5274 = vmatprep.subr.mxu0 0.0
    %5275 = vmatpush2.msra.mxu0 %v4276
    %5276 = vmatprep.subr.mxu0 0.0
    %5277 = vmatpush2.msra.mxu0 %v4275
    %5278 = vmatprep.subr.mxu0 0.0
    %5279 = vmatpush2.msra.mxu0 %v4274
    %5280 = vmatprep.subr.mxu0 0.0
    %5281 = vmatpush2.msra.mxu0 %v4273
    %5282 = vmatprep.mubr.f32.mxu0 %v5215
    %5283 = vmatmul.mubr.f32.gmra.mxu0 %v5214
    %v5284 = vpop.f32.mrf.mxu0
    %v5285 = vadd.f32 0.0, %v5284
    %v5286 = vpop.f32.mrf.mxu0
    %5287 = vdwg.mxu0
    %5288 = vmatprep.subr.mxu0 0.0
    %5289 = vmatpush1.msra.mxu0 %v4239
    %5290 = vmatprep.subr.mxu0 0.0
    %5291 = vmatpush1.msra.mxu0 %v4238
    %5292 = vmatprep.subr.mxu0 0.0
    %5293 = vmatpush1.msra.mxu0 %v4237
    %5294 = vmatprep.subr.mxu0 0.0
    %5295 = vmatpush1.msra.mxu0 %v4236
    %5296 = vmatprep.subr.mxu0 0.0
    %5297 = vmatpush1.msra.mxu0 %v4235
    %5298 = vmatprep.subr.mxu0 0.0
    %5299 = vmatpush1.msra.mxu0 %v4234
    %5300 = vmatprep.subr.mxu0 0.0
    %5301 = vmatpush1.msra.mxu0 %v4233
    %5302 = vmatprep.subr.mxu0 0.0
    %5303 = vmatpush1.msra.mxu0 %v4232
    %5304 = vmatprep.subr.mxu0 0.0
    %5305 = vmatpush1.msra.mxu0 %v4231
    %5306 = vmatprep.subr.mxu0 0.0
    %5307 = vmatpush1.msra.mxu0 %v4230
    %5308 = vmatprep.subr.mxu0 0.0
    %5309 = vmatpush1.msra.mxu0 %v4229
    %5310 = vmatprep.subr.mxu0 0.0
    %5311 = vmatpush1.msra.mxu0 %v4228
    %5312 = vmatprep.subr.mxu0 0.0
    %5313 = vmatpush1.msra.mxu0 %v4227
    %5314 = vmatprep.subr.mxu0 0.0
    %5315 = vmatpush1.msra.mxu0 %v4226
    %5316 = vmatprep.subr.mxu0 0.0
    %5317 = vmatpush1.msra.mxu0 %v4225
    %5318 = vmatprep.subr.mxu0 0.0
    %5319 = vmatpush1.msra.mxu0 %v4224
    %5320 = vmatprep.subr.mxu0 0.0
    %5321 = vmatpush2.msra.mxu0 %v4255
    %5322 = vmatprep.subr.mxu0 0.0
    %5323 = vmatpush2.msra.mxu0 %v4254
    %5324 = vmatprep.subr.mxu0 0.0
    %5325 = vmatpush2.msra.mxu0 %v4253
    %5326 = vmatprep.subr.mxu0 0.0
    %5327 = vmatpush2.msra.mxu0 %v4252
    %5328 = vmatprep.subr.mxu0 0.0
    %5329 = vmatpush2.msra.mxu0 %v4251
    %5330 = vmatprep.subr.mxu0 0.0
    %5331 = vmatpush2.msra.mxu0 %v4250
    %5332 = vmatprep.subr.mxu0 0.0
    %5333 = vmatpush2.msra.mxu0 %v4249
    %5334 = vmatprep.subr.mxu0 0.0
    %5335 = vmatpush2.msra.mxu0 %v4248
    %5336 = vmatprep.subr.mxu0 0.0
    %5337 = vmatpush2.msra.mxu0 %v4247
    %5338 = vmatprep.subr.mxu0 0.0
    %5339 = vmatpush2.msra.mxu0 %v4246
    %5340 = vmatprep.subr.mxu0 0.0
    %5341 = vmatpush2.msra.mxu0 %v4245
    %5342 = vmatprep.subr.mxu0 0.0
    %5343 = vmatpush2.msra.mxu0 %v4244
    %5344 = vmatprep.subr.mxu0 0.0
    %5345 = vmatpush2.msra.mxu0 %v4243
    %5346 = vmatprep.subr.mxu0 0.0
    %5347 = vmatpush2.msra.mxu0 %v4242
    %5348 = vmatprep.subr.mxu0 0.0
    %5349 = vmatpush2.msra.mxu0 %v4241
    %5350 = vmatprep.subr.mxu0 0.0
    %5351 = vmatpush2.msra.mxu0 %v4240
    %5352 = vmatprep.mubr.f32.mxu0 %v5211
    %5353 = vmatmul.mubr.f32.gmra.mxu0 %v5210
    %v5354 = vpop.f32.mrf.mxu0
    %v5355 = vadd.f32 %v5285, %v5354
    %v5356 = vpop.f32.mrf.mxu0
    %5357 = vdwg.mxu0
    %v5358 = vrot.slane %v5210, 2
    %v5359 = vrot.slane %v5211, 2
    %5362 = vmatprep.subr.mxu0 0.0
    %5363 = vmatpush1.msra.mxu0 %v4451
    %5364 = vmatprep.subr.mxu0 0.0
    %5365 = vmatpush1.msra.mxu0 %v4450
    %5366 = vmatprep.subr.mxu0 0.0
    %5367 = vmatpush1.msra.mxu0 %v4449
    %5368 = vmatprep.subr.mxu0 0.0
    %5369 = vmatpush1.msra.mxu0 %v4448
    %5370 = vmatprep.subr.mxu0 0.0
    %5371 = vmatpush1.msra.mxu0 %v4447
    %5372 = vmatprep.subr.mxu0 0.0
    %5373 = vmatpush1.msra.mxu0 %v4446
    %5374 = vmatprep.subr.mxu0 0.0
    %5375 = vmatpush1.msra.mxu0 %v4445
    %5376 = vmatprep.subr.mxu0 0.0
    %5377 = vmatpush1.msra.mxu0 %v4444
    %5378 = vmatprep.subr.mxu0 0.0
    %5379 = vmatpush1.msra.mxu0 %v4443
    %5380 = vmatprep.subr.mxu0 0.0
    %5381 = vmatpush1.msra.mxu0 %v4442
    %5382 = vmatprep.subr.mxu0 0.0
    %5383 = vmatpush1.msra.mxu0 %v4441
    %5384 = vmatprep.subr.mxu0 0.0
    %5385 = vmatpush1.msra.mxu0 %v4440
    %5386 = vmatprep.subr.mxu0 0.0
    %5387 = vmatpush1.msra.mxu0 %v4439
    %5388 = vmatprep.subr.mxu0 0.0
    %5389 = vmatpush1.msra.mxu0 %v4438
    %5390 = vmatprep.subr.mxu0 0.0
    %5391 = vmatpush1.msra.mxu0 %v4437
    %5392 = vmatprep.subr.mxu0 0.0
    %5393 = vmatpush1.msra.mxu0 %v4436
    %5394 = vmatprep.subr.mxu0 0.0
    %5395 = vmatpush2.msra.mxu0 %v4467
    %5396 = vmatprep.subr.mxu0 0.0
    %5397 = vmatpush2.msra.mxu0 %v4466
    %5398 = vmatprep.subr.mxu0 0.0
    %5399 = vmatpush2.msra.mxu0 %v4465
    %5400 = vmatprep.subr.mxu0 0.0
    %5401 = vmatpush2.msra.mxu0 %v4464
    %5402 = vmatprep.subr.mxu0 0.0
    %5403 = vmatpush2.msra.mxu0 %v4463
    %5404 = vmatprep.subr.mxu0 0.0
    %5405 = vmatpush2.msra.mxu0 %v4462
    %5406 = vmatprep.subr.mxu0 0.0
    %5407 = vmatpush2.msra.mxu0 %v4461
    %5408 = vmatprep.subr.mxu0 0.0
    %5409 = vmatpush2.msra.mxu0 %v4460
    %5410 = vmatprep.subr.mxu0 0.0
    %5411 = vmatpush2.msra.mxu0 %v4459
    %5412 = vmatprep.subr.mxu0 0.0
    %5413 = vmatpush2.msra.mxu0 %v4458
    %5414 = vmatprep.subr.mxu0 0.0
    %5415 = vmatpush2.msra.mxu0 %v4457
    %5416 = vmatprep.subr.mxu0 0.0
    %5417 = vmatpush2.msra.mxu0 %v4456
    %5418 = vmatprep.subr.mxu0 0.0
    %5419 = vmatpush2.msra.mxu0 %v4455
    %5420 = vmatprep.subr.mxu0 0.0
    %5421 = vmatpush2.msra.mxu0 %v4454
    %5422 = vmatprep.subr.mxu0 0.0
    %5423 = vmatpush2.msra.mxu0 %v4453
    %5424 = vmatprep.subr.mxu0 0.0
    %5425 = vmatpush2.msra.mxu0 %v4452
    %5426 = vmatprep.mubr.f32.mxu0 %v5359
    %5427 = vmatmul.mubr.f32.gmra.mxu0 %v5358
    %v5428 = vpop.f32.mrf.mxu0
    %v5429 = vadd.f32 0.0, %v5428
    %v5430 = vpop.f32.mrf.mxu0
    %5431 = vdwg.mxu0
    %v5432 = vadd.f32 %v5355, %v5429
    %v5433 = vrot.slane %v5210, 3
    %v5434 = vrot.slane %v5211, 3
    %5437 = vmatprep.subr.mxu0 0.0
    %5438 = vmatpush1.msra.mxu0 %v4559
    %5439 = vmatprep.subr.mxu0 0.0
    %5440 = vmatpush1.msra.mxu0 %v4558
    %5441 = vmatprep.subr.mxu0 0.0
    %5442 = vmatpush1.msra.mxu0 %v4557
    %5443 = vmatprep.subr.mxu0 0.0
    %5444 = vmatpush1.msra.mxu0 %v4556
    %5445 = vmatprep.subr.mxu0 0.0
    %5446 = vmatpush1.msra.mxu0 %v4555
    %5447 = vmatprep.subr.mxu0 0.0
    %5448 = vmatpush1.msra.mxu0 %v4554
    %5449 = vmatprep.subr.mxu0 0.0
    %5450 = vmatpush1.msra.mxu0 %v4553
    %5451 = vmatprep.subr.mxu0 0.0
    %5452 = vmatpush1.msra.mxu0 %v4552
    %5453 = vmatprep.subr.mxu0 0.0
    %5454 = vmatpush1.msra.mxu0 %v4551
    %5455 = vmatprep.subr.mxu0 0.0
    %5456 = vmatpush1.msra.mxu0 %v4550
    %5457 = vmatprep.subr.mxu0 0.0
    %5458 = vmatpush1.msra.mxu0 %v4549
    %5459 = vmatprep.subr.mxu0 0.0
    %5460 = vmatpush1.msra.mxu0 %v4548
    %5461 = vmatprep.subr.mxu0 0.0
    %5462 = vmatpush1.msra.mxu0 %v4547
    %5463 = vmatprep.subr.mxu0 0.0
    %5464 = vmatpush1.msra.mxu0 %v4546
    %5465 = vmatprep.subr.mxu0 0.0
    %5466 = vmatpush1.msra.mxu0 %v4545
    %5467 = vmatprep.subr.mxu0 0.0
    %5468 = vmatpush1.msra.mxu0 %v4544
    %5469 = vmatprep.subr.mxu0 0.0
    %5470 = vmatpush2.msra.mxu0 %v4575
    %5471 = vmatprep.subr.mxu0 0.0
    %5472 = vmatpush2.msra.mxu0 %v4574
    %5473 = vmatprep.subr.mxu0 0.0
    %5474 = vmatpush2.msra.mxu0 %v4573
    %5475 = vmatprep.subr.mxu0 0.0
    %5476 = vmatpush2.msra.mxu0 %v4572
    %5477 = vmatprep.subr.mxu0 0.0
    %5478 = vmatpush2.msra.mxu0 %v4571
    %5479 = vmatprep.subr.mxu0 0.0
    %5480 = vmatpush2.msra.mxu0 %v4570
    %5481 = vmatprep.subr.mxu0 0.0
    %5482 = vmatpush2.msra.mxu0 %v4569
    %5483 = vmatprep.subr.mxu0 0.0
    %5484 = vmatpush2.msra.mxu0 %v4568
    %5485 = vmatprep.subr.mxu0 0.0
    %5486 = vmatpush2.msra.mxu0 %v4567
    %5487 = vmatprep.subr.mxu0 0.0
    %5488 = vmatpush2.msra.mxu0 %v4566
    %5489 = vmatprep.subr.mxu0 0.0
    %5490 = vmatpush2.msra.mxu0 %v4565
    %5491 = vmatprep.subr.mxu0 0.0
    %5492 = vmatpush2.msra.mxu0 %v4564
    %5493 = vmatprep.subr.mxu0 0.0
    %5494 = vmatpush2.msra.mxu0 %v4563
    %5495 = vmatprep.subr.mxu0 0.0
    %5496 = vmatpush2.msra.mxu0 %v4562
    %5497 = vmatprep.subr.mxu0 0.0
    %5498 = vmatpush2.msra.mxu0 %v4561
    %5499 = vmatprep.subr.mxu0 0.0
    %5500 = vmatpush2.msra.mxu0 %v4560
    %5501 = vmatprep.mubr.f32.mxu0 %v5434
    %5502 = vmatmul.mubr.f32.gmra.mxu0 %v5433
    %v5503 = vpop.f32.mrf.mxu0
    %v5504 = vadd.f32 0.0, %v5503
    %v5505 = vpop.f32.mrf.mxu0
    %5506 = vdwg.mxu0
    %v5507 = vadd.f32 %v5432, %v5504
    %v5508 = vrot.slane %v5210, 4
    %v5509 = vrot.slane %v5211, 4
    %5512 = vmatprep.subr.mxu0 0.0
    %5513 = vmatpush1.msra.mxu0 %v4667
    %5514 = vmatprep.subr.mxu0 0.0
    %5515 = vmatpush1.msra.mxu0 %v4666
    %5516 = vmatprep.subr.mxu0 0.0
    %5517 = vmatpush1.msra.mxu0 %v4665
    %5518 = vmatprep.subr.mxu0 0.0
    %5519 = vmatpush1.msra.mxu0 %v4664
    %5520 = vmatprep.subr.mxu0 0.0
    %5521 = vmatpush1.msra.mxu0 %v4663
    %5522 = vmatprep.subr.mxu0 0.0
    %5523 = vmatpush1.msra.mxu0 %v4662
    %5524 = vmatprep.subr.mxu0 0.0
    %5525 = vmatpush1.msra.mxu0 %v4661
    %5526 = vmatprep.subr.mxu0 0.0
    %5527 = vmatpush1.msra.mxu0 %v4660
    %5528 = vmatprep.subr.mxu0 0.0
    %5529 = vmatpush1.msra.mxu0 %v4659
    %5530 = vmatprep.subr.mxu0 0.0
    %5531 = vmatpush1.msra.mxu0 %v4658
    %5532 = vmatprep.subr.mxu0 0.0
    %5533 = vmatpush1.msra.mxu0 %v4657
    %5534 = vmatprep.subr.mxu0 0.0
    %5535 = vmatpush1.msra.mxu0 %v4656
    %5536 = vmatprep.subr.mxu0 0.0
    %5537 = vmatpush1.msra.mxu0 %v4655
    %5538 = vmatprep.subr.mxu0 0.0
    %5539 = vmatpush1.msra.mxu0 %v4654
    %5540 = vmatprep.subr.mxu0 0.0
    %5541 = vmatpush1.msra.mxu0 %v4653
    %5542 = vmatprep.subr.mxu0 0.0
    %5543 = vmatpush1.msra.mxu0 %v4652
    %5544 = vmatprep.subr.mxu0 0.0
    %5545 = vmatpush2.msra.mxu0 %v4683
    %5546 = vmatprep.subr.mxu0 0.0
    %5547 = vmatpush2.msra.mxu0 %v4682
    %5548 = vmatprep.subr.mxu0 0.0
    %5549 = vmatpush2.msra.mxu0 %v4681
    %5550 = vmatprep.subr.mxu0 0.0
    %5551 = vmatpush2.msra.mxu0 %v4680
    %5552 = vmatprep.subr.mxu0 0.0
    %5553 = vmatpush2.msra.mxu0 %v4679
    %5554 = vmatprep.subr.mxu0 0.0
    %5555 = vmatpush2.msra.mxu0 %v4678
    %5556 = vmatprep.subr.mxu0 0.0
    %5557 = vmatpush2.msra.mxu0 %v4677
    %5558 = vmatprep.subr.mxu0 0.0
    %5559 = vmatpush2.msra.mxu0 %v4676
    %5560 = vmatprep.subr.mxu0 0.0
    %5561 = vmatpush2.msra.mxu0 %v4675
    %5562 = vmatprep.subr.mxu0 0.0
    %5563 = vmatpush2.msra.mxu0 %v4674
    %5564 = vmatprep.subr.mxu0 0.0
    %5565 = vmatpush2.msra.mxu0 %v4673
    %5566 = vmatprep.subr.mxu0 0.0
    %5567 = vmatpush2.msra.mxu0 %v4672
    %5568 = vmatprep.subr.mxu0 0.0
    %5569 = vmatpush2.msra.mxu0 %v4671
    %5570 = vmatprep.subr.mxu0 0.0
    %5571 = vmatpush2.msra.mxu0 %v4670
    %5572 = vmatprep.subr.mxu0 0.0
    %5573 = vmatpush2.msra.mxu0 %v4669
    %5574 = vmatprep.subr.mxu0 0.0
    %5575 = vmatpush2.msra.mxu0 %v4668
    %5576 = vmatprep.mubr.f32.mxu0 %v5509
    %5577 = vmatmul.mubr.f32.gmra.mxu0 %v5508
    %v5578 = vpop.f32.mrf.mxu0
    %v5579 = vadd.f32 0.0, %v5578
    %v5580 = vpop.f32.mrf.mxu0
    %5581 = vdwg.mxu0
    %v5582 = vadd.f32 %v5507, %v5579
    %v5583 = vrot.slane %v5210, 5
    %v5584 = vrot.slane %v5211, 5
    %5587 = vmatprep.subr.mxu0 0.0
    %5588 = vmatpush1.msra.mxu0 %v4775
    %5589 = vmatprep.subr.mxu0 0.0
    %5590 = vmatpush1.msra.mxu0 %v4774
    %5591 = vmatprep.subr.mxu0 0.0
    %5592 = vmatpush1.msra.mxu0 %v4773
    %5593 = vmatprep.subr.mxu0 0.0
    %5594 = vmatpush1.msra.mxu0 %v4772
    %5595 = vmatprep.subr.mxu0 0.0
    %5596 = vmatpush1.msra.mxu0 %v4771
    %5597 = vmatprep.subr.mxu0 0.0
    %5598 = vmatpush1.msra.mxu0 %v4770
    %5599 = vmatprep.subr.mxu0 0.0
    %5600 = vmatpush1.msra.mxu0 %v4769
    %5601 = vmatprep.subr.mxu0 0.0
    %5602 = vmatpush1.msra.mxu0 %v4768
    %5603 = vmatprep.subr.mxu0 0.0
    %5604 = vmatpush1.msra.mxu0 %v4767
    %5605 = vmatprep.subr.mxu0 0.0
    %5606 = vmatpush1.msra.mxu0 %v4766
    %5607 = vmatprep.subr.mxu0 0.0
    %5608 = vmatpush1.msra.mxu0 %v4765
    %5609 = vmatprep.subr.mxu0 0.0
    %5610 = vmatpush1.msra.mxu0 %v4764
    %5611 = vmatprep.subr.mxu0 0.0
    %5612 = vmatpush1.msra.mxu0 %v4763
    %5613 = vmatprep.subr.mxu0 0.0
    %5614 = vmatpush1.msra.mxu0 %v4762
    %5615 = vmatprep.subr.mxu0 0.0
    %5616 = vmatpush1.msra.mxu0 %v4761
    %5617 = vmatprep.subr.mxu0 0.0
    %5618 = vmatpush1.msra.mxu0 %v4760
    %5619 = vmatprep.subr.mxu0 0.0
    %5620 = vmatpush2.msra.mxu0 %v4791
    %5621 = vmatprep.subr.mxu0 0.0
    %5622 = vmatpush2.msra.mxu0 %v4790
    %5623 = vmatprep.subr.mxu0 0.0
    %5624 = vmatpush2.msra.mxu0 %v4789
    %5625 = vmatprep.subr.mxu0 0.0
    %5626 = vmatpush2.msra.mxu0 %v4788
    %5627 = vmatprep.subr.mxu0 0.0
    %5628 = vmatpush2.msra.mxu0 %v4787
    %5629 = vmatprep.subr.mxu0 0.0
    %5630 = vmatpush2.msra.mxu0 %v4786
    %5631 = vmatprep.subr.mxu0 0.0
    %5632 = vmatpush2.msra.mxu0 %v4785
    %5633 = vmatprep.subr.mxu0 0.0
    %5634 = vmatpush2.msra.mxu0 %v4784
    %5635 = vmatprep.subr.mxu0 0.0
    %5636 = vmatpush2.msra.mxu0 %v4783
    %5637 = vmatprep.subr.mxu0 0.0
    %5638 = vmatpush2.msra.mxu0 %v4782
    %5639 = vmatprep.subr.mxu0 0.0
    %5640 = vmatpush2.msra.mxu0 %v4781
    %5641 = vmatprep.subr.mxu0 0.0
    %5642 = vmatpush2.msra.mxu0 %v4780
    %5643 = vmatprep.subr.mxu0 0.0
    %5644 = vmatpush2.msra.mxu0 %v4779
    %5645 = vmatprep.subr.mxu0 0.0
    %5646 = vmatpush2.msra.mxu0 %v4778
    %5647 = vmatprep.subr.mxu0 0.0
    %5648 = vmatpush2.msra.mxu0 %v4777
    %5649 = vmatprep.subr.mxu0 0.0
    %5650 = vmatpush2.msra.mxu0 %v4776
    %5651 = vmatprep.mubr.f32.mxu0 %v5584
    %5652 = vmatmul.mubr.f32.gmra.mxu0 %v5583
    %v5653 = vpop.f32.mrf.mxu0
    %v5654 = vadd.f32 0.0, %v5653
    %v5655 = vpop.f32.mrf.mxu0
    %5656 = vdwg.mxu0
    %v5657 = vadd.f32 %v5582, %v5654
    %v5658 = vrot.slane %v5210, 6
    %v5659 = vrot.slane %v5211, 6
    %5662 = vmatprep.subr.mxu0 0.0
    %5663 = vmatpush1.msra.mxu0 %v4883
    %5664 = vmatprep.subr.mxu0 0.0
    %5665 = vmatpush1.msra.mxu0 %v4882
    %5666 = vmatprep.subr.mxu0 0.0
    %5667 = vmatpush1.msra.mxu0 %v4881
    %5668 = vmatprep.subr.mxu0 0.0
    %5669 = vmatpush1.msra.mxu0 %v4880
    %5670 = vmatprep.subr.mxu0 0.0
    %5671 = vmatpush1.msra.mxu0 %v4879
    %5672 = vmatprep.subr.mxu0 0.0
    %5673 = vmatpush1.msra.mxu0 %v4878
    %5674 = vmatprep.subr.mxu0 0.0
    %5675 = vmatpush1.msra.mxu0 %v4877
    %5676 = vmatprep.subr.mxu0 0.0
    %5677 = vmatpush1.msra.mxu0 %v4876
    %5678 = vmatprep.subr.mxu0 0.0
    %5679 = vmatpush1.msra.mxu0 %v4875
    %5680 = vmatprep.subr.mxu0 0.0
    %5681 = vmatpush1.msra.mxu0 %v4874
    %5682 = vmatprep.subr.mxu0 0.0
    %5683 = vmatpush1.msra.mxu0 %v4873
    %5684 = vmatprep.subr.mxu0 0.0
    %5685 = vmatpush1.msra.mxu0 %v4872
    %5686 = vmatprep.subr.mxu0 0.0
    %5687 = vmatpush1.msra.mxu0 %v4871
    %5688 = vmatprep.subr.mxu0 0.0
    %5689 = vmatpush1.msra.mxu0 %v4870
    %5690 = vmatprep.subr.mxu0 0.0
    %5691 = vmatpush1.msra.mxu0 %v4869
    %5692 = vmatprep.subr.mxu0 0.0
    %5693 = vmatpush1.msra.mxu0 %v4868
    %5694 = vmatprep.subr.mxu0 0.0
    %5695 = vmatpush2.msra.mxu0 %v4899
    %5696 = vmatprep.subr.mxu0 0.0
    %5697 = vmatpush2.msra.mxu0 %v4898
    %5698 = vmatprep.subr.mxu0 0.0
    %5699 = vmatpush2.msra.mxu0 %v4897
    %5700 = vmatprep.subr.mxu0 0.0
    %5701 = vmatpush2.msra.mxu0 %v4896
    %5702 = vmatprep.subr.mxu0 0.0
    %5703 = vmatpush2.msra.mxu0 %v4895
    %5704 = vmatprep.subr.mxu0 0.0
    %5705 = vmatpush2.msra.mxu0 %v4894
    %5706 = vmatprep.subr.mxu0 0.0
    %5707 = vmatpush2.msra.mxu0 %v4893
    %5708 = vmatprep.subr.mxu0 0.0
    %5709 = vmatpush2.msra.mxu0 %v4892
    %5710 = vmatprep.subr.mxu0 0.0
    %5711 = vmatpush2.msra.mxu0 %v4891
    %5712 = vmatprep.subr.mxu0 0.0
    %5713 = vmatpush2.msra.mxu0 %v4890
    %5714 = vmatprep.subr.mxu0 0.0
    %5715 = vmatpush2.msra.mxu0 %v4889
    %5716 = vmatprep.subr.mxu0 0.0
    %5717 = vmatpush2.msra.mxu0 %v4888
    %5718 = vmatprep.subr.mxu0 0.0
    %5719 = vmatpush2.msra.mxu0 %v4887
    %5720 = vmatprep.subr.mxu0 0.0
    %5721 = vmatpush2.msra.mxu0 %v4886
    %5722 = vmatprep.subr.mxu0 0.0
    %5723 = vmatpush2.msra.mxu0 %v4885
    %5724 = vmatprep.subr.mxu0 0.0
    %5725 = vmatpush2.msra.mxu0 %v4884
    %5726 = vmatprep.mubr.f32.mxu0 %v5659
    %5727 = vmatmul.mubr.f32.gmra.mxu0 %v5658
    %v5728 = vpop.f32.mrf.mxu0
    %v5729 = vadd.f32 0.0, %v5728
    %v5730 = vpop.f32.mrf.mxu0
    %5731 = vdwg.mxu0
    %v5732 = vadd.f32 %v5657, %v5729
    %v5733 = vrot.slane %v5210, 7
    %v5734 = vrot.slane %v5211, 7
    %5737 = vmatprep.subr.mxu0 0.0
    %5738 = vmatpush1.msra.mxu0 %v4991
    %5739 = vmatprep.subr.mxu0 0.0
    %5740 = vmatpush1.msra.mxu0 %v4990
    %5741 = vmatprep.subr.mxu0 0.0
    %5742 = vmatpush1.msra.mxu0 %v4989
    %5743 = vmatprep.subr.mxu0 0.0
    %5744 = vmatpush1.msra.mxu0 %v4988
    %5745 = vmatprep.subr.mxu0 0.0
    %5746 = vmatpush1.msra.mxu0 %v4987
    %5747 = vmatprep.subr.mxu0 0.0
    %5748 = vmatpush1.msra.mxu0 %v4986
    %5749 = vmatprep.subr.mxu0 0.0
    %5750 = vmatpush1.msra.mxu0 %v4985
    %5751 = vmatprep.subr.mxu0 0.0
    %5752 = vmatpush1.msra.mxu0 %v4984
    %5753 = vmatprep.subr.mxu0 0.0
    %5754 = vmatpush1.msra.mxu0 %v4983
    %5755 = vmatprep.subr.mxu0 0.0
    %5756 = vmatpush1.msra.mxu0 %v4982
    %5757 = vmatprep.subr.mxu0 0.0
    %5758 = vmatpush1.msra.mxu0 %v4981
    %5759 = vmatprep.subr.mxu0 0.0
    %5760 = vmatpush1.msra.mxu0 %v4980
    %5761 = vmatprep.subr.mxu0 0.0
    %5762 = vmatpush1.msra.mxu0 %v4979
    %5763 = vmatprep.subr.mxu0 0.0
    %5764 = vmatpush1.msra.mxu0 %v4978
    %5765 = vmatprep.subr.mxu0 0.0
    %5766 = vmatpush1.msra.mxu0 %v4977
    %5767 = vmatprep.subr.mxu0 0.0
    %5768 = vmatpush1.msra.mxu0 %v4976
    %5769 = vmatprep.subr.mxu0 0.0
    %5770 = vmatpush2.msra.mxu0 %v5007
    %5771 = vmatprep.subr.mxu0 0.0
    %5772 = vmatpush2.msra.mxu0 %v5006
    %5773 = vmatprep.subr.mxu0 0.0
    %5774 = vmatpush2.msra.mxu0 %v5005
    %5775 = vmatprep.subr.mxu0 0.0
    %5776 = vmatpush2.msra.mxu0 %v5004
    %5777 = vmatprep.subr.mxu0 0.0
    %5778 = vmatpush2.msra.mxu0 %v5003
    %5779 = vmatprep.subr.mxu0 0.0
    %5780 = vmatpush2.msra.mxu0 %v5002
    %5781 = vmatprep.subr.mxu0 0.0
    %5782 = vmatpush2.msra.mxu0 %v5001
    %5783 = vmatprep.subr.mxu0 0.0
    %5784 = vmatpush2.msra.mxu0 %v5000
    %5785 = vmatprep.subr.mxu0 0.0
    %5786 = vmatpush2.msra.mxu0 %v4999
    %5787 = vmatprep.subr.mxu0 0.0
    %5788 = vmatpush2.msra.mxu0 %v4998
    %5789 = vmatprep.subr.mxu0 0.0
    %5790 = vmatpush2.msra.mxu0 %v4997
    %5791 = vmatprep.subr.mxu0 0.0
    %5792 = vmatpush2.msra.mxu0 %v4996
    %5793 = vmatprep.subr.mxu0 0.0
    %5794 = vmatpush2.msra.mxu0 %v4995
    %5795 = vmatprep.subr.mxu0 0.0
    %5796 = vmatpush2.msra.mxu0 %v4994
    %5797 = vmatprep.subr.mxu0 0.0
    %5798 = vmatpush2.msra.mxu0 %v4993
    %5799 = vmatprep.subr.mxu0 0.0
    %5800 = vmatpush2.msra.mxu0 %v4992
    %5801 = vmatprep.mubr.f32.mxu0 %v5734
    %5802 = vmatmul.mubr.f32.gmra.mxu0 %v5733
    %v5803 = vpop.f32.mrf.mxu0
    %v5804 = vadd.f32 0.0, %v5803
    %v5805 = vpop.f32.mrf.mxu0
    %5806 = vdwg.mxu0
    %v5807 = vadd.f32 %v5732, %v5804
    %v5809 = vrot.slane %v5807, 7
    %v5811 = vsel %vm1940, %v5082, %v5809
    %v5812 = vmax.f32 %v5811, 0.0
    %v5813 = vld [vmem:[%s14] sm:$0xff]
    %v5814 = vld [vmem:[%s14 + $0x8] sm:$0xff]
    %v5815 = vld [vmem:[%s14 + $0x10] sm:$0xff]
    %v5816 = vld [vmem:[%s14 + $0x18] sm:$0xff]
    %v5817 = vld [vmem:[%s14 + $0x20] sm:$0xff]
    %v5818 = vld [vmem:[%s14 + $0x28] sm:$0xff]
    %v5819 = vld [vmem:[%s14 + $0x30] sm:$0xff]
    %v5820 = vld [vmem:[%s14 + $0x38] sm:$0xff]
    %vm5821 = vcmask 523264
    %v5823 = vsel %vm5821, %v5812, 0
    %5825 = vmatprep.subr.mxu0 0.0
    %5826 = vmatpush1.msra.mxu0 0.0
    %5827 = vmatprep.subr.mxu0 0.0
    %5828 = vmatpush1.msra.mxu0 0.0
    %5829 = vmatprep.subr.mxu0 0.0
    %5830 = vmatpush1.msra.mxu0 0.0
    %5831 = vmatprep.subr.mxu0 0.0
    %5832 = vmatpush1.msra.mxu0 0.0
    %5833 = vmatprep.subr.mxu0 0.0
    %5834 = vmatpush1.msra.mxu0 0.0
    %5835 = vmatprep.subr.mxu0 0.0
    %5836 = vmatpush1.msra.mxu0 0.0
    %5837 = vmatprep.subr.mxu0 0.0
    %5838 = vmatpush1.msra.mxu0 0.0
    %5839 = vmatprep.subr.mxu0 0.0
    %5840 = vmatpush1.msra.mxu0 0.0
    %5841 = vmatprep.subr.mxu0 0.0
    %5842 = vmatpush1.msra.mxu0 %v5820
    %5843 = vmatprep.subr.mxu0 0.0
    %5844 = vmatpush1.msra.mxu0 %v5819
    %5845 = vmatprep.subr.mxu0 0.0
    %5846 = vmatpush1.msra.mxu0 %v5818
    %5847 = vmatprep.subr.mxu0 0.0
    %5848 = vmatpush1.msra.mxu0 %v5817
    %5849 = vmatprep.subr.mxu0 0.0
    %5850 = vmatpush1.msra.mxu0 %v5816
    %5851 = vmatprep.subr.mxu0 0.0
    %5852 = vmatpush1.msra.mxu0 %v5815
    %5853 = vmatprep.subr.mxu0 0.0
    %5854 = vmatpush1.msra.mxu0 %v5814
    %5855 = vmatprep.subr.mxu0 0.0
    %5856 = vmatpush1.msra.mxu0 %v5813
    %5857 = vmatprep.subr.mxu0 0.0
    %5858 = vmatpush2.msra.mxu0 0.0
    %5859 = vmatprep.subr.mxu0 0.0
    %5860 = vmatpush2.msra.mxu0 0.0
    %5861 = vmatprep.subr.mxu0 0.0
    %5862 = vmatpush2.msra.mxu0 0.0
    %5863 = vmatprep.subr.mxu0 0.0
    %5864 = vmatpush2.msra.mxu0 0.0
    %5865 = vmatprep.subr.mxu0 0.0
    %5866 = vmatpush2.msra.mxu0 0.0
    %5867 = vmatprep.subr.mxu0 0.0
    %5868 = vmatpush2.msra.mxu0 0.0
    %5869 = vmatprep.subr.mxu0 0.0
    %5870 = vmatpush2.msra.mxu0 0.0
    %5871 = vmatprep.subr.mxu0 0.0
    %5872 = vmatpush2.msra.mxu0 0.0
    %5873 = vmatprep.subr.mxu0 0.0
    %5874 = vmatpush2.msra.mxu0 0.0
    %5875 = vmatprep.subr.mxu0 0.0
    %5876 = vmatpush2.msra.mxu0 0.0
    %5877 = vmatprep.subr.mxu0 0.0
    %5878 = vmatpush2.msra.mxu0 0.0
    %5879 = vmatprep.subr.mxu0 0.0
    %5880 = vmatpush2.msra.mxu0 0.0
    %5881 = vmatprep.subr.mxu0 0.0
    %5882 = vmatpush2.msra.mxu0 0.0
    %5883 = vmatprep.subr.mxu0 0.0
    %5884 = vmatpush2.msra.mxu0 0.0
    %5885 = vmatprep.subr.mxu0 0.0
    %5886 = vmatpush2.msra.mxu0 0.0
    %5887 = vmatprep.subr.mxu0 0.0
    %5888 = vmatpush2.msra.mxu0 0.0
    %5889 = vmatprep.mubr.f32.mxu0 0.0
    %5890 = vmatmul.mubr.f32.gmra.mxu0 %v5823
    %v5891 = vpop.f32.mrf.mxu0
    %v5892 = vadd.f32 0.0, %v5891
    %v5893 = vpop.f32.mrf.mxu0
    %5894 = vdwg.mxu0
    %v5895 = vmax.f32 %v5892, 0.0
    %v5896 = vld [vmem:[%s15] sm:$0xff]
    %v5897 = vld [vmem:[%s15 + $0x8] sm:$0xff]
    %v5898 = vld [vmem:[%s15 + $0x10] sm:$0xff]
    %v5899 = vld [vmem:[%s15 + $0x18] sm:$0xff]
    %v5901 = vsel %vm1981, %v5895, 0
    %5903 = vmatprep.subr.mxu0 0.0
    %5904 = vmatpush1.msra.mxu0 0.0
    %5905 = vmatprep.subr.mxu0 0.0
    %5906 = vmatpush1.msra.mxu0 0.0
    %5907 = vmatprep.subr.mxu0 0.0
    %5908 = vmatpush1.msra.mxu0 0.0
    %5909 = vmatprep.subr.mxu0 0.0
    %5910 = vmatpush1.msra.mxu0 0.0
    %5911 = vmatprep.subr.mxu0 0.0
    %5912 = vmatpush1.msra.mxu0 0.0
    %5913 = vmatprep.subr.mxu0 0.0
    %5914 = vmatpush1.msra.mxu0 0.0
    %5915 = vmatprep.subr.mxu0 0.0
    %5916 = vmatpush1.msra.mxu0 0.0
    %5917 = vmatprep.subr.mxu0 0.0
    %5918 = vmatpush1.msra.mxu0 0.0
    %5919 = vmatprep.subr.mxu0 0.0
    %5920 = vmatpush1.msra.mxu0 0.0
    %5921 = vmatprep.subr.mxu0 0.0
    %5922 = vmatpush1.msra.mxu0 0.0
    %5923 = vmatprep.subr.mxu0 0.0
    %5924 = vmatpush1.msra.mxu0 0.0
    %5925 = vmatprep.subr.mxu0 0.0
    %5926 = vmatpush1.msra.mxu0 0.0
    %5927 = vmatprep.subr.mxu0 0.0
    %5928 = vmatpush1.msra.mxu0 %v5899
    %5929 = vmatprep.subr.mxu0 0.0
    %5930 = vmatpush1.msra.mxu0 %v5898
    %5931 = vmatprep.subr.mxu0 0.0
    %5932 = vmatpush1.msra.mxu0 %v5897
    %5933 = vmatprep.subr.mxu0 0.0
    %5934 = vmatpush1.msra.mxu0 %v5896
    %5935 = vmatprep.subr.mxu0 0.0
    %5936 = vmatpush2.msra.mxu0 0.0
    %5937 = vmatprep.subr.mxu0 0.0
    %5938 = vmatpush2.msra.mxu0 0.0
    %5939 = vmatprep.subr.mxu0 0.0
    %5940 = vmatpush2.msra.mxu0 0.0
    %5941 = vmatprep.subr.mxu0 0.0
    %5942 = vmatpush2.msra.mxu0 0.0
    %5943 = vmatprep.subr.mxu0 0.0
    %5944 = vmatpush2.msra.mxu0 0.0
    %5945 = vmatprep.subr.mxu0 0.0
    %5946 = vmatpush2.msra.mxu0 0.0
    %5947 = vmatprep.subr.mxu0 0.0
    %5948 = vmatpush2.msra.mxu0 0.0
    %5949 = vmatprep.subr.mxu0 0.0
    %5950 = vmatpush2.msra.mxu0 0.0
    %5951 = vmatprep.subr.mxu0 0.0
    %5952 = vmatpush2.msra.mxu0 0.0
    %5953 = vmatprep.subr.mxu0 0.0
    %5954 = vmatpush2.msra.mxu0 0.0
    %5955 = vmatprep.subr.mxu0 0.0
    %5956 = vmatpush2.msra.mxu0 0.0
    %5957 = vmatprep.subr.mxu0 0.0
    %5958 = vmatpush2.msra.mxu0 0.0
    %5959 = vmatprep.subr.mxu0 0.0
    %5960 = vmatpush2.msra.mxu0 0.0
    %5961 = vmatprep.subr.mxu0 0.0
    %5962 = vmatpush2.msra.mxu0 0.0
    %5963 = vmatprep.subr.mxu0 0.0
    %5964 = vmatpush2.msra.mxu0 0.0
    %5965 = vmatprep.subr.mxu0 0.0
    %5966 = vmatpush2.msra.mxu0 0.0
    %5967 = vmatprep.mubr.f32.mxu0 0.0
    %5968 = vmatmul.mubr.f32.gmra.mxu0 %v5901
    %v5969 = vpop.f32.mrf.mxu0
    %v5970 = vadd.f32 0.0, %v5969
    %v5971 = vpop.f32.mrf.mxu0
    %5972 = vdwg.mxu0
    %vm5973 = vcmask 74752
    %5974 = vst.msk [vmem:[#allocation2] sm:$0x3] %vm5973, %v5970
    // Predicated region
    $region66: #{learner_forward.1} parent=1 // pred_check
      _
    $region67: #{learner_forward.1} parent=1 // pred_check_branch
      %5976 = sbr.rel (0) target = $region69
    $region68: #{learner_forward.1} parent=1 // pred_region
      %s5978 = ssub.s32 32, 32
      %5979 = vsyncadd [#allocation3], %s5978
      %s5981 = sshll.u32 [#allocation2], 4
      %s5982 = int_to_ptr.vmem [resolvable:$true] %s5981
      %5984 = dma.vmem_to_hbm [thread:$0]  %s5982, 32, %s16, [#allocation3]
    $region69: #{learner_forward.1} parent=1 // pred_fallthru
      _
    // Predicated region
    $region70: #{learner_forward.1} parent=1 // pred_check
      _
    $region71: #{learner_forward.1} parent=1 // pred_check_branch
      %5986 = sbr.rel (0) target = $region73
    $region72: #{learner_forward.1} parent=1 // pred_region
      %5987 = dma.done [#allocation3], 32
    $region73: #{learner_forward.1} parent=1 // pred_fallthru
      _
    %5988 = vsyncpa [#allocation3], 1

</llo_original>
